<compile_context>
chip_gen: v6e
topology: v6e:2x2x1
jax: 0.10.0
libtpu: 0.0.40
codegen_flags: <defaults>
</compile_context>

<pallas_src>
import functools

import jax
import jax.numpy as jnp
from jax import lax
from jax.experimental import pallas as pl
from jax.experimental.pallas import tpu as pltpu

CP = 128            # lane-padded channel width (TPU lane count)
EPS = 1e-5          # BatchNorm eps
LRELU_SLOPE = 0.1   # LeakyReLU negative slope


# ----------------------------------------------------------------------------
# Fused kernel: conv1x1 -> conv3x3 -> conv1x1 -> conv3x3 -> conv1x1
# (each followed by folded-BN bias + LeakyReLU), one batch image per grid step.
# ----------------------------------------------------------------------------
def _fused_set_kernel(x_ref, w1_ref, b1_ref, w2_ref, b2_ref, w3_ref, b3_ref,
                      w4_ref, b4_ref, w5_ref, b5_ref, o_ref, pbuf, *, H, W):
    hw = H * W

    def bn_lrelu(acc_f32, b_ref):
        # BN scale is already folded into the weights; bias = beta.
        y = acc_f32 + b_ref[...]
        return jnp.where(y > 0, y, LRELU_SLOPE * y)

    def conv1x1(a_bf16, w_ref, b_ref):
        acc = jnp.dot(a_bf16, w_ref[...], preferred_element_type=jnp.float32)
        return bn_lrelu(acc, b_ref)

    def to_halo_buf(a_f32):
        # Write the (H, W, CP) activation into the interior of the zero-halo
        # buffer; the 1-pixel border stays zero.
        pbuf[1:H + 1, 1:W + 1, :] = a_f32.reshape(H, W, CP).astype(pbuf.dtype)

    def conv3x3(w_ref, b_ref):
        # 9 accumulating MXU matmuls with K=CP=128 each (f32 accumulation).
        acc = jnp.zeros((hw, CP), jnp.float32)
        for dy in range(3):
            for dx in range(3):
                patch = pbuf[dy:dy + H, dx:dx + W, :].reshape(hw, CP)
                acc = acc + jnp.dot(patch, w_ref[dy * 3 + dx],
                                    preferred_element_type=jnp.float32)
        return bn_lrelu(acc, b_ref)

    # Zero the halo scratch every grid step (tens of cycles, <1% of the step).
    # Only the 1-pixel border ever stays zero; the interior is overwritten by
    # to_halo_buf() before each 3x3 conv.  Deliberately NOT guarded with
    # pl.when(program_id==0): with a "parallel" batch axis the grid may be
    # sharded across TensorCores and a core whose first step has program_id!=0
    # would otherwise see an uninitialized border.
    pbuf[...] = jnp.zeros((H + 2, W + 2, CP), pbuf.dtype)

    x = x_ref[0].reshape(hw, CP)                       # bf16, lane-padded channels

    a1 = conv1x1(x, w1_ref, b1_ref)                    # 1x1: Cin  -> Cout
    to_halo_buf(a1)
    a2 = conv3x3(w2_ref, b2_ref)                       # 3x3: Cout -> Cin
    a3 = conv1x1(a2.astype(jnp.bfloat16), w3_ref, b3_ref)
    to_halo_buf(a3)
    a4 = conv3x3(w4_ref, b4_ref)
    a5 = conv1x1(a4.astype(jnp.bfloat16), w5_ref, b5_ref)

    # Lane-dense (CP-wide) unmasked store; wrapper strips the channel padding.
    o_ref[...] = a5.reshape(1, H, W, CP)


def convolutional_set_fused(x_nchw, fused_params, *, out_channels):
    n, cin, h, w = x_nchw.shape
    (w1, b1, w2, b2, w3, b3, w4, b4, w5, b5) = fused_params

    # NCHW -> NHWC (channels on the lane axis), pad channels to the lane width
    # and cast to bf16 (halves input DMA).  All of this is wrapper-side layout
    # plumbing handled by XLA.
    x_nhwc = jnp.transpose(x_nchw, (0, 2, 3, 1))
    x_pad = jnp.pad(x_nhwc, ((0, 0), (0, 0), (0, 0), (0, CP - cin)))
    x_pad = x_pad.astype(jnp.bfloat16)

    kernel = functools.partial(_fused_set_kernel, H=h, W=w)

    vec_spec = pl.BlockSpec((1, CP), lambda b: (0, 0))
    w1x1_spec = pl.BlockSpec((CP, CP), lambda b: (0, 0))
    w3x3_spec = pl.BlockSpec((9, CP, CP), lambda b: (0, 0, 0))

    out_padded = pl.pallas_call(
        kernel,
        out_shape=jax.ShapeDtypeStruct((n, h, w, CP), jnp.float32),
        grid_spec=pltpu.PrefetchScalarGridSpec(
            num_scalar_prefetch=0,
            grid=(n,),
            in_specs=[
                pl.BlockSpec((1, h, w, CP), lambda b: (b, 0, 0, 0)),   # x
                w1x1_spec, vec_spec,                                   # layer 1 (1x1)
                w3x3_spec, vec_spec,                                   # layer 2 (3x3)
                w1x1_spec, vec_spec,                                   # layer 3 (1x1)
                w3x3_spec, vec_spec,                                   # layer 4 (3x3)
                w1x1_spec, vec_spec,                                   # layer 5 (1x1)
            ],
            out_specs=pl.BlockSpec((1, h, w, CP), lambda b: (b, 0, 0, 0)),
            scratch_shapes=[pltpu.VMEM((h + 2, w + 2, CP), jnp.bfloat16)],
        ),
        compiler_params=pltpu.CompilerParams(
            dimension_semantics=("parallel",),
            vmem_limit_bytes=32 * 1024 * 1024),
    )(x_pad, w1, b1, w2, b2, w3, b3, w4, b4, w5, b5)

    # Strip lane padding and return NCHW to match the PyTorch module.
    out_nhwc = out_padded[..., :out_channels]
    return jnp.transpose(out_nhwc, (0, 3, 1, 2))


# ----------------------------------------------------------------------------
# Parameter construction (deterministic, mirrors PyTorch shapes)
# ----------------------------------------------------------------------------
def make_layer_params(key, cin, cout, ksize):
    kw, kg, kb = jax.random.split(key, 3)
    # Conv2d weight, PyTorch layout (Cout, Cin, kH, kW), no bias.
    w_oihw = jax.random.normal(kw, (cout, cin, ksize, ksize), jnp.float32) * 0.1
    # BatchNorm2d affine params; eval-mode running stats: mean=0, var=1.
    gamma = 1.0 + 0.1 * jax.random.normal(kg, (cout,), jnp.float32)
    beta = 0.1 * jax.random.normal(kb, (cout,), jnp.float32)
    return {"w_oihw": w_oihw, "gamma": gamma, "beta": beta, "ksize": ksize}


def prepare_fused_params(layers):
    """Fold BN scale into the conv weights, pad channels to CP, cast to bf16."""
    flat = []
    for p in layers:
        w_oihw, gamma, beta, ks = p["w_oihw"], p["gamma"], p["beta"], p["ksize"]
        cout, cin = w_oihw.shape[0], w_oihw.shape[1]
        scale = gamma / jnp.sqrt(1.0 + EPS)        # gamma / sqrt(running_var + eps)
        bias = beta                                # beta - running_mean * scale
        # (Cout,Cin,kH,kW) * scale  ->  (kH,kW,Cin,Cout)
        w_hwio = jnp.transpose(w_oihw * scale[:, None, None, None], (2, 3, 1, 0))
        if ks == 1:
            wk = jnp.zeros((CP, CP), jnp.float32).at[:cin, :cout].set(w_hwio[0, 0])
        else:
            wk = jnp.zeros((9, CP, CP), jnp.float32).at[:, :cin, :cout].set(
                w_hwio.reshape(9, cin, cout))
        flat.append(wk.astype(jnp.bfloat16))
        flat.append(jnp.zeros((1, CP), jnp.float32).at[0, :cout].set(bias))
    return tuple(flat)


# ----------------------------------------------------------------------------
# Pure-JAX reference (NCHW, f32) for a correctness sanity check
# ----------------------------------------------------------------------------
def reference_set(x_nchw, layers):
    y = x_nchw
    for p in layers:
        k = p["ksize"]
        pad = "SAME" if k == 3 else "VALID"
        y = lax.conv_general_dilated(
            y, p["w_oihw"], window_strides=(1, 1), padding=pad,
            dimension_numbers=("NCHW", "OIHW", "NCHW"))
        scale = (p["gamma"] / jnp.sqrt(1.0 + EPS))[None, :, None, None]
        y = y * scale + p["beta"][None, :, None, None]
        y = jnp.where(y > 0, y, LRELU_SLOPE * y)
    return y


if __name__ == "__main__":
    in_channels, out_channels = 4, 8
    N, H, W = 2, 16, 16

    key = jax.random.PRNGKey(0)
    kx, k1, k2, k3, k4, k5 = jax.random.split(key, 6)

    # Input in NCHW, exactly like the PyTorch module: (2, 4, 16, 16).
    x = jax.random.normal(kx, (N, in_channels, H, W), jnp.float32)

    layers = [
        make_layer_params(k1, in_channels, out_channels, 1),
        make_layer_params(k2, out_channels, in_channels, 3),
        make_layer_params(k3, in_channels, out_channels, 1),
        make_layer_params(k4, out_channels, in_channels, 3),
        make_layer_params(k5, in_channels, out_channels, 1),
    ]
    fused_params = prepare_fused_params(layers)

    fwd = jax.jit(functools.partial(convolutional_set_fused,
                                    out_channels=out_channels))
    out = jax.block_until_ready(fwd(x, fused_params))

    ref = reference_set(x, layers)
    assert out.shape == (N, out_channels, H, W), out.shape
    # bf16 matmul operands (f32 accumulation) -> loosen tolerance vs f32 reference.
    max_err = float(jnp.max(jnp.abs(out - ref)))
    assert jnp.allclose(out, ref, atol=5e-2, rtol=5e-2), max_err

    print("KERNEL_OK")
</pallas_src>

<mosaic_0001>
module attributes {stable_mosaic.version = 11 : i64} {
  func.func @_fused_set_kernel(%arg0: i32, %arg1: memref<1x16x16x128xbf16, #tpu.memory_space<vmem>>, %arg2: memref<128x128xbf16, #tpu.memory_space<vmem>>, %arg3: memref<1x128xf32, #tpu.memory_space<vmem>>, %arg4: memref<9x128x128xbf16, #tpu.memory_space<vmem>>, %arg5: memref<1x128xf32, #tpu.memory_space<vmem>>, %arg6: memref<128x128xbf16, #tpu.memory_space<vmem>>, %arg7: memref<1x128xf32, #tpu.memory_space<vmem>>, %arg8: memref<9x128x128xbf16, #tpu.memory_space<vmem>>, %arg9: memref<1x128xf32, #tpu.memory_space<vmem>>, %arg10: memref<128x128xbf16, #tpu.memory_space<vmem>>, %arg11: memref<1x128xf32, #tpu.memory_space<vmem>>, %arg12: memref<1x16x16x128xf32, #tpu.memory_space<vmem>>, %arg13: memref<18x18x128xbf16, #tpu.memory_space<vmem>>) attributes {dimension_semantics = [#tpu.dimension_semantics<parallel>], iteration_bounds = array<i64: 2>, scalar_prefetch = 0 : i64, scratch_operands = 1 : i64, tpu.core_type = #tpu.core_type<tc>, window_params = [{transform_indices = @transform_0, window_bounds = array<i64: 1, 16, 16, 128>}, {pipeline_mode = #tpu.pipeline_mode<synchronous>, transform_indices = @transform_1, window_bounds = array<i64: 128, 128>}, {pipeline_mode = #tpu.pipeline_mode<synchronous>, transform_indices = @transform_2, window_bounds = array<i64: 1, 128>}, {pipeline_mode = #tpu.pipeline_mode<synchronous>, transform_indices = @transform_3, window_bounds = array<i64: 9, 128, 128>}, {pipeline_mode = #tpu.pipeline_mode<synchronous>, transform_indices = @transform_4, window_bounds = array<i64: 1, 128>}, {pipeline_mode = #tpu.pipeline_mode<synchronous>, transform_indices = @transform_5, window_bounds = array<i64: 128, 128>}, {pipeline_mode = #tpu.pipeline_mode<synchronous>, transform_indices = @transform_6, window_bounds = array<i64: 1, 128>}, {pipeline_mode = #tpu.pipeline_mode<synchronous>, transform_indices = @transform_7, window_bounds = array<i64: 9, 128, 128>}, {pipeline_mode = #tpu.pipeline_mode<synchronous>, transform_indices = @transform_8, window_bounds = array<i64: 1, 128>}, {pipeline_mode = #tpu.pipeline_mode<synchronous>, transform_indices = @transform_9, window_bounds = array<i64: 128, 128>}, {pipeline_mode = #tpu.pipeline_mode<synchronous>, transform_indices = @transform_10, window_bounds = array<i64: 1, 128>}, {transform_indices = @transform_11, window_bounds = array<i64: 1, 16, 16, 128>}]} {
    %cst = arith.constant 0.000000e+00 : bf16
    %0 = vector.broadcast %cst : bf16 to vector<18x18x128xbf16>
    %c0 = arith.constant 0 : index
    %c0_0 = arith.constant 0 : index
    %c0_1 = arith.constant 0 : index
    %1 = vector.load %arg13[%c0, %c0_0, %c0_1] : memref<18x18x128xbf16, #tpu.memory_space<vmem>>, vector<18x18x128xbf16>
    tpu.vector_store %arg13[%c0, %c0_0, %c0_1], %0 {strides = array<i32>} : memref<18x18x128xbf16, #tpu.memory_space<vmem>>, vector<18x18x128xbf16>,
    %c0_2 = arith.constant 0 : index
    %c0_3 = arith.constant 0 : index
    %c0_4 = arith.constant 0 : index
    %c0_5 = arith.constant 0 : index
    %2 = vector.load %arg1[%c0_2, %c0_3, %c0_4, %c0_5] : memref<1x16x16x128xbf16, #tpu.memory_space<vmem>>, vector<1x16x16x128xbf16>
    %3 = vector.shape_cast %2 : vector<1x16x16x128xbf16> to vector<16x16x128xbf16>
    %4 = vector.shape_cast %3 : vector<16x16x128xbf16> to vector<256x128xbf16>
    %c0_6 = arith.constant 0 : index
    %c0_7 = arith.constant 0 : index
    %5 = vector.load %arg2[%c0_6, %c0_7] : memref<128x128xbf16, #tpu.memory_space<vmem>>, vector<128x128xbf16>
    %cst_8 = arith.constant dense<0.000000e+00> : vector<256x128xf32>
    %6 = tpu.matmul %4, %5, %cst_8 {dimension_numbers = #tpu.dot_dimension_numbers<[1], [0], [0], [1], [0, 0, 1, 1], [], []>} : vector<256x128xbf16>, vector<128x128xbf16>, vector<256x128xf32> -> vector<256x128xf32>
    %c0_9 = arith.constant 0 : index
    %c0_10 = arith.constant 0 : index
    %7 = vector.load %arg3[%c0_9, %c0_10] : memref<1x128xf32, #tpu.memory_space<vmem>>, vector<1x128xf32>
    %8 = vector.broadcast %7 : vector<1x128xf32> to vector<256x128xf32>
    %9 = arith.addf %6, %8 : vector<256x128xf32>
    %cst_11 = arith.constant 0.000000e+00 : f32
    %10 = vector.broadcast %cst_11 : f32 to vector<256x128xf32>
    %11 = arith.cmpf ogt, %9, %10 : vector<256x128xf32>
    %cst_12 = arith.constant 1.000000e-01 : f32
    %12 = vector.broadcast %cst_12 : f32 to vector<256x128xf32>
    %13 = arith.mulf %12, %9 : vector<256x128xf32>
    %14 = arith.select %11, %9, %13 : vector<256x128xi1>, vector<256x128xf32>
    %15 = vector.shape_cast %14 : vector<256x128xf32> to vector<16x16x128xf32>
    %16 = arith.truncf %15 : vector<16x16x128xf32> to vector<16x16x128xbf16>
    %c1 = arith.constant 1 : index
    %c1_13 = arith.constant 1 : index
    %c0_14 = arith.constant 0 : index
    %17 = vector.load %arg13[%c1, %c1_13, %c0_14] : memref<18x18x128xbf16, #tpu.memory_space<vmem>>, vector<16x16x128xbf16>
    tpu.vector_store %arg13[%c1, %c1_13, %c0_14], %16 {strides = array<i32>} : memref<18x18x128xbf16, #tpu.memory_space<vmem>>, vector<16x16x128xbf16>,
    %cst_15 = arith.constant 0.000000e+00 : f32
    %18 = vector.broadcast %cst_15 : f32 to vector<256x128xf32>
    %c0_16 = arith.constant 0 : index
    %c0_17 = arith.constant 0 : index
    %c0_18 = arith.constant 0 : index
    %19 = vector.load %arg13[%c0_16, %c0_17, %c0_18] : memref<18x18x128xbf16, #tpu.memory_space<vmem>>, vector<16x16x128xbf16>
    %20 = vector.shape_cast %19 : vector<16x16x128xbf16> to vector<256x128xbf16>
    %c0_19 = arith.constant 0 : index
    %c0_20 = arith.constant 0 : index
    %c0_21 = arith.constant 0 : index
    %21 = vector.load %arg4[%c0_19, %c0_20, %c0_21] : memref<9x128x128xbf16, #tpu.memory_space<vmem>>, vector<1x128x128xbf16>
    %22 = vector.shape_cast %21 : vector<1x128x128xbf16> to vector<128x128xbf16>
    %cst_22 = arith.constant dense<0.000000e+00> : vector<256x128xf32>
    %23 = tpu.matmul %20, %22, %cst_22 {dimension_numbers = #tpu.dot_dimension_numbers<[1], [0], [0], [1], [0, 0, 1, 1], [], []>} : vector<256x128xbf16>, vector<128x128xbf16>, vector<256x128xf32> -> vector<256x128xf32>
    %24 = arith.addf %18, %23 : vector<256x128xf32>
    %c0_23 = arith.constant 0 : index
    %c1_24 = arith.constant 1 : index
    %c0_25 = arith.constant 0 : index
    %25 = vector.load %arg13[%c0_23, %c1_24, %c0_25] : memref<18x18x128xbf16, #tpu.memory_space<vmem>>, vector<16x16x128xbf16>
    %26 = vector.shape_cast %25 : vector<16x16x128xbf16> to vector<256x128xbf16>
    %c1_26 = arith.constant 1 : index
    %c0_27 = arith.constant 0 : index
    %c0_28 = arith.constant 0 : index
    %27 = vector.load %arg4[%c1_26, %c0_27, %c0_28] : memref<9x128x128xbf16, #tpu.memory_space<vmem>>, vector<1x128x128xbf16>
    %28 = vector.shape_cast %27 : vector<1x128x128xbf16> to vector<128x128xbf16>
    %cst_29 = arith.constant dense<0.000000e+00> : vector<256x128xf32>
    %29 = tpu.matmul %26, %28, %cst_29 {dimension_numbers = #tpu.dot_dimension_numbers<[1], [0], [0], [1], [0, 0, 1, 1], [], []>} : vector<256x128xbf16>, vector<128x128xbf16>, vector<256x128xf32> -> vector<256x128xf32>
    %30 = arith.addf %24, %29 : vector<256x128xf32>
    %c0_30 = arith.constant 0 : index
    %c2 = arith.constant 2 : index
    %c0_31 = arith.constant 0 : index
    %31 = vector.load %arg13[%c0_30, %c2, %c0_31] : memref<18x18x128xbf16, #tpu.memory_space<vmem>>, vector<16x16x128xbf16>
    %32 = vector.shape_cast %31 : vector<16x16x128xbf16> to vector<256x128xbf16>
    %c2_32 = arith.constant 2 : index
    %c0_33 = arith.constant 0 : index
    %c0_34 = arith.constant 0 : index
    %33 = vector.load %arg4[%c2_32, %c0_33, %c0_34] : memref<9x128x128xbf16, #tpu.memory_space<vmem>>, vector<1x128x128xbf16>
    %34 = vector.shape_cast %33 : vector<1x128x128xbf16> to vector<128x128xbf16>
    %cst_35 = arith.constant dense<0.000000e+00> : vector<256x128xf32>
    %35 = tpu.matmul %32, %34, %cst_35 {dimension_numbers = #tpu.dot_dimension_numbers<[1], [0], [0], [1], [0, 0, 1, 1], [], []>} : vector<256x128xbf16>, vector<128x128xbf16>, vector<256x128xf32> -> vector<256x128xf32>
    %36 = arith.addf %30, %35 : vector<256x128xf32>
    %c1_36 = arith.constant 1 : index
    %c0_37 = arith.constant 0 : index
    %c0_38 = arith.constant 0 : index
    %37 = vector.load %arg13[%c1_36, %c0_37, %c0_38] : memref<18x18x128xbf16, #tpu.memory_space<vmem>>, vector<16x16x128xbf16>
    %38 = vector.shape_cast %37 : vector<16x16x128xbf16> to vector<256x128xbf16>
    %c3 = arith.constant 3 : index
    %c0_39 = arith.constant 0 : index
    %c0_40 = arith.constant 0 : index
    %39 = vector.load %arg4[%c3, %c0_39, %c0_40] : memref<9x128x128xbf16, #tpu.memory_space<vmem>>, vector<1x128x128xbf16>
    %40 = vector.shape_cast %39 : vector<1x128x128xbf16> to vector<128x128xbf16>
    %cst_41 = arith.constant dense<0.000000e+00> : vector<256x128xf32>
    %41 = tpu.matmul %38, %40, %cst_41 {dimension_numbers = #tpu.dot_dimension_numbers<[1], [0], [0], [1], [0, 0, 1, 1], [], []>} : vector<256x128xbf16>, vector<128x128xbf16>, vector<256x128xf32> -> vector<256x128xf32>
    %42 = arith.addf %36, %41 : vector<256x128xf32>
    %c1_42 = arith.constant 1 : index
    %c1_43 = arith.constant 1 : index
    %c0_44 = arith.constant 0 : index
    %43 = vector.load %arg13[%c1_42, %c1_43, %c0_44] : memref<18x18x128xbf16, #tpu.memory_space<vmem>>, vector<16x16x128xbf16>
    %44 = vector.shape_cast %43 : vector<16x16x128xbf16> to vector<256x128xbf16>
    %c4 = arith.constant 4 : index
    %c0_45 = arith.constant 0 : index
    %c0_46 = arith.constant 0 : index
    %45 = vector.load %arg4[%c4, %c0_45, %c0_46] : memref<9x128x128xbf16, #tpu.memory_space<vmem>>, vector<1x128x128xbf16>
    %46 = vector.shape_cast %45 : vector<1x128x128xbf16> to vector<128x128xbf16>
    %cst_47 = arith.constant dense<0.000000e+00> : vector<256x128xf32>
    %47 = tpu.matmul %44, %46, %cst_47 {dimension_numbers = #tpu.dot_dimension_numbers<[1], [0], [0], [1], [0, 0, 1, 1], [], []>} : vector<256x128xbf16>, vector<128x128xbf16>, vector<256x128xf32> -> vector<256x128xf32>
    %48 = arith.addf %42, %47 : vector<256x128xf32>
    %c1_48 = arith.constant 1 : index
    %c2_49 = arith.constant 2 : index
    %c0_50 = arith.constant 0 : index
    %49 = vector.load %arg13[%c1_48, %c2_49, %c0_50] : memref<18x18x128xbf16, #tpu.memory_space<vmem>>, vector<16x16x128xbf16>
    %50 = vector.shape_cast %49 : vector<16x16x128xbf16> to vector<256x128xbf16>
    %c5 = arith.constant 5 : index
    %c0_51 = arith.constant 0 : index
    %c0_52 = arith.constant 0 : index
    %51 = vector.load %arg4[%c5, %c0_51, %c0_52] : memref<9x128x128xbf16, #tpu.memory_space<vmem>>, vector<1x128x128xbf16>
    %52 = vector.shape_cast %51 : vector<1x128x128xbf16> to vector<128x128xbf16>
    %cst_53 = arith.constant dense<0.000000e+00> : vector<256x128xf32>
    %53 = tpu.matmul %50, %52, %cst_53 {dimension_numbers = #tpu.dot_dimension_numbers<[1], [0], [0], [1], [0, 0, 1, 1], [], []>} : vector<256x128xbf16>, vector<128x128xbf16>, vector<256x128xf32> -> vector<256x128xf32>
    %54 = arith.addf %48, %53 : vector<256x128xf32>
    %c2_54 = arith.constant 2 : index
    %c0_55 = arith.constant 0 : index
    %c0_56 = arith.constant 0 : index
    %55 = vector.load %arg13[%c2_54, %c0_55, %c0_56] : memref<18x18x128xbf16, #tpu.memory_space<vmem>>, vector<16x16x128xbf16>
    %56 = vector.shape_cast %55 : vector<16x16x128xbf16> to vector<256x128xbf16>
    %c6 = arith.constant 6 : index
    %c0_57 = arith.constant 0 : index
    %c0_58 = arith.constant 0 : index
    %57 = vector.load %arg4[%c6, %c0_57, %c0_58] : memref<9x128x128xbf16, #tpu.memory_space<vmem>>, vector<1x128x128xbf16>
    %58 = vector.shape_cast %57 : vector<1x128x128xbf16> to vector<128x128xbf16>
    %cst_59 = arith.constant dense<0.000000e+00> : vector<256x128xf32>
    %59 = tpu.matmul %56, %58, %cst_59 {dimension_numbers = #tpu.dot_dimension_numbers<[1], [0], [0], [1], [0, 0, 1, 1], [], []>} : vector<256x128xbf16>, vector<128x128xbf16>, vector<256x128xf32> -> vector<256x128xf32>
    %60 = arith.addf %54, %59 : vector<256x128xf32>
    %c2_60 = arith.constant 2 : index
    %c1_61 = arith.constant 1 : index
    %c0_62 = arith.constant 0 : index
    %61 = vector.load %arg13[%c2_60, %c1_61, %c0_62] : memref<18x18x128xbf16, #tpu.memory_space<vmem>>, vector<16x16x128xbf16>
    %62 = vector.shape_cast %61 : vector<16x16x128xbf16> to vector<256x128xbf16>
    %c7 = arith.constant 7 : index
    %c0_63 = arith.constant 0 : index
    %c0_64 = arith.constant 0 : index
    %63 = vector.load %arg4[%c7, %c0_63, %c0_64] : memref<9x128x128xbf16, #tpu.memory_space<vmem>>, vector<1x128x128xbf16>
    %64 = vector.shape_cast %63 : vector<1x128x128xbf16> to vector<128x128xbf16>
    %cst_65 = arith.constant dense<0.000000e+00> : vector<256x128xf32>
    %65 = tpu.matmul %62, %64, %cst_65 {dimension_numbers = #tpu.dot_dimension_numbers<[1], [0], [0], [1], [0, 0, 1, 1], [], []>} : vector<256x128xbf16>, vector<128x128xbf16>, vector<256x128xf32> -> vector<256x128xf32>
    %66 = arith.addf %60, %65 : vector<256x128xf32>
    %c2_66 = arith.constant 2 : index
    %c2_67 = arith.constant 2 : index
    %c0_68 = arith.constant 0 : index
    %67 = vector.load %arg13[%c2_66, %c2_67, %c0_68] : memref<18x18x128xbf16, #tpu.memory_space<vmem>>, vector<16x16x128xbf16>
    %68 = vector.shape_cast %67 : vector<16x16x128xbf16> to vector<256x128xbf16>
    %c8 = arith.constant 8 : index
    %c0_69 = arith.constant 0 : index
    %c0_70 = arith.constant 0 : index
    %69 = vector.load %arg4[%c8, %c0_69, %c0_70] : memref<9x128x128xbf16, #tpu.memory_space<vmem>>, vector<1x128x128xbf16>
    %70 = vector.shape_cast %69 : vector<1x128x128xbf16> to vector<128x128xbf16>
    %cst_71 = arith.constant dense<0.000000e+00> : vector<256x128xf32>
    %71 = tpu.matmul %68, %70, %cst_71 {dimension_numbers = #tpu.dot_dimension_numbers<[1], [0], [0], [1], [0, 0, 1, 1], [], []>} : vector<256x128xbf16>, vector<128x128xbf16>, vector<256x128xf32> -> vector<256x128xf32>
    %72 = arith.addf %66, %71 : vector<256x128xf32>
    %c0_72 = arith.constant 0 : index
    %c0_73 = arith.constant 0 : index
    %73 = vector.load %arg5[%c0_72, %c0_73] : memref<1x128xf32, #tpu.memory_space<vmem>>, vector<1x128xf32>
    %74 = vector.broadcast %73 : vector<1x128xf32> to vector<256x128xf32>
    %75 = arith.addf %72, %74 : vector<256x128xf32>
    %cst_74 = arith.constant 0.000000e+00 : f32
    %76 = vector.broadcast %cst_74 : f32 to vector<256x128xf32>
    %77 = arith.cmpf ogt, %75, %76 : vector<256x128xf32>
    %cst_75 = arith.constant 1.000000e-01 : f32
    %78 = vector.broadcast %cst_75 : f32 to vector<256x128xf32>
    %79 = arith.mulf %78, %75 : vector<256x128xf32>
    %80 = arith.select %77, %75, %79 : vector<256x128xi1>, vector<256x128xf32>
    %81 = arith.truncf %80 : vector<256x128xf32> to vector<256x128xbf16>
    %c0_76 = arith.constant 0 : index
    %c0_77 = arith.constant 0 : index
    %82 = vector.load %arg6[%c0_76, %c0_77] : memref<128x128xbf16, #tpu.memory_space<vmem>>, vector<128x128xbf16>
    %cst_78 = arith.constant dense<0.000000e+00> : vector<256x128xf32>
    %83 = tpu.matmul %81, %82, %cst_78 {dimension_numbers = #tpu.dot_dimension_numbers<[1], [0], [0], [1], [0, 0, 1, 1], [], []>} : vector<256x128xbf16>, vector<128x128xbf16>, vector<256x128xf32> -> vector<256x128xf32>
    %c0_79 = arith.constant 0 : index
    %c0_80 = arith.constant 0 : index
    %84 = vector.load %arg7[%c0_79, %c0_80] : memref<1x128xf32, #tpu.memory_space<vmem>>, vector<1x128xf32>
    %85 = vector.broadcast %84 : vector<1x128xf32> to vector<256x128xf32>
    %86 = arith.addf %83, %85 : vector<256x128xf32>
    %cst_81 = arith.constant 0.000000e+00 : f32
    %87 = vector.broadcast %cst_81 : f32 to vector<256x128xf32>
    %88 = arith.cmpf ogt, %86, %87 : vector<256x128xf32>
    %cst_82 = arith.constant 1.000000e-01 : f32
    %89 = vector.broadcast %cst_82 : f32 to vector<256x128xf32>
    %90 = arith.mulf %89, %86 : vector<256x128xf32>
    %91 = arith.select %88, %86, %90 : vector<256x128xi1>, vector<256x128xf32>
    %92 = vector.shape_cast %91 : vector<256x128xf32> to vector<16x16x128xf32>
    %93 = arith.truncf %92 : vector<16x16x128xf32> to vector<16x16x128xbf16>
    %c1_83 = arith.constant 1 : index
    %c1_84 = arith.constant 1 : index
    %c0_85 = arith.constant 0 : index
    %94 = vector.load %arg13[%c1_83, %c1_84, %c0_85] : memref<18x18x128xbf16, #tpu.memory_space<vmem>>, vector<16x16x128xbf16>
    tpu.vector_store %arg13[%c1_83, %c1_84, %c0_85], %93 {strides = array<i32>} : memref<18x18x128xbf16, #tpu.memory_space<vmem>>, vector<16x16x128xbf16>,
    %cst_86 = arith.constant 0.000000e+00 : f32
    %95 = vector.broadcast %cst_86 : f32 to vector<256x128xf32>
    %c0_87 = arith.constant 0 : index
    %c0_88 = arith.constant 0 : index
    %c0_89 = arith.constant 0 : index
    %96 = vector.load %arg13[%c0_87, %c0_88, %c0_89] : memref<18x18x128xbf16, #tpu.memory_space<vmem>>, vector<16x16x128xbf16>
    %97 = vector.shape_cast %96 : vector<16x16x128xbf16> to vector<256x128xbf16>
    %c0_90 = arith.constant 0 : index
    %c0_91 = arith.constant 0 : index
    %c0_92 = arith.constant 0 : index
    %98 = vector.load %arg8[%c0_90, %c0_91, %c0_92] : memref<9x128x128xbf16, #tpu.memory_space<vmem>>, vector<1x128x128xbf16>
    %99 = vector.shape_cast %98 : vector<1x128x128xbf16> to vector<128x128xbf16>
    %cst_93 = arith.constant dense<0.000000e+00> : vector<256x128xf32>
    %100 = tpu.matmul %97, %99, %cst_93 {dimension_numbers = #tpu.dot_dimension_numbers<[1], [0], [0], [1], [0, 0, 1, 1], [], []>} : vector<256x128xbf16>, vector<128x128xbf16>, vector<256x128xf32> -> vector<256x128xf32>
    %101 = arith.addf %95, %100 : vector<256x128xf32>
    %c0_94 = arith.constant 0 : index
    %c1_95 = arith.constant 1 : index
    %c0_96 = arith.constant 0 : index
    %102 = vector.load %arg13[%c0_94, %c1_95, %c0_96] : memref<18x18x128xbf16, #tpu.memory_space<vmem>>, vector<16x16x128xbf16>
    %103 = vector.shape_cast %102 : vector<16x16x128xbf16> to vector<256x128xbf16>
    %c1_97 = arith.constant 1 : index
    %c0_98 = arith.constant 0 : index
    %c0_99 = arith.constant 0 : index
    %104 = vector.load %arg8[%c1_97, %c0_98, %c0_99] : memref<9x128x128xbf16, #tpu.memory_space<vmem>>, vector<1x128x128xbf16>
    %105 = vector.shape_cast %104 : vector<1x128x128xbf16> to vector<128x128xbf16>
    %cst_100 = arith.constant dense<0.000000e+00> : vector<256x128xf32>
    %106 = tpu.matmul %103, %105, %cst_100 {dimension_numbers = #tpu.dot_dimension_numbers<[1], [0], [0], [1], [0, 0, 1, 1], [], []>} : vector<256x128xbf16>, vector<128x128xbf16>, vector<256x128xf32> -> vector<256x128xf32>
    %107 = arith.addf %101, %106 : vector<256x128xf32>
    %c0_101 = arith.constant 0 : index
    %c2_102 = arith.constant 2 : index
    %c0_103 = arith.constant 0 : index
    %108 = vector.load %arg13[%c0_101, %c2_102, %c0_103] : memref<18x18x128xbf16, #tpu.memory_space<vmem>>, vector<16x16x128xbf16>
    %109 = vector.shape_cast %108 : vector<16x16x128xbf16> to vector<256x128xbf16>
    %c2_104 = arith.constant 2 : index
    %c0_105 = arith.constant 0 : index
    %c0_106 = arith.constant 0 : index
    %110 = vector.load %arg8[%c2_104, %c0_105, %c0_106] : memref<9x128x128xbf16, #tpu.memory_space<vmem>>, vector<1x128x128xbf16>
    %111 = vector.shape_cast %110 : vector<1x128x128xbf16> to vector<128x128xbf16>
    %cst_107 = arith.constant dense<0.000000e+00> : vector<256x128xf32>
    %112 = tpu.matmul %109, %111, %cst_107 {dimension_numbers = #tpu.dot_dimension_numbers<[1], [0], [0], [1], [0, 0, 1, 1], [], []>} : vector<256x128xbf16>, vector<128x128xbf16>, vector<256x128xf32> -> vector<256x128xf32>
    %113 = arith.addf %107, %112 : vector<256x128xf32>
    %c1_108 = arith.constant 1 : index
    %c0_109 = arith.constant 0 : index
    %c0_110 = arith.constant 0 : index
    %114 = vector.load %arg13[%c1_108, %c0_109, %c0_110] : memref<18x18x128xbf16, #tpu.memory_space<vmem>>, vector<16x16x128xbf16>
    %115 = vector.shape_cast %114 : vector<16x16x128xbf16> to vector<256x128xbf16>
    %c3_111 = arith.constant 3 : index
    %c0_112 = arith.constant 0 : index
    %c0_113 = arith.constant 0 : index
    %116 = vector.load %arg8[%c3_111, %c0_112, %c0_113] : memref<9x128x128xbf16, #tpu.memory_space<vmem>>, vector<1x128x128xbf16>
    %117 = vector.shape_cast %116 : vector<1x128x128xbf16> to vector<128x128xbf16>
    %cst_114 = arith.constant dense<0.000000e+00> : vector<256x128xf32>
    %118 = tpu.matmul %115, %117, %cst_114 {dimension_numbers = #tpu.dot_dimension_numbers<[1], [0], [0], [1], [0, 0, 1, 1], [], []>} : vector<256x128xbf16>, vector<128x128xbf16>, vector<256x128xf32> -> vector<256x128xf32>
    %119 = arith.addf %113, %118 : vector<256x128xf32>
    %c1_115 = arith.constant 1 : index
    %c1_116 = arith.constant 1 : index
    %c0_117 = arith.constant 0 : index
    %120 = vector.load %arg13[%c1_115, %c1_116, %c0_117] : memref<18x18x128xbf16, #tpu.memory_space<vmem>>, vector<16x16x128xbf16>
    %121 = vector.shape_cast %120 : vector<16x16x128xbf16> to vector<256x128xbf16>
    %c4_118 = arith.constant 4 : index
    %c0_119 = arith.constant 0 : index
    %c0_120 = arith.constant 0 : index
    %122 = vector.load %arg8[%c4_118, %c0_119, %c0_120] : memref<9x128x128xbf16, #tpu.memory_space<vmem>>, vector<1x128x128xbf16>
    %123 = vector.shape_cast %122 : vector<1x128x128xbf16> to vector<128x128xbf16>
    %cst_121 = arith.constant dense<0.000000e+00> : vector<256x128xf32>
    %124 = tpu.matmul %121, %123, %cst_121 {dimension_numbers = #tpu.dot_dimension_numbers<[1], [0], [0], [1], [0, 0, 1, 1], [], []>} : vector<256x128xbf16>, vector<128x128xbf16>, vector<256x128xf32> -> vector<256x128xf32>
    %125 = arith.addf %119, %124 : vector<256x128xf32>
    %c1_122 = arith.constant 1 : index
    %c2_123 = arith.constant 2 : index
    %c0_124 = arith.constant 0 : index
    %126 = vector.load %arg13[%c1_122, %c2_123, %c0_124] : memref<18x18x128xbf16, #tpu.memory_space<vmem>>, vector<16x16x128xbf16>
    %127 = vector.shape_cast %126 : vector<16x16x128xbf16> to vector<256x128xbf16>
    %c5_125 = arith.constant 5 : index
    %c0_126 = arith.constant 0 : index
    %c0_127 = arith.constant 0 : index
    %128 = vector.load %arg8[%c5_125, %c0_126, %c0_127] : memref<9x128x128xbf16, #tpu.memory_space<vmem>>, vector<1x128x128xbf16>
    %129 = vector.shape_cast %128 : vector<1x128x128xbf16> to vector<128x128xbf16>
    %cst_128 = arith.constant dense<0.000000e+00> : vector<256x128xf32>
    %130 = tpu.matmul %127, %129, %cst_128 {dimension_numbers = #tpu.dot_dimension_numbers<[1], [0], [0], [1], [0, 0, 1, 1], [], []>} : vector<256x128xbf16>, vector<128x128xbf16>, vector<256x128xf32> -> vector<256x128xf32>
    %131 = arith.addf %125, %130 : vector<256x128xf32>
    %c2_129 = arith.constant 2 : index
    %c0_130 = arith.constant 0 : index
    %c0_131 = arith.constant 0 : index
    %132 = vector.load %arg13[%c2_129, %c0_130, %c0_131] : memref<18x18x128xbf16, #tpu.memory_space<vmem>>, vector<16x16x128xbf16>
    %133 = vector.shape_cast %132 : vector<16x16x128xbf16> to vector<256x128xbf16>
    %c6_132 = arith.constant 6 : index
    %c0_133 = arith.constant 0 : index
    %c0_134 = arith.constant 0 : index
    %134 = vector.load %arg8[%c6_132, %c0_133, %c0_134] : memref<9x128x128xbf16, #tpu.memory_space<vmem>>, vector<1x128x128xbf16>
    %135 = vector.shape_cast %134 : vector<1x128x128xbf16> to vector<128x128xbf16>
    %cst_135 = arith.constant dense<0.000000e+00> : vector<256x128xf32>
    %136 = tpu.matmul %133, %135, %cst_135 {dimension_numbers = #tpu.dot_dimension_numbers<[1], [0], [0], [1], [0, 0, 1, 1], [], []>} : vector<256x128xbf16>, vector<128x128xbf16>, vector<256x128xf32> -> vector<256x128xf32>
    %137 = arith.addf %131, %136 : vector<256x128xf32>
    %c2_136 = arith.constant 2 : index
    %c1_137 = arith.constant 1 : index
    %c0_138 = arith.constant 0 : index
    %138 = vector.load %arg13[%c2_136, %c1_137, %c0_138] : memref<18x18x128xbf16, #tpu.memory_space<vmem>>, vector<16x16x128xbf16>
    %139 = vector.shape_cast %138 : vector<16x16x128xbf16> to vector<256x128xbf16>
    %c7_139 = arith.constant 7 : index
    %c0_140 = arith.constant 0 : index
    %c0_141 = arith.constant 0 : index
    %140 = vector.load %arg8[%c7_139, %c0_140, %c0_141] : memref<9x128x128xbf16, #tpu.memory_space<vmem>>, vector<1x128x128xbf16>
    %141 = vector.shape_cast %140 : vector<1x128x128xbf16> to vector<128x128xbf16>
    %cst_142 = arith.constant dense<0.000000e+00> : vector<256x128xf32>
    %142 = tpu.matmul %139, %141, %cst_142 {dimension_numbers = #tpu.dot_dimension_numbers<[1], [0], [0], [1], [0, 0, 1, 1], [], []>} : vector<256x128xbf16>, vector<128x128xbf16>, vector<256x128xf32> -> vector<256x128xf32>
    %143 = arith.addf %137, %142 : vector<256x128xf32>
    %c2_143 = arith.constant 2 : index
    %c2_144 = arith.constant 2 : index
    %c0_145 = arith.constant 0 : index
    %144 = vector.load %arg13[%c2_143, %c2_144, %c0_145] : memref<18x18x128xbf16, #tpu.memory_space<vmem>>, vector<16x16x128xbf16>
    %145 = vector.shape_cast %144 : vector<16x16x128xbf16> to vector<256x128xbf16>
    %c8_146 = arith.constant 8 : index
    %c0_147 = arith.constant 0 : index
    %c0_148 = arith.constant 0 : index
    %146 = vector.load %arg8[%c8_146, %c0_147, %c0_148] : memref<9x128x128xbf16, #tpu.memory_space<vmem>>, vector<1x128x128xbf16>
    %147 = vector.shape_cast %146 : vector<1x128x128xbf16> to vector<128x128xbf16>
    %cst_149 = arith.constant dense<0.000000e+00> : vector<256x128xf32>
    %148 = tpu.matmul %145, %147, %cst_149 {dimension_numbers = #tpu.dot_dimension_numbers<[1], [0], [0], [1], [0, 0, 1, 1], [], []>} : vector<256x128xbf16>, vector<128x128xbf16>, vector<256x128xf32> -> vector<256x128xf32>
    %149 = arith.addf %143, %148 : vector<256x128xf32>
    %c0_150 = arith.constant 0 : index
    %c0_151 = arith.constant 0 : index
    %150 = vector.load %arg9[%c0_150, %c0_151] : memref<1x128xf32, #tpu.memory_space<vmem>>, vector<1x128xf32>
    %151 = vector.broadcast %150 : vector<1x128xf32> to vector<256x128xf32>
    %152 = arith.addf %149, %151 : vector<256x128xf32>
    %cst_152 = arith.constant 0.000000e+00 : f32
    %153 = vector.broadcast %cst_152 : f32 to vector<256x128xf32>
    %154 = arith.cmpf ogt, %152, %153 : vector<256x128xf32>
    %cst_153 = arith.constant 1.000000e-01 : f32
    %155 = vector.broadcast %cst_153 : f32 to vector<256x128xf32>
    %156 = arith.mulf %155, %152 : vector<256x128xf32>
    %157 = arith.select %154, %152, %156 : vector<256x128xi1>, vector<256x128xf32>
    %158 = arith.truncf %157 : vector<256x128xf32> to vector<256x128xbf16>
    %c0_154 = arith.constant 0 : index
    %c0_155 = arith.constant 0 : index
    %159 = vector.load %arg10[%c0_154, %c0_155] : memref<128x128xbf16, #tpu.memory_space<vmem>>, vector<128x128xbf16>
    %cst_156 = arith.constant dense<0.000000e+00> : vector<256x128xf32>
    %160 = tpu.matmul %158, %159, %cst_156 {dimension_numbers = #tpu.dot_dimension_numbers<[1], [0], [0], [1], [0, 0, 1, 1], [], []>} : vector<256x128xbf16>, vector<128x128xbf16>, vector<256x128xf32> -> vector<256x128xf32>
    %c0_157 = arith.constant 0 : index
    %c0_158 = arith.constant 0 : index
    %161 = vector.load %arg11[%c0_157, %c0_158] : memref<1x128xf32, #tpu.memory_space<vmem>>, vector<1x128xf32>
    %162 = vector.broadcast %161 : vector<1x128xf32> to vector<256x128xf32>
    %163 = arith.addf %160, %162 : vector<256x128xf32>
    %cst_159 = arith.constant 0.000000e+00 : f32
    %164 = vector.broadcast %cst_159 : f32 to vector<256x128xf32>
    %165 = arith.cmpf ogt, %163, %164 : vector<256x128xf32>
    %cst_160 = arith.constant 1.000000e-01 : f32
    %166 = vector.broadcast %cst_160 : f32 to vector<256x128xf32>
    %167 = arith.mulf %166, %163 : vector<256x128xf32>
    %168 = arith.select %165, %163, %167 : vector<256x128xi1>, vector<256x128xf32>
    %169 = vector.shape_cast %168 : vector<256x128xf32> to vector<1x16x16x128xf32>
    %c0_161 = arith.constant 0 : index
    %c0_162 = arith.constant 0 : index
    %c0_163 = arith.constant 0 : index
    %c0_164 = arith.constant 0 : index
    %170 = vector.load %arg12[%c0_161, %c0_162, %c0_163, %c0_164] : memref<1x16x16x128xf32, #tpu.memory_space<vmem>>, vector<1x16x16x128xf32>
    tpu.vector_store %arg12[%c0_161, %c0_162, %c0_163, %c0_164], %169 {strides = array<i32>} : memref<1x16x16x128xf32, #tpu.memory_space<vmem>>, vector<1x16x16x128xf32>,
    return
  }
  func.func @transform_0(%arg0: i32) -> (i32, i32, i32, i32) {
    %c0_i32 = arith.constant 0 : i32
    %c0_i32_0 = arith.constant 0 : i32
    %c0_i32_1 = arith.constant 0 : i32
    %c0_i32_2 = arith.constant 0 : i32
    return %arg0, %c0_i32, %c0_i32_0, %c0_i32_1 : i32, i32, i32, i32
  }
  func.func @transform_1(%arg0: i32) -> (i32, i32) {
    %c0_i32 = arith.constant 0 : i32
    %c0_i32_0 = arith.constant 0 : i32
    %c0_i32_1 = arith.constant 0 : i32
    return %c0_i32, %c0_i32_0 : i32, i32
  }
  func.func @transform_2(%arg0: i32) -> (i32, i32) {
    %c0_i32 = arith.constant 0 : i32
    %c0_i32_0 = arith.constant 0 : i32
    %c0_i32_1 = arith.constant 0 : i32
    return %c0_i32, %c0_i32_0 : i32, i32
  }
  func.func @transform_3(%arg0: i32) -> (i32, i32, i32) {
    %c0_i32 = arith.constant 0 : i32
    %c0_i32_0 = arith.constant 0 : i32
    %c0_i32_1 = arith.constant 0 : i32
    %c0_i32_2 = arith.constant 0 : i32
    return %c0_i32, %c0_i32_0, %c0_i32_1 : i32, i32, i32
  }
  func.func @transform_4(%arg0: i32) -> (i32, i32) {
    %c0_i32 = arith.constant 0 : i32
    %c0_i32_0 = arith.constant 0 : i32
    %c0_i32_1 = arith.constant 0 : i32
    return %c0_i32, %c0_i32_0 : i32, i32
  }
  func.func @transform_5(%arg0: i32) -> (i32, i32) {
    %c0_i32 = arith.constant 0 : i32
    %c0_i32_0 = arith.constant 0 : i32
    %c0_i32_1 = arith.constant 0 : i32
    return %c0_i32, %c0_i32_0 : i32, i32
  }
  func.func @transform_6(%arg0: i32) -> (i32, i32) {
    %c0_i32 = arith.constant 0 : i32
    %c0_i32_0 = arith.constant 0 : i32
    %c0_i32_1 = arith.constant 0 : i32
    return %c0_i32, %c0_i32_0 : i32, i32
  }
  func.func @transform_7(%arg0: i32) -> (i32, i32, i32) {
    %c0_i32 = arith.constant 0 : i32
    %c0_i32_0 = arith.constant 0 : i32
    %c0_i32_1 = arith.constant 0 : i32
    %c0_i32_2 = arith.constant 0 : i32
    return %c0_i32, %c0_i32_0, %c0_i32_1 : i32, i32, i32
  }
  func.func @transform_8(%arg0: i32) -> (i32, i32) {
    %c0_i32 = arith.constant 0 : i32
    %c0_i32_0 = arith.constant 0 : i32
    %c0_i32_1 = arith.constant 0 : i32
    return %c0_i32, %c0_i32_0 : i32, i32
  }
  func.func @transform_9(%arg0: i32) -> (i32, i32) {
    %c0_i32 = arith.constant 0 : i32
    %c0_i32_0 = arith.constant 0 : i32
    %c0_i32_1 = arith.constant 0 : i32
    return %c0_i32, %c0_i32_0 : i32, i32
  }
  func.func @transform_10(%arg0: i32) -> (i32, i32) {
    %c0_i32 = arith.constant 0 : i32
    %c0_i32_0 = arith.constant 0 : i32
    %c0_i32_1 = arith.constant 0 : i32
    return %c0_i32, %c0_i32_0 : i32, i32
  }
  func.func @transform_11(%arg0: i32) -> (i32, i32, i32, i32) {
    %c0_i32 = arith.constant 0 : i32
    %c0_i32_0 = arith.constant 0 : i32
    %c0_i32_1 = arith.constant 0 : i32
    %c0_i32_2 = arith.constant 0 : i32
    return %arg0, %c0_i32, %c0_i32_0, %c0_i32_1 : i32, i32, i32, i32
  }
}

</mosaic_0001>

<llo_original>
// kernel: convolutional_set_fused.1
$region0: #{convolutional_set_fused.1}
  #allocation0 [shape = 'u32[]', space=smem, size = 0x4, offset = 0x4, fixed_abs, tag = 'smem constant byte address 0x4 - core index']
  #allocation1 [shape = 'u32[144,128]{1,0:T(1,128)}', space=vmem, size = 0x12000, scoped, tag = 'internal scratch']
  #allocation2 [shape = 'bf16[18,18,128]{2,1,0:T(8,128)(2,1)}', space=vmem, size = 0x1b000, scoped, tag = 'scratch operand']
  %s0 = inlined_call_operand.vmem [shape: bf16[2,16,16,128], index: 0, kind: input, shape index: {}]
  %s1 = inlined_call_operand.vmem [shape: bf16[128,128], index: 1, kind: input, shape index: {}]
  %s2 = inlined_call_operand.vmem [shape: f32[1,128], index: 2, kind: input, shape index: {}]
  %s3 = inlined_call_operand.vmem [shape: bf16[9,128,128], index: 3, kind: input, shape index: {}]
  %s4 = inlined_call_operand.vmem [shape: f32[1,128], index: 4, kind: input, shape index: {}]
  %s5 = inlined_call_operand.vmem [shape: bf16[128,128], index: 5, kind: input, shape index: {}]
  %s6 = inlined_call_operand.vmem [shape: f32[1,128], index: 6, kind: input, shape index: {}]
  %s7 = inlined_call_operand.hbm [shape: bf16[9,128,128], index: 7, kind: input, shape index: {}]
  %s8 = inlined_call_operand.vmem [shape: f32[1,128], index: 8, kind: input, shape index: {}]
  %s9 = inlined_call_operand.vmem [shape: bf16[128,128], index: 9, kind: input, shape index: {}]
  %s10 = inlined_call_operand.vmem [shape: f32[1,128], index: 10, kind: input, shape index: {}]
  %s11 = inlined_call_operand.vmem [shape: f32[2,16,16,128], index: 11, kind: output, shape index: {}]
  %s12 = sld [smem:[#allocation0]]
  $region81: #{convolutional_set_fused.1} parent=0
    _
  %s14 = ssub.s32 1, %s12
  %s15 = scalar_select 0, %s14, %s12
  $region1: #{convolutional_set_fused.1} parent=0
    #allocation3 [shape = 'u8[294912]{0}', space=vmem, size = 0x48000, scoped, tag = 'input window, operand 7, single buffered']
    #allocation4 [shape = 's32[2]{0}', space=sflag, size = 0x8, scoped, tag = 'scoped memory for convolutional_set_fused.1']
    %16 = vsyncpa [#allocation4], 0
    loop: start=0, step=1, limit=4
    $region2: #{convolutional_set_fused.1} parent=1 // loop_pre_header
      _
    $region3: #{convolutional_set_fused.1} parent=1 // loop_header
      %s18 = sphi 0, %s22
      %p19 = scmp.ge.s32.totalorder %s18, 4
      %s28 = sphi 0, %s30
      %s31 = sphi 0, %s28
      %s32 = sphi 0, %s31
      %s48 = sphi 0, %s32
      %s52 = sphi 0, %s52
      %s54 = sphi 0, %s52
      %s55 = sphi 0, %s54
      %s69 = sphi 0, %s55
      %s73 = sphi 0, %s73
      %s75 = sphi 0, %s73
      %s76 = sphi 0, %s75
      %s90 = sphi 0, %s76
      %s94 = sphi 0, %s94
      %s96 = sphi 0, %s94
      %s97 = sphi 0, %s96
      %s111 = sphi 0, %s97
      %s115 = sphi 0, %s115
      %s117 = sphi 0, %s115
      %s118 = sphi 0, %s117
      %s132 = sphi 0, %s118
      %s136 = sphi 0, %s136
      %s138 = sphi 0, %s136
      %s139 = sphi 0, %s138
      %s153 = sphi 0, %s139
      %s157 = sphi 0, %s157
      %s159 = sphi 0, %s157
      %s160 = sphi 0, %s159
      %s174 = sphi 0, %s160
      %s178 = sphi 0, %s178
      %s180 = sphi 0, %s178
      %s181 = sphi 0, %s180
      %s195 = sphi 0, %s181
      %s199 = sphi 0, %s199
      %s201 = sphi 0, %s199
      %s202 = sphi 0, %s201
      %s216 = sphi 0, %s202
      %s220 = sphi 0, %s220
      %s222 = sphi 0, %s220
      %s223 = sphi 0, %s222
      %s237 = sphi 0, %s223
      %s241 = sphi 0, %s241
      %s243 = sphi 0, %s241
      %s244 = sphi 0, %s243
      %s258 = sphi 0, %s244
      %s264 = sphi 0, %s266
      %s267 = sphi 0, %s264
      %s268 = sphi 0, %s267
      %s284 = sphi 0, %s268
    $region4: #{convolutional_set_fused.1} parent=1 // loop_header_branch
      %21 = sbr.rel (%p19) target = $region8
    $region5: #{convolutional_set_fused.1} parent=1 // loop_body
      %s23 = ssub.s32 %s18, 1
      %s24 = ssub.s32 %s18, 2
      %s25 = sadd.s32 %s18, 1
      %s26 = ssub.s32 %s18, %s25
      %p27 = scmp.eq.s32.totalorder %s26, 0
      %s29 = sadd.s32 %s28, 1
      %s30 = scalar_select %p27, %s28, %s29
      %p33 = pneg %p27
      %p34 = scmp.eq.s32.totalorder %s18, 1
      %p35 = por %p33, %p34
      %p36 = scmp.ne.s32.totalorder %s28, %s31
      %p37 = scmp.eq.s32.totalorder %s18, 0
      %p38 = por %p36, %p37
      %p39 = scmp.ne.s32.totalorder %s28, %s31
      %p40 = scmp.eq.s32.totalorder %s23, 1
      %p41 = por %p39, %p40
      %p42 = scmp.ne.s32.totalorder %s31, %s32
      %p43 = scmp.eq.s32.totalorder %s23, 0
      %p44 = por %p42, %p43
      %p45 = scmp.ne.s32.totalorder %s31, %s32
      %p46 = scmp.eq.s32.totalorder %s24, 1
      %p47 = por %p45, %p46
      %p49 = scmp.ne.s32.totalorder %s32, %s48
      %p50 = scmp.eq.s32.totalorder %s24, 0
      %p51 = por %p49, %p50
      %s53 = sadd.s32 %s52, 1
      %p56 = scmp.eq.s32.totalorder %s18, 1
      %p57 = scmp.ne.s32.totalorder %s52, %s54
      %p58 = scmp.eq.s32.totalorder %s18, 0
      %p59 = por %p57, %p58
      %p60 = scmp.ne.s32.totalorder %s52, %s54
      %p61 = scmp.eq.s32.totalorder %s23, 1
      %p62 = por %p60, %p61
      %p63 = scmp.ne.s32.totalorder %s54, %s55
      %p64 = scmp.eq.s32.totalorder %s23, 0
      %p65 = por %p63, %p64
      %p66 = scmp.ne.s32.totalorder %s54, %s55
      %p67 = scmp.eq.s32.totalorder %s24, 1
      %p68 = por %p66, %p67
      %p70 = scmp.ne.s32.totalorder %s55, %s69
      %p71 = scmp.eq.s32.totalorder %s24, 0
      %p72 = por %p70, %p71
      %s74 = sadd.s32 %s73, 1
      %p77 = scmp.eq.s32.totalorder %s18, 1
      %p78 = scmp.ne.s32.totalorder %s73, %s75
      %p79 = scmp.eq.s32.totalorder %s18, 0
      %p80 = por %p78, %p79
      %p81 = scmp.ne.s32.totalorder %s73, %s75
      %p82 = scmp.eq.s32.totalorder %s23, 1
      %p83 = por %p81, %p82
      %p84 = scmp.ne.s32.totalorder %s75, %s76
      %p85 = scmp.eq.s32.totalorder %s23, 0
      %p86 = por %p84, %p85
      %p87 = scmp.ne.s32.totalorder %s75, %s76
      %p88 = scmp.eq.s32.totalorder %s24, 1
      %p89 = por %p87, %p88
      %p91 = scmp.ne.s32.totalorder %s76, %s90
      %p92 = scmp.eq.s32.totalorder %s24, 0
      %p93 = por %p91, %p92
      %s95 = sadd.s32 %s94, 1
      %p98 = scmp.eq.s32.totalorder %s18, 1
      %p99 = scmp.ne.s32.totalorder %s94, %s96
      %p100 = scmp.eq.s32.totalorder %s18, 0
      %p101 = por %p99, %p100
      %p102 = scmp.ne.s32.totalorder %s94, %s96
      %p103 = scmp.eq.s32.totalorder %s23, 1
      %p104 = por %p102, %p103
      %p105 = scmp.ne.s32.totalorder %s96, %s97
      %p106 = scmp.eq.s32.totalorder %s23, 0
      %p107 = por %p105, %p106
      %p108 = scmp.ne.s32.totalorder %s96, %s97
      %p109 = scmp.eq.s32.totalorder %s24, 1
      %p110 = por %p108, %p109
      %p112 = scmp.ne.s32.totalorder %s97, %s111
      %p113 = scmp.eq.s32.totalorder %s24, 0
      %p114 = por %p112, %p113
      %s116 = sadd.s32 %s115, 1
      %p119 = scmp.eq.s32.totalorder %s18, 1
      %p120 = scmp.ne.s32.totalorder %s115, %s117
      %p121 = scmp.eq.s32.totalorder %s18, 0
      %p122 = por %p120, %p121
      %p123 = scmp.ne.s32.totalorder %s115, %s117
      %p124 = scmp.eq.s32.totalorder %s23, 1
      %p125 = por %p123, %p124
      %p126 = scmp.ne.s32.totalorder %s117, %s118
      %p127 = scmp.eq.s32.totalorder %s23, 0
      %p128 = por %p126, %p127
      %p129 = scmp.ne.s32.totalorder %s117, %s118
      %p130 = scmp.eq.s32.totalorder %s24, 1
      %p131 = por %p129, %p130
      %p133 = scmp.ne.s32.totalorder %s118, %s132
      %p134 = scmp.eq.s32.totalorder %s24, 0
      %p135 = por %p133, %p134
      %s137 = sadd.s32 %s136, 1
      %p140 = scmp.eq.s32.totalorder %s18, 1
      %p141 = scmp.ne.s32.totalorder %s136, %s138
      %p142 = scmp.eq.s32.totalorder %s18, 0
      %p143 = por %p141, %p142
      %p144 = scmp.ne.s32.totalorder %s136, %s138
      %p145 = scmp.eq.s32.totalorder %s23, 1
      %p146 = por %p144, %p145
      %p147 = scmp.ne.s32.totalorder %s138, %s139
      %p148 = scmp.eq.s32.totalorder %s23, 0
      %p149 = por %p147, %p148
      %p150 = scmp.ne.s32.totalorder %s138, %s139
      %p151 = scmp.eq.s32.totalorder %s24, 1
      %p152 = por %p150, %p151
      %p154 = scmp.ne.s32.totalorder %s139, %s153
      %p155 = scmp.eq.s32.totalorder %s24, 0
      %p156 = por %p154, %p155
      %s158 = sadd.s32 %s157, 1
      %p161 = scmp.eq.s32.totalorder %s18, 1
      %p162 = scmp.ne.s32.totalorder %s157, %s159
      %p163 = scmp.eq.s32.totalorder %s18, 0
      %p164 = por %p162, %p163
      %p165 = scmp.ne.s32.totalorder %s157, %s159
      %p166 = scmp.eq.s32.totalorder %s23, 1
      %p167 = por %p165, %p166
      %p168 = scmp.ne.s32.totalorder %s159, %s160
      %p169 = scmp.eq.s32.totalorder %s23, 0
      %p170 = por %p168, %p169
      %p171 = scmp.ne.s32.totalorder %s159, %s160
      %p172 = scmp.eq.s32.totalorder %s24, 1
      %p173 = por %p171, %p172
      %p175 = scmp.ne.s32.totalorder %s160, %s174
      %p176 = scmp.eq.s32.totalorder %s24, 0
      %p177 = por %p175, %p176
      %s179 = sadd.s32 %s178, 1
      %p182 = scmp.eq.s32.totalorder %s18, 1
      %p183 = scmp.ne.s32.totalorder %s178, %s180
      %p184 = scmp.eq.s32.totalorder %s18, 0
      %p185 = por %p183, %p184
      %p186 = scmp.ne.s32.totalorder %s178, %s180
      %p187 = scmp.eq.s32.totalorder %s23, 1
      %p188 = por %p186, %p187
      %p189 = scmp.ne.s32.totalorder %s180, %s181
      %p190 = scmp.eq.s32.totalorder %s23, 0
      %p191 = por %p189, %p190
      %p192 = scmp.ne.s32.totalorder %s180, %s181
      %p193 = scmp.eq.s32.totalorder %s24, 1
      %p194 = por %p192, %p193
      %p196 = scmp.ne.s32.totalorder %s181, %s195
      %p197 = scmp.eq.s32.totalorder %s24, 0
      %p198 = por %p196, %p197
      %s200 = sadd.s32 %s199, 1
      %p203 = scmp.eq.s32.totalorder %s18, 1
      %p204 = scmp.ne.s32.totalorder %s199, %s201
      %p205 = scmp.eq.s32.totalorder %s18, 0
      %p206 = por %p204, %p205
      %p207 = scmp.ne.s32.totalorder %s199, %s201
      %p208 = scmp.eq.s32.totalorder %s23, 1
      %p209 = por %p207, %p208
      %p210 = scmp.ne.s32.totalorder %s201, %s202
      %p211 = scmp.eq.s32.totalorder %s23, 0
      %p212 = por %p210, %p211
      %p213 = scmp.ne.s32.totalorder %s201, %s202
      %p214 = scmp.eq.s32.totalorder %s24, 1
      %p215 = por %p213, %p214
      %p217 = scmp.ne.s32.totalorder %s202, %s216
      %p218 = scmp.eq.s32.totalorder %s24, 0
      %p219 = por %p217, %p218
      %s221 = sadd.s32 %s220, 1
      %p224 = scmp.eq.s32.totalorder %s18, 1
      %p225 = scmp.ne.s32.totalorder %s220, %s222
      %p226 = scmp.eq.s32.totalorder %s18, 0
      %p227 = por %p225, %p226
      %p228 = scmp.ne.s32.totalorder %s220, %s222
      %p229 = scmp.eq.s32.totalorder %s23, 1
      %p230 = por %p228, %p229
      %p231 = scmp.ne.s32.totalorder %s222, %s223
      %p232 = scmp.eq.s32.totalorder %s23, 0
      %p233 = por %p231, %p232
      %p234 = scmp.ne.s32.totalorder %s222, %s223
      %p235 = scmp.eq.s32.totalorder %s24, 1
      %p236 = por %p234, %p235
      %p238 = scmp.ne.s32.totalorder %s223, %s237
      %p239 = scmp.eq.s32.totalorder %s24, 0
      %p240 = por %p238, %p239
      %s242 = sadd.s32 %s241, 1
      %p245 = scmp.eq.s32.totalorder %s18, 1
      %p246 = scmp.ne.s32.totalorder %s241, %s243
      %p247 = scmp.eq.s32.totalorder %s18, 0
      %p248 = por %p246, %p247
      %p249 = scmp.ne.s32.totalorder %s241, %s243
      %p250 = scmp.eq.s32.totalorder %s23, 1
      %p251 = por %p249, %p250
      %p252 = scmp.ne.s32.totalorder %s243, %s244
      %p253 = scmp.eq.s32.totalorder %s23, 0
      %p254 = por %p252, %p253
      %p255 = scmp.ne.s32.totalorder %s243, %s244
      %p256 = scmp.eq.s32.totalorder %s24, 1
      %p257 = por %p255, %p256
      %p259 = scmp.ne.s32.totalorder %s244, %s258
      %p260 = scmp.eq.s32.totalorder %s24, 0
      %p261 = por %p259, %p260
      %s262 = ssub.s32 %s18, %s25
      %p263 = scmp.eq.s32.totalorder %s262, 0
      %s265 = sadd.s32 %s264, 1
      %s266 = scalar_select %p263, %s264, %s265
      %p269 = pneg %p263
      %p270 = scmp.eq.s32.totalorder %s18, 1
      %p271 = por %p269, %p270
      %p272 = scmp.ne.s32.totalorder %s264, %s267
      %p273 = scmp.eq.s32.totalorder %s18, 0
      %p274 = por %p272, %p273
      %p275 = scmp.ne.s32.totalorder %s264, %s267
      %p276 = scmp.eq.s32.totalorder %s23, 1
      %p277 = por %p275, %p276
      %p278 = scmp.ne.s32.totalorder %s267, %s268
      %p279 = scmp.eq.s32.totalorder %s23, 0
      %p280 = por %p278, %p279
      %p281 = scmp.ne.s32.totalorder %s267, %s268
      %p282 = scmp.eq.s32.totalorder %s24, 1
      %p283 = por %p281, %p282
      %p285 = scmp.ne.s32.totalorder %s268, %s284
      %p286 = scmp.eq.s32.totalorder %s24, 0
      %p287 = por %p285, %p286
      %p288 = scmp.le.s32.totalorder 1, %s18
      %p289 = scmp.lt.s32.totalorder %s18, 3
      %p290 = pnand %p288, %p289
      %p291 = pneg %p290
      // Predicated region
      $region9: #{convolutional_set_fused.1} parent=5 // pred_check
        _
      $region10: #{convolutional_set_fused.1} parent=5 // pred_check_branch
        %293 = sbr.rel (%p290) target = $region12
      $region11: #{convolutional_set_fused.1} parent=5 // pred_region
        %s294 = ssub.s32 %s18, 1
        // Predicated region
        $region13: #{convolutional_set_fused.1} parent=11 // pred_check
          %p295 = pneg %p65
        $region14: #{convolutional_set_fused.1} parent=11 // pred_check_branch
          %297 = sbr.rel (%p295) target = $region16
        $region15: #{convolutional_set_fused.1} parent=11 // pred_region
          _
        $region16: #{convolutional_set_fused.1} parent=11 // pred_fallthru
          _
        // Predicated region
        $region17: #{convolutional_set_fused.1} parent=11 // pred_check
          %p298 = pneg %p86
        $region18: #{convolutional_set_fused.1} parent=11 // pred_check_branch
          %300 = sbr.rel (%p298) target = $region20
        $region19: #{convolutional_set_fused.1} parent=11 // pred_region
          _
        $region20: #{convolutional_set_fused.1} parent=11 // pred_fallthru
          _
        // Predicated region
        $region21: #{convolutional_set_fused.1} parent=11 // pred_check
          %p301 = pneg %p107
        $region22: #{convolutional_set_fused.1} parent=11 // pred_check_branch
          %303 = sbr.rel (%p301) target = $region24
        $region23: #{convolutional_set_fused.1} parent=11 // pred_region
          _
        $region24: #{convolutional_set_fused.1} parent=11 // pred_fallthru
          _
        // Predicated region
        $region25: #{convolutional_set_fused.1} parent=11 // pred_check
          %p304 = pneg %p128
        $region26: #{convolutional_set_fused.1} parent=11 // pred_check_branch
          %306 = sbr.rel (%p304) target = $region28
        $region27: #{convolutional_set_fused.1} parent=11 // pred_region
          _
        $region28: #{convolutional_set_fused.1} parent=11 // pred_fallthru
          _
        // Predicated region
        $region29: #{convolutional_set_fused.1} parent=11 // pred_check
          %p307 = pneg %p149
        $region30: #{convolutional_set_fused.1} parent=11 // pred_check_branch
          %309 = sbr.rel (%p307) target = $region32
        $region31: #{convolutional_set_fused.1} parent=11 // pred_region
          _
        $region32: #{convolutional_set_fused.1} parent=11 // pred_fallthru
          _
        // Predicated region
        $region33: #{convolutional_set_fused.1} parent=11 // pred_check
          %p310 = pneg %p170
        $region34: #{convolutional_set_fused.1} parent=11 // pred_check_branch
          %312 = sbr.rel (%p310) target = $region36
        $region35: #{convolutional_set_fused.1} parent=11 // pred_region
          _
        $region36: #{convolutional_set_fused.1} parent=11 // pred_fallthru
          _
        // Predicated region
        $region37: #{convolutional_set_fused.1} parent=11 // pred_check
          %p313 = pneg %p191
        $region38: #{convolutional_set_fused.1} parent=11 // pred_check_branch
          %315 = sbr.rel (%p313) target = $region40
        $region39: #{convolutional_set_fused.1} parent=11 // pred_region
          %s317 = ssub.s32 9216, 9216
          %318 = vsyncadd [#allocation4], %s317
          %s319 = sshll.u32 [#allocation3], 4
          %s320 = int_to_ptr.vmem [resolvable:$true] %s319
          %325 = dma.hbm_to_vmem [thread:$0]  %s7, 9216, %s320, [#allocation4], 64, 64, 4
        $region40: #{convolutional_set_fused.1} parent=11 // pred_fallthru
          _
        // Predicated region
        $region41: #{convolutional_set_fused.1} parent=11 // pred_check
          %p326 = pneg %p212
        $region42: #{convolutional_set_fused.1} parent=11 // pred_check_branch
          %328 = sbr.rel (%p326) target = $region44
        $region43: #{convolutional_set_fused.1} parent=11 // pred_region
          _
        $region44: #{convolutional_set_fused.1} parent=11 // pred_fallthru
          _
        // Predicated region
        $region45: #{convolutional_set_fused.1} parent=11 // pred_check
          %p329 = pneg %p233
        $region46: #{convolutional_set_fused.1} parent=11 // pred_check_branch
          %331 = sbr.rel (%p329) target = $region48
        $region47: #{convolutional_set_fused.1} parent=11 // pred_region
          _
        $region48: #{convolutional_set_fused.1} parent=11 // pred_fallthru
          _
        // Predicated region
        $region49: #{convolutional_set_fused.1} parent=11 // pred_check
          %p332 = pneg %p254
        $region50: #{convolutional_set_fused.1} parent=11 // pred_check_branch
          %334 = sbr.rel (%p332) target = $region52
        $region51: #{convolutional_set_fused.1} parent=11 // pred_region
          _
        $region52: #{convolutional_set_fused.1} parent=11 // pred_fallthru
          _
      $region12: #{convolutional_set_fused.1} parent=5 // pred_fallthru
        _
      %p335 = scmp.lt.s32.totalorder %s18, 2
      // Predicated region
      $region53: #{convolutional_set_fused.1} parent=5 // pred_check
        %p336 = pneg %p335
      $region54: #{convolutional_set_fused.1} parent=5 // pred_check_branch
        %338 = sbr.rel (%p336) target = $region56
      $region55: #{convolutional_set_fused.1} parent=5 // pred_region
        // Predicated region
        $region57: #{convolutional_set_fused.1} parent=55 // pred_check
          %p339 = pneg %p38
        $region58: #{convolutional_set_fused.1} parent=55 // pred_check_branch
          %341 = sbr.rel (%p339) target = $region60
        $region59: #{convolutional_set_fused.1} parent=55 // pred_region
          %p342 = scmp.lt.s32.totalorder %s18, 1
          %s343 = scalar_select %p342, %s18, 1
          %s344 = smul.addr %s343, 32
          %s345 = smul.addr %s344, 4
          %s346 = scalar_lea.vmem %s0, %s345
        $region60: #{convolutional_set_fused.1} parent=55 // pred_fallthru
          _
      $region56: #{convolutional_set_fused.1} parent=5 // pred_fallthru
        _
      %p347 = scmp.le.s32.totalorder 1, %s18
      %p348 = scmp.lt.s32.totalorder %s18, 3
      %p349 = pnand %p347, %p348
      %p350 = pneg %p349
      // Predicated region
      $region61: #{convolutional_set_fused.1} parent=5 // pred_check
        _
      $region62: #{convolutional_set_fused.1} parent=5 // pred_check_branch
        %352 = sbr.rel (%p349) target = $region64
      $region63: #{convolutional_set_fused.1} parent=5 // pred_region
        %s353 = ssub.s32 %s18, 1
        // Predicated region
        $region65: #{convolutional_set_fused.1} parent=63 // pred_check
          %p354 = pneg %p191
        $region66: #{convolutional_set_fused.1} parent=63 // pred_check_branch
          %356 = sbr.rel (%p354) target = $region68
        $region67: #{convolutional_set_fused.1} parent=63 // pred_region
          %357 = dma.done [#allocation4], 9216
        $region68: #{convolutional_set_fused.1} parent=63 // pred_fallthru
          _
        %p358 = scmp.lt.s32.totalorder %s23, 1
        %s359 = scalar_select %p358, %s23, 1
        %s360 = smul.addr %s359, 32
        %s361 = smul.addr %s360, 4
        %s362 = scalar_lea.vmem %s0, %s361
        %p363 = pneg %p44
        %p364 = pneg %p41
        %p365 = pneg %p65
        %p366 = pneg %p62
        %p367 = pneg %p86
        %p368 = pneg %p83
        %p369 = pneg %p107
        %p370 = pneg %p104
        %p371 = pneg %p128
        %p372 = pneg %p125
        %p373 = pneg %p149
        %p374 = pneg %p146
        %p375 = pneg %p170
        %p376 = pneg %p167
        %p377 = pneg %p191
        %p378 = pneg %p188
        %p379 = pneg %p212
        %p380 = pneg %p209
        %p381 = pneg %p233
        %p382 = pneg %p230
        %p383 = pneg %p254
        %p384 = pneg %p251
        %p385 = pneg %p280
        %p386 = pneg %p277
        %p387 = scmp.lt.s32.totalorder %s23, 1
        %s388 = scalar_select %p387, %s23, 1
        %s389 = smul.addr %s388, 32
        %s390 = smul.addr %s389, 8
        %s391 = scalar_lea.vmem %s11, %s390
        %p392 = scmp.lt.s32.totalorder %s23, 1
        %s393 = scalar_select %p392, %s23, 1
        %s394 = smul.addr %s393, 32
        %s395 = smul.addr %s394, 4
        %s396 = scalar_lea.vmem %s0, %s395
        %p397 = scmp.lt.s32.totalorder %s23, 1
        %s398 = scalar_select %p397, %s23, 1
        %s399 = smul.addr %s398, 32
        %s400 = smul.addr %s399, 8
        %s401 = scalar_lea.vmem %s11, %s400
        %403 = vst [vmem:[#allocation2] sm:$0xf] 0
        %404 = vst [vmem:[#allocation2 + $0x4] sm:$0xf] 0
        %405 = vst [vmem:[#allocation2 + $0x8] sm:$0x1] 0
        %406 = vst [vmem:[#allocation2 + $0xc] sm:$0xf] 0
        %407 = vst [vmem:[#allocation2 + $0x10] sm:$0xf] 0
        %408 = vst [vmem:[#allocation2 + $0x14] sm:$0x1] 0
        %409 = vst [vmem:[#allocation2 + $0x18] sm:$0xf] 0
        %410 = vst [vmem:[#allocation2 + $0x1c] sm:$0xf] 0
        %411 = vst [vmem:[#allocation2 + $0x20] sm:$0x1] 0
        %412 = vst [vmem:[#allocation2 + $0x24] sm:$0xf] 0
        %413 = vst [vmem:[#allocation2 + $0x28] sm:$0xf] 0
        %414 = vst [vmem:[#allocation2 + $0x2c] sm:$0x1] 0
        %415 = vst [vmem:[#allocation2 + $0x30] sm:$0xf] 0
        %416 = vst [vmem:[#allocation2 + $0x34] sm:$0xf] 0
        %417 = vst [vmem:[#allocation2 + $0x38] sm:$0x1] 0
        %418 = vst [vmem:[#allocation2 + $0x3c] sm:$0xf] 0
        %419 = vst [vmem:[#allocation2 + $0x40] sm:$0xf] 0
        %420 = vst [vmem:[#allocation2 + $0x44] sm:$0x1] 0
        %421 = vst [vmem:[#allocation2 + $0x48] sm:$0xf] 0
        %422 = vst [vmem:[#allocation2 + $0x4c] sm:$0xf] 0
        %423 = vst [vmem:[#allocation2 + $0x50] sm:$0x1] 0
        %424 = vst [vmem:[#allocation2 + $0x54] sm:$0xf] 0
        %425 = vst [vmem:[#allocation2 + $0x58] sm:$0xf] 0
        %426 = vst [vmem:[#allocation2 + $0x5c] sm:$0x1] 0
        %427 = vst [vmem:[#allocation2 + $0x60] sm:$0xf] 0
        %428 = vst [vmem:[#allocation2 + $0x64] sm:$0xf] 0
        %429 = vst [vmem:[#allocation2 + $0x68] sm:$0x1] 0
        %430 = vst [vmem:[#allocation2 + $0x6c] sm:$0xf] 0
        %431 = vst [vmem:[#allocation2 + $0x70] sm:$0xf] 0
        %432 = vst [vmem:[#allocation2 + $0x74] sm:$0x1] 0
        %433 = vst [vmem:[#allocation2 + $0x78] sm:$0xf] 0
        %434 = vst [vmem:[#allocation2 + $0x7c] sm:$0xf] 0
        %435 = vst [vmem:[#allocation2 + $0x80] sm:$0x1] 0
        %436 = vst [vmem:[#allocation2 + $0x84] sm:$0xf] 0
        %437 = vst [vmem:[#allocation2 + $0x88] sm:$0xf] 0
        %438 = vst [vmem:[#allocation2 + $0x8c] sm:$0x1] 0
        %439 = vst [vmem:[#allocation2 + $0x90] sm:$0xf] 0
        %440 = vst [vmem:[#allocation2 + $0x94] sm:$0xf] 0
        %441 = vst [vmem:[#allocation2 + $0x98] sm:$0x1] 0
        %442 = vst [vmem:[#allocation2 + $0x9c] sm:$0xf] 0
        %443 = vst [vmem:[#allocation2 + $0xa0] sm:$0xf] 0
        %444 = vst [vmem:[#allocation2 + $0xa4] sm:$0x1] 0
        %445 = vst [vmem:[#allocation2 + $0xa8] sm:$0xf] 0
        %446 = vst [vmem:[#allocation2 + $0xac] sm:$0xf] 0
        %447 = vst [vmem:[#allocation2 + $0xb0] sm:$0x1] 0
        %448 = vst [vmem:[#allocation2 + $0xb4] sm:$0xf] 0
        %449 = vst [vmem:[#allocation2 + $0xb8] sm:$0xf] 0
        %450 = vst [vmem:[#allocation2 + $0xbc] sm:$0x1] 0
        %451 = vst [vmem:[#allocation2 + $0xc0] sm:$0xf] 0
        %452 = vst [vmem:[#allocation2 + $0xc4] sm:$0xf] 0
        %453 = vst [vmem:[#allocation2 + $0xc8] sm:$0x1] 0
        %454 = vst [vmem:[#allocation2 + $0xcc] sm:$0xf] 0
        %455 = vst [vmem:[#allocation2 + $0xd0] sm:$0xf] 0
        %456 = vst [vmem:[#allocation2 + $0xd4] sm:$0x1] 0
        %v457 = vld [vmem:[%s396] sm:$0xf]
        %v458 = vld [vmem:[%s396 + $0x4] sm:$0xf]
        %v459 = vld [vmem:[%s396 + $0x8] sm:$0xf]
        %v460 = vld [vmem:[%s396 + $0xc] sm:$0xf]
        %v461 = vld [vmem:[%s396 + $0x10] sm:$0xf]
        %v462 = vld [vmem:[%s396 + $0x14] sm:$0xf]
        %v463 = vld [vmem:[%s396 + $0x18] sm:$0xf]
        %v464 = vld [vmem:[%s396 + $0x1c] sm:$0xf]
        %v465 = vld [vmem:[%s396 + $0x20] sm:$0xf]
        %v466 = vld [vmem:[%s396 + $0x24] sm:$0xf]
        %v467 = vld [vmem:[%s396 + $0x28] sm:$0xf]
        %v468 = vld [vmem:[%s396 + $0x2c] sm:$0xf]
        %v469 = vld [vmem:[%s396 + $0x30] sm:$0xf]
        %v470 = vld [vmem:[%s396 + $0x34] sm:$0xf]
        %v471 = vld [vmem:[%s396 + $0x38] sm:$0xf]
        %v472 = vld [vmem:[%s396 + $0x3c] sm:$0xf]
        %v473 = vld [vmem:[%s396 + $0x40] sm:$0xf]
        %v474 = vld [vmem:[%s396 + $0x44] sm:$0xf]
        %v475 = vld [vmem:[%s396 + $0x48] sm:$0xf]
        %v476 = vld [vmem:[%s396 + $0x4c] sm:$0xf]
        %v477 = vld [vmem:[%s396 + $0x50] sm:$0xf]
        %v478 = vld [vmem:[%s396 + $0x54] sm:$0xf]
        %v479 = vld [vmem:[%s396 + $0x58] sm:$0xf]
        %v480 = vld [vmem:[%s396 + $0x5c] sm:$0xf]
        %v481 = vld [vmem:[%s396 + $0x60] sm:$0xf]
        %v482 = vld [vmem:[%s396 + $0x64] sm:$0xf]
        %v483 = vld [vmem:[%s396 + $0x68] sm:$0xf]
        %v484 = vld [vmem:[%s396 + $0x6c] sm:$0xf]
        %v485 = vld [vmem:[%s396 + $0x70] sm:$0xf]
        %v486 = vld [vmem:[%s396 + $0x74] sm:$0xf]
        %v487 = vld [vmem:[%s396 + $0x78] sm:$0xf]
        %v488 = vld [vmem:[%s396 + $0x7c] sm:$0xf]
        %v489 = vld [vmem:[%s1] sm:$0xf]
        %v490 = vld [vmem:[%s1 + $0x4] sm:$0xf]
        %v491 = vld [vmem:[%s1 + $0x8] sm:$0xf]
        %v492 = vld [vmem:[%s1 + $0xc] sm:$0xf]
        %v493 = vld [vmem:[%s1 + $0x10] sm:$0xf]
        %v494 = vld [vmem:[%s1 + $0x14] sm:$0xf]
        %v495 = vld [vmem:[%s1 + $0x18] sm:$0xf]
        %v496 = vld [vmem:[%s1 + $0x1c] sm:$0xf]
        %v497 = vld [vmem:[%s1 + $0x20] sm:$0xf]
        %v498 = vld [vmem:[%s1 + $0x24] sm:$0xf]
        %v499 = vld [vmem:[%s1 + $0x28] sm:$0xf]
        %v500 = vld [vmem:[%s1 + $0x2c] sm:$0xf]
        %v501 = vld [vmem:[%s1 + $0x30] sm:$0xf]
        %v502 = vld [vmem:[%s1 + $0x34] sm:$0xf]
        %v503 = vld [vmem:[%s1 + $0x38] sm:$0xf]
        %v504 = vld [vmem:[%s1 + $0x3c] sm:$0xf]
        %v505 = vld [vmem:[%s2] sm:$0x1]
        %v507 = vlaneseq
        %v508 = vshrl.u32 %v507, 7
        %v509 = vsub.s32 0, %v508
        %v510 = vrot.slane %v505, %v509
        %v544 = vunpack.c.l.b16 %v457
        %v545 = vunpack.c.l.b16 %v458
        %v546 = vunpack.c.l.b16 %v459
        %v547 = vunpack.c.l.b16 %v460
        %v548 = vunpack.c.l.b16 %v461
        %v549 = vunpack.c.l.b16 %v462
        %v550 = vunpack.c.l.b16 %v463
        %v551 = vunpack.c.l.b16 %v464
        %v552 = vunpack.c.l.b16 %v465
        %v553 = vunpack.c.l.b16 %v466
        %v554 = vunpack.c.l.b16 %v467
        %v555 = vunpack.c.l.b16 %v468
        %v556 = vunpack.c.l.b16 %v469
        %v557 = vunpack.c.l.b16 %v470
        %v558 = vunpack.c.l.b16 %v471
        %v559 = vunpack.c.l.b16 %v472
        %v560 = vunpack.c.l.b16 %v473
        %v561 = vunpack.c.l.b16 %v474
        %v562 = vunpack.c.l.b16 %v475
        %v563 = vunpack.c.l.b16 %v476
        %v564 = vunpack.c.l.b16 %v477
        %v565 = vunpack.c.l.b16 %v478
        %v566 = vunpack.c.l.b16 %v479
        %v567 = vunpack.c.l.b16 %v480
        %v568 = vunpack.c.l.b16 %v481
        %v569 = vunpack.c.l.b16 %v482
        %v570 = vunpack.c.l.b16 %v483
        %v571 = vunpack.c.l.b16 %v484
        %v572 = vunpack.c.l.b16 %v485
        %v573 = vunpack.c.l.b16 %v486
        %v574 = vunpack.c.l.b16 %v487
        %v575 = vunpack.c.l.b16 %v488
        %v576 = vpack.c.b16 %v545, %v544
        %v577 = vpack.c.b16 %v547, %v546
        %v578 = vpack.c.b16 %v549, %v548
        %v579 = vpack.c.b16 %v551, %v550
        %v580 = vpack.c.b16 %v553, %v552
        %v581 = vpack.c.b16 %v555, %v554
        %v582 = vpack.c.b16 %v557, %v556
        %v583 = vpack.c.b16 %v559, %v558
        %v584 = vpack.c.b16 %v561, %v560
        %v585 = vpack.c.b16 %v563, %v562
        %v586 = vpack.c.b16 %v565, %v564
        %v587 = vpack.c.b16 %v567, %v566
        %v588 = vpack.c.b16 %v569, %v568
        %v589 = vpack.c.b16 %v571, %v570
        %v590 = vpack.c.b16 %v573, %v572
        %v591 = vpack.c.b16 %v575, %v574
        %v624 = vunpack.c.l.b16 %v489
        %v625 = vunpack.c.l.b16 %v490
        %v626 = vunpack.c.l.b16 %v491
        %v627 = vunpack.c.l.b16 %v492
        %v628 = vunpack.c.l.b16 %v493
        %v629 = vunpack.c.l.b16 %v494
        %v630 = vunpack.c.l.b16 %v495
        %v631 = vunpack.c.l.b16 %v496
        %v632 = vunpack.c.l.b16 %v497
        %v633 = vunpack.c.l.b16 %v498
        %v634 = vunpack.c.l.b16 %v499
        %v635 = vunpack.c.l.b16 %v500
        %v636 = vunpack.c.l.b16 %v501
        %v637 = vunpack.c.l.b16 %v502
        %v638 = vunpack.c.l.b16 %v503
        %v639 = vunpack.c.l.b16 %v504
        %v640 = vpack.c.b16 %v625, %v624
        %v641 = vpack.c.b16 %v627, %v626
        %v642 = vpack.c.b16 %v629, %v628
        %v643 = vpack.c.b16 %v631, %v630
        %v644 = vpack.c.b16 %v633, %v632
        %v645 = vpack.c.b16 %v635, %v634
        %v646 = vpack.c.b16 %v637, %v636
        %v647 = vpack.c.b16 %v639, %v638
        %656 = vmatprep.subr.bf16.mxu0 0
        %657 = vmatpush1.bf16.msra.mxu0 %v647
        %658 = vmatprep.subr.bf16.mxu0 0
        %659 = vmatpush1.bf16.msra.mxu0 %v646
        %660 = vmatprep.subr.bf16.mxu0 0
        %661 = vmatpush1.bf16.msra.mxu0 %v645
        %662 = vmatprep.subr.bf16.mxu0 0
        %663 = vmatpush1.bf16.msra.mxu0 %v644
        %664 = vmatprep.subr.bf16.mxu0 0
        %665 = vmatpush1.bf16.msra.mxu0 %v643
        %666 = vmatprep.subr.bf16.mxu0 0
        %667 = vmatpush1.bf16.msra.mxu0 %v642
        %668 = vmatprep.subr.bf16.mxu0 0
        %669 = vmatpush1.bf16.msra.mxu0 %v641
        %670 = vmatprep.subr.bf16.mxu0 0
        %671 = vmatpush1.bf16.msra.mxu0 %v640
        %672 = vmatprep.subr.bf16.mxu0 0
        %673 = vmatpush2.bf16.msra.mxu0 0
        %674 = vmatprep.subr.bf16.mxu0 0
        %675 = vmatpush2.bf16.msra.mxu0 0
        %676 = vmatprep.subr.bf16.mxu0 0
        %677 = vmatpush2.bf16.msra.mxu0 0
        %678 = vmatprep.subr.bf16.mxu0 0
        %679 = vmatpush2.bf16.msra.mxu0 0
        %680 = vmatprep.subr.bf16.mxu0 0
        %681 = vmatpush2.bf16.msra.mxu0 0
        %682 = vmatprep.subr.bf16.mxu0 0
        %683 = vmatpush2.bf16.msra.mxu0 0
        %684 = vmatprep.subr.bf16.mxu0 0
        %685 = vmatpush2.bf16.msra.mxu0 0
        %686 = vmatprep.subr.bf16.mxu0 0
        %687 = vmatpush2.bf16.msra.mxu0 0
        %688 = vmatprep.mubr.bf16.mxu0 0
        %689 = vmatmul.mubr.bf16.gmra.mxu0 %v576
        %v690 = vpop.f32.mrf.mxu0
        %v691 = vadd.f32 %v510, %v690
        %v692 = vpop.f32.mrf.mxu0
        %v693 = vpop.f32.mrf.mxu0
        %v694 = vadd.f32 %v510, %v693
        %v695 = vpop.f32.mrf.mxu0
        %696 = vmatprep.mubr.bf16.mxu0 0
        %697 = vmatmul.mubr.bf16.gmra.mxu0 %v577
        %v698 = vpop.f32.mrf.mxu0
        %v699 = vadd.f32 %v510, %v698
        %v700 = vpop.f32.mrf.mxu0
        %v701 = vpop.f32.mrf.mxu0
        %v702 = vadd.f32 %v510, %v701
        %v703 = vpop.f32.mrf.mxu0
        %704 = vmatprep.mubr.bf16.mxu0 0
        %705 = vmatmul.mubr.bf16.gmra.mxu0 %v578
        %v706 = vpop.f32.mrf.mxu0
        %v707 = vadd.f32 %v510, %v706
        %v708 = vpop.f32.mrf.mxu0
        %v709 = vpop.f32.mrf.mxu0
        %v710 = vadd.f32 %v510, %v709
        %v711 = vpop.f32.mrf.mxu0
        %712 = vmatprep.mubr.bf16.mxu0 0
        %713 = vmatmul.mubr.bf16.gmra.mxu0 %v579
        %v714 = vpop.f32.mrf.mxu0
        %v715 = vadd.f32 %v510, %v714
        %v716 = vpop.f32.mrf.mxu0
        %v717 = vpop.f32.mrf.mxu0
        %v718 = vadd.f32 %v510, %v717
        %v719 = vpop.f32.mrf.mxu0
        %720 = vmatprep.mubr.bf16.mxu0 0
        %721 = vmatmul.mubr.bf16.gmra.mxu0 %v580
        %v722 = vpop.f32.mrf.mxu0
        %v723 = vadd.f32 %v510, %v722
        %v724 = vpop.f32.mrf.mxu0
        %v725 = vpop.f32.mrf.mxu0
        %v726 = vadd.f32 %v510, %v725
        %v727 = vpop.f32.mrf.mxu0
        %728 = vmatprep.mubr.bf16.mxu0 0
        %729 = vmatmul.mubr.bf16.gmra.mxu0 %v581
        %v730 = vpop.f32.mrf.mxu0
        %v731 = vadd.f32 %v510, %v730
        %v732 = vpop.f32.mrf.mxu0
        %v733 = vpop.f32.mrf.mxu0
        %v734 = vadd.f32 %v510, %v733
        %v735 = vpop.f32.mrf.mxu0
        %736 = vmatprep.mubr.bf16.mxu0 0
        %737 = vmatmul.mubr.bf16.gmra.mxu0 %v582
        %v738 = vpop.f32.mrf.mxu0
        %v739 = vadd.f32 %v510, %v738
        %v740 = vpop.f32.mrf.mxu0
        %v741 = vpop.f32.mrf.mxu0
        %v742 = vadd.f32 %v510, %v741
        %v743 = vpop.f32.mrf.mxu0
        %744 = vmatprep.mubr.bf16.mxu0 0
        %745 = vmatmul.mubr.bf16.gmra.mxu0 %v583
        %v746 = vpop.f32.mrf.mxu0
        %v747 = vadd.f32 %v510, %v746
        %v748 = vpop.f32.mrf.mxu0
        %v749 = vpop.f32.mrf.mxu0
        %v750 = vadd.f32 %v510, %v749
        %v751 = vpop.f32.mrf.mxu0
        %752 = vmatprep.mubr.bf16.mxu0 0
        %753 = vmatmul.mubr.bf16.gmra.mxu0 %v584
        %v754 = vpop.f32.mrf.mxu0
        %v755 = vadd.f32 %v510, %v754
        %v756 = vpop.f32.mrf.mxu0
        %v757 = vpop.f32.mrf.mxu0
        %v758 = vadd.f32 %v510, %v757
        %v759 = vpop.f32.mrf.mxu0
        %760 = vmatprep.mubr.bf16.mxu0 0
        %761 = vmatmul.mubr.bf16.gmra.mxu0 %v585
        %v762 = vpop.f32.mrf.mxu0
        %v763 = vadd.f32 %v510, %v762
        %v764 = vpop.f32.mrf.mxu0
        %v765 = vpop.f32.mrf.mxu0
        %v766 = vadd.f32 %v510, %v765
        %v767 = vpop.f32.mrf.mxu0
        %768 = vmatprep.mubr.bf16.mxu0 0
        %769 = vmatmul.mubr.bf16.gmra.mxu0 %v586
        %v770 = vpop.f32.mrf.mxu0
        %v771 = vadd.f32 %v510, %v770
        %v772 = vpop.f32.mrf.mxu0
        %v773 = vpop.f32.mrf.mxu0
        %v774 = vadd.f32 %v510, %v773
        %v775 = vpop.f32.mrf.mxu0
        %776 = vmatprep.mubr.bf16.mxu0 0
        %777 = vmatmul.mubr.bf16.gmra.mxu0 %v587
        %v778 = vpop.f32.mrf.mxu0
        %v779 = vadd.f32 %v510, %v778
        %v780 = vpop.f32.mrf.mxu0
        %v781 = vpop.f32.mrf.mxu0
        %v782 = vadd.f32 %v510, %v781
        %v783 = vpop.f32.mrf.mxu0
        %784 = vmatprep.mubr.bf16.mxu0 0
        %785 = vmatmul.mubr.bf16.gmra.mxu0 %v588
        %v786 = vpop.f32.mrf.mxu0
        %v787 = vadd.f32 %v510, %v786
        %v788 = vpop.f32.mrf.mxu0
        %v789 = vpop.f32.mrf.mxu0
        %v790 = vadd.f32 %v510, %v789
        %v791 = vpop.f32.mrf.mxu0
        %792 = vmatprep.mubr.bf16.mxu0 0
        %793 = vmatmul.mubr.bf16.gmra.mxu0 %v589
        %v794 = vpop.f32.mrf.mxu0
        %v795 = vadd.f32 %v510, %v794
        %v796 = vpop.f32.mrf.mxu0
        %v797 = vpop.f32.mrf.mxu0
        %v798 = vadd.f32 %v510, %v797
        %v799 = vpop.f32.mrf.mxu0
        %800 = vmatprep.mubr.bf16.mxu0 0
        %801 = vmatmul.mubr.bf16.gmra.mxu0 %v590
        %v802 = vpop.f32.mrf.mxu0
        %v803 = vadd.f32 %v510, %v802
        %v804 = vpop.f32.mrf.mxu0
        %v805 = vpop.f32.mrf.mxu0
        %v806 = vadd.f32 %v510, %v805
        %v807 = vpop.f32.mrf.mxu0
        %808 = vmatprep.mubr.bf16.mxu0 0
        %809 = vmatmul.mubr.bf16.gmra.mxu0 %v591
        %v810 = vpop.f32.mrf.mxu0
        %v811 = vadd.f32 %v510, %v810
        %v812 = vpop.f32.mrf.mxu0
        %v813 = vpop.f32.mrf.mxu0
        %v814 = vadd.f32 %v510, %v813
        %v815 = vpop.f32.mrf.mxu0
        %816 = vdwg.mxu0
        %vm817 = vcmp.gt.f32.partialorder %v691, 0.0
        %vm818 = vcmp.gt.f32.partialorder %v694, 0.0
        %vm819 = vcmp.gt.f32.partialorder %v699, 0.0
        %vm820 = vcmp.gt.f32.partialorder %v702, 0.0
        %vm821 = vcmp.gt.f32.partialorder %v707, 0.0
        %vm822 = vcmp.gt.f32.partialorder %v710, 0.0
        %vm823 = vcmp.gt.f32.partialorder %v715, 0.0
        %vm824 = vcmp.gt.f32.partialorder %v718, 0.0
        %vm825 = vcmp.gt.f32.partialorder %v723, 0.0
        %vm826 = vcmp.gt.f32.partialorder %v726, 0.0
        %vm827 = vcmp.gt.f32.partialorder %v731, 0.0
        %vm828 = vcmp.gt.f32.partialorder %v734, 0.0
        %vm829 = vcmp.gt.f32.partialorder %v739, 0.0
        %vm830 = vcmp.gt.f32.partialorder %v742, 0.0
        %vm831 = vcmp.gt.f32.partialorder %v747, 0.0
        %vm832 = vcmp.gt.f32.partialorder %v750, 0.0
        %vm833 = vcmp.gt.f32.partialorder %v755, 0.0
        %vm834 = vcmp.gt.f32.partialorder %v758, 0.0
        %vm835 = vcmp.gt.f32.partialorder %v763, 0.0
        %vm836 = vcmp.gt.f32.partialorder %v766, 0.0
        %vm837 = vcmp.gt.f32.partialorder %v771, 0.0
        %vm838 = vcmp.gt.f32.partialorder %v774, 0.0
        %vm839 = vcmp.gt.f32.partialorder %v779, 0.0
        %vm840 = vcmp.gt.f32.partialorder %v782, 0.0
        %vm841 = vcmp.gt.f32.partialorder %v787, 0.0
        %vm842 = vcmp.gt.f32.partialorder %v790, 0.0
        %vm843 = vcmp.gt.f32.partialorder %v795, 0.0
        %vm844 = vcmp.gt.f32.partialorder %v798, 0.0
        %vm845 = vcmp.gt.f32.partialorder %v803, 0.0
        %vm846 = vcmp.gt.f32.partialorder %v806, 0.0
        %vm847 = vcmp.gt.f32.partialorder %v811, 0.0
        %vm848 = vcmp.gt.f32.partialorder %v814, 0.0
        %v849 = vmul.f32 %v691, 0.1
        %v850 = vmul.f32 %v694, 0.1
        %v851 = vmul.f32 %v699, 0.1
        %v852 = vmul.f32 %v702, 0.1
        %v853 = vmul.f32 %v707, 0.1
        %v854 = vmul.f32 %v710, 0.1
        %v855 = vmul.f32 %v715, 0.1
        %v856 = vmul.f32 %v718, 0.1
        %v857 = vmul.f32 %v723, 0.1
        %v858 = vmul.f32 %v726, 0.1
        %v859 = vmul.f32 %v731, 0.1
        %v860 = vmul.f32 %v734, 0.1
        %v861 = vmul.f32 %v739, 0.1
        %v862 = vmul.f32 %v742, 0.1
        %v863 = vmul.f32 %v747, 0.1
        %v864 = vmul.f32 %v750, 0.1
        %v865 = vmul.f32 %v755, 0.1
        %v866 = vmul.f32 %v758, 0.1
        %v867 = vmul.f32 %v763, 0.1
        %v868 = vmul.f32 %v766, 0.1
        %v869 = vmul.f32 %v771, 0.1
        %v870 = vmul.f32 %v774, 0.1
        %v871 = vmul.f32 %v779, 0.1
        %v872 = vmul.f32 %v782, 0.1
        %v873 = vmul.f32 %v787, 0.1
        %v874 = vmul.f32 %v790, 0.1
        %v875 = vmul.f32 %v795, 0.1
        %v876 = vmul.f32 %v798, 0.1
        %v877 = vmul.f32 %v803, 0.1
        %v878 = vmul.f32 %v806, 0.1
        %v879 = vmul.f32 %v811, 0.1
        %v880 = vmul.f32 %v814, 0.1
        %v881 = vsel %vm817, %v691, %v849
        %v882 = vsel %vm818, %v694, %v850
        %v883 = vsel %vm819, %v699, %v851
        %v884 = vsel %vm820, %v702, %v852
        %v885 = vsel %vm821, %v707, %v853
        %v886 = vsel %vm822, %v710, %v854
        %v887 = vsel %vm823, %v715, %v855
        %v888 = vsel %vm824, %v718, %v856
        %v889 = vsel %vm825, %v723, %v857
        %v890 = vsel %vm826, %v726, %v858
        %v891 = vsel %vm827, %v731, %v859
        %v892 = vsel %vm828, %v734, %v860
        %v893 = vsel %vm829, %v739, %v861
        %v894 = vsel %vm830, %v742, %v862
        %v895 = vsel %vm831, %v747, %v863
        %v896 = vsel %vm832, %v750, %v864
        %v897 = vsel %vm833, %v755, %v865
        %v898 = vsel %vm834, %v758, %v866
        %v899 = vsel %vm835, %v763, %v867
        %v900 = vsel %vm836, %v766, %v868
        %v901 = vsel %vm837, %v771, %v869
        %v902 = vsel %vm838, %v774, %v870
        %v903 = vsel %vm839, %v779, %v871
        %v904 = vsel %vm840, %v782, %v872
        %v905 = vsel %vm841, %v787, %v873
        %v906 = vsel %vm842, %v790, %v874
        %v907 = vsel %vm843, %v795, %v875
        %v908 = vsel %vm844, %v798, %v876
        %v909 = vsel %vm845, %v803, %v877
        %v910 = vsel %vm846, %v806, %v878
        %v911 = vsel %vm847, %v811, %v879
        %v912 = vsel %vm848, %v814, %v880
        %v913 = vpack.c.bf16 %v882, %v881
        %v914 = vpack.c.bf16 %v884, %v883
        %v915 = vpack.c.bf16 %v886, %v885
        %v916 = vpack.c.bf16 %v888, %v887
        %v917 = vpack.c.bf16 %v890, %v889
        %v918 = vpack.c.bf16 %v892, %v891
        %v919 = vpack.c.bf16 %v894, %v893
        %v920 = vpack.c.bf16 %v896, %v895
        %v921 = vpack.c.bf16 %v898, %v897
        %v922 = vpack.c.bf16 %v900, %v899
        %v923 = vpack.c.bf16 %v902, %v901
        %v924 = vpack.c.bf16 %v904, %v903
        %v925 = vpack.c.bf16 %v906, %v905
        %v926 = vpack.c.bf16 %v908, %v907
        %v927 = vpack.c.bf16 %v910, %v909
        %v928 = vpack.c.bf16 %v912, %v911
        %v945 = vunpack.c.l.b16 %v913
        %v946 = vunpack.c.h.b16 %v913
        %v947 = vunpack.c.l.b16 %v914
        %v948 = vunpack.c.h.b16 %v914
        %v949 = vunpack.c.l.b16 %v915
        %v950 = vunpack.c.h.b16 %v915
        %v951 = vunpack.c.l.b16 %v916
        %v952 = vunpack.c.h.b16 %v916
        %v953 = vunpack.c.l.b16 %v917
        %v954 = vunpack.c.h.b16 %v917
        %v955 = vunpack.c.l.b16 %v918
        %v956 = vunpack.c.h.b16 %v918
        %v957 = vunpack.c.l.b16 %v919
        %v958 = vunpack.c.h.b16 %v919
        %v959 = vunpack.c.l.b16 %v920
        %v960 = vunpack.c.h.b16 %v920
        %v961 = vunpack.c.l.b16 %v921
        %v962 = vunpack.c.h.b16 %v921
        %v963 = vunpack.c.l.b16 %v922
        %v964 = vunpack.c.h.b16 %v922
        %v965 = vunpack.c.l.b16 %v923
        %v966 = vunpack.c.h.b16 %v923
        %v967 = vunpack.c.l.b16 %v924
        %v968 = vunpack.c.h.b16 %v924
        %v969 = vunpack.c.l.b16 %v925
        %v970 = vunpack.c.h.b16 %v925
        %v971 = vunpack.c.l.b16 %v926
        %v972 = vunpack.c.h.b16 %v926
        %v973 = vunpack.c.l.b16 %v927
        %v974 = vunpack.c.h.b16 %v927
        %v975 = vunpack.c.l.b16 %v928
        %v976 = vunpack.c.h.b16 %v928
        %v977 = vpack.c.b16 %v945, %v945
        %v978 = vpack.c.b16 %v946, %v946
        %v979 = vpack.c.b16 %v947, %v947
        %v980 = vpack.c.b16 %v948, %v948
        %v981 = vpack.c.b16 %v949, %v949
        %v982 = vpack.c.b16 %v950, %v950
        %v983 = vpack.c.b16 %v951, %v951
        %v984 = vpack.c.b16 %v952, %v952
        %v985 = vpack.c.b16 %v953, %v953
        %v986 = vpack.c.b16 %v954, %v954
        %v987 = vpack.c.b16 %v955, %v955
        %v988 = vpack.c.b16 %v956, %v956
        %v989 = vpack.c.b16 %v957, %v957
        %v990 = vpack.c.b16 %v958, %v958
        %v991 = vpack.c.b16 %v959, %v959
        %v992 = vpack.c.b16 %v960, %v960
        %v993 = vpack.c.b16 %v961, %v961
        %v994 = vpack.c.b16 %v962, %v962
        %v995 = vpack.c.b16 %v963, %v963
        %v996 = vpack.c.b16 %v964, %v964
        %v997 = vpack.c.b16 %v965, %v965
        %v998 = vpack.c.b16 %v966, %v966
        %v999 = vpack.c.b16 %v967, %v967
        %v1000 = vpack.c.b16 %v968, %v968
        %v1001 = vpack.c.b16 %v969, %v969
        %v1002 = vpack.c.b16 %v970, %v970
        %v1003 = vpack.c.b16 %v971, %v971
        %v1004 = vpack.c.b16 %v972, %v972
        %v1005 = vpack.c.b16 %v973, %v973
        %v1006 = vpack.c.b16 %v974, %v974
        %v1007 = vpack.c.b16 %v975, %v975
        %v1008 = vpack.c.b16 %v976, %v976
        %vm1009 = vsmask.f32 256
        %vm1010 = vsmask.f32 4368
        %vm1011 = vmor %vm1009, %vm1010
        %v1013 = vshrl.u32 %v977, 16
        %v1015 = vrot.slane %v1013, 7
        %v1016 = vshll.u32 %v977, 16
        %v1018 = vor.u32 %v1015, %v1016
        %v1019 = vrot.slane %v1015, 4
        %v1021 = vshrl.u32 %v978, 16
        %v1023 = vrot.slane %v1021, 7
        %v1024 = vshll.u32 %v978, 16
        %v1026 = vor.u32 %v1023, %v1024
        %v1027 = vsel %vm1011, %v1019, %v1026
        %v1028 = vrot.slane %v1023, 4
        %v1030 = vshrl.u32 %v979, 16
        %v1032 = vrot.slane %v1030, 7
        %v1033 = vshll.u32 %v979, 16
        %v1035 = vor.u32 %v1032, %v1033
        %v1036 = vrot.slane %v1032, 4
        %v1038 = vshrl.u32 %v980, 16
        %v1040 = vrot.slane %v1038, 7
        %v1041 = vshll.u32 %v980, 16
        %v1043 = vor.u32 %v1040, %v1041
        %v1044 = vsel %vm1011, %v1036, %v1043
        %v1045 = vrot.slane %v1040, 4
        %v1047 = vshrl.u32 %v981, 16
        %v1049 = vrot.slane %v1047, 7
        %v1050 = vshll.u32 %v981, 16
        %v1052 = vor.u32 %v1049, %v1050
        %v1053 = vrot.slane %v1049, 4
        %v1055 = vshrl.u32 %v982, 16
        %v1057 = vrot.slane %v1055, 7
        %v1058 = vshll.u32 %v982, 16
        %v1060 = vor.u32 %v1057, %v1058
        %v1061 = vsel %vm1011, %v1053, %v1060
        %v1062 = vrot.slane %v1057, 4
        %v1064 = vshrl.u32 %v983, 16
        %v1066 = vrot.slane %v1064, 7
        %v1067 = vshll.u32 %v983, 16
        %v1069 = vor.u32 %v1066, %v1067
        %v1070 = vrot.slane %v1066, 4
        %v1072 = vshrl.u32 %v984, 16
        %v1074 = vrot.slane %v1072, 7
        %v1075 = vshll.u32 %v984, 16
        %v1077 = vor.u32 %v1074, %v1075
        %v1078 = vsel %vm1011, %v1070, %v1077
        %v1079 = vrot.slane %v1074, 4
        %v1081 = vshrl.u32 %v985, 16
        %v1083 = vrot.slane %v1081, 7
        %v1084 = vshll.u32 %v985, 16
        %v1086 = vor.u32 %v1083, %v1084
        %v1087 = vrot.slane %v1083, 4
        %v1089 = vshrl.u32 %v986, 16
        %v1091 = vrot.slane %v1089, 7
        %v1092 = vshll.u32 %v986, 16
        %v1094 = vor.u32 %v1091, %v1092
        %v1095 = vsel %vm1011, %v1087, %v1094
        %v1096 = vrot.slane %v1091, 4
        %v1098 = vshrl.u32 %v987, 16
        %v1100 = vrot.slane %v1098, 7
        %v1101 = vshll.u32 %v987, 16
        %v1103 = vor.u32 %v1100, %v1101
        %v1104 = vrot.slane %v1100, 4
        %v1106 = vshrl.u32 %v988, 16
        %v1108 = vrot.slane %v1106, 7
        %v1109 = vshll.u32 %v988, 16
        %v1111 = vor.u32 %v1108, %v1109
        %v1112 = vsel %vm1011, %v1104, %v1111
        %v1113 = vrot.slane %v1108, 4
        %v1115 = vshrl.u32 %v989, 16
        %v1117 = vrot.slane %v1115, 7
        %v1118 = vshll.u32 %v989, 16
        %v1120 = vor.u32 %v1117, %v1118
        %v1121 = vrot.slane %v1117, 4
        %v1123 = vshrl.u32 %v990, 16
        %v1125 = vrot.slane %v1123, 7
        %v1126 = vshll.u32 %v990, 16
        %v1128 = vor.u32 %v1125, %v1126
        %v1129 = vsel %vm1011, %v1121, %v1128
        %v1130 = vrot.slane %v1125, 4
        %v1132 = vshrl.u32 %v991, 16
        %v1134 = vrot.slane %v1132, 7
        %v1135 = vshll.u32 %v991, 16
        %v1137 = vor.u32 %v1134, %v1135
        %v1138 = vrot.slane %v1134, 4
        %v1140 = vshrl.u32 %v992, 16
        %v1142 = vrot.slane %v1140, 7
        %v1143 = vshll.u32 %v992, 16
        %v1145 = vor.u32 %v1142, %v1143
        %v1146 = vsel %vm1011, %v1138, %v1145
        %v1147 = vrot.slane %v1142, 4
        %v1149 = vshrl.u32 %v993, 16
        %v1151 = vrot.slane %v1149, 7
        %v1152 = vshll.u32 %v993, 16
        %v1154 = vor.u32 %v1151, %v1152
        %v1155 = vrot.slane %v1151, 4
        %v1157 = vshrl.u32 %v994, 16
        %v1159 = vrot.slane %v1157, 7
        %v1160 = vshll.u32 %v994, 16
        %v1162 = vor.u32 %v1159, %v1160
        %v1163 = vsel %vm1011, %v1155, %v1162
        %v1164 = vrot.slane %v1159, 4
        %v1166 = vshrl.u32 %v995, 16
        %v1168 = vrot.slane %v1166, 7
        %v1169 = vshll.u32 %v995, 16
        %v1171 = vor.u32 %v1168, %v1169
        %v1172 = vrot.slane %v1168, 4
        %v1174 = vshrl.u32 %v996, 16
        %v1176 = vrot.slane %v1174, 7
        %v1177 = vshll.u32 %v996, 16
        %v1179 = vor.u32 %v1176, %v1177
        %v1180 = vsel %vm1011, %v1172, %v1179
        %v1181 = vrot.slane %v1176, 4
        %v1183 = vshrl.u32 %v997, 16
        %v1185 = vrot.slane %v1183, 7
        %v1186 = vshll.u32 %v997, 16
        %v1188 = vor.u32 %v1185, %v1186
        %v1189 = vrot.slane %v1185, 4
        %v1191 = vshrl.u32 %v998, 16
        %v1193 = vrot.slane %v1191, 7
        %v1194 = vshll.u32 %v998, 16
        %v1196 = vor.u32 %v1193, %v1194
        %v1197 = vsel %vm1011, %v1189, %v1196
        %v1198 = vrot.slane %v1193, 4
        %v1200 = vshrl.u32 %v999, 16
        %v1202 = vrot.slane %v1200, 7
        %v1203 = vshll.u32 %v999, 16
        %v1205 = vor.u32 %v1202, %v1203
        %v1206 = vrot.slane %v1202, 4
        %v1208 = vshrl.u32 %v1000, 16
        %v1210 = vrot.slane %v1208, 7
        %v1211 = vshll.u32 %v1000, 16
        %v1213 = vor.u32 %v1210, %v1211
        %v1214 = vsel %vm1011, %v1206, %v1213
        %v1215 = vrot.slane %v1210, 4
        %v1217 = vshrl.u32 %v1001, 16
        %v1219 = vrot.slane %v1217, 7
        %v1220 = vshll.u32 %v1001, 16
        %v1222 = vor.u32 %v1219, %v1220
        %v1223 = vrot.slane %v1219, 4
        %v1225 = vshrl.u32 %v1002, 16
        %v1227 = vrot.slane %v1225, 7
        %v1228 = vshll.u32 %v1002, 16
        %v1230 = vor.u32 %v1227, %v1228
        %v1231 = vsel %vm1011, %v1223, %v1230
        %v1232 = vrot.slane %v1227, 4
        %v1234 = vshrl.u32 %v1003, 16
        %v1236 = vrot.slane %v1234, 7
        %v1237 = vshll.u32 %v1003, 16
        %v1239 = vor.u32 %v1236, %v1237
        %v1240 = vrot.slane %v1236, 4
        %v1242 = vshrl.u32 %v1004, 16
        %v1244 = vrot.slane %v1242, 7
        %v1245 = vshll.u32 %v1004, 16
        %v1247 = vor.u32 %v1244, %v1245
        %v1248 = vsel %vm1011, %v1240, %v1247
        %v1249 = vrot.slane %v1244, 4
        %v1251 = vshrl.u32 %v1005, 16
        %v1253 = vrot.slane %v1251, 7
        %v1254 = vshll.u32 %v1005, 16
        %v1256 = vor.u32 %v1253, %v1254
        %v1257 = vrot.slane %v1253, 4
        %v1259 = vshrl.u32 %v1006, 16
        %v1261 = vrot.slane %v1259, 7
        %v1262 = vshll.u32 %v1006, 16
        %v1264 = vor.u32 %v1261, %v1262
        %v1265 = vsel %vm1011, %v1257, %v1264
        %v1266 = vrot.slane %v1261, 4
        %v1268 = vshrl.u32 %v1007, 16
        %v1270 = vrot.slane %v1268, 7
        %v1271 = vshll.u32 %v1007, 16
        %v1273 = vor.u32 %v1270, %v1271
        %v1274 = vrot.slane %v1270, 4
        %v1276 = vshrl.u32 %v1008, 16
        %v1278 = vrot.slane %v1276, 7
        %v1279 = vshll.u32 %v1008, 16
        %v1281 = vor.u32 %v1278, %v1279
        %v1282 = vsel %vm1011, %v1274, %v1281
        %v1283 = vrot.slane %v1278, 4
        %s1332 = scalar_lea.vmem [#allocation2], 12
        %vm1333 = vcmask 1043456
        %vm1334 = vsmask.f32 7938
        %vm1335 = vmand %vm1333, %vm1334
        %v1336 = vld [vmem:[%s1332] sm:$0xf]
        %v1337 = vsel %vm1335, %v1018, %v1336
        %1338 = vst [vmem:[%s1332] sm:$0xf] %v1337
        %1339 = vst [vmem:[%s1332 + $0x4] sm:$0xf] %v1027
        %vm1340 = vcmask 1040384
        %vm1341 = vmand %vm1340, %vm1009
        %v1342 = vld [vmem:[%s1332 + $0x8] sm:$0x1]
        %v1343 = vsel %vm1341, %v1028, %v1342
        %1344 = vst [vmem:[%s1332 + $0x8] sm:$0x1] %v1343
        %v1345 = vld [vmem:[%s1332 + $0xc] sm:$0xf]
        %v1346 = vsel %vm1335, %v1035, %v1345
        %1347 = vst [vmem:[%s1332 + $0xc] sm:$0xf] %v1346
        %1348 = vst [vmem:[%s1332 + $0x10] sm:$0xf] %v1044
        %v1349 = vld [vmem:[%s1332 + $0x14] sm:$0x1]
        %v1350 = vsel %vm1341, %v1045, %v1349
        %1351 = vst [vmem:[%s1332 + $0x14] sm:$0x1] %v1350
        %v1352 = vld [vmem:[%s1332 + $0x18] sm:$0xf]
        %v1353 = vsel %vm1335, %v1052, %v1352
        %1354 = vst [vmem:[%s1332 + $0x18] sm:$0xf] %v1353
        %1355 = vst [vmem:[%s1332 + $0x1c] sm:$0xf] %v1061
        %v1356 = vld [vmem:[%s1332 + $0x20] sm:$0x1]
        %v1357 = vsel %vm1341, %v1062, %v1356
        %1358 = vst [vmem:[%s1332 + $0x20] sm:$0x1] %v1357
        %v1359 = vld [vmem:[%s1332 + $0x24] sm:$0xf]
        %v1360 = vsel %vm1335, %v1069, %v1359
        %1361 = vst [vmem:[%s1332 + $0x24] sm:$0xf] %v1360
        %1362 = vst [vmem:[%s1332 + $0x28] sm:$0xf] %v1078
        %v1363 = vld [vmem:[%s1332 + $0x2c] sm:$0x1]
        %v1364 = vsel %vm1341, %v1079, %v1363
        %1365 = vst [vmem:[%s1332 + $0x2c] sm:$0x1] %v1364
        %v1366 = vld [vmem:[%s1332 + $0x30] sm:$0xf]
        %v1367 = vsel %vm1335, %v1086, %v1366
        %1368 = vst [vmem:[%s1332 + $0x30] sm:$0xf] %v1367
        %1369 = vst [vmem:[%s1332 + $0x34] sm:$0xf] %v1095
        %v1370 = vld [vmem:[%s1332 + $0x38] sm:$0x1]
        %v1371 = vsel %vm1341, %v1096, %v1370
        %1372 = vst [vmem:[%s1332 + $0x38] sm:$0x1] %v1371
        %v1373 = vld [vmem:[%s1332 + $0x3c] sm:$0xf]
        %v1374 = vsel %vm1335, %v1103, %v1373
        %1375 = vst [vmem:[%s1332 + $0x3c] sm:$0xf] %v1374
        %1376 = vst [vmem:[%s1332 + $0x40] sm:$0xf] %v1112
        %v1377 = vld [vmem:[%s1332 + $0x44] sm:$0x1]
        %v1378 = vsel %vm1341, %v1113, %v1377
        %1379 = vst [vmem:[%s1332 + $0x44] sm:$0x1] %v1378
        %v1380 = vld [vmem:[%s1332 + $0x48] sm:$0xf]
        %v1381 = vsel %vm1335, %v1120, %v1380
        %1382 = vst [vmem:[%s1332 + $0x48] sm:$0xf] %v1381
        %1383 = vst [vmem:[%s1332 + $0x4c] sm:$0xf] %v1129
        %v1384 = vld [vmem:[%s1332 + $0x50] sm:$0x1]
        %v1385 = vsel %vm1341, %v1130, %v1384
        %1386 = vst [vmem:[%s1332 + $0x50] sm:$0x1] %v1385
        %v1387 = vld [vmem:[%s1332 + $0x54] sm:$0xf]
        %v1388 = vsel %vm1335, %v1137, %v1387
        %1389 = vst [vmem:[%s1332 + $0x54] sm:$0xf] %v1388
        %1390 = vst [vmem:[%s1332 + $0x58] sm:$0xf] %v1146
        %v1391 = vld [vmem:[%s1332 + $0x5c] sm:$0x1]
        %v1392 = vsel %vm1341, %v1147, %v1391
        %1393 = vst [vmem:[%s1332 + $0x5c] sm:$0x1] %v1392
        %v1394 = vld [vmem:[%s1332 + $0x60] sm:$0xf]
        %v1395 = vsel %vm1335, %v1154, %v1394
        %1396 = vst [vmem:[%s1332 + $0x60] sm:$0xf] %v1395
        %1397 = vst [vmem:[%s1332 + $0x64] sm:$0xf] %v1163
        %v1398 = vld [vmem:[%s1332 + $0x68] sm:$0x1]
        %v1399 = vsel %vm1341, %v1164, %v1398
        %1400 = vst [vmem:[%s1332 + $0x68] sm:$0x1] %v1399
        %v1401 = vld [vmem:[%s1332 + $0x6c] sm:$0xf]
        %v1402 = vsel %vm1335, %v1171, %v1401
        %1403 = vst [vmem:[%s1332 + $0x6c] sm:$0xf] %v1402
        %1404 = vst [vmem:[%s1332 + $0x70] sm:$0xf] %v1180
        %v1405 = vld [vmem:[%s1332 + $0x74] sm:$0x1]
        %v1406 = vsel %vm1341, %v1181, %v1405
        %1407 = vst [vmem:[%s1332 + $0x74] sm:$0x1] %v1406
        %v1408 = vld [vmem:[%s1332 + $0x78] sm:$0xf]
        %v1409 = vsel %vm1335, %v1188, %v1408
        %1410 = vst [vmem:[%s1332 + $0x78] sm:$0xf] %v1409
        %1411 = vst [vmem:[%s1332 + $0x7c] sm:$0xf] %v1197
        %v1412 = vld [vmem:[%s1332 + $0x80] sm:$0x1]
        %v1413 = vsel %vm1341, %v1198, %v1412
        %1414 = vst [vmem:[%s1332 + $0x80] sm:$0x1] %v1413
        %v1415 = vld [vmem:[%s1332 + $0x84] sm:$0xf]
        %v1416 = vsel %vm1335, %v1205, %v1415
        %1417 = vst [vmem:[%s1332 + $0x84] sm:$0xf] %v1416
        %1418 = vst [vmem:[%s1332 + $0x88] sm:$0xf] %v1214
        %v1419 = vld [vmem:[%s1332 + $0x8c] sm:$0x1]
        %v1420 = vsel %vm1341, %v1215, %v1419
        %1421 = vst [vmem:[%s1332 + $0x8c] sm:$0x1] %v1420
        %v1422 = vld [vmem:[%s1332 + $0x90] sm:$0xf]
        %v1423 = vsel %vm1335, %v1222, %v1422
        %1424 = vst [vmem:[%s1332 + $0x90] sm:$0xf] %v1423
        %1425 = vst [vmem:[%s1332 + $0x94] sm:$0xf] %v1231
        %v1426 = vld [vmem:[%s1332 + $0x98] sm:$0x1]
        %v1427 = vsel %vm1341, %v1232, %v1426
        %1428 = vst [vmem:[%s1332 + $0x98] sm:$0x1] %v1427
        %v1429 = vld [vmem:[%s1332 + $0x9c] sm:$0xf]
        %v1430 = vsel %vm1335, %v1239, %v1429
        %1431 = vst [vmem:[%s1332 + $0x9c] sm:$0xf] %v1430
        %1432 = vst [vmem:[%s1332 + $0xa0] sm:$0xf] %v1248
        %v1433 = vld [vmem:[%s1332 + $0xa4] sm:$0x1]
        %v1434 = vsel %vm1341, %v1249, %v1433
        %1435 = vst [vmem:[%s1332 + $0xa4] sm:$0x1] %v1434
        %v1436 = vld [vmem:[%s1332 + $0xa8] sm:$0xf]
        %v1437 = vsel %vm1335, %v1256, %v1436
        %1438 = vst [vmem:[%s1332 + $0xa8] sm:$0xf] %v1437
        %1439 = vst [vmem:[%s1332 + $0xac] sm:$0xf] %v1265
        %v1440 = vld [vmem:[%s1332 + $0xb0] sm:$0x1]
        %v1441 = vsel %vm1341, %v1266, %v1440
        %1442 = vst [vmem:[%s1332 + $0xb0] sm:$0x1] %v1441
        %v1443 = vld [vmem:[%s1332 + $0xb4] sm:$0xf]
        %v1444 = vsel %vm1335, %v1273, %v1443
        %1445 = vst [vmem:[%s1332 + $0xb4] sm:$0xf] %v1444
        %1446 = vst [vmem:[%s1332 + $0xb8] sm:$0xf] %v1282
        %v1447 = vld [vmem:[%s1332 + $0xbc] sm:$0x1]
        %v1448 = vsel %vm1341, %v1283, %v1447
        %1449 = vst [vmem:[%s1332 + $0xbc] sm:$0x1] %v1448
        %v1450 = vld [vmem:[#allocation2] sm:$0xf]
        %v1451 = vld [vmem:[#allocation2 + $0x4] sm:$0xf]
        %v1452 = vld [vmem:[#allocation2 + $0xc] sm:$0xf]
        %v1453 = vld [vmem:[#allocation2 + $0x10] sm:$0xf]
        %v1454 = vld [vmem:[#allocation2 + $0x18] sm:$0xf]
        %v1455 = vld [vmem:[#allocation2 + $0x1c] sm:$0xf]
        %v1456 = vld [vmem:[#allocation2 + $0x24] sm:$0xf]
        %v1457 = vld [vmem:[#allocation2 + $0x28] sm:$0xf]
        %v1458 = vld [vmem:[#allocation2 + $0x30] sm:$0xf]
        %v1459 = vld [vmem:[#allocation2 + $0x34] sm:$0xf]
        %v1460 = vld [vmem:[#allocation2 + $0x3c] sm:$0xf]
        %v1461 = vld [vmem:[#allocation2 + $0x40] sm:$0xf]
        %v1462 = vld [vmem:[#allocation2 + $0x48] sm:$0xf]
        %v1463 = vld [vmem:[#allocation2 + $0x4c] sm:$0xf]
        %v1464 = vld [vmem:[#allocation2 + $0x54] sm:$0xf]
        %v1465 = vld [vmem:[#allocation2 + $0x58] sm:$0xf]
        %v1466 = vld [vmem:[#allocation2 + $0x60] sm:$0xf]
        %v1467 = vld [vmem:[#allocation2 + $0x64] sm:$0xf]
        %v1468 = vld [vmem:[#allocation2 + $0x6c] sm:$0xf]
        %v1469 = vld [vmem:[#allocation2 + $0x70] sm:$0xf]
        %v1470 = vld [vmem:[#allocation2 + $0x78] sm:$0xf]
        %v1471 = vld [vmem:[#allocation2 + $0x7c] sm:$0xf]
        %v1472 = vld [vmem:[#allocation2 + $0x84] sm:$0xf]
        %v1473 = vld [vmem:[#allocation2 + $0x88] sm:$0xf]
        %v1474 = vld [vmem:[#allocation2 + $0x90] sm:$0xf]
        %v1475 = vld [vmem:[#allocation2 + $0x94] sm:$0xf]
        %v1476 = vld [vmem:[#allocation2 + $0x9c] sm:$0xf]
        %v1477 = vld [vmem:[#allocation2 + $0xa0] sm:$0xf]
        %v1478 = vld [vmem:[#allocation2 + $0xa8] sm:$0xf]
        %v1479 = vld [vmem:[#allocation2 + $0xac] sm:$0xf]
        %v1480 = vld [vmem:[#allocation2 + $0xb4] sm:$0xf]
        %v1481 = vld [vmem:[#allocation2 + $0xb8] sm:$0xf]
        %v1482 = vld [vmem:[%s3] sm:$0xf]
        %v1483 = vld [vmem:[%s3 + $0x4] sm:$0xf]
        %v1484 = vld [vmem:[%s3 + $0x8] sm:$0xf]
        %v1485 = vld [vmem:[%s3 + $0xc] sm:$0xf]
        %v1486 = vld [vmem:[%s3 + $0x10] sm:$0xf]
        %v1487 = vld [vmem:[%s3 + $0x14] sm:$0xf]
        %v1488 = vld [vmem:[%s3 + $0x18] sm:$0xf]
        %v1489 = vld [vmem:[%s3 + $0x1c] sm:$0xf]
        %v1490 = vld [vmem:[%s3 + $0x20] sm:$0xf]
        %v1491 = vld [vmem:[%s3 + $0x24] sm:$0xf]
        %v1492 = vld [vmem:[%s3 + $0x28] sm:$0xf]
        %v1493 = vld [vmem:[%s3 + $0x2c] sm:$0xf]
        %v1494 = vld [vmem:[%s3 + $0x30] sm:$0xf]
        %v1495 = vld [vmem:[%s3 + $0x34] sm:$0xf]
        %v1496 = vld [vmem:[%s3 + $0x38] sm:$0xf]
        %v1497 = vld [vmem:[%s3 + $0x3c] sm:$0xf]
        %v1498 = vld [vmem:[#allocation2 + $0x8] sm:$0x1]
        %v1499 = vld [vmem:[#allocation2 + $0x14] sm:$0x1]
        %v1500 = vld [vmem:[#allocation2 + $0x20] sm:$0x1]
        %v1501 = vld [vmem:[#allocation2 + $0x2c] sm:$0x1]
        %v1502 = vld [vmem:[#allocation2 + $0x38] sm:$0x1]
        %v1503 = vld [vmem:[#allocation2 + $0x44] sm:$0x1]
        %v1504 = vld [vmem:[#allocation2 + $0x50] sm:$0x1]
        %v1505 = vld [vmem:[#allocation2 + $0x5c] sm:$0x1]
        %v1506 = vld [vmem:[#allocation2 + $0x68] sm:$0x1]
        %v1507 = vld [vmem:[#allocation2 + $0x74] sm:$0x1]
        %v1508 = vld [vmem:[#allocation2 + $0x80] sm:$0x1]
        %v1509 = vld [vmem:[#allocation2 + $0x8c] sm:$0x1]
        %v1510 = vld [vmem:[#allocation2 + $0x98] sm:$0x1]
        %v1511 = vld [vmem:[#allocation2 + $0xa4] sm:$0x1]
        %v1512 = vld [vmem:[#allocation2 + $0xb0] sm:$0x1]
        %v1513 = vld [vmem:[#allocation2 + $0xbc] sm:$0x1]
        %vm1514 = vsmask.f32 3328
        %vm1515 = vsmask.f32 7440
        %vm1516 = vmor %vm1514, %vm1515
        %v1518 = vshrl.u32 %v1450, 16
        %v1520 = vrot.slane %v1518, 4
        %v1521 = vshll.u32 %v1450, 16
        %v1523 = vrot.slane %v1521, 5
        %v1524 = vor.u32 %v1520, %v1523
        %v1525 = vrot.slane %v1524, 4
        %v1527 = vshll.u32 %v1451, 16
        %v1529 = vrot.slane %v1527, 5
        %v1530 = vsel %vm1516, %v1525, %v1529
        %v1531 = vshrl.u32 %v1451, 16
        %v1533 = vrot.slane %v1531, 4
        %v1534 = vor.u32 %v1533, %v1529
        %v1535 = vrot.slane %v1534, 4
        %v1537 = vshll.u32 %v1498, 16
        %v1539 = vrot.slane %v1537, 5
        %v1540 = vsel %vm1516, %v1535, %v1539
        %v1542 = vshrl.u32 %v1452, 16
        %v1544 = vrot.slane %v1542, 4
        %v1545 = vshll.u32 %v1452, 16
        %v1547 = vrot.slane %v1545, 5
        %v1548 = vor.u32 %v1544, %v1547
        %v1549 = vrot.slane %v1548, 4
        %v1551 = vshll.u32 %v1453, 16
        %v1553 = vrot.slane %v1551, 5
        %v1554 = vsel %vm1516, %v1549, %v1553
        %v1555 = vshrl.u32 %v1453, 16
        %v1557 = vrot.slane %v1555, 4
        %v1558 = vor.u32 %v1557, %v1553
        %v1559 = vrot.slane %v1558, 4
        %v1561 = vshll.u32 %v1499, 16
        %v1563 = vrot.slane %v1561, 5
        %v1564 = vsel %vm1516, %v1559, %v1563
        %v1566 = vshrl.u32 %v1454, 16
        %v1568 = vrot.slane %v1566, 4
        %v1569 = vshll.u32 %v1454, 16
        %v1571 = vrot.slane %v1569, 5
        %v1572 = vor.u32 %v1568, %v1571
        %v1573 = vrot.slane %v1572, 4
        %v1575 = vshll.u32 %v1455, 16
        %v1577 = vrot.slane %v1575, 5
        %v1578 = vsel %vm1516, %v1573, %v1577
        %v1579 = vshrl.u32 %v1455, 16
        %v1581 = vrot.slane %v1579, 4
        %v1582 = vor.u32 %v1581, %v1577
        %v1583 = vrot.slane %v1582, 4
        %v1585 = vshll.u32 %v1500, 16
        %v1587 = vrot.slane %v1585, 5
        %v1588 = vsel %vm1516, %v1583, %v1587
        %v1590 = vshrl.u32 %v1456, 16
        %v1592 = vrot.slane %v1590, 4
        %v1593 = vshll.u32 %v1456, 16
        %v1595 = vrot.slane %v1593, 5
        %v1596 = vor.u32 %v1592, %v1595
        %v1597 = vrot.slane %v1596, 4
        %v1599 = vshll.u32 %v1457, 16
        %v1601 = vrot.slane %v1599, 5
        %v1602 = vsel %vm1516, %v1597, %v1601
        %v1603 = vshrl.u32 %v1457, 16
        %v1605 = vrot.slane %v1603, 4
        %v1606 = vor.u32 %v1605, %v1601
        %v1607 = vrot.slane %v1606, 4
        %v1609 = vshll.u32 %v1501, 16
        %v1611 = vrot.slane %v1609, 5
        %v1612 = vsel %vm1516, %v1607, %v1611
        %v1614 = vshrl.u32 %v1458, 16
        %v1616 = vrot.slane %v1614, 4
        %v1617 = vshll.u32 %v1458, 16
        %v1619 = vrot.slane %v1617, 5
        %v1620 = vor.u32 %v1616, %v1619
        %v1621 = vrot.slane %v1620, 4
        %v1623 = vshll.u32 %v1459, 16
        %v1625 = vrot.slane %v1623, 5
        %v1626 = vsel %vm1516, %v1621, %v1625
        %v1627 = vshrl.u32 %v1459, 16
        %v1629 = vrot.slane %v1627, 4
        %v1630 = vor.u32 %v1629, %v1625
        %v1631 = vrot.slane %v1630, 4
        %v1633 = vshll.u32 %v1502, 16
        %v1635 = vrot.slane %v1633, 5
        %v1636 = vsel %vm1516, %v1631, %v1635
        %v1638 = vshrl.u32 %v1460, 16
        %v1640 = vrot.slane %v1638, 4
        %v1641 = vshll.u32 %v1460, 16
        %v1643 = vrot.slane %v1641, 5
        %v1644 = vor.u32 %v1640, %v1643
        %v1645 = vrot.slane %v1644, 4
        %v1647 = vshll.u32 %v1461, 16
        %v1649 = vrot.slane %v1647, 5
        %v1650 = vsel %vm1516, %v1645, %v1649
        %v1651 = vshrl.u32 %v1461, 16
        %v1653 = vrot.slane %v1651, 4
        %v1654 = vor.u32 %v1653, %v1649
        %v1655 = vrot.slane %v1654, 4
        %v1657 = vshll.u32 %v1503, 16
        %v1659 = vrot.slane %v1657, 5
        %v1660 = vsel %vm1516, %v1655, %v1659
        %v1662 = vshrl.u32 %v1462, 16
        %v1664 = vrot.slane %v1662, 4
        %v1665 = vshll.u32 %v1462, 16
        %v1667 = vrot.slane %v1665, 5
        %v1668 = vor.u32 %v1664, %v1667
        %v1669 = vrot.slane %v1668, 4
        %v1671 = vshll.u32 %v1463, 16
        %v1673 = vrot.slane %v1671, 5
        %v1674 = vsel %vm1516, %v1669, %v1673
        %v1675 = vshrl.u32 %v1463, 16
        %v1677 = vrot.slane %v1675, 4
        %v1678 = vor.u32 %v1677, %v1673
        %v1679 = vrot.slane %v1678, 4
        %v1681 = vshll.u32 %v1504, 16
        %v1683 = vrot.slane %v1681, 5
        %v1684 = vsel %vm1516, %v1679, %v1683
        %v1686 = vshrl.u32 %v1464, 16
        %v1688 = vrot.slane %v1686, 4
        %v1689 = vshll.u32 %v1464, 16
        %v1691 = vrot.slane %v1689, 5
        %v1692 = vor.u32 %v1688, %v1691
        %v1693 = vrot.slane %v1692, 4
        %v1695 = vshll.u32 %v1465, 16
        %v1697 = vrot.slane %v1695, 5
        %v1698 = vsel %vm1516, %v1693, %v1697
        %v1699 = vshrl.u32 %v1465, 16
        %v1701 = vrot.slane %v1699, 4
        %v1702 = vor.u32 %v1701, %v1697
        %v1703 = vrot.slane %v1702, 4
        %v1705 = vshll.u32 %v1505, 16
        %v1707 = vrot.slane %v1705, 5
        %v1708 = vsel %vm1516, %v1703, %v1707
        %v1710 = vshrl.u32 %v1466, 16
        %v1712 = vrot.slane %v1710, 4
        %v1713 = vshll.u32 %v1466, 16
        %v1715 = vrot.slane %v1713, 5
        %v1716 = vor.u32 %v1712, %v1715
        %v1717 = vrot.slane %v1716, 4
        %v1719 = vshll.u32 %v1467, 16
        %v1721 = vrot.slane %v1719, 5
        %v1722 = vsel %vm1516, %v1717, %v1721
        %v1723 = vshrl.u32 %v1467, 16
        %v1725 = vrot.slane %v1723, 4
        %v1726 = vor.u32 %v1725, %v1721
        %v1727 = vrot.slane %v1726, 4
        %v1729 = vshll.u32 %v1506, 16
        %v1731 = vrot.slane %v1729, 5
        %v1732 = vsel %vm1516, %v1727, %v1731
        %v1734 = vshrl.u32 %v1468, 16
        %v1736 = vrot.slane %v1734, 4
        %v1737 = vshll.u32 %v1468, 16
        %v1739 = vrot.slane %v1737, 5
        %v1740 = vor.u32 %v1736, %v1739
        %v1741 = vrot.slane %v1740, 4
        %v1743 = vshll.u32 %v1469, 16
        %v1745 = vrot.slane %v1743, 5
        %v1746 = vsel %vm1516, %v1741, %v1745
        %v1747 = vshrl.u32 %v1469, 16
        %v1749 = vrot.slane %v1747, 4
        %v1750 = vor.u32 %v1749, %v1745
        %v1751 = vrot.slane %v1750, 4
        %v1753 = vshll.u32 %v1507, 16
        %v1755 = vrot.slane %v1753, 5
        %v1756 = vsel %vm1516, %v1751, %v1755
        %v1758 = vshrl.u32 %v1470, 16
        %v1760 = vrot.slane %v1758, 4
        %v1761 = vshll.u32 %v1470, 16
        %v1763 = vrot.slane %v1761, 5
        %v1764 = vor.u32 %v1760, %v1763
        %v1765 = vrot.slane %v1764, 4
        %v1767 = vshll.u32 %v1471, 16
        %v1769 = vrot.slane %v1767, 5
        %v1770 = vsel %vm1516, %v1765, %v1769
        %v1771 = vshrl.u32 %v1471, 16
        %v1773 = vrot.slane %v1771, 4
        %v1774 = vor.u32 %v1773, %v1769
        %v1775 = vrot.slane %v1774, 4
        %v1777 = vshll.u32 %v1508, 16
        %v1779 = vrot.slane %v1777, 5
        %v1780 = vsel %vm1516, %v1775, %v1779
        %v1782 = vshrl.u32 %v1472, 16
        %v1784 = vrot.slane %v1782, 4
        %v1785 = vshll.u32 %v1472, 16
        %v1787 = vrot.slane %v1785, 5
        %v1788 = vor.u32 %v1784, %v1787
        %v1789 = vrot.slane %v1788, 4
        %v1791 = vshll.u32 %v1473, 16
        %v1793 = vrot.slane %v1791, 5
        %v1794 = vsel %vm1516, %v1789, %v1793
        %v1795 = vshrl.u32 %v1473, 16
        %v1797 = vrot.slane %v1795, 4
        %v1798 = vor.u32 %v1797, %v1793
        %v1799 = vrot.slane %v1798, 4
        %v1801 = vshll.u32 %v1509, 16
        %v1803 = vrot.slane %v1801, 5
        %v1804 = vsel %vm1516, %v1799, %v1803
        %v1806 = vshrl.u32 %v1474, 16
        %v1808 = vrot.slane %v1806, 4
        %v1809 = vshll.u32 %v1474, 16
        %v1811 = vrot.slane %v1809, 5
        %v1812 = vor.u32 %v1808, %v1811
        %v1813 = vrot.slane %v1812, 4
        %v1815 = vshll.u32 %v1475, 16
        %v1817 = vrot.slane %v1815, 5
        %v1818 = vsel %vm1516, %v1813, %v1817
        %v1819 = vshrl.u32 %v1475, 16
        %v1821 = vrot.slane %v1819, 4
        %v1822 = vor.u32 %v1821, %v1817
        %v1823 = vrot.slane %v1822, 4
        %v1825 = vshll.u32 %v1510, 16
        %v1827 = vrot.slane %v1825, 5
        %v1828 = vsel %vm1516, %v1823, %v1827
        %v1830 = vshrl.u32 %v1476, 16
        %v1832 = vrot.slane %v1830, 4
        %v1833 = vshll.u32 %v1476, 16
        %v1835 = vrot.slane %v1833, 5
        %v1836 = vor.u32 %v1832, %v1835
        %v1837 = vrot.slane %v1836, 4
        %v1839 = vshll.u32 %v1477, 16
        %v1841 = vrot.slane %v1839, 5
        %v1842 = vsel %vm1516, %v1837, %v1841
        %v1843 = vshrl.u32 %v1477, 16
        %v1845 = vrot.slane %v1843, 4
        %v1846 = vor.u32 %v1845, %v1841
        %v1847 = vrot.slane %v1846, 4
        %v1849 = vshll.u32 %v1511, 16
        %v1851 = vrot.slane %v1849, 5
        %v1852 = vsel %vm1516, %v1847, %v1851
        %v1854 = vshrl.u32 %v1478, 16
        %v1856 = vrot.slane %v1854, 4
        %v1857 = vshll.u32 %v1478, 16
        %v1859 = vrot.slane %v1857, 5
        %v1860 = vor.u32 %v1856, %v1859
        %v1861 = vrot.slane %v1860, 4
        %v1863 = vshll.u32 %v1479, 16
        %v1865 = vrot.slane %v1863, 5
        %v1866 = vsel %vm1516, %v1861, %v1865
        %v1867 = vshrl.u32 %v1479, 16
        %v1869 = vrot.slane %v1867, 4
        %v1870 = vor.u32 %v1869, %v1865
        %v1871 = vrot.slane %v1870, 4
        %v1873 = vshll.u32 %v1512, 16
        %v1875 = vrot.slane %v1873, 5
        %v1876 = vsel %vm1516, %v1871, %v1875
        %v1878 = vshrl.u32 %v1480, 16
        %v1880 = vrot.slane %v1878, 4
        %v1881 = vshll.u32 %v1480, 16
        %v1883 = vrot.slane %v1881, 5
        %v1884 = vor.u32 %v1880, %v1883
        %v1885 = vrot.slane %v1884, 4
        %v1887 = vshll.u32 %v1481, 16
        %v1889 = vrot.slane %v1887, 5
        %v1890 = vsel %vm1516, %v1885, %v1889
        %v1891 = vshrl.u32 %v1481, 16
        %v1893 = vrot.slane %v1891, 4
        %v1894 = vor.u32 %v1893, %v1889
        %v1895 = vrot.slane %v1894, 4
        %v1897 = vshll.u32 %v1513, 16
        %v1899 = vrot.slane %v1897, 5
        %v1900 = vsel %vm1516, %v1895, %v1899
        %s1901 = scalar_lea.vmem %s3, 64
        %v1902 = vld [vmem:[%s1901] sm:$0xf]
        %v1903 = vld [vmem:[%s1901 + $0x4] sm:$0xf]
        %v1904 = vld [vmem:[%s1901 + $0x8] sm:$0xf]
        %v1905 = vld [vmem:[%s1901 + $0xc] sm:$0xf]
        %v1906 = vld [vmem:[%s1901 + $0x10] sm:$0xf]
        %v1907 = vld [vmem:[%s1901 + $0x14] sm:$0xf]
        %v1908 = vld [vmem:[%s1901 + $0x18] sm:$0xf]
        %v1909 = vld [vmem:[%s1901 + $0x1c] sm:$0xf]
        %v1910 = vld [vmem:[%s1901 + $0x20] sm:$0xf]
        %v1911 = vld [vmem:[%s1901 + $0x24] sm:$0xf]
        %v1912 = vld [vmem:[%s1901 + $0x28] sm:$0xf]
        %v1913 = vld [vmem:[%s1901 + $0x2c] sm:$0xf]
        %v1914 = vld [vmem:[%s1901 + $0x30] sm:$0xf]
        %v1915 = vld [vmem:[%s1901 + $0x34] sm:$0xf]
        %v1916 = vld [vmem:[%s1901 + $0x38] sm:$0xf]
        %v1917 = vld [vmem:[%s1901 + $0x3c] sm:$0xf]
        %v1918 = vunpack.c.l.b16 %v1530
        %v1919 = vunpack.c.l.b16 %v1540
        %v1920 = vunpack.c.l.b16 %v1554
        %v1921 = vunpack.c.l.b16 %v1564
        %v1922 = vunpack.c.l.b16 %v1578
        %v1923 = vunpack.c.l.b16 %v1588
        %v1924 = vunpack.c.l.b16 %v1602
        %v1925 = vunpack.c.l.b16 %v1612
        %v1926 = vunpack.c.l.b16 %v1626
        %v1927 = vunpack.c.l.b16 %v1636
        %v1928 = vunpack.c.l.b16 %v1650
        %v1929 = vunpack.c.l.b16 %v1660
        %v1930 = vunpack.c.l.b16 %v1674
        %v1931 = vunpack.c.l.b16 %v1684
        %v1932 = vunpack.c.l.b16 %v1698
        %v1933 = vunpack.c.l.b16 %v1708
        %v1934 = vunpack.c.l.b16 %v1722
        %v1935 = vunpack.c.l.b16 %v1732
        %v1936 = vunpack.c.l.b16 %v1746
        %v1937 = vunpack.c.l.b16 %v1756
        %v1938 = vunpack.c.l.b16 %v1770
        %v1939 = vunpack.c.l.b16 %v1780
        %v1940 = vunpack.c.l.b16 %v1794
        %v1941 = vunpack.c.l.b16 %v1804
        %v1942 = vunpack.c.l.b16 %v1818
        %v1943 = vunpack.c.l.b16 %v1828
        %v1944 = vunpack.c.l.b16 %v1842
        %v1945 = vunpack.c.l.b16 %v1852
        %v1946 = vunpack.c.l.b16 %v1866
        %v1947 = vunpack.c.l.b16 %v1876
        %v1948 = vunpack.c.l.b16 %v1890
        %v1949 = vunpack.c.l.b16 %v1900
        %v1950 = vpack.c.b16 %v1919, %v1918
        %v1951 = vpack.c.b16 %v1921, %v1920
        %v1952 = vpack.c.b16 %v1923, %v1922
        %v1953 = vpack.c.b16 %v1925, %v1924
        %v1954 = vpack.c.b16 %v1927, %v1926
        %v1955 = vpack.c.b16 %v1929, %v1928
        %v1956 = vpack.c.b16 %v1931, %v1930
        %v1957 = vpack.c.b16 %v1933, %v1932
        %v1958 = vpack.c.b16 %v1935, %v1934
        %v1959 = vpack.c.b16 %v1937, %v1936
        %v1960 = vpack.c.b16 %v1939, %v1938
        %v1961 = vpack.c.b16 %v1941, %v1940
        %v1962 = vpack.c.b16 %v1943, %v1942
        %v1963 = vpack.c.b16 %v1945, %v1944
        %v1964 = vpack.c.b16 %v1947, %v1946
        %v1965 = vpack.c.b16 %v1949, %v1948
        %v1998 = vunpack.c.l.b16 %v1902
        %v1999 = vunpack.c.l.b16 %v1903
        %v2000 = vunpack.c.l.b16 %v1904
        %v2001 = vunpack.c.l.b16 %v1905
        %v2002 = vunpack.c.l.b16 %v1906
        %v2003 = vunpack.c.l.b16 %v1907
        %v2004 = vunpack.c.l.b16 %v1908
        %v2005 = vunpack.c.l.b16 %v1909
        %v2006 = vunpack.c.l.b16 %v1910
        %v2007 = vunpack.c.l.b16 %v1911
        %v2008 = vunpack.c.l.b16 %v1912
        %v2009 = vunpack.c.l.b16 %v1913
        %v2010 = vunpack.c.l.b16 %v1914
        %v2011 = vunpack.c.l.b16 %v1915
        %v2012 = vunpack.c.l.b16 %v1916
        %v2013 = vunpack.c.l.b16 %v1917
        %v2014 = vpack.c.b16 %v1999, %v1998
        %v2015 = vpack.c.b16 %v2001, %v2000
        %v2016 = vpack.c.b16 %v2003, %v2002
        %v2017 = vpack.c.b16 %v2005, %v2004
        %v2018 = vpack.c.b16 %v2007, %v2006
        %v2019 = vpack.c.b16 %v2009, %v2008
        %v2020 = vpack.c.b16 %v2011, %v2010
        %v2021 = vpack.c.b16 %v2013, %v2012
        %2030 = vmatprep.subr.bf16.mxu0 0
        %2031 = vmatpush1.bf16.msra.mxu0 %v2021
        %2032 = vmatprep.subr.bf16.mxu0 0
        %2033 = vmatpush1.bf16.msra.mxu0 %v2020
        %2034 = vmatprep.subr.bf16.mxu0 0
        %2035 = vmatpush1.bf16.msra.mxu0 %v2019
        %2036 = vmatprep.subr.bf16.mxu0 0
        %2037 = vmatpush1.bf16.msra.mxu0 %v2018
        %2038 = vmatprep.subr.bf16.mxu0 0
        %2039 = vmatpush1.bf16.msra.mxu0 %v2017
        %2040 = vmatprep.subr.bf16.mxu0 0
        %2041 = vmatpush1.bf16.msra.mxu0 %v2016
        %2042 = vmatprep.subr.bf16.mxu0 0
        %2043 = vmatpush1.bf16.msra.mxu0 %v2015
        %2044 = vmatprep.subr.bf16.mxu0 0
        %2045 = vmatpush1.bf16.msra.mxu0 %v2014
        %2046 = vmatprep.subr.bf16.mxu0 0
        %2047 = vmatpush2.bf16.msra.mxu0 0
        %2048 = vmatprep.subr.bf16.mxu0 0
        %2049 = vmatpush2.bf16.msra.mxu0 0
        %2050 = vmatprep.subr.bf16.mxu0 0
        %2051 = vmatpush2.bf16.msra.mxu0 0
        %2052 = vmatprep.subr.bf16.mxu0 0
        %2053 = vmatpush2.bf16.msra.mxu0 0
        %2054 = vmatprep.subr.bf16.mxu0 0
        %2055 = vmatpush2.bf16.msra.mxu0 0
        %2056 = vmatprep.subr.bf16.mxu0 0
        %2057 = vmatpush2.bf16.msra.mxu0 0
        %2058 = vmatprep.subr.bf16.mxu0 0
        %2059 = vmatpush2.bf16.msra.mxu0 0
        %2060 = vmatprep.subr.bf16.mxu0 0
        %2061 = vmatpush2.bf16.msra.mxu0 0
        %2062 = vmatprep.mubr.bf16.mxu0 0
        %2063 = vmatmul.mubr.bf16.gmra.mxu0 %v1950
        %v2064 = vpop.f32.mrf.mxu0
        %v2065 = vadd.f32 0.0, %v2064
        %v2066 = vpop.f32.mrf.mxu0
        %v2067 = vpop.f32.mrf.mxu0
        %v2068 = vadd.f32 0.0, %v2067
        %v2069 = vpop.f32.mrf.mxu0
        %2070 = vmatprep.mubr.bf16.mxu0 0
        %2071 = vmatmul.mubr.bf16.gmra.mxu0 %v1951
        %v2072 = vpop.f32.mrf.mxu0
        %v2073 = vadd.f32 0.0, %v2072
        %v2074 = vpop.f32.mrf.mxu0
        %v2075 = vpop.f32.mrf.mxu0
        %v2076 = vadd.f32 0.0, %v2075
        %v2077 = vpop.f32.mrf.mxu0
        %2078 = vmatprep.mubr.bf16.mxu0 0
        %2079 = vmatmul.mubr.bf16.gmra.mxu0 %v1952
        %v2080 = vpop.f32.mrf.mxu0
        %v2081 = vadd.f32 0.0, %v2080
        %v2082 = vpop.f32.mrf.mxu0
        %v2083 = vpop.f32.mrf.mxu0
        %v2084 = vadd.f32 0.0, %v2083
        %v2085 = vpop.f32.mrf.mxu0
        %2086 = vmatprep.mubr.bf16.mxu0 0
        %2087 = vmatmul.mubr.bf16.gmra.mxu0 %v1953
        %v2088 = vpop.f32.mrf.mxu0
        %v2089 = vadd.f32 0.0, %v2088
        %v2090 = vpop.f32.mrf.mxu0
        %v2091 = vpop.f32.mrf.mxu0
        %v2092 = vadd.f32 0.0, %v2091
        %v2093 = vpop.f32.mrf.mxu0
        %2094 = vmatprep.mubr.bf16.mxu0 0
        %2095 = vmatmul.mubr.bf16.gmra.mxu0 %v1954
        %v2096 = vpop.f32.mrf.mxu0
        %v2097 = vadd.f32 0.0, %v2096
        %v2098 = vpop.f32.mrf.mxu0
        %v2099 = vpop.f32.mrf.mxu0
        %v2100 = vadd.f32 0.0, %v2099
        %v2101 = vpop.f32.mrf.mxu0
        %2102 = vmatprep.mubr.bf16.mxu0 0
        %2103 = vmatmul.mubr.bf16.gmra.mxu0 %v1955
        %v2104 = vpop.f32.mrf.mxu0
        %v2105 = vadd.f32 0.0, %v2104
        %v2106 = vpop.f32.mrf.mxu0
        %v2107 = vpop.f32.mrf.mxu0
        %v2108 = vadd.f32 0.0, %v2107
        %v2109 = vpop.f32.mrf.mxu0
        %2110 = vmatprep.mubr.bf16.mxu0 0
        %2111 = vmatmul.mubr.bf16.gmra.mxu0 %v1956
        %v2112 = vpop.f32.mrf.mxu0
        %v2113 = vadd.f32 0.0, %v2112
        %v2114 = vpop.f32.mrf.mxu0
        %v2115 = vpop.f32.mrf.mxu0
        %v2116 = vadd.f32 0.0, %v2115
        %v2117 = vpop.f32.mrf.mxu0
        %2118 = vmatprep.mubr.bf16.mxu0 0
        %2119 = vmatmul.mubr.bf16.gmra.mxu0 %v1957
        %v2120 = vpop.f32.mrf.mxu0
        %v2121 = vadd.f32 0.0, %v2120
        %v2122 = vpop.f32.mrf.mxu0
        %v2123 = vpop.f32.mrf.mxu0
        %v2124 = vadd.f32 0.0, %v2123
        %v2125 = vpop.f32.mrf.mxu0
        %2126 = vmatprep.mubr.bf16.mxu0 0
        %2127 = vmatmul.mubr.bf16.gmra.mxu0 %v1958
        %v2128 = vpop.f32.mrf.mxu0
        %v2129 = vadd.f32 0.0, %v2128
        %v2130 = vpop.f32.mrf.mxu0
        %v2131 = vpop.f32.mrf.mxu0
        %v2132 = vadd.f32 0.0, %v2131
        %v2133 = vpop.f32.mrf.mxu0
        %2134 = vmatprep.mubr.bf16.mxu0 0
        %2135 = vmatmul.mubr.bf16.gmra.mxu0 %v1959
        %v2136 = vpop.f32.mrf.mxu0
        %v2137 = vadd.f32 0.0, %v2136
        %v2138 = vpop.f32.mrf.mxu0
        %v2139 = vpop.f32.mrf.mxu0
        %v2140 = vadd.f32 0.0, %v2139
        %v2141 = vpop.f32.mrf.mxu0
        %2142 = vmatprep.mubr.bf16.mxu0 0
        %2143 = vmatmul.mubr.bf16.gmra.mxu0 %v1960
        %v2144 = vpop.f32.mrf.mxu0
        %v2145 = vadd.f32 0.0, %v2144
        %v2146 = vpop.f32.mrf.mxu0
        %v2147 = vpop.f32.mrf.mxu0
        %v2148 = vadd.f32 0.0, %v2147
        %v2149 = vpop.f32.mrf.mxu0
        %2150 = vmatprep.mubr.bf16.mxu0 0
        %2151 = vmatmul.mubr.bf16.gmra.mxu0 %v1961
        %v2152 = vpop.f32.mrf.mxu0
        %v2153 = vadd.f32 0.0, %v2152
        %v2154 = vpop.f32.mrf.mxu0
        %v2155 = vpop.f32.mrf.mxu0
        %v2156 = vadd.f32 0.0, %v2155
        %v2157 = vpop.f32.mrf.mxu0
        %2158 = vmatprep.mubr.bf16.mxu0 0
        %2159 = vmatmul.mubr.bf16.gmra.mxu0 %v1962
        %v2160 = vpop.f32.mrf.mxu0
        %v2161 = vadd.f32 0.0, %v2160
        %v2162 = vpop.f32.mrf.mxu0
        %v2163 = vpop.f32.mrf.mxu0
        %v2164 = vadd.f32 0.0, %v2163
        %v2165 = vpop.f32.mrf.mxu0
        %2166 = vmatprep.mubr.bf16.mxu0 0
        %2167 = vmatmul.mubr.bf16.gmra.mxu0 %v1963
        %v2168 = vpop.f32.mrf.mxu0
        %v2169 = vadd.f32 0.0, %v2168
        %v2170 = vpop.f32.mrf.mxu0
        %v2171 = vpop.f32.mrf.mxu0
        %v2172 = vadd.f32 0.0, %v2171
        %v2173 = vpop.f32.mrf.mxu0
        %2174 = vmatprep.mubr.bf16.mxu0 0
        %2175 = vmatmul.mubr.bf16.gmra.mxu0 %v1964
        %v2176 = vpop.f32.mrf.mxu0
        %v2177 = vadd.f32 0.0, %v2176
        %v2178 = vpop.f32.mrf.mxu0
        %v2179 = vpop.f32.mrf.mxu0
        %v2180 = vadd.f32 0.0, %v2179
        %v2181 = vpop.f32.mrf.mxu0
        %2182 = vmatprep.mubr.bf16.mxu0 0
        %2183 = vmatmul.mubr.bf16.gmra.mxu0 %v1965
        %v2184 = vpop.f32.mrf.mxu0
        %v2185 = vadd.f32 0.0, %v2184
        %v2186 = vpop.f32.mrf.mxu0
        %v2187 = vpop.f32.mrf.mxu0
        %v2188 = vadd.f32 0.0, %v2187
        %v2189 = vpop.f32.mrf.mxu0
        %2190 = vdwg.mxu0
        %v2223 = vunpack.c.l.b16 %v1450
        %v2224 = vunpack.c.l.b16 %v1451
        %v2225 = vunpack.c.l.b16 %v1452
        %v2226 = vunpack.c.l.b16 %v1453
        %v2227 = vunpack.c.l.b16 %v1454
        %v2228 = vunpack.c.l.b16 %v1455
        %v2229 = vunpack.c.l.b16 %v1456
        %v2230 = vunpack.c.l.b16 %v1457
        %v2231 = vunpack.c.l.b16 %v1458
        %v2232 = vunpack.c.l.b16 %v1459
        %v2233 = vunpack.c.l.b16 %v1460
        %v2234 = vunpack.c.l.b16 %v1461
        %v2235 = vunpack.c.l.b16 %v1462
        %v2236 = vunpack.c.l.b16 %v1463
        %v2237 = vunpack.c.l.b16 %v1464
        %v2238 = vunpack.c.l.b16 %v1465
        %v2239 = vunpack.c.l.b16 %v1466
        %v2240 = vunpack.c.l.b16 %v1467
        %v2241 = vunpack.c.l.b16 %v1468
        %v2242 = vunpack.c.l.b16 %v1469
        %v2243 = vunpack.c.l.b16 %v1470
        %v2244 = vunpack.c.l.b16 %v1471
        %v2245 = vunpack.c.l.b16 %v1472
        %v2246 = vunpack.c.l.b16 %v1473
        %v2247 = vunpack.c.l.b16 %v1474
        %v2248 = vunpack.c.l.b16 %v1475
        %v2249 = vunpack.c.l.b16 %v1476
        %v2250 = vunpack.c.l.b16 %v1477
        %v2251 = vunpack.c.l.b16 %v1478
        %v2252 = vunpack.c.l.b16 %v1479
        %v2253 = vunpack.c.l.b16 %v1480
        %v2254 = vunpack.c.l.b16 %v1481
        %v2255 = vpack.c.b16 %v2224, %v2223
        %v2256 = vpack.c.b16 %v2226, %v2225
        %v2257 = vpack.c.b16 %v2228, %v2227
        %v2258 = vpack.c.b16 %v2230, %v2229
        %v2259 = vpack.c.b16 %v2232, %v2231
        %v2260 = vpack.c.b16 %v2234, %v2233
        %v2261 = vpack.c.b16 %v2236, %v2235
        %v2262 = vpack.c.b16 %v2238, %v2237
        %v2263 = vpack.c.b16 %v2240, %v2239
        %v2264 = vpack.c.b16 %v2242, %v2241
        %v2265 = vpack.c.b16 %v2244, %v2243
        %v2266 = vpack.c.b16 %v2246, %v2245
        %v2267 = vpack.c.b16 %v2248, %v2247
        %v2268 = vpack.c.b16 %v2250, %v2249
        %v2269 = vpack.c.b16 %v2252, %v2251
        %v2270 = vpack.c.b16 %v2254, %v2253
        %v2303 = vunpack.c.l.b16 %v1482
        %v2304 = vunpack.c.l.b16 %v1483
        %v2305 = vunpack.c.l.b16 %v1484
        %v2306 = vunpack.c.l.b16 %v1485
        %v2307 = vunpack.c.l.b16 %v1486
        %v2308 = vunpack.c.l.b16 %v1487
        %v2309 = vunpack.c.l.b16 %v1488
        %v2310 = vunpack.c.l.b16 %v1489
        %v2311 = vunpack.c.l.b16 %v1490
        %v2312 = vunpack.c.l.b16 %v1491
        %v2313 = vunpack.c.l.b16 %v1492
        %v2314 = vunpack.c.l.b16 %v1493
        %v2315 = vunpack.c.l.b16 %v1494
        %v2316 = vunpack.c.l.b16 %v1495
        %v2317 = vunpack.c.l.b16 %v1496
        %v2318 = vunpack.c.l.b16 %v1497
        %v2319 = vpack.c.b16 %v2304, %v2303
        %v2320 = vpack.c.b16 %v2306, %v2305
        %v2321 = vpack.c.b16 %v2308, %v2307
        %v2322 = vpack.c.b16 %v2310, %v2309
        %v2323 = vpack.c.b16 %v2312, %v2311
        %v2324 = vpack.c.b16 %v2314, %v2313
        %v2325 = vpack.c.b16 %v2316, %v2315
        %v2326 = vpack.c.b16 %v2318, %v2317
        %2335 = vmatprep.subr.bf16.mxu0 0
        %2336 = vmatpush1.bf16.msra.mxu0 %v2326
        %2337 = vmatprep.subr.bf16.mxu0 0
        %2338 = vmatpush1.bf16.msra.mxu0 %v2325
        %2339 = vmatprep.subr.bf16.mxu0 0
        %2340 = vmatpush1.bf16.msra.mxu0 %v2324
        %2341 = vmatprep.subr.bf16.mxu0 0
        %2342 = vmatpush1.bf16.msra.mxu0 %v2323
        %2343 = vmatprep.subr.bf16.mxu0 0
        %2344 = vmatpush1.bf16.msra.mxu0 %v2322
        %2345 = vmatprep.subr.bf16.mxu0 0
        %2346 = vmatpush1.bf16.msra.mxu0 %v2321
        %2347 = vmatprep.subr.bf16.mxu0 0
        %2348 = vmatpush1.bf16.msra.mxu0 %v2320
        %2349 = vmatprep.subr.bf16.mxu0 0
        %2350 = vmatpush1.bf16.msra.mxu0 %v2319
        %2351 = vmatprep.subr.bf16.mxu0 0
        %2352 = vmatpush2.bf16.msra.mxu0 0
        %2353 = vmatprep.subr.bf16.mxu0 0
        %2354 = vmatpush2.bf16.msra.mxu0 0
        %2355 = vmatprep.subr.bf16.mxu0 0
        %2356 = vmatpush2.bf16.msra.mxu0 0
        %2357 = vmatprep.subr.bf16.mxu0 0
        %2358 = vmatpush2.bf16.msra.mxu0 0
        %2359 = vmatprep.subr.bf16.mxu0 0
        %2360 = vmatpush2.bf16.msra.mxu0 0
        %2361 = vmatprep.subr.bf16.mxu0 0
        %2362 = vmatpush2.bf16.msra.mxu0 0
        %2363 = vmatprep.subr.bf16.mxu0 0
        %2364 = vmatpush2.bf16.msra.mxu0 0
        %2365 = vmatprep.subr.bf16.mxu0 0
        %2366 = vmatpush2.bf16.msra.mxu0 0
        %2367 = vmatprep.mubr.bf16.mxu0 0
        %2368 = vmatmul.mubr.bf16.gmra.mxu0 %v2255
        %v2369 = vpop.f32.mrf.mxu0
        %v2370 = vadd.f32 %v2065, %v2369
        %v2371 = vpop.f32.mrf.mxu0
        %v2372 = vpop.f32.mrf.mxu0
        %v2373 = vadd.f32 %v2068, %v2372
        %v2374 = vpop.f32.mrf.mxu0
        %2375 = vmatprep.mubr.bf16.mxu0 0
        %2376 = vmatmul.mubr.bf16.gmra.mxu0 %v2256
        %v2377 = vpop.f32.mrf.mxu0
        %v2378 = vadd.f32 %v2073, %v2377
        %v2379 = vpop.f32.mrf.mxu0
        %v2380 = vpop.f32.mrf.mxu0
        %v2381 = vadd.f32 %v2076, %v2380
        %v2382 = vpop.f32.mrf.mxu0
        %2383 = vmatprep.mubr.bf16.mxu0 0
        %2384 = vmatmul.mubr.bf16.gmra.mxu0 %v2257
        %v2385 = vpop.f32.mrf.mxu0
        %v2386 = vadd.f32 %v2081, %v2385
        %v2387 = vpop.f32.mrf.mxu0
        %v2388 = vpop.f32.mrf.mxu0
        %v2389 = vadd.f32 %v2084, %v2388
        %v2390 = vpop.f32.mrf.mxu0
        %2391 = vmatprep.mubr.bf16.mxu0 0
        %2392 = vmatmul.mubr.bf16.gmra.mxu0 %v2258
        %v2393 = vpop.f32.mrf.mxu0
        %v2394 = vadd.f32 %v2089, %v2393
        %v2395 = vpop.f32.mrf.mxu0
        %v2396 = vpop.f32.mrf.mxu0
        %v2397 = vadd.f32 %v2092, %v2396
        %v2398 = vpop.f32.mrf.mxu0
        %2399 = vmatprep.mubr.bf16.mxu0 0
        %2400 = vmatmul.mubr.bf16.gmra.mxu0 %v2259
        %v2401 = vpop.f32.mrf.mxu0
        %v2402 = vadd.f32 %v2097, %v2401
        %v2403 = vpop.f32.mrf.mxu0
        %v2404 = vpop.f32.mrf.mxu0
        %v2405 = vadd.f32 %v2100, %v2404
        %v2406 = vpop.f32.mrf.mxu0
        %2407 = vmatprep.mubr.bf16.mxu0 0
        %2408 = vmatmul.mubr.bf16.gmra.mxu0 %v2260
        %v2409 = vpop.f32.mrf.mxu0
        %v2410 = vadd.f32 %v2105, %v2409
        %v2411 = vpop.f32.mrf.mxu0
        %v2412 = vpop.f32.mrf.mxu0
        %v2413 = vadd.f32 %v2108, %v2412
        %v2414 = vpop.f32.mrf.mxu0
        %2415 = vmatprep.mubr.bf16.mxu0 0
        %2416 = vmatmul.mubr.bf16.gmra.mxu0 %v2261
        %v2417 = vpop.f32.mrf.mxu0
        %v2418 = vadd.f32 %v2113, %v2417
        %v2419 = vpop.f32.mrf.mxu0
        %v2420 = vpop.f32.mrf.mxu0
        %v2421 = vadd.f32 %v2116, %v2420
        %v2422 = vpop.f32.mrf.mxu0
        %2423 = vmatprep.mubr.bf16.mxu0 0
        %2424 = vmatmul.mubr.bf16.gmra.mxu0 %v2262
        %v2425 = vpop.f32.mrf.mxu0
        %v2426 = vadd.f32 %v2121, %v2425
        %v2427 = vpop.f32.mrf.mxu0
        %v2428 = vpop.f32.mrf.mxu0
        %v2429 = vadd.f32 %v2124, %v2428
        %v2430 = vpop.f32.mrf.mxu0
        %2431 = vmatprep.mubr.bf16.mxu0 0
        %2432 = vmatmul.mubr.bf16.gmra.mxu0 %v2263
        %v2433 = vpop.f32.mrf.mxu0
        %v2434 = vadd.f32 %v2129, %v2433
        %v2435 = vpop.f32.mrf.mxu0
        %v2436 = vpop.f32.mrf.mxu0
        %v2437 = vadd.f32 %v2132, %v2436
        %v2438 = vpop.f32.mrf.mxu0
        %2439 = vmatprep.mubr.bf16.mxu0 0
        %2440 = vmatmul.mubr.bf16.gmra.mxu0 %v2264
        %v2441 = vpop.f32.mrf.mxu0
        %v2442 = vadd.f32 %v2137, %v2441
        %v2443 = vpop.f32.mrf.mxu0
        %v2444 = vpop.f32.mrf.mxu0
        %v2445 = vadd.f32 %v2140, %v2444
        %v2446 = vpop.f32.mrf.mxu0
        %2447 = vmatprep.mubr.bf16.mxu0 0
        %2448 = vmatmul.mubr.bf16.gmra.mxu0 %v2265
        %v2449 = vpop.f32.mrf.mxu0
        %v2450 = vadd.f32 %v2145, %v2449
        %v2451 = vpop.f32.mrf.mxu0
        %v2452 = vpop.f32.mrf.mxu0
        %v2453 = vadd.f32 %v2148, %v2452
        %v2454 = vpop.f32.mrf.mxu0
        %2455 = vmatprep.mubr.bf16.mxu0 0
        %2456 = vmatmul.mubr.bf16.gmra.mxu0 %v2266
        %v2457 = vpop.f32.mrf.mxu0
        %v2458 = vadd.f32 %v2153, %v2457
        %v2459 = vpop.f32.mrf.mxu0
        %v2460 = vpop.f32.mrf.mxu0
        %v2461 = vadd.f32 %v2156, %v2460
        %v2462 = vpop.f32.mrf.mxu0
        %2463 = vmatprep.mubr.bf16.mxu0 0
        %2464 = vmatmul.mubr.bf16.gmra.mxu0 %v2267
        %v2465 = vpop.f32.mrf.mxu0
        %v2466 = vadd.f32 %v2161, %v2465
        %v2467 = vpop.f32.mrf.mxu0
        %v2468 = vpop.f32.mrf.mxu0
        %v2469 = vadd.f32 %v2164, %v2468
        %v2470 = vpop.f32.mrf.mxu0
        %2471 = vmatprep.mubr.bf16.mxu0 0
        %2472 = vmatmul.mubr.bf16.gmra.mxu0 %v2268
        %v2473 = vpop.f32.mrf.mxu0
        %v2474 = vadd.f32 %v2169, %v2473
        %v2475 = vpop.f32.mrf.mxu0
        %v2476 = vpop.f32.mrf.mxu0
        %v2477 = vadd.f32 %v2172, %v2476
        %v2478 = vpop.f32.mrf.mxu0
        %2479 = vmatprep.mubr.bf16.mxu0 0
        %2480 = vmatmul.mubr.bf16.gmra.mxu0 %v2269
        %v2481 = vpop.f32.mrf.mxu0
        %v2482 = vadd.f32 %v2177, %v2481
        %v2483 = vpop.f32.mrf.mxu0
        %v2484 = vpop.f32.mrf.mxu0
        %v2485 = vadd.f32 %v2180, %v2484
        %v2486 = vpop.f32.mrf.mxu0
        %2487 = vmatprep.mubr.bf16.mxu0 0
        %2488 = vmatmul.mubr.bf16.gmra.mxu0 %v2270
        %v2489 = vpop.f32.mrf.mxu0
        %v2490 = vadd.f32 %v2185, %v2489
        %v2491 = vpop.f32.mrf.mxu0
        %v2492 = vpop.f32.mrf.mxu0
        %v2493 = vadd.f32 %v2188, %v2492
        %v2494 = vpop.f32.mrf.mxu0
        %2495 = vdwg.mxu0
        %v2496 = vld [vmem:[#allocation2] sm:$0xe]
        %v2497 = vld [vmem:[#allocation2 + $0xc] sm:$0xe]
        %v2498 = vld [vmem:[#allocation2 + $0x18] sm:$0xe]
        %v2499 = vld [vmem:[#allocation2 + $0x24] sm:$0xe]
        %v2500 = vld [vmem:[#allocation2 + $0x30] sm:$0xe]
        %v2501 = vld [vmem:[#allocation2 + $0x3c] sm:$0xe]
        %v2502 = vld [vmem:[#allocation2 + $0x48] sm:$0xe]
        %v2503 = vld [vmem:[#allocation2 + $0x54] sm:$0xe]
        %v2504 = vld [vmem:[#allocation2 + $0x60] sm:$0xe]
        %v2505 = vld [vmem:[#allocation2 + $0x6c] sm:$0xe]
        %v2506 = vld [vmem:[#allocation2 + $0x78] sm:$0xe]
        %v2507 = vld [vmem:[#allocation2 + $0x84] sm:$0xe]
        %v2508 = vld [vmem:[#allocation2 + $0x90] sm:$0xe]
        %v2509 = vld [vmem:[#allocation2 + $0x9c] sm:$0xe]
        %v2510 = vld [vmem:[#allocation2 + $0xa8] sm:$0xe]
        %v2511 = vld [vmem:[#allocation2 + $0xb4] sm:$0xe]
        %vm2544 = vcmask 1042432
        %vm2545 = vcmask 1046532
        %vm2546 = vmor %vm2544, %vm2545
        %v2547 = vrot.slane %v2496, 5
        %v2548 = vrot.slane %v2547, 4
        %v2549 = vrot.slane %v1451, 5
        %v2550 = vsel %vm2546, %v2548, %v2549
        %v2551 = vrot.slane %v2549, 4
        %v2552 = vrot.slane %v1498, 5
        %v2553 = vsel %vm2546, %v2551, %v2552
        %v2554 = vrot.slane %v2497, 5
        %v2555 = vrot.slane %v2554, 4
        %v2556 = vrot.slane %v1453, 5
        %v2557 = vsel %vm2546, %v2555, %v2556
        %v2558 = vrot.slane %v2556, 4
        %v2559 = vrot.slane %v1499, 5
        %v2560 = vsel %vm2546, %v2558, %v2559
        %v2561 = vrot.slane %v2498, 5
        %v2562 = vrot.slane %v2561, 4
        %v2563 = vrot.slane %v1455, 5
        %v2564 = vsel %vm2546, %v2562, %v2563
        %v2565 = vrot.slane %v2563, 4
        %v2566 = vrot.slane %v1500, 5
        %v2567 = vsel %vm2546, %v2565, %v2566
        %v2568 = vrot.slane %v2499, 5
        %v2569 = vrot.slane %v2568, 4
        %v2570 = vrot.slane %v1457, 5
        %v2571 = vsel %vm2546, %v2569, %v2570
        %v2572 = vrot.slane %v2570, 4
        %v2573 = vrot.slane %v1501, 5
        %v2574 = vsel %vm2546, %v2572, %v2573
        %v2575 = vrot.slane %v2500, 5
        %v2576 = vrot.slane %v2575, 4
        %v2577 = vrot.slane %v1459, 5
        %v2578 = vsel %vm2546, %v2576, %v2577
        %v2579 = vrot.slane %v2577, 4
        %v2580 = vrot.slane %v1502, 5
        %v2581 = vsel %vm2546, %v2579, %v2580
        %v2582 = vrot.slane %v2501, 5
        %v2583 = vrot.slane %v2582, 4
        %v2584 = vrot.slane %v1461, 5
        %v2585 = vsel %vm2546, %v2583, %v2584
        %v2586 = vrot.slane %v2584, 4
        %v2587 = vrot.slane %v1503, 5
        %v2588 = vsel %vm2546, %v2586, %v2587
        %v2589 = vrot.slane %v2502, 5
        %v2590 = vrot.slane %v2589, 4
        %v2591 = vrot.slane %v1463, 5
        %v2592 = vsel %vm2546, %v2590, %v2591
        %v2593 = vrot.slane %v2591, 4
        %v2594 = vrot.slane %v1504, 5
        %v2595 = vsel %vm2546, %v2593, %v2594
        %v2596 = vrot.slane %v2503, 5
        %v2597 = vrot.slane %v2596, 4
        %v2598 = vrot.slane %v1465, 5
        %v2599 = vsel %vm2546, %v2597, %v2598
        %v2600 = vrot.slane %v2598, 4
        %v2601 = vrot.slane %v1505, 5
        %v2602 = vsel %vm2546, %v2600, %v2601
        %v2603 = vrot.slane %v2504, 5
        %v2604 = vrot.slane %v2603, 4
        %v2605 = vrot.slane %v1467, 5
        %v2606 = vsel %vm2546, %v2604, %v2605
        %v2607 = vrot.slane %v2605, 4
        %v2608 = vrot.slane %v1506, 5
        %v2609 = vsel %vm2546, %v2607, %v2608
        %v2610 = vrot.slane %v2505, 5
        %v2611 = vrot.slane %v2610, 4
        %v2612 = vrot.slane %v1469, 5
        %v2613 = vsel %vm2546, %v2611, %v2612
        %v2614 = vrot.slane %v2612, 4
        %v2615 = vrot.slane %v1507, 5
        %v2616 = vsel %vm2546, %v2614, %v2615
        %v2617 = vrot.slane %v2506, 5
        %v2618 = vrot.slane %v2617, 4
        %v2619 = vrot.slane %v1471, 5
        %v2620 = vsel %vm2546, %v2618, %v2619
        %v2621 = vrot.slane %v2619, 4
        %v2622 = vrot.slane %v1508, 5
        %v2623 = vsel %vm2546, %v2621, %v2622
        %v2624 = vrot.slane %v2507, 5
        %v2625 = vrot.slane %v2624, 4
        %v2626 = vrot.slane %v1473, 5
        %v2627 = vsel %vm2546, %v2625, %v2626
        %v2628 = vrot.slane %v2626, 4
        %v2629 = vrot.slane %v1509, 5
        %v2630 = vsel %vm2546, %v2628, %v2629
        %v2631 = vrot.slane %v2508, 5
        %v2632 = vrot.slane %v2631, 4
        %v2633 = vrot.slane %v1475, 5
        %v2634 = vsel %vm2546, %v2632, %v2633
        %v2635 = vrot.slane %v2633, 4
        %v2636 = vrot.slane %v1510, 5
        %v2637 = vsel %vm2546, %v2635, %v2636
        %v2638 = vrot.slane %v2509, 5
        %v2639 = vrot.slane %v2638, 4
        %v2640 = vrot.slane %v1477, 5
        %v2641 = vsel %vm2546, %v2639, %v2640
        %v2642 = vrot.slane %v2640, 4
        %v2643 = vrot.slane %v1511, 5
        %v2644 = vsel %vm2546, %v2642, %v2643
        %v2645 = vrot.slane %v2510, 5
        %v2646 = vrot.slane %v2645, 4
        %v2647 = vrot.slane %v1479, 5
        %v2648 = vsel %vm2546, %v2646, %v2647
        %v2649 = vrot.slane %v2647, 4
        %v2650 = vrot.slane %v1512, 5
        %v2651 = vsel %vm2546, %v2649, %v2650
        %v2652 = vrot.slane %v2511, 5
        %v2653 = vrot.slane %v2652, 4
        %v2654 = vrot.slane %v1481, 5
        %v2655 = vsel %vm2546, %v2653, %v2654
        %v2656 = vrot.slane %v2654, 4
        %v2657 = vrot.slane %v1513, 5
        %v2658 = vsel %vm2546, %v2656, %v2657
        %s2659 = scalar_lea.vmem %s3, 128
        %v2660 = vld [vmem:[%s2659] sm:$0xf]
        %v2661 = vld [vmem:[%s2659 + $0x4] sm:$0xf]
        %v2662 = vld [vmem:[%s2659 + $0x8] sm:$0xf]
        %v2663 = vld [vmem:[%s2659 + $0xc] sm:$0xf]
        %v2664 = vld [vmem:[%s2659 + $0x10] sm:$0xf]
        %v2665 = vld [vmem:[%s2659 + $0x14] sm:$0xf]
        %v2666 = vld [vmem:[%s2659 + $0x18] sm:$0xf]
        %v2667 = vld [vmem:[%s2659 + $0x1c] sm:$0xf]
        %v2668 = vld [vmem:[%s2659 + $0x20] sm:$0xf]
        %v2669 = vld [vmem:[%s2659 + $0x24] sm:$0xf]
        %v2670 = vld [vmem:[%s2659 + $0x28] sm:$0xf]
        %v2671 = vld [vmem:[%s2659 + $0x2c] sm:$0xf]
        %v2672 = vld [vmem:[%s2659 + $0x30] sm:$0xf]
        %v2673 = vld [vmem:[%s2659 + $0x34] sm:$0xf]
        %v2674 = vld [vmem:[%s2659 + $0x38] sm:$0xf]
        %v2675 = vld [vmem:[%s2659 + $0x3c] sm:$0xf]
        %v2676 = vunpack.c.l.b16 %v2550
        %v2677 = vunpack.c.l.b16 %v2553
        %v2678 = vunpack.c.l.b16 %v2557
        %v2679 = vunpack.c.l.b16 %v2560
        %v2680 = vunpack.c.l.b16 %v2564
        %v2681 = vunpack.c.l.b16 %v2567
        %v2682 = vunpack.c.l.b16 %v2571
        %v2683 = vunpack.c.l.b16 %v2574
        %v2684 = vunpack.c.l.b16 %v2578
        %v2685 = vunpack.c.l.b16 %v2581
        %v2686 = vunpack.c.l.b16 %v2585
        %v2687 = vunpack.c.l.b16 %v2588
        %v2688 = vunpack.c.l.b16 %v2592
        %v2689 = vunpack.c.l.b16 %v2595
        %v2690 = vunpack.c.l.b16 %v2599
        %v2691 = vunpack.c.l.b16 %v2602
        %v2692 = vunpack.c.l.b16 %v2606
        %v2693 = vunpack.c.l.b16 %v2609
        %v2694 = vunpack.c.l.b16 %v2613
        %v2695 = vunpack.c.l.b16 %v2616
        %v2696 = vunpack.c.l.b16 %v2620
        %v2697 = vunpack.c.l.b16 %v2623
        %v2698 = vunpack.c.l.b16 %v2627
        %v2699 = vunpack.c.l.b16 %v2630
        %v2700 = vunpack.c.l.b16 %v2634
        %v2701 = vunpack.c.l.b16 %v2637
        %v2702 = vunpack.c.l.b16 %v2641
        %v2703 = vunpack.c.l.b16 %v2644
        %v2704 = vunpack.c.l.b16 %v2648
        %v2705 = vunpack.c.l.b16 %v2651
        %v2706 = vunpack.c.l.b16 %v2655
        %v2707 = vunpack.c.l.b16 %v2658
        %v2708 = vpack.c.b16 %v2677, %v2676
        %v2709 = vpack.c.b16 %v2679, %v2678
        %v2710 = vpack.c.b16 %v2681, %v2680
        %v2711 = vpack.c.b16 %v2683, %v2682
        %v2712 = vpack.c.b16 %v2685, %v2684
        %v2713 = vpack.c.b16 %v2687, %v2686
        %v2714 = vpack.c.b16 %v2689, %v2688
        %v2715 = vpack.c.b16 %v2691, %v2690
        %v2716 = vpack.c.b16 %v2693, %v2692
        %v2717 = vpack.c.b16 %v2695, %v2694
        %v2718 = vpack.c.b16 %v2697, %v2696
        %v2719 = vpack.c.b16 %v2699, %v2698
        %v2720 = vpack.c.b16 %v2701, %v2700
        %v2721 = vpack.c.b16 %v2703, %v2702
        %v2722 = vpack.c.b16 %v2705, %v2704
        %v2723 = vpack.c.b16 %v2707, %v2706
        %v2756 = vunpack.c.l.b16 %v2660
        %v2757 = vunpack.c.l.b16 %v2661
        %v2758 = vunpack.c.l.b16 %v2662
        %v2759 = vunpack.c.l.b16 %v2663
        %v2760 = vunpack.c.l.b16 %v2664
        %v2761 = vunpack.c.l.b16 %v2665
        %v2762 = vunpack.c.l.b16 %v2666
        %v2763 = vunpack.c.l.b16 %v2667
        %v2764 = vunpack.c.l.b16 %v2668
        %v2765 = vunpack.c.l.b16 %v2669
        %v2766 = vunpack.c.l.b16 %v2670
        %v2767 = vunpack.c.l.b16 %v2671
        %v2768 = vunpack.c.l.b16 %v2672
        %v2769 = vunpack.c.l.b16 %v2673
        %v2770 = vunpack.c.l.b16 %v2674
        %v2771 = vunpack.c.l.b16 %v2675
        %v2772 = vpack.c.b16 %v2757, %v2756
        %v2773 = vpack.c.b16 %v2759, %v2758
        %v2774 = vpack.c.b16 %v2761, %v2760
        %v2775 = vpack.c.b16 %v2763, %v2762
        %v2776 = vpack.c.b16 %v2765, %v2764
        %v2777 = vpack.c.b16 %v2767, %v2766
        %v2778 = vpack.c.b16 %v2769, %v2768
        %v2779 = vpack.c.b16 %v2771, %v2770
        %2788 = vmatprep.subr.bf16.mxu0 0
        %2789 = vmatpush1.bf16.msra.mxu0 %v2779
        %2790 = vmatprep.subr.bf16.mxu0 0
        %2791 = vmatpush1.bf16.msra.mxu0 %v2778
        %2792 = vmatprep.subr.bf16.mxu0 0
        %2793 = vmatpush1.bf16.msra.mxu0 %v2777
        %2794 = vmatprep.subr.bf16.mxu0 0
        %2795 = vmatpush1.bf16.msra.mxu0 %v2776
        %2796 = vmatprep.subr.bf16.mxu0 0
        %2797 = vmatpush1.bf16.msra.mxu0 %v2775
        %2798 = vmatprep.subr.bf16.mxu0 0
        %2799 = vmatpush1.bf16.msra.mxu0 %v2774
        %2800 = vmatprep.subr.bf16.mxu0 0
        %2801 = vmatpush1.bf16.msra.mxu0 %v2773
        %2802 = vmatprep.subr.bf16.mxu0 0
        %2803 = vmatpush1.bf16.msra.mxu0 %v2772
        %2804 = vmatprep.subr.bf16.mxu0 0
        %2805 = vmatpush2.bf16.msra.mxu0 0
        %2806 = vmatprep.subr.bf16.mxu0 0
        %2807 = vmatpush2.bf16.msra.mxu0 0
        %2808 = vmatprep.subr.bf16.mxu0 0
        %2809 = vmatpush2.bf16.msra.mxu0 0
        %2810 = vmatprep.subr.bf16.mxu0 0
        %2811 = vmatpush2.bf16.msra.mxu0 0
        %2812 = vmatprep.subr.bf16.mxu0 0
        %2813 = vmatpush2.bf16.msra.mxu0 0
        %2814 = vmatprep.subr.bf16.mxu0 0
        %2815 = vmatpush2.bf16.msra.mxu0 0
        %2816 = vmatprep.subr.bf16.mxu0 0
        %2817 = vmatpush2.bf16.msra.mxu0 0
        %2818 = vmatprep.subr.bf16.mxu0 0
        %2819 = vmatpush2.bf16.msra.mxu0 0
        %2820 = vmatprep.mubr.bf16.mxu0 0
        %2821 = vmatmul.mubr.bf16.gmra.mxu0 %v2708
        %v2822 = vpop.f32.mrf.mxu0
        %v2823 = vadd.f32 0.0, %v2822
        %v2824 = vpop.f32.mrf.mxu0
        %v2825 = vpop.f32.mrf.mxu0
        %v2826 = vadd.f32 0.0, %v2825
        %v2827 = vpop.f32.mrf.mxu0
        %2828 = vmatprep.mubr.bf16.mxu0 0
        %2829 = vmatmul.mubr.bf16.gmra.mxu0 %v2709
        %v2830 = vpop.f32.mrf.mxu0
        %v2831 = vadd.f32 0.0, %v2830
        %v2832 = vpop.f32.mrf.mxu0
        %v2833 = vpop.f32.mrf.mxu0
        %v2834 = vadd.f32 0.0, %v2833
        %v2835 = vpop.f32.mrf.mxu0
        %2836 = vmatprep.mubr.bf16.mxu0 0
        %2837 = vmatmul.mubr.bf16.gmra.mxu0 %v2710
        %v2838 = vpop.f32.mrf.mxu0
        %v2839 = vadd.f32 0.0, %v2838
        %v2840 = vpop.f32.mrf.mxu0
        %v2841 = vpop.f32.mrf.mxu0
        %v2842 = vadd.f32 0.0, %v2841
        %v2843 = vpop.f32.mrf.mxu0
        %2844 = vmatprep.mubr.bf16.mxu0 0
        %2845 = vmatmul.mubr.bf16.gmra.mxu0 %v2711
        %v2846 = vpop.f32.mrf.mxu0
        %v2847 = vadd.f32 0.0, %v2846
        %v2848 = vpop.f32.mrf.mxu0
        %v2849 = vpop.f32.mrf.mxu0
        %v2850 = vadd.f32 0.0, %v2849
        %v2851 = vpop.f32.mrf.mxu0
        %2852 = vmatprep.mubr.bf16.mxu0 0
        %2853 = vmatmul.mubr.bf16.gmra.mxu0 %v2712
        %v2854 = vpop.f32.mrf.mxu0
        %v2855 = vadd.f32 0.0, %v2854
        %v2856 = vpop.f32.mrf.mxu0
        %v2857 = vpop.f32.mrf.mxu0
        %v2858 = vadd.f32 0.0, %v2857
        %v2859 = vpop.f32.mrf.mxu0
        %2860 = vmatprep.mubr.bf16.mxu0 0
        %2861 = vmatmul.mubr.bf16.gmra.mxu0 %v2713
        %v2862 = vpop.f32.mrf.mxu0
        %v2863 = vadd.f32 0.0, %v2862
        %v2864 = vpop.f32.mrf.mxu0
        %v2865 = vpop.f32.mrf.mxu0
        %v2866 = vadd.f32 0.0, %v2865
        %v2867 = vpop.f32.mrf.mxu0
        %2868 = vmatprep.mubr.bf16.mxu0 0
        %2869 = vmatmul.mubr.bf16.gmra.mxu0 %v2714
        %v2870 = vpop.f32.mrf.mxu0
        %v2871 = vadd.f32 0.0, %v2870
        %v2872 = vpop.f32.mrf.mxu0
        %v2873 = vpop.f32.mrf.mxu0
        %v2874 = vadd.f32 0.0, %v2873
        %v2875 = vpop.f32.mrf.mxu0
        %2876 = vmatprep.mubr.bf16.mxu0 0
        %2877 = vmatmul.mubr.bf16.gmra.mxu0 %v2715
        %v2878 = vpop.f32.mrf.mxu0
        %v2879 = vadd.f32 0.0, %v2878
        %v2880 = vpop.f32.mrf.mxu0
        %v2881 = vpop.f32.mrf.mxu0
        %v2882 = vadd.f32 0.0, %v2881
        %v2883 = vpop.f32.mrf.mxu0
        %2884 = vmatprep.mubr.bf16.mxu0 0
        %2885 = vmatmul.mubr.bf16.gmra.mxu0 %v2716
        %v2886 = vpop.f32.mrf.mxu0
        %v2887 = vadd.f32 0.0, %v2886
        %v2888 = vpop.f32.mrf.mxu0
        %v2889 = vpop.f32.mrf.mxu0
        %v2890 = vadd.f32 0.0, %v2889
        %v2891 = vpop.f32.mrf.mxu0
        %2892 = vmatprep.mubr.bf16.mxu0 0
        %2893 = vmatmul.mubr.bf16.gmra.mxu0 %v2717
        %v2894 = vpop.f32.mrf.mxu0
        %v2895 = vadd.f32 0.0, %v2894
        %v2896 = vpop.f32.mrf.mxu0
        %v2897 = vpop.f32.mrf.mxu0
        %v2898 = vadd.f32 0.0, %v2897
        %v2899 = vpop.f32.mrf.mxu0
        %2900 = vmatprep.mubr.bf16.mxu0 0
        %2901 = vmatmul.mubr.bf16.gmra.mxu0 %v2718
        %v2902 = vpop.f32.mrf.mxu0
        %v2903 = vadd.f32 0.0, %v2902
        %v2904 = vpop.f32.mrf.mxu0
        %v2905 = vpop.f32.mrf.mxu0
        %v2906 = vadd.f32 0.0, %v2905
        %v2907 = vpop.f32.mrf.mxu0
        %2908 = vmatprep.mubr.bf16.mxu0 0
        %2909 = vmatmul.mubr.bf16.gmra.mxu0 %v2719
        %v2910 = vpop.f32.mrf.mxu0
        %v2911 = vadd.f32 0.0, %v2910
        %v2912 = vpop.f32.mrf.mxu0
        %v2913 = vpop.f32.mrf.mxu0
        %v2914 = vadd.f32 0.0, %v2913
        %v2915 = vpop.f32.mrf.mxu0
        %2916 = vmatprep.mubr.bf16.mxu0 0
        %2917 = vmatmul.mubr.bf16.gmra.mxu0 %v2720
        %v2918 = vpop.f32.mrf.mxu0
        %v2919 = vadd.f32 0.0, %v2918
        %v2920 = vpop.f32.mrf.mxu0
        %v2921 = vpop.f32.mrf.mxu0
        %v2922 = vadd.f32 0.0, %v2921
        %v2923 = vpop.f32.mrf.mxu0
        %2924 = vmatprep.mubr.bf16.mxu0 0
        %2925 = vmatmul.mubr.bf16.gmra.mxu0 %v2721
        %v2926 = vpop.f32.mrf.mxu0
        %v2927 = vadd.f32 0.0, %v2926
        %v2928 = vpop.f32.mrf.mxu0
        %v2929 = vpop.f32.mrf.mxu0
        %v2930 = vadd.f32 0.0, %v2929
        %v2931 = vpop.f32.mrf.mxu0
        %2932 = vmatprep.mubr.bf16.mxu0 0
        %2933 = vmatmul.mubr.bf16.gmra.mxu0 %v2722
        %v2934 = vpop.f32.mrf.mxu0
        %v2935 = vadd.f32 0.0, %v2934
        %v2936 = vpop.f32.mrf.mxu0
        %v2937 = vpop.f32.mrf.mxu0
        %v2938 = vadd.f32 0.0, %v2937
        %v2939 = vpop.f32.mrf.mxu0
        %2940 = vmatprep.mubr.bf16.mxu0 0
        %2941 = vmatmul.mubr.bf16.gmra.mxu0 %v2723
        %v2942 = vpop.f32.mrf.mxu0
        %v2943 = vadd.f32 0.0, %v2942
        %v2944 = vpop.f32.mrf.mxu0
        %v2945 = vpop.f32.mrf.mxu0
        %v2946 = vadd.f32 0.0, %v2945
        %v2947 = vpop.f32.mrf.mxu0
        %2948 = vdwg.mxu0
        %v2949 = vadd.f32 %v2370, %v2823
        %v2950 = vadd.f32 %v2373, %v2826
        %v2951 = vadd.f32 %v2378, %v2831
        %v2952 = vadd.f32 %v2381, %v2834
        %v2953 = vadd.f32 %v2386, %v2839
        %v2954 = vadd.f32 %v2389, %v2842
        %v2955 = vadd.f32 %v2394, %v2847
        %v2956 = vadd.f32 %v2397, %v2850
        %v2957 = vadd.f32 %v2402, %v2855
        %v2958 = vadd.f32 %v2405, %v2858
        %v2959 = vadd.f32 %v2410, %v2863
        %v2960 = vadd.f32 %v2413, %v2866
        %v2961 = vadd.f32 %v2418, %v2871
        %v2962 = vadd.f32 %v2421, %v2874
        %v2963 = vadd.f32 %v2426, %v2879
        %v2964 = vadd.f32 %v2429, %v2882
        %v2965 = vadd.f32 %v2434, %v2887
        %v2966 = vadd.f32 %v2437, %v2890
        %v2967 = vadd.f32 %v2442, %v2895
        %v2968 = vadd.f32 %v2445, %v2898
        %v2969 = vadd.f32 %v2450, %v2903
        %v2970 = vadd.f32 %v2453, %v2906
        %v2971 = vadd.f32 %v2458, %v2911
        %v2972 = vadd.f32 %v2461, %v2914
        %v2973 = vadd.f32 %v2466, %v2919
        %v2974 = vadd.f32 %v2469, %v2922
        %v2975 = vadd.f32 %v2474, %v2927
        %v2976 = vadd.f32 %v2477, %v2930
        %v2977 = vadd.f32 %v2482, %v2935
        %v2978 = vadd.f32 %v2485, %v2938
        %v2979 = vadd.f32 %v2490, %v2943
        %v2980 = vadd.f32 %v2493, %v2946
        %v2981 = vld [vmem:[%s1332] sm:$0xf]
        %v2982 = vld [vmem:[%s1332 + $0x4] sm:$0xf]
        %v2983 = vld [vmem:[%s1332 + $0xc] sm:$0xf]
        %v2984 = vld [vmem:[%s1332 + $0x10] sm:$0xf]
        %v2985 = vld [vmem:[%s1332 + $0x18] sm:$0xf]
        %v2986 = vld [vmem:[%s1332 + $0x1c] sm:$0xf]
        %v2987 = vld [vmem:[%s1332 + $0x24] sm:$0xf]
        %v2988 = vld [vmem:[%s1332 + $0x28] sm:$0xf]
        %v2989 = vld [vmem:[%s1332 + $0x30] sm:$0xf]
        %v2990 = vld [vmem:[%s1332 + $0x34] sm:$0xf]
        %v2991 = vld [vmem:[%s1332 + $0x3c] sm:$0xf]
        %v2992 = vld [vmem:[%s1332 + $0x40] sm:$0xf]
        %v2993 = vld [vmem:[%s1332 + $0x48] sm:$0xf]
        %v2994 = vld [vmem:[%s1332 + $0x4c] sm:$0xf]
        %v2995 = vld [vmem:[%s1332 + $0x54] sm:$0xf]
        %v2996 = vld [vmem:[%s1332 + $0x58] sm:$0xf]
        %v2997 = vld [vmem:[%s1332 + $0x60] sm:$0xf]
        %v2998 = vld [vmem:[%s1332 + $0x64] sm:$0xf]
        %v2999 = vld [vmem:[%s1332 + $0x6c] sm:$0xf]
        %v3000 = vld [vmem:[%s1332 + $0x70] sm:$0xf]
        %v3001 = vld [vmem:[%s1332 + $0x78] sm:$0xf]
        %v3002 = vld [vmem:[%s1332 + $0x7c] sm:$0xf]
        %v3003 = vld [vmem:[%s1332 + $0x84] sm:$0xf]
        %v3004 = vld [vmem:[%s1332 + $0x88] sm:$0xf]
        %v3005 = vld [vmem:[%s1332 + $0x90] sm:$0xf]
        %v3006 = vld [vmem:[%s1332 + $0x94] sm:$0xf]
        %v3007 = vld [vmem:[%s1332 + $0x9c] sm:$0xf]
        %v3008 = vld [vmem:[%s1332 + $0xa0] sm:$0xf]
        %v3009 = vld [vmem:[%s1332 + $0xa8] sm:$0xf]
        %v3010 = vld [vmem:[%s1332 + $0xac] sm:$0xf]
        %v3011 = vld [vmem:[%s1332 + $0xb4] sm:$0xf]
        %v3012 = vld [vmem:[%s1332 + $0xb8] sm:$0xf]
        %s3013 = scalar_lea.vmem %s3, 192
        %v3014 = vld [vmem:[%s3013] sm:$0xf]
        %v3015 = vld [vmem:[%s3013 + $0x4] sm:$0xf]
        %v3016 = vld [vmem:[%s3013 + $0x8] sm:$0xf]
        %v3017 = vld [vmem:[%s3013 + $0xc] sm:$0xf]
        %v3018 = vld [vmem:[%s3013 + $0x10] sm:$0xf]
        %v3019 = vld [vmem:[%s3013 + $0x14] sm:$0xf]
        %v3020 = vld [vmem:[%s3013 + $0x18] sm:$0xf]
        %v3021 = vld [vmem:[%s3013 + $0x1c] sm:$0xf]
        %v3022 = vld [vmem:[%s3013 + $0x20] sm:$0xf]
        %v3023 = vld [vmem:[%s3013 + $0x24] sm:$0xf]
        %v3024 = vld [vmem:[%s3013 + $0x28] sm:$0xf]
        %v3025 = vld [vmem:[%s3013 + $0x2c] sm:$0xf]
        %v3026 = vld [vmem:[%s3013 + $0x30] sm:$0xf]
        %v3027 = vld [vmem:[%s3013 + $0x34] sm:$0xf]
        %v3028 = vld [vmem:[%s3013 + $0x38] sm:$0xf]
        %v3029 = vld [vmem:[%s3013 + $0x3c] sm:$0xf]
        %v3062 = vunpack.c.l.b16 %v2981
        %v3063 = vunpack.c.l.b16 %v2982
        %v3064 = vunpack.c.l.b16 %v2983
        %v3065 = vunpack.c.l.b16 %v2984
        %v3066 = vunpack.c.l.b16 %v2985
        %v3067 = vunpack.c.l.b16 %v2986
        %v3068 = vunpack.c.l.b16 %v2987
        %v3069 = vunpack.c.l.b16 %v2988
        %v3070 = vunpack.c.l.b16 %v2989
        %v3071 = vunpack.c.l.b16 %v2990
        %v3072 = vunpack.c.l.b16 %v2991
        %v3073 = vunpack.c.l.b16 %v2992
        %v3074 = vunpack.c.l.b16 %v2993
        %v3075 = vunpack.c.l.b16 %v2994
        %v3076 = vunpack.c.l.b16 %v2995
        %v3077 = vunpack.c.l.b16 %v2996
        %v3078 = vunpack.c.l.b16 %v2997
        %v3079 = vunpack.c.l.b16 %v2998
        %v3080 = vunpack.c.l.b16 %v2999
        %v3081 = vunpack.c.l.b16 %v3000
        %v3082 = vunpack.c.l.b16 %v3001
        %v3083 = vunpack.c.l.b16 %v3002
        %v3084 = vunpack.c.l.b16 %v3003
        %v3085 = vunpack.c.l.b16 %v3004
        %v3086 = vunpack.c.l.b16 %v3005
        %v3087 = vunpack.c.l.b16 %v3006
        %v3088 = vunpack.c.l.b16 %v3007
        %v3089 = vunpack.c.l.b16 %v3008
        %v3090 = vunpack.c.l.b16 %v3009
        %v3091 = vunpack.c.l.b16 %v3010
        %v3092 = vunpack.c.l.b16 %v3011
        %v3093 = vunpack.c.l.b16 %v3012
        %v3094 = vpack.c.b16 %v3063, %v3062
        %v3095 = vpack.c.b16 %v3065, %v3064
        %v3096 = vpack.c.b16 %v3067, %v3066
        %v3097 = vpack.c.b16 %v3069, %v3068
        %v3098 = vpack.c.b16 %v3071, %v3070
        %v3099 = vpack.c.b16 %v3073, %v3072
        %v3100 = vpack.c.b16 %v3075, %v3074
        %v3101 = vpack.c.b16 %v3077, %v3076
        %v3102 = vpack.c.b16 %v3079, %v3078
        %v3103 = vpack.c.b16 %v3081, %v3080
        %v3104 = vpack.c.b16 %v3083, %v3082
        %v3105 = vpack.c.b16 %v3085, %v3084
        %v3106 = vpack.c.b16 %v3087, %v3086
        %v3107 = vpack.c.b16 %v3089, %v3088
        %v3108 = vpack.c.b16 %v3091, %v3090
        %v3109 = vpack.c.b16 %v3093, %v3092
        %v3142 = vunpack.c.l.b16 %v3014
        %v3143 = vunpack.c.l.b16 %v3015
        %v3144 = vunpack.c.l.b16 %v3016
        %v3145 = vunpack.c.l.b16 %v3017
        %v3146 = vunpack.c.l.b16 %v3018
        %v3147 = vunpack.c.l.b16 %v3019
        %v3148 = vunpack.c.l.b16 %v3020
        %v3149 = vunpack.c.l.b16 %v3021
        %v3150 = vunpack.c.l.b16 %v3022
        %v3151 = vunpack.c.l.b16 %v3023
        %v3152 = vunpack.c.l.b16 %v3024
        %v3153 = vunpack.c.l.b16 %v3025
        %v3154 = vunpack.c.l.b16 %v3026
        %v3155 = vunpack.c.l.b16 %v3027
        %v3156 = vunpack.c.l.b16 %v3028
        %v3157 = vunpack.c.l.b16 %v3029
        %v3158 = vpack.c.b16 %v3143, %v3142
        %v3159 = vpack.c.b16 %v3145, %v3144
        %v3160 = vpack.c.b16 %v3147, %v3146
        %v3161 = vpack.c.b16 %v3149, %v3148
        %v3162 = vpack.c.b16 %v3151, %v3150
        %v3163 = vpack.c.b16 %v3153, %v3152
        %v3164 = vpack.c.b16 %v3155, %v3154
        %v3165 = vpack.c.b16 %v3157, %v3156
        %3174 = vmatprep.subr.bf16.mxu0 0
        %3175 = vmatpush1.bf16.msra.mxu0 %v3165
        %3176 = vmatprep.subr.bf16.mxu0 0
        %3177 = vmatpush1.bf16.msra.mxu0 %v3164
        %3178 = vmatprep.subr.bf16.mxu0 0
        %3179 = vmatpush1.bf16.msra.mxu0 %v3163
        %3180 = vmatprep.subr.bf16.mxu0 0
        %3181 = vmatpush1.bf16.msra.mxu0 %v3162
        %3182 = vmatprep.subr.bf16.mxu0 0
        %3183 = vmatpush1.bf16.msra.mxu0 %v3161
        %3184 = vmatprep.subr.bf16.mxu0 0
        %3185 = vmatpush1.bf16.msra.mxu0 %v3160
        %3186 = vmatprep.subr.bf16.mxu0 0
        %3187 = vmatpush1.bf16.msra.mxu0 %v3159
        %3188 = vmatprep.subr.bf16.mxu0 0
        %3189 = vmatpush1.bf16.msra.mxu0 %v3158
        %3190 = vmatprep.subr.bf16.mxu0 0
        %3191 = vmatpush2.bf16.msra.mxu0 0
        %3192 = vmatprep.subr.bf16.mxu0 0
        %3193 = vmatpush2.bf16.msra.mxu0 0
        %3194 = vmatprep.subr.bf16.mxu0 0
        %3195 = vmatpush2.bf16.msra.mxu0 0
        %3196 = vmatprep.subr.bf16.mxu0 0
        %3197 = vmatpush2.bf16.msra.mxu0 0
        %3198 = vmatprep.subr.bf16.mxu0 0
        %3199 = vmatpush2.bf16.msra.mxu0 0
        %3200 = vmatprep.subr.bf16.mxu0 0
        %3201 = vmatpush2.bf16.msra.mxu0 0
        %3202 = vmatprep.subr.bf16.mxu0 0
        %3203 = vmatpush2.bf16.msra.mxu0 0
        %3204 = vmatprep.subr.bf16.mxu0 0
        %3205 = vmatpush2.bf16.msra.mxu0 0
        %3206 = vmatprep.mubr.bf16.mxu0 0
        %3207 = vmatmul.mubr.bf16.gmra.mxu0 %v3094
        %v3208 = vpop.f32.mrf.mxu0
        %v3209 = vadd.f32 0.0, %v3208
        %v3210 = vpop.f32.mrf.mxu0
        %v3211 = vpop.f32.mrf.mxu0
        %v3212 = vadd.f32 0.0, %v3211
        %v3213 = vpop.f32.mrf.mxu0
        %3214 = vmatprep.mubr.bf16.mxu0 0
        %3215 = vmatmul.mubr.bf16.gmra.mxu0 %v3095
        %v3216 = vpop.f32.mrf.mxu0
        %v3217 = vadd.f32 0.0, %v3216
        %v3218 = vpop.f32.mrf.mxu0
        %v3219 = vpop.f32.mrf.mxu0
        %v3220 = vadd.f32 0.0, %v3219
        %v3221 = vpop.f32.mrf.mxu0
        %3222 = vmatprep.mubr.bf16.mxu0 0
        %3223 = vmatmul.mubr.bf16.gmra.mxu0 %v3096
        %v3224 = vpop.f32.mrf.mxu0
        %v3225 = vadd.f32 0.0, %v3224
        %v3226 = vpop.f32.mrf.mxu0
        %v3227 = vpop.f32.mrf.mxu0
        %v3228 = vadd.f32 0.0, %v3227
        %v3229 = vpop.f32.mrf.mxu0
        %3230 = vmatprep.mubr.bf16.mxu0 0
        %3231 = vmatmul.mubr.bf16.gmra.mxu0 %v3097
        %v3232 = vpop.f32.mrf.mxu0
        %v3233 = vadd.f32 0.0, %v3232
        %v3234 = vpop.f32.mrf.mxu0
        %v3235 = vpop.f32.mrf.mxu0
        %v3236 = vadd.f32 0.0, %v3235
        %v3237 = vpop.f32.mrf.mxu0
        %3238 = vmatprep.mubr.bf16.mxu0 0
        %3239 = vmatmul.mubr.bf16.gmra.mxu0 %v3098
        %v3240 = vpop.f32.mrf.mxu0
        %v3241 = vadd.f32 0.0, %v3240
        %v3242 = vpop.f32.mrf.mxu0
        %v3243 = vpop.f32.mrf.mxu0
        %v3244 = vadd.f32 0.0, %v3243
        %v3245 = vpop.f32.mrf.mxu0
        %3246 = vmatprep.mubr.bf16.mxu0 0
        %3247 = vmatmul.mubr.bf16.gmra.mxu0 %v3099
        %v3248 = vpop.f32.mrf.mxu0
        %v3249 = vadd.f32 0.0, %v3248
        %v3250 = vpop.f32.mrf.mxu0
        %v3251 = vpop.f32.mrf.mxu0
        %v3252 = vadd.f32 0.0, %v3251
        %v3253 = vpop.f32.mrf.mxu0
        %3254 = vmatprep.mubr.bf16.mxu0 0
        %3255 = vmatmul.mubr.bf16.gmra.mxu0 %v3100
        %v3256 = vpop.f32.mrf.mxu0
        %v3257 = vadd.f32 0.0, %v3256
        %v3258 = vpop.f32.mrf.mxu0
        %v3259 = vpop.f32.mrf.mxu0
        %v3260 = vadd.f32 0.0, %v3259
        %v3261 = vpop.f32.mrf.mxu0
        %3262 = vmatprep.mubr.bf16.mxu0 0
        %3263 = vmatmul.mubr.bf16.gmra.mxu0 %v3101
        %v3264 = vpop.f32.mrf.mxu0
        %v3265 = vadd.f32 0.0, %v3264
        %v3266 = vpop.f32.mrf.mxu0
        %v3267 = vpop.f32.mrf.mxu0
        %v3268 = vadd.f32 0.0, %v3267
        %v3269 = vpop.f32.mrf.mxu0
        %3270 = vmatprep.mubr.bf16.mxu0 0
        %3271 = vmatmul.mubr.bf16.gmra.mxu0 %v3102
        %v3272 = vpop.f32.mrf.mxu0
        %v3273 = vadd.f32 0.0, %v3272
        %v3274 = vpop.f32.mrf.mxu0
        %v3275 = vpop.f32.mrf.mxu0
        %v3276 = vadd.f32 0.0, %v3275
        %v3277 = vpop.f32.mrf.mxu0
        %3278 = vmatprep.mubr.bf16.mxu0 0
        %3279 = vmatmul.mubr.bf16.gmra.mxu0 %v3103
        %v3280 = vpop.f32.mrf.mxu0
        %v3281 = vadd.f32 0.0, %v3280
        %v3282 = vpop.f32.mrf.mxu0
        %v3283 = vpop.f32.mrf.mxu0
        %v3284 = vadd.f32 0.0, %v3283
        %v3285 = vpop.f32.mrf.mxu0
        %3286 = vmatprep.mubr.bf16.mxu0 0
        %3287 = vmatmul.mubr.bf16.gmra.mxu0 %v3104
        %v3288 = vpop.f32.mrf.mxu0
        %v3289 = vadd.f32 0.0, %v3288
        %v3290 = vpop.f32.mrf.mxu0
        %v3291 = vpop.f32.mrf.mxu0
        %v3292 = vadd.f32 0.0, %v3291
        %v3293 = vpop.f32.mrf.mxu0
        %3294 = vmatprep.mubr.bf16.mxu0 0
        %3295 = vmatmul.mubr.bf16.gmra.mxu0 %v3105
        %v3296 = vpop.f32.mrf.mxu0
        %v3297 = vadd.f32 0.0, %v3296
        %v3298 = vpop.f32.mrf.mxu0
        %v3299 = vpop.f32.mrf.mxu0
        %v3300 = vadd.f32 0.0, %v3299
        %v3301 = vpop.f32.mrf.mxu0
        %3302 = vmatprep.mubr.bf16.mxu0 0
        %3303 = vmatmul.mubr.bf16.gmra.mxu0 %v3106
        %v3304 = vpop.f32.mrf.mxu0
        %v3305 = vadd.f32 0.0, %v3304
        %v3306 = vpop.f32.mrf.mxu0
        %v3307 = vpop.f32.mrf.mxu0
        %v3308 = vadd.f32 0.0, %v3307
        %v3309 = vpop.f32.mrf.mxu0
        %3310 = vmatprep.mubr.bf16.mxu0 0
        %3311 = vmatmul.mubr.bf16.gmra.mxu0 %v3107
        %v3312 = vpop.f32.mrf.mxu0
        %v3313 = vadd.f32 0.0, %v3312
        %v3314 = vpop.f32.mrf.mxu0
        %v3315 = vpop.f32.mrf.mxu0
        %v3316 = vadd.f32 0.0, %v3315
        %v3317 = vpop.f32.mrf.mxu0
        %3318 = vmatprep.mubr.bf16.mxu0 0
        %3319 = vmatmul.mubr.bf16.gmra.mxu0 %v3108
        %v3320 = vpop.f32.mrf.mxu0
        %v3321 = vadd.f32 0.0, %v3320
        %v3322 = vpop.f32.mrf.mxu0
        %v3323 = vpop.f32.mrf.mxu0
        %v3324 = vadd.f32 0.0, %v3323
        %v3325 = vpop.f32.mrf.mxu0
        %3326 = vmatprep.mubr.bf16.mxu0 0
        %3327 = vmatmul.mubr.bf16.gmra.mxu0 %v3109
        %v3328 = vpop.f32.mrf.mxu0
        %v3329 = vadd.f32 0.0, %v3328
        %v3330 = vpop.f32.mrf.mxu0
        %v3331 = vpop.f32.mrf.mxu0
        %v3332 = vadd.f32 0.0, %v3331
        %v3333 = vpop.f32.mrf.mxu0
        %3334 = vdwg.mxu0
        %v3335 = vadd.f32 %v2949, %v3209
        %v3336 = vadd.f32 %v2950, %v3212
        %v3337 = vadd.f32 %v2951, %v3217
        %v3338 = vadd.f32 %v2952, %v3220
        %v3339 = vadd.f32 %v2953, %v3225
        %v3340 = vadd.f32 %v2954, %v3228
        %v3341 = vadd.f32 %v2955, %v3233
        %v3342 = vadd.f32 %v2956, %v3236
        %v3343 = vadd.f32 %v2957, %v3241
        %v3344 = vadd.f32 %v2958, %v3244
        %v3345 = vadd.f32 %v2959, %v3249
        %v3346 = vadd.f32 %v2960, %v3252
        %v3347 = vadd.f32 %v2961, %v3257
        %v3348 = vadd.f32 %v2962, %v3260
        %v3349 = vadd.f32 %v2963, %v3265
        %v3350 = vadd.f32 %v2964, %v3268
        %v3351 = vadd.f32 %v2965, %v3273
        %v3352 = vadd.f32 %v2966, %v3276
        %v3353 = vadd.f32 %v2967, %v3281
        %v3354 = vadd.f32 %v2968, %v3284
        %v3355 = vadd.f32 %v2969, %v3289
        %v3356 = vadd.f32 %v2970, %v3292
        %v3357 = vadd.f32 %v2971, %v3297
        %v3358 = vadd.f32 %v2972, %v3300
        %v3359 = vadd.f32 %v2973, %v3305
        %v3360 = vadd.f32 %v2974, %v3308
        %v3361 = vadd.f32 %v2975, %v3313
        %v3362 = vadd.f32 %v2976, %v3316
        %v3363 = vadd.f32 %v2977, %v3321
        %v3364 = vadd.f32 %v2978, %v3324
        %v3365 = vadd.f32 %v2979, %v3329
        %v3366 = vadd.f32 %v2980, %v3332
        %v3367 = vld [vmem:[%s1332] sm:$0xf]
        %v3368 = vld [vmem:[%s1332 + $0x4] sm:$0xf]
        %v3369 = vld [vmem:[%s1332 + $0x8] sm:$0x1]
        %v3370 = vld [vmem:[%s1332 + $0xc] sm:$0xf]
        %v3371 = vld [vmem:[%s1332 + $0x10] sm:$0xf]
        %v3372 = vld [vmem:[%s1332 + $0x14] sm:$0x1]
        %v3373 = vld [vmem:[%s1332 + $0x18] sm:$0xf]
        %v3374 = vld [vmem:[%s1332 + $0x1c] sm:$0xf]
        %v3375 = vld [vmem:[%s1332 + $0x20] sm:$0x1]
        %v3376 = vld [vmem:[%s1332 + $0x24] sm:$0xf]
        %v3377 = vld [vmem:[%s1332 + $0x28] sm:$0xf]
        %v3378 = vld [vmem:[%s1332 + $0x2c] sm:$0x1]
        %v3379 = vld [vmem:[%s1332 + $0x30] sm:$0xf]
        %v3380 = vld [vmem:[%s1332 + $0x34] sm:$0xf]
        %v3381 = vld [vmem:[%s1332 + $0x38] sm:$0x1]
        %v3382 = vld [vmem:[%s1332 + $0x3c] sm:$0xf]
        %v3383 = vld [vmem:[%s1332 + $0x40] sm:$0xf]
        %v3384 = vld [vmem:[%s1332 + $0x44] sm:$0x1]
        %v3385 = vld [vmem:[%s1332 + $0x48] sm:$0xf]
        %v3386 = vld [vmem:[%s1332 + $0x4c] sm:$0xf]
        %v3387 = vld [vmem:[%s1332 + $0x50] sm:$0x1]
        %v3388 = vld [vmem:[%s1332 + $0x54] sm:$0xf]
        %v3389 = vld [vmem:[%s1332 + $0x58] sm:$0xf]
        %v3390 = vld [vmem:[%s1332 + $0x5c] sm:$0x1]
        %v3391 = vld [vmem:[%s1332 + $0x60] sm:$0xf]
        %v3392 = vld [vmem:[%s1332 + $0x64] sm:$0xf]
        %v3393 = vld [vmem:[%s1332 + $0x68] sm:$0x1]
        %v3394 = vld [vmem:[%s1332 + $0x6c] sm:$0xf]
        %v3395 = vld [vmem:[%s1332 + $0x70] sm:$0xf]
        %v3396 = vld [vmem:[%s1332 + $0x74] sm:$0x1]
        %v3397 = vld [vmem:[%s1332 + $0x78] sm:$0xf]
        %v3398 = vld [vmem:[%s1332 + $0x7c] sm:$0xf]
        %v3399 = vld [vmem:[%s1332 + $0x80] sm:$0x1]
        %v3400 = vld [vmem:[%s1332 + $0x84] sm:$0xf]
        %v3401 = vld [vmem:[%s1332 + $0x88] sm:$0xf]
        %v3402 = vld [vmem:[%s1332 + $0x8c] sm:$0x1]
        %v3403 = vld [vmem:[%s1332 + $0x90] sm:$0xf]
        %v3404 = vld [vmem:[%s1332 + $0x94] sm:$0xf]
        %v3405 = vld [vmem:[%s1332 + $0x98] sm:$0x1]
        %v3406 = vld [vmem:[%s1332 + $0x9c] sm:$0xf]
        %v3407 = vld [vmem:[%s1332 + $0xa0] sm:$0xf]
        %v3408 = vld [vmem:[%s1332 + $0xa4] sm:$0x1]
        %v3409 = vld [vmem:[%s1332 + $0xa8] sm:$0xf]
        %v3410 = vld [vmem:[%s1332 + $0xac] sm:$0xf]
        %v3411 = vld [vmem:[%s1332 + $0xb0] sm:$0x1]
        %v3412 = vld [vmem:[%s1332 + $0xb4] sm:$0xf]
        %v3413 = vld [vmem:[%s1332 + $0xb8] sm:$0xf]
        %v3414 = vld [vmem:[%s1332 + $0xbc] sm:$0x1]
        %v3416 = vshrl.u32 %v3367, 16
        %v3418 = vrot.slane %v3416, 4
        %v3419 = vshll.u32 %v3367, 16
        %v3421 = vrot.slane %v3419, 5
        %v3422 = vor.u32 %v3418, %v3421
        %v3423 = vrot.slane %v3422, 4
        %v3425 = vshll.u32 %v3368, 16
        %v3427 = vrot.slane %v3425, 5
        %v3428 = vsel %vm1516, %v3423, %v3427
        %v3429 = vshrl.u32 %v3368, 16
        %v3431 = vrot.slane %v3429, 4
        %v3432 = vor.u32 %v3431, %v3427
        %v3433 = vrot.slane %v3432, 4
        %v3435 = vshll.u32 %v3369, 16
        %v3437 = vrot.slane %v3435, 5
        %v3438 = vsel %vm1516, %v3433, %v3437
        %v3440 = vshrl.u32 %v3370, 16
        %v3442 = vrot.slane %v3440, 4
        %v3443 = vshll.u32 %v3370, 16
        %v3445 = vrot.slane %v3443, 5
        %v3446 = vor.u32 %v3442, %v3445
        %v3447 = vrot.slane %v3446, 4
        %v3449 = vshll.u32 %v3371, 16
        %v3451 = vrot.slane %v3449, 5
        %v3452 = vsel %vm1516, %v3447, %v3451
        %v3453 = vshrl.u32 %v3371, 16
        %v3455 = vrot.slane %v3453, 4
        %v3456 = vor.u32 %v3455, %v3451
        %v3457 = vrot.slane %v3456, 4
        %v3459 = vshll.u32 %v3372, 16
        %v3461 = vrot.slane %v3459, 5
        %v3462 = vsel %vm1516, %v3457, %v3461
        %v3464 = vshrl.u32 %v3373, 16
        %v3466 = vrot.slane %v3464, 4
        %v3467 = vshll.u32 %v3373, 16
        %v3469 = vrot.slane %v3467, 5
        %v3470 = vor.u32 %v3466, %v3469
        %v3471 = vrot.slane %v3470, 4
        %v3473 = vshll.u32 %v3374, 16
        %v3475 = vrot.slane %v3473, 5
        %v3476 = vsel %vm1516, %v3471, %v3475
        %v3477 = vshrl.u32 %v3374, 16
        %v3479 = vrot.slane %v3477, 4
        %v3480 = vor.u32 %v3479, %v3475
        %v3481 = vrot.slane %v3480, 4
        %v3483 = vshll.u32 %v3375, 16
        %v3485 = vrot.slane %v3483, 5
        %v3486 = vsel %vm1516, %v3481, %v3485
        %v3488 = vshrl.u32 %v3376, 16
        %v3490 = vrot.slane %v3488, 4
        %v3491 = vshll.u32 %v3376, 16
        %v3493 = vrot.slane %v3491, 5
        %v3494 = vor.u32 %v3490, %v3493
        %v3495 = vrot.slane %v3494, 4
        %v3497 = vshll.u32 %v3377, 16
        %v3499 = vrot.slane %v3497, 5
        %v3500 = vsel %vm1516, %v3495, %v3499
        %v3501 = vshrl.u32 %v3377, 16
        %v3503 = vrot.slane %v3501, 4
        %v3504 = vor.u32 %v3503, %v3499
        %v3505 = vrot.slane %v3504, 4
        %v3507 = vshll.u32 %v3378, 16
        %v3509 = vrot.slane %v3507, 5
        %v3510 = vsel %vm1516, %v3505, %v3509
        %v3512 = vshrl.u32 %v3379, 16
        %v3514 = vrot.slane %v3512, 4
        %v3515 = vshll.u32 %v3379, 16
        %v3517 = vrot.slane %v3515, 5
        %v3518 = vor.u32 %v3514, %v3517
        %v3519 = vrot.slane %v3518, 4
        %v3521 = vshll.u32 %v3380, 16
        %v3523 = vrot.slane %v3521, 5
        %v3524 = vsel %vm1516, %v3519, %v3523
        %v3525 = vshrl.u32 %v3380, 16
        %v3527 = vrot.slane %v3525, 4
        %v3528 = vor.u32 %v3527, %v3523
        %v3529 = vrot.slane %v3528, 4
        %v3531 = vshll.u32 %v3381, 16
        %v3533 = vrot.slane %v3531, 5
        %v3534 = vsel %vm1516, %v3529, %v3533
        %v3536 = vshrl.u32 %v3382, 16
        %v3538 = vrot.slane %v3536, 4
        %v3539 = vshll.u32 %v3382, 16
        %v3541 = vrot.slane %v3539, 5
        %v3542 = vor.u32 %v3538, %v3541
        %v3543 = vrot.slane %v3542, 4
        %v3545 = vshll.u32 %v3383, 16
        %v3547 = vrot.slane %v3545, 5
        %v3548 = vsel %vm1516, %v3543, %v3547
        %v3549 = vshrl.u32 %v3383, 16
        %v3551 = vrot.slane %v3549, 4
        %v3552 = vor.u32 %v3551, %v3547
        %v3553 = vrot.slane %v3552, 4
        %v3555 = vshll.u32 %v3384, 16
        %v3557 = vrot.slane %v3555, 5
        %v3558 = vsel %vm1516, %v3553, %v3557
        %v3560 = vshrl.u32 %v3385, 16
        %v3562 = vrot.slane %v3560, 4
        %v3563 = vshll.u32 %v3385, 16
        %v3565 = vrot.slane %v3563, 5
        %v3566 = vor.u32 %v3562, %v3565
        %v3567 = vrot.slane %v3566, 4
        %v3569 = vshll.u32 %v3386, 16
        %v3571 = vrot.slane %v3569, 5
        %v3572 = vsel %vm1516, %v3567, %v3571
        %v3573 = vshrl.u32 %v3386, 16
        %v3575 = vrot.slane %v3573, 4
        %v3576 = vor.u32 %v3575, %v3571
        %v3577 = vrot.slane %v3576, 4
        %v3579 = vshll.u32 %v3387, 16
        %v3581 = vrot.slane %v3579, 5
        %v3582 = vsel %vm1516, %v3577, %v3581
        %v3584 = vshrl.u32 %v3388, 16
        %v3586 = vrot.slane %v3584, 4
        %v3587 = vshll.u32 %v3388, 16
        %v3589 = vrot.slane %v3587, 5
        %v3590 = vor.u32 %v3586, %v3589
        %v3591 = vrot.slane %v3590, 4
        %v3593 = vshll.u32 %v3389, 16
        %v3595 = vrot.slane %v3593, 5
        %v3596 = vsel %vm1516, %v3591, %v3595
        %v3597 = vshrl.u32 %v3389, 16
        %v3599 = vrot.slane %v3597, 4
        %v3600 = vor.u32 %v3599, %v3595
        %v3601 = vrot.slane %v3600, 4
        %v3603 = vshll.u32 %v3390, 16
        %v3605 = vrot.slane %v3603, 5
        %v3606 = vsel %vm1516, %v3601, %v3605
        %v3608 = vshrl.u32 %v3391, 16
        %v3610 = vrot.slane %v3608, 4
        %v3611 = vshll.u32 %v3391, 16
        %v3613 = vrot.slane %v3611, 5
        %v3614 = vor.u32 %v3610, %v3613
        %v3615 = vrot.slane %v3614, 4
        %v3617 = vshll.u32 %v3392, 16
        %v3619 = vrot.slane %v3617, 5
        %v3620 = vsel %vm1516, %v3615, %v3619
        %v3621 = vshrl.u32 %v3392, 16
        %v3623 = vrot.slane %v3621, 4
        %v3624 = vor.u32 %v3623, %v3619
        %v3625 = vrot.slane %v3624, 4
        %v3627 = vshll.u32 %v3393, 16
        %v3629 = vrot.slane %v3627, 5
        %v3630 = vsel %vm1516, %v3625, %v3629
        %v3632 = vshrl.u32 %v3394, 16
        %v3634 = vrot.slane %v3632, 4
        %v3635 = vshll.u32 %v3394, 16
        %v3637 = vrot.slane %v3635, 5
        %v3638 = vor.u32 %v3634, %v3637
        %v3639 = vrot.slane %v3638, 4
        %v3641 = vshll.u32 %v3395, 16
        %v3643 = vrot.slane %v3641, 5
        %v3644 = vsel %vm1516, %v3639, %v3643
        %v3645 = vshrl.u32 %v3395, 16
        %v3647 = vrot.slane %v3645, 4
        %v3648 = vor.u32 %v3647, %v3643
        %v3649 = vrot.slane %v3648, 4
        %v3651 = vshll.u32 %v3396, 16
        %v3653 = vrot.slane %v3651, 5
        %v3654 = vsel %vm1516, %v3649, %v3653
        %v3656 = vshrl.u32 %v3397, 16
        %v3658 = vrot.slane %v3656, 4
        %v3659 = vshll.u32 %v3397, 16
        %v3661 = vrot.slane %v3659, 5
        %v3662 = vor.u32 %v3658, %v3661
        %v3663 = vrot.slane %v3662, 4
        %v3665 = vshll.u32 %v3398, 16
        %v3667 = vrot.slane %v3665, 5
        %v3668 = vsel %vm1516, %v3663, %v3667
        %v3669 = vshrl.u32 %v3398, 16
        %v3671 = vrot.slane %v3669, 4
        %v3672 = vor.u32 %v3671, %v3667
        %v3673 = vrot.slane %v3672, 4
        %v3675 = vshll.u32 %v3399, 16
        %v3677 = vrot.slane %v3675, 5
        %v3678 = vsel %vm1516, %v3673, %v3677
        %v3680 = vshrl.u32 %v3400, 16
        %v3682 = vrot.slane %v3680, 4
        %v3683 = vshll.u32 %v3400, 16
        %v3685 = vrot.slane %v3683, 5
        %v3686 = vor.u32 %v3682, %v3685
        %v3687 = vrot.slane %v3686, 4
        %v3689 = vshll.u32 %v3401, 16
        %v3691 = vrot.slane %v3689, 5
        %v3692 = vsel %vm1516, %v3687, %v3691
        %v3693 = vshrl.u32 %v3401, 16
        %v3695 = vrot.slane %v3693, 4
        %v3696 = vor.u32 %v3695, %v3691
        %v3697 = vrot.slane %v3696, 4
        %v3699 = vshll.u32 %v3402, 16
        %v3701 = vrot.slane %v3699, 5
        %v3702 = vsel %vm1516, %v3697, %v3701
        %v3704 = vshrl.u32 %v3403, 16
        %v3706 = vrot.slane %v3704, 4
        %v3707 = vshll.u32 %v3403, 16
        %v3709 = vrot.slane %v3707, 5
        %v3710 = vor.u32 %v3706, %v3709
        %v3711 = vrot.slane %v3710, 4
        %v3713 = vshll.u32 %v3404, 16
        %v3715 = vrot.slane %v3713, 5
        %v3716 = vsel %vm1516, %v3711, %v3715
        %v3717 = vshrl.u32 %v3404, 16
        %v3719 = vrot.slane %v3717, 4
        %v3720 = vor.u32 %v3719, %v3715
        %v3721 = vrot.slane %v3720, 4
        %v3723 = vshll.u32 %v3405, 16
        %v3725 = vrot.slane %v3723, 5
        %v3726 = vsel %vm1516, %v3721, %v3725
        %v3728 = vshrl.u32 %v3406, 16
        %v3730 = vrot.slane %v3728, 4
        %v3731 = vshll.u32 %v3406, 16
        %v3733 = vrot.slane %v3731, 5
        %v3734 = vor.u32 %v3730, %v3733
        %v3735 = vrot.slane %v3734, 4
        %v3737 = vshll.u32 %v3407, 16
        %v3739 = vrot.slane %v3737, 5
        %v3740 = vsel %vm1516, %v3735, %v3739
        %v3741 = vshrl.u32 %v3407, 16
        %v3743 = vrot.slane %v3741, 4
        %v3744 = vor.u32 %v3743, %v3739
        %v3745 = vrot.slane %v3744, 4
        %v3747 = vshll.u32 %v3408, 16
        %v3749 = vrot.slane %v3747, 5
        %v3750 = vsel %vm1516, %v3745, %v3749
        %v3752 = vshrl.u32 %v3409, 16
        %v3754 = vrot.slane %v3752, 4
        %v3755 = vshll.u32 %v3409, 16
        %v3757 = vrot.slane %v3755, 5
        %v3758 = vor.u32 %v3754, %v3757
        %v3759 = vrot.slane %v3758, 4
        %v3761 = vshll.u32 %v3410, 16
        %v3763 = vrot.slane %v3761, 5
        %v3764 = vsel %vm1516, %v3759, %v3763
        %v3765 = vshrl.u32 %v3410, 16
        %v3767 = vrot.slane %v3765, 4
        %v3768 = vor.u32 %v3767, %v3763
        %v3769 = vrot.slane %v3768, 4
        %v3771 = vshll.u32 %v3411, 16
        %v3773 = vrot.slane %v3771, 5
        %v3774 = vsel %vm1516, %v3769, %v3773
        %v3776 = vshrl.u32 %v3412, 16
        %v3778 = vrot.slane %v3776, 4
        %v3779 = vshll.u32 %v3412, 16
        %v3781 = vrot.slane %v3779, 5
        %v3782 = vor.u32 %v3778, %v3781
        %v3783 = vrot.slane %v3782, 4
        %v3785 = vshll.u32 %v3413, 16
        %v3787 = vrot.slane %v3785, 5
        %v3788 = vsel %vm1516, %v3783, %v3787
        %v3789 = vshrl.u32 %v3413, 16
        %v3791 = vrot.slane %v3789, 4
        %v3792 = vor.u32 %v3791, %v3787
        %v3793 = vrot.slane %v3792, 4
        %v3795 = vshll.u32 %v3414, 16
        %v3797 = vrot.slane %v3795, 5
        %v3798 = vsel %vm1516, %v3793, %v3797
        %s3799 = scalar_lea.vmem %s3, 256
        %v3800 = vld [vmem:[%s3799] sm:$0xf]
        %v3801 = vld [vmem:[%s3799 + $0x4] sm:$0xf]
        %v3802 = vld [vmem:[%s3799 + $0x8] sm:$0xf]
        %v3803 = vld [vmem:[%s3799 + $0xc] sm:$0xf]
        %v3804 = vld [vmem:[%s3799 + $0x10] sm:$0xf]
        %v3805 = vld [vmem:[%s3799 + $0x14] sm:$0xf]
        %v3806 = vld [vmem:[%s3799 + $0x18] sm:$0xf]
        %v3807 = vld [vmem:[%s3799 + $0x1c] sm:$0xf]
        %v3808 = vld [vmem:[%s3799 + $0x20] sm:$0xf]
        %v3809 = vld [vmem:[%s3799 + $0x24] sm:$0xf]
        %v3810 = vld [vmem:[%s3799 + $0x28] sm:$0xf]
        %v3811 = vld [vmem:[%s3799 + $0x2c] sm:$0xf]
        %v3812 = vld [vmem:[%s3799 + $0x30] sm:$0xf]
        %v3813 = vld [vmem:[%s3799 + $0x34] sm:$0xf]
        %v3814 = vld [vmem:[%s3799 + $0x38] sm:$0xf]
        %v3815 = vld [vmem:[%s3799 + $0x3c] sm:$0xf]
        %v3816 = vunpack.c.l.b16 %v3428
        %v3817 = vunpack.c.l.b16 %v3438
        %v3818 = vunpack.c.l.b16 %v3452
        %v3819 = vunpack.c.l.b16 %v3462
        %v3820 = vunpack.c.l.b16 %v3476
        %v3821 = vunpack.c.l.b16 %v3486
        %v3822 = vunpack.c.l.b16 %v3500
        %v3823 = vunpack.c.l.b16 %v3510
        %v3824 = vunpack.c.l.b16 %v3524
        %v3825 = vunpack.c.l.b16 %v3534
        %v3826 = vunpack.c.l.b16 %v3548
        %v3827 = vunpack.c.l.b16 %v3558
        %v3828 = vunpack.c.l.b16 %v3572
        %v3829 = vunpack.c.l.b16 %v3582
        %v3830 = vunpack.c.l.b16 %v3596
        %v3831 = vunpack.c.l.b16 %v3606
        %v3832 = vunpack.c.l.b16 %v3620
        %v3833 = vunpack.c.l.b16 %v3630
        %v3834 = vunpack.c.l.b16 %v3644
        %v3835 = vunpack.c.l.b16 %v3654
        %v3836 = vunpack.c.l.b16 %v3668
        %v3837 = vunpack.c.l.b16 %v3678
        %v3838 = vunpack.c.l.b16 %v3692
        %v3839 = vunpack.c.l.b16 %v3702
        %v3840 = vunpack.c.l.b16 %v3716
        %v3841 = vunpack.c.l.b16 %v3726
        %v3842 = vunpack.c.l.b16 %v3740
        %v3843 = vunpack.c.l.b16 %v3750
        %v3844 = vunpack.c.l.b16 %v3764
        %v3845 = vunpack.c.l.b16 %v3774
        %v3846 = vunpack.c.l.b16 %v3788
        %v3847 = vunpack.c.l.b16 %v3798
        %v3848 = vpack.c.b16 %v3817, %v3816
        %v3849 = vpack.c.b16 %v3819, %v3818
        %v3850 = vpack.c.b16 %v3821, %v3820
        %v3851 = vpack.c.b16 %v3823, %v3822
        %v3852 = vpack.c.b16 %v3825, %v3824
        %v3853 = vpack.c.b16 %v3827, %v3826
        %v3854 = vpack.c.b16 %v3829, %v3828
        %v3855 = vpack.c.b16 %v3831, %v3830
        %v3856 = vpack.c.b16 %v3833, %v3832
        %v3857 = vpack.c.b16 %v3835, %v3834
        %v3858 = vpack.c.b16 %v3837, %v3836
        %v3859 = vpack.c.b16 %v3839, %v3838
        %v3860 = vpack.c.b16 %v3841, %v3840
        %v3861 = vpack.c.b16 %v3843, %v3842
        %v3862 = vpack.c.b16 %v3845, %v3844
        %v3863 = vpack.c.b16 %v3847, %v3846
        %v3896 = vunpack.c.l.b16 %v3800
        %v3897 = vunpack.c.l.b16 %v3801
        %v3898 = vunpack.c.l.b16 %v3802
        %v3899 = vunpack.c.l.b16 %v3803
        %v3900 = vunpack.c.l.b16 %v3804
        %v3901 = vunpack.c.l.b16 %v3805
        %v3902 = vunpack.c.l.b16 %v3806
        %v3903 = vunpack.c.l.b16 %v3807
        %v3904 = vunpack.c.l.b16 %v3808
        %v3905 = vunpack.c.l.b16 %v3809
        %v3906 = vunpack.c.l.b16 %v3810
        %v3907 = vunpack.c.l.b16 %v3811
        %v3908 = vunpack.c.l.b16 %v3812
        %v3909 = vunpack.c.l.b16 %v3813
        %v3910 = vunpack.c.l.b16 %v3814
        %v3911 = vunpack.c.l.b16 %v3815
        %v3912 = vpack.c.b16 %v3897, %v3896
        %v3913 = vpack.c.b16 %v3899, %v3898
        %v3914 = vpack.c.b16 %v3901, %v3900
        %v3915 = vpack.c.b16 %v3903, %v3902
        %v3916 = vpack.c.b16 %v3905, %v3904
        %v3917 = vpack.c.b16 %v3907, %v3906
        %v3918 = vpack.c.b16 %v3909, %v3908
        %v3919 = vpack.c.b16 %v3911, %v3910
        %3928 = vmatprep.subr.bf16.mxu0 0
        %3929 = vmatpush1.bf16.msra.mxu0 %v3919
        %3930 = vmatprep.subr.bf16.mxu0 0
        %3931 = vmatpush1.bf16.msra.mxu0 %v3918
        %3932 = vmatprep.subr.bf16.mxu0 0
        %3933 = vmatpush1.bf16.msra.mxu0 %v3917
        %3934 = vmatprep.subr.bf16.mxu0 0
        %3935 = vmatpush1.bf16.msra.mxu0 %v3916
        %3936 = vmatprep.subr.bf16.mxu0 0
        %3937 = vmatpush1.bf16.msra.mxu0 %v3915
        %3938 = vmatprep.subr.bf16.mxu0 0
        %3939 = vmatpush1.bf16.msra.mxu0 %v3914
        %3940 = vmatprep.subr.bf16.mxu0 0
        %3941 = vmatpush1.bf16.msra.mxu0 %v3913
        %3942 = vmatprep.subr.bf16.mxu0 0
        %3943 = vmatpush1.bf16.msra.mxu0 %v3912
        %3944 = vmatprep.subr.bf16.mxu0 0
        %3945 = vmatpush2.bf16.msra.mxu0 0
        %3946 = vmatprep.subr.bf16.mxu0 0
        %3947 = vmatpush2.bf16.msra.mxu0 0
        %3948 = vmatprep.subr.bf16.mxu0 0
        %3949 = vmatpush2.bf16.msra.mxu0 0
        %3950 = vmatprep.subr.bf16.mxu0 0
        %3951 = vmatpush2.bf16.msra.mxu0 0
        %3952 = vmatprep.subr.bf16.mxu0 0
        %3953 = vmatpush2.bf16.msra.mxu0 0
        %3954 = vmatprep.subr.bf16.mxu0 0
        %3955 = vmatpush2.bf16.msra.mxu0 0
        %3956 = vmatprep.subr.bf16.mxu0 0
        %3957 = vmatpush2.bf16.msra.mxu0 0
        %3958 = vmatprep.subr.bf16.mxu0 0
        %3959 = vmatpush2.bf16.msra.mxu0 0
        %3960 = vmatprep.mubr.bf16.mxu0 0
        %3961 = vmatmul.mubr.bf16.gmra.mxu0 %v3848
        %v3962 = vpop.f32.mrf.mxu0
        %v3963 = vadd.f32 0.0, %v3962
        %v3964 = vpop.f32.mrf.mxu0
        %v3965 = vpop.f32.mrf.mxu0
        %v3966 = vadd.f32 0.0, %v3965
        %v3967 = vpop.f32.mrf.mxu0
        %3968 = vmatprep.mubr.bf16.mxu0 0
        %3969 = vmatmul.mubr.bf16.gmra.mxu0 %v3849
        %v3970 = vpop.f32.mrf.mxu0
        %v3971 = vadd.f32 0.0, %v3970
        %v3972 = vpop.f32.mrf.mxu0
        %v3973 = vpop.f32.mrf.mxu0
        %v3974 = vadd.f32 0.0, %v3973
        %v3975 = vpop.f32.mrf.mxu0
        %3976 = vmatprep.mubr.bf16.mxu0 0
        %3977 = vmatmul.mubr.bf16.gmra.mxu0 %v3850
        %v3978 = vpop.f32.mrf.mxu0
        %v3979 = vadd.f32 0.0, %v3978
        %v3980 = vpop.f32.mrf.mxu0
        %v3981 = vpop.f32.mrf.mxu0
        %v3982 = vadd.f32 0.0, %v3981
        %v3983 = vpop.f32.mrf.mxu0
        %3984 = vmatprep.mubr.bf16.mxu0 0
        %3985 = vmatmul.mubr.bf16.gmra.mxu0 %v3851
        %v3986 = vpop.f32.mrf.mxu0
        %v3987 = vadd.f32 0.0, %v3986
        %v3988 = vpop.f32.mrf.mxu0
        %v3989 = vpop.f32.mrf.mxu0
        %v3990 = vadd.f32 0.0, %v3989
        %v3991 = vpop.f32.mrf.mxu0
        %3992 = vmatprep.mubr.bf16.mxu0 0
        %3993 = vmatmul.mubr.bf16.gmra.mxu0 %v3852
        %v3994 = vpop.f32.mrf.mxu0
        %v3995 = vadd.f32 0.0, %v3994
        %v3996 = vpop.f32.mrf.mxu0
        %v3997 = vpop.f32.mrf.mxu0
        %v3998 = vadd.f32 0.0, %v3997
        %v3999 = vpop.f32.mrf.mxu0
        %4000 = vmatprep.mubr.bf16.mxu0 0
        %4001 = vmatmul.mubr.bf16.gmra.mxu0 %v3853
        %v4002 = vpop.f32.mrf.mxu0
        %v4003 = vadd.f32 0.0, %v4002
        %v4004 = vpop.f32.mrf.mxu0
        %v4005 = vpop.f32.mrf.mxu0
        %v4006 = vadd.f32 0.0, %v4005
        %v4007 = vpop.f32.mrf.mxu0
        %4008 = vmatprep.mubr.bf16.mxu0 0
        %4009 = vmatmul.mubr.bf16.gmra.mxu0 %v3854
        %v4010 = vpop.f32.mrf.mxu0
        %v4011 = vadd.f32 0.0, %v4010
        %v4012 = vpop.f32.mrf.mxu0
        %v4013 = vpop.f32.mrf.mxu0
        %v4014 = vadd.f32 0.0, %v4013
        %v4015 = vpop.f32.mrf.mxu0
        %4016 = vmatprep.mubr.bf16.mxu0 0
        %4017 = vmatmul.mubr.bf16.gmra.mxu0 %v3855
        %v4018 = vpop.f32.mrf.mxu0
        %v4019 = vadd.f32 0.0, %v4018
        %v4020 = vpop.f32.mrf.mxu0
        %v4021 = vpop.f32.mrf.mxu0
        %v4022 = vadd.f32 0.0, %v4021
        %v4023 = vpop.f32.mrf.mxu0
        %4024 = vmatprep.mubr.bf16.mxu0 0
        %4025 = vmatmul.mubr.bf16.gmra.mxu0 %v3856
        %v4026 = vpop.f32.mrf.mxu0
        %v4027 = vadd.f32 0.0, %v4026
        %v4028 = vpop.f32.mrf.mxu0
        %v4029 = vpop.f32.mrf.mxu0
        %v4030 = vadd.f32 0.0, %v4029
        %v4031 = vpop.f32.mrf.mxu0
        %4032 = vmatprep.mubr.bf16.mxu0 0
        %4033 = vmatmul.mubr.bf16.gmra.mxu0 %v3857
        %v4034 = vpop.f32.mrf.mxu0
        %v4035 = vadd.f32 0.0, %v4034
        %v4036 = vpop.f32.mrf.mxu0
        %v4037 = vpop.f32.mrf.mxu0
        %v4038 = vadd.f32 0.0, %v4037
        %v4039 = vpop.f32.mrf.mxu0
        %4040 = vmatprep.mubr.bf16.mxu0 0
        %4041 = vmatmul.mubr.bf16.gmra.mxu0 %v3858
        %v4042 = vpop.f32.mrf.mxu0
        %v4043 = vadd.f32 0.0, %v4042
        %v4044 = vpop.f32.mrf.mxu0
        %v4045 = vpop.f32.mrf.mxu0
        %v4046 = vadd.f32 0.0, %v4045
        %v4047 = vpop.f32.mrf.mxu0
        %4048 = vmatprep.mubr.bf16.mxu0 0
        %4049 = vmatmul.mubr.bf16.gmra.mxu0 %v3859
        %v4050 = vpop.f32.mrf.mxu0
        %v4051 = vadd.f32 0.0, %v4050
        %v4052 = vpop.f32.mrf.mxu0
        %v4053 = vpop.f32.mrf.mxu0
        %v4054 = vadd.f32 0.0, %v4053
        %v4055 = vpop.f32.mrf.mxu0
        %4056 = vmatprep.mubr.bf16.mxu0 0
        %4057 = vmatmul.mubr.bf16.gmra.mxu0 %v3860
        %v4058 = vpop.f32.mrf.mxu0
        %v4059 = vadd.f32 0.0, %v4058
        %v4060 = vpop.f32.mrf.mxu0
        %v4061 = vpop.f32.mrf.mxu0
        %v4062 = vadd.f32 0.0, %v4061
        %v4063 = vpop.f32.mrf.mxu0
        %4064 = vmatprep.mubr.bf16.mxu0 0
        %4065 = vmatmul.mubr.bf16.gmra.mxu0 %v3861
        %v4066 = vpop.f32.mrf.mxu0
        %v4067 = vadd.f32 0.0, %v4066
        %v4068 = vpop.f32.mrf.mxu0
        %v4069 = vpop.f32.mrf.mxu0
        %v4070 = vadd.f32 0.0, %v4069
        %v4071 = vpop.f32.mrf.mxu0
        %4072 = vmatprep.mubr.bf16.mxu0 0
        %4073 = vmatmul.mubr.bf16.gmra.mxu0 %v3862
        %v4074 = vpop.f32.mrf.mxu0
        %v4075 = vadd.f32 0.0, %v4074
        %v4076 = vpop.f32.mrf.mxu0
        %v4077 = vpop.f32.mrf.mxu0
        %v4078 = vadd.f32 0.0, %v4077
        %v4079 = vpop.f32.mrf.mxu0
        %4080 = vmatprep.mubr.bf16.mxu0 0
        %4081 = vmatmul.mubr.bf16.gmra.mxu0 %v3863
        %v4082 = vpop.f32.mrf.mxu0
        %v4083 = vadd.f32 0.0, %v4082
        %v4084 = vpop.f32.mrf.mxu0
        %v4085 = vpop.f32.mrf.mxu0
        %v4086 = vadd.f32 0.0, %v4085
        %v4087 = vpop.f32.mrf.mxu0
        %4088 = vdwg.mxu0
        %v4089 = vadd.f32 %v3335, %v3963
        %v4090 = vadd.f32 %v3336, %v3966
        %v4091 = vadd.f32 %v3337, %v3971
        %v4092 = vadd.f32 %v3338, %v3974
        %v4093 = vadd.f32 %v3339, %v3979
        %v4094 = vadd.f32 %v3340, %v3982
        %v4095 = vadd.f32 %v3341, %v3987
        %v4096 = vadd.f32 %v3342, %v3990
        %v4097 = vadd.f32 %v3343, %v3995
        %v4098 = vadd.f32 %v3344, %v3998
        %v4099 = vadd.f32 %v3345, %v4003
        %v4100 = vadd.f32 %v3346, %v4006
        %v4101 = vadd.f32 %v3347, %v4011
        %v4102 = vadd.f32 %v3348, %v4014
        %v4103 = vadd.f32 %v3349, %v4019
        %v4104 = vadd.f32 %v3350, %v4022
        %v4105 = vadd.f32 %v3351, %v4027
        %v4106 = vadd.f32 %v3352, %v4030
        %v4107 = vadd.f32 %v3353, %v4035
        %v4108 = vadd.f32 %v3354, %v4038
        %v4109 = vadd.f32 %v3355, %v4043
        %v4110 = vadd.f32 %v3356, %v4046
        %v4111 = vadd.f32 %v3357, %v4051
        %v4112 = vadd.f32 %v3358, %v4054
        %v4113 = vadd.f32 %v3359, %v4059
        %v4114 = vadd.f32 %v3360, %v4062
        %v4115 = vadd.f32 %v3361, %v4067
        %v4116 = vadd.f32 %v3362, %v4070
        %v4117 = vadd.f32 %v3363, %v4075
        %v4118 = vadd.f32 %v3364, %v4078
        %v4119 = vadd.f32 %v3365, %v4083
        %v4120 = vadd.f32 %v3366, %v4086
        %v4121 = vld [vmem:[%s1332] sm:$0xe]
        %v4122 = vld [vmem:[%s1332 + $0xc] sm:$0xe]
        %v4123 = vld [vmem:[%s1332 + $0x18] sm:$0xe]
        %v4124 = vld [vmem:[%s1332 + $0x24] sm:$0xe]
        %v4125 = vld [vmem:[%s1332 + $0x30] sm:$0xe]
        %v4126 = vld [vmem:[%s1332 + $0x3c] sm:$0xe]
        %v4127 = vld [vmem:[%s1332 + $0x48] sm:$0xe]
        %v4128 = vld [vmem:[%s1332 + $0x54] sm:$0xe]
        %v4129 = vld [vmem:[%s1332 + $0x60] sm:$0xe]
        %v4130 = vld [vmem:[%s1332 + $0x6c] sm:$0xe]
        %v4131 = vld [vmem:[%s1332 + $0x78] sm:$0xe]
        %v4132 = vld [vmem:[%s1332 + $0x84] sm:$0xe]
        %v4133 = vld [vmem:[%s1332 + $0x90] sm:$0xe]
        %v4134 = vld [vmem:[%s1332 + $0x9c] sm:$0xe]
        %v4135 = vld [vmem:[%s1332 + $0xa8] sm:$0xe]
        %v4136 = vld [vmem:[%s1332 + $0xb4] sm:$0xe]
        %v4185 = vrot.slane %v4121, 5
        %v4186 = vrot.slane %v4185, 4
        %v4187 = vrot.slane %v3368, 5
        %v4188 = vsel %vm2546, %v4186, %v4187
        %v4189 = vrot.slane %v4187, 4
        %v4190 = vrot.slane %v3369, 5
        %v4191 = vsel %vm2546, %v4189, %v4190
        %v4192 = vrot.slane %v4122, 5
        %v4193 = vrot.slane %v4192, 4
        %v4194 = vrot.slane %v3371, 5
        %v4195 = vsel %vm2546, %v4193, %v4194
        %v4196 = vrot.slane %v4194, 4
        %v4197 = vrot.slane %v3372, 5
        %v4198 = vsel %vm2546, %v4196, %v4197
        %v4199 = vrot.slane %v4123, 5
        %v4200 = vrot.slane %v4199, 4
        %v4201 = vrot.slane %v3374, 5
        %v4202 = vsel %vm2546, %v4200, %v4201
        %v4203 = vrot.slane %v4201, 4
        %v4204 = vrot.slane %v3375, 5
        %v4205 = vsel %vm2546, %v4203, %v4204
        %v4206 = vrot.slane %v4124, 5
        %v4207 = vrot.slane %v4206, 4
        %v4208 = vrot.slane %v3377, 5
        %v4209 = vsel %vm2546, %v4207, %v4208
        %v4210 = vrot.slane %v4208, 4
        %v4211 = vrot.slane %v3378, 5
        %v4212 = vsel %vm2546, %v4210, %v4211
        %v4213 = vrot.slane %v4125, 5
        %v4214 = vrot.slane %v4213, 4
        %v4215 = vrot.slane %v3380, 5
        %v4216 = vsel %vm2546, %v4214, %v4215
        %v4217 = vrot.slane %v4215, 4
        %v4218 = vrot.slane %v3381, 5
        %v4219 = vsel %vm2546, %v4217, %v4218
        %v4220 = vrot.slane %v4126, 5
        %v4221 = vrot.slane %v4220, 4
        %v4222 = vrot.slane %v3383, 5
        %v4223 = vsel %vm2546, %v4221, %v4222
        %v4224 = vrot.slane %v4222, 4
        %v4225 = vrot.slane %v3384, 5
        %v4226 = vsel %vm2546, %v4224, %v4225
        %v4227 = vrot.slane %v4127, 5
        %v4228 = vrot.slane %v4227, 4
        %v4229 = vrot.slane %v3386, 5
        %v4230 = vsel %vm2546, %v4228, %v4229
        %v4231 = vrot.slane %v4229, 4
        %v4232 = vrot.slane %v3387, 5
        %v4233 = vsel %vm2546, %v4231, %v4232
        %v4234 = vrot.slane %v4128, 5
        %v4235 = vrot.slane %v4234, 4
        %v4236 = vrot.slane %v3389, 5
        %v4237 = vsel %vm2546, %v4235, %v4236
        %v4238 = vrot.slane %v4236, 4
        %v4239 = vrot.slane %v3390, 5
        %v4240 = vsel %vm2546, %v4238, %v4239
        %v4241 = vrot.slane %v4129, 5
        %v4242 = vrot.slane %v4241, 4
        %v4243 = vrot.slane %v3392, 5
        %v4244 = vsel %vm2546, %v4242, %v4243
        %v4245 = vrot.slane %v4243, 4
        %v4246 = vrot.slane %v3393, 5
        %v4247 = vsel %vm2546, %v4245, %v4246
        %v4248 = vrot.slane %v4130, 5
        %v4249 = vrot.slane %v4248, 4
        %v4250 = vrot.slane %v3395, 5
        %v4251 = vsel %vm2546, %v4249, %v4250
        %v4252 = vrot.slane %v4250, 4
        %v4253 = vrot.slane %v3396, 5
        %v4254 = vsel %vm2546, %v4252, %v4253
        %v4255 = vrot.slane %v4131, 5
        %v4256 = vrot.slane %v4255, 4
        %v4257 = vrot.slane %v3398, 5
        %v4258 = vsel %vm2546, %v4256, %v4257
        %v4259 = vrot.slane %v4257, 4
        %v4260 = vrot.slane %v3399, 5
        %v4261 = vsel %vm2546, %v4259, %v4260
        %v4262 = vrot.slane %v4132, 5
        %v4263 = vrot.slane %v4262, 4
        %v4264 = vrot.slane %v3401, 5
        %v4265 = vsel %vm2546, %v4263, %v4264
        %v4266 = vrot.slane %v4264, 4
        %v4267 = vrot.slane %v3402, 5
        %v4268 = vsel %vm2546, %v4266, %v4267
        %v4269 = vrot.slane %v4133, 5
        %v4270 = vrot.slane %v4269, 4
        %v4271 = vrot.slane %v3404, 5
        %v4272 = vsel %vm2546, %v4270, %v4271
        %v4273 = vrot.slane %v4271, 4
        %v4274 = vrot.slane %v3405, 5
        %v4275 = vsel %vm2546, %v4273, %v4274
        %v4276 = vrot.slane %v4134, 5
        %v4277 = vrot.slane %v4276, 4
        %v4278 = vrot.slane %v3407, 5
        %v4279 = vsel %vm2546, %v4277, %v4278
        %v4280 = vrot.slane %v4278, 4
        %v4281 = vrot.slane %v3408, 5
        %v4282 = vsel %vm2546, %v4280, %v4281
        %v4283 = vrot.slane %v4135, 5
        %v4284 = vrot.slane %v4283, 4
        %v4285 = vrot.slane %v3410, 5
        %v4286 = vsel %vm2546, %v4284, %v4285
        %v4287 = vrot.slane %v4285, 4
        %v4288 = vrot.slane %v3411, 5
        %v4289 = vsel %vm2546, %v4287, %v4288
        %v4290 = vrot.slane %v4136, 5
        %v4291 = vrot.slane %v4290, 4
        %v4292 = vrot.slane %v3413, 5
        %v4293 = vsel %vm2546, %v4291, %v4292
        %v4294 = vrot.slane %v4292, 4
        %v4295 = vrot.slane %v3414, 5
        %v4296 = vsel %vm2546, %v4294, %v4295
        %s4297 = scalar_lea.vmem %s3, 320
        %v4298 = vld [vmem:[%s4297] sm:$0xf]
        %v4299 = vld [vmem:[%s4297 + $0x4] sm:$0xf]
        %v4300 = vld [vmem:[%s4297 + $0x8] sm:$0xf]
        %v4301 = vld [vmem:[%s4297 + $0xc] sm:$0xf]
        %v4302 = vld [vmem:[%s4297 + $0x10] sm:$0xf]
        %v4303 = vld [vmem:[%s4297 + $0x14] sm:$0xf]
        %v4304 = vld [vmem:[%s4297 + $0x18] sm:$0xf]
        %v4305 = vld [vmem:[%s4297 + $0x1c] sm:$0xf]
        %v4306 = vld [vmem:[%s4297 + $0x20] sm:$0xf]
        %v4307 = vld [vmem:[%s4297 + $0x24] sm:$0xf]
        %v4308 = vld [vmem:[%s4297 + $0x28] sm:$0xf]
        %v4309 = vld [vmem:[%s4297 + $0x2c] sm:$0xf]
        %v4310 = vld [vmem:[%s4297 + $0x30] sm:$0xf]
        %v4311 = vld [vmem:[%s4297 + $0x34] sm:$0xf]
        %v4312 = vld [vmem:[%s4297 + $0x38] sm:$0xf]
        %v4313 = vld [vmem:[%s4297 + $0x3c] sm:$0xf]
        %v4314 = vunpack.c.l.b16 %v4188
        %v4315 = vunpack.c.l.b16 %v4191
        %v4316 = vunpack.c.l.b16 %v4195
        %v4317 = vunpack.c.l.b16 %v4198
        %v4318 = vunpack.c.l.b16 %v4202
        %v4319 = vunpack.c.l.b16 %v4205
        %v4320 = vunpack.c.l.b16 %v4209
        %v4321 = vunpack.c.l.b16 %v4212
        %v4322 = vunpack.c.l.b16 %v4216
        %v4323 = vunpack.c.l.b16 %v4219
        %v4324 = vunpack.c.l.b16 %v4223
        %v4325 = vunpack.c.l.b16 %v4226
        %v4326 = vunpack.c.l.b16 %v4230
        %v4327 = vunpack.c.l.b16 %v4233
        %v4328 = vunpack.c.l.b16 %v4237
        %v4329 = vunpack.c.l.b16 %v4240
        %v4330 = vunpack.c.l.b16 %v4244
        %v4331 = vunpack.c.l.b16 %v4247
        %v4332 = vunpack.c.l.b16 %v4251
        %v4333 = vunpack.c.l.b16 %v4254
        %v4334 = vunpack.c.l.b16 %v4258
        %v4335 = vunpack.c.l.b16 %v4261
        %v4336 = vunpack.c.l.b16 %v4265
        %v4337 = vunpack.c.l.b16 %v4268
        %v4338 = vunpack.c.l.b16 %v4272
        %v4339 = vunpack.c.l.b16 %v4275
        %v4340 = vunpack.c.l.b16 %v4279
        %v4341 = vunpack.c.l.b16 %v4282
        %v4342 = vunpack.c.l.b16 %v4286
        %v4343 = vunpack.c.l.b16 %v4289
        %v4344 = vunpack.c.l.b16 %v4293
        %v4345 = vunpack.c.l.b16 %v4296
        %v4346 = vpack.c.b16 %v4315, %v4314
        %v4347 = vpack.c.b16 %v4317, %v4316
        %v4348 = vpack.c.b16 %v4319, %v4318
        %v4349 = vpack.c.b16 %v4321, %v4320
        %v4350 = vpack.c.b16 %v4323, %v4322
        %v4351 = vpack.c.b16 %v4325, %v4324
        %v4352 = vpack.c.b16 %v4327, %v4326
        %v4353 = vpack.c.b16 %v4329, %v4328
        %v4354 = vpack.c.b16 %v4331, %v4330
        %v4355 = vpack.c.b16 %v4333, %v4332
        %v4356 = vpack.c.b16 %v4335, %v4334
        %v4357 = vpack.c.b16 %v4337, %v4336
        %v4358 = vpack.c.b16 %v4339, %v4338
        %v4359 = vpack.c.b16 %v4341, %v4340
        %v4360 = vpack.c.b16 %v4343, %v4342
        %v4361 = vpack.c.b16 %v4345, %v4344
        %v4394 = vunpack.c.l.b16 %v4298
        %v4395 = vunpack.c.l.b16 %v4299
        %v4396 = vunpack.c.l.b16 %v4300
        %v4397 = vunpack.c.l.b16 %v4301
        %v4398 = vunpack.c.l.b16 %v4302
        %v4399 = vunpack.c.l.b16 %v4303
        %v4400 = vunpack.c.l.b16 %v4304
        %v4401 = vunpack.c.l.b16 %v4305
        %v4402 = vunpack.c.l.b16 %v4306
        %v4403 = vunpack.c.l.b16 %v4307
        %v4404 = vunpack.c.l.b16 %v4308
        %v4405 = vunpack.c.l.b16 %v4309
        %v4406 = vunpack.c.l.b16 %v4310
        %v4407 = vunpack.c.l.b16 %v4311
        %v4408 = vunpack.c.l.b16 %v4312
        %v4409 = vunpack.c.l.b16 %v4313
        %v4410 = vpack.c.b16 %v4395, %v4394
        %v4411 = vpack.c.b16 %v4397, %v4396
        %v4412 = vpack.c.b16 %v4399, %v4398
        %v4413 = vpack.c.b16 %v4401, %v4400
        %v4414 = vpack.c.b16 %v4403, %v4402
        %v4415 = vpack.c.b16 %v4405, %v4404
        %v4416 = vpack.c.b16 %v4407, %v4406
        %v4417 = vpack.c.b16 %v4409, %v4408
        %4426 = vmatprep.subr.bf16.mxu0 0
        %4427 = vmatpush1.bf16.msra.mxu0 %v4417
        %4428 = vmatprep.subr.bf16.mxu0 0
        %4429 = vmatpush1.bf16.msra.mxu0 %v4416
        %4430 = vmatprep.subr.bf16.mxu0 0
        %4431 = vmatpush1.bf16.msra.mxu0 %v4415
        %4432 = vmatprep.subr.bf16.mxu0 0
        %4433 = vmatpush1.bf16.msra.mxu0 %v4414
        %4434 = vmatprep.subr.bf16.mxu0 0
        %4435 = vmatpush1.bf16.msra.mxu0 %v4413
        %4436 = vmatprep.subr.bf16.mxu0 0
        %4437 = vmatpush1.bf16.msra.mxu0 %v4412
        %4438 = vmatprep.subr.bf16.mxu0 0
        %4439 = vmatpush1.bf16.msra.mxu0 %v4411
        %4440 = vmatprep.subr.bf16.mxu0 0
        %4441 = vmatpush1.bf16.msra.mxu0 %v4410
        %4442 = vmatprep.subr.bf16.mxu0 0
        %4443 = vmatpush2.bf16.msra.mxu0 0
        %4444 = vmatprep.subr.bf16.mxu0 0
        %4445 = vmatpush2.bf16.msra.mxu0 0
        %4446 = vmatprep.subr.bf16.mxu0 0
        %4447 = vmatpush2.bf16.msra.mxu0 0
        %4448 = vmatprep.subr.bf16.mxu0 0
        %4449 = vmatpush2.bf16.msra.mxu0 0
        %4450 = vmatprep.subr.bf16.mxu0 0
        %4451 = vmatpush2.bf16.msra.mxu0 0
        %4452 = vmatprep.subr.bf16.mxu0 0
        %4453 = vmatpush2.bf16.msra.mxu0 0
        %4454 = vmatprep.subr.bf16.mxu0 0
        %4455 = vmatpush2.bf16.msra.mxu0 0
        %4456 = vmatprep.subr.bf16.mxu0 0
        %4457 = vmatpush2.bf16.msra.mxu0 0
        %4458 = vmatprep.mubr.bf16.mxu0 0
        %4459 = vmatmul.mubr.bf16.gmra.mxu0 %v4346
        %v4460 = vpop.f32.mrf.mxu0
        %v4461 = vadd.f32 0.0, %v4460
        %v4462 = vpop.f32.mrf.mxu0
        %v4463 = vpop.f32.mrf.mxu0
        %v4464 = vadd.f32 0.0, %v4463
        %v4465 = vpop.f32.mrf.mxu0
        %4466 = vmatprep.mubr.bf16.mxu0 0
        %4467 = vmatmul.mubr.bf16.gmra.mxu0 %v4347
        %v4468 = vpop.f32.mrf.mxu0
        %v4469 = vadd.f32 0.0, %v4468
        %v4470 = vpop.f32.mrf.mxu0
        %v4471 = vpop.f32.mrf.mxu0
        %v4472 = vadd.f32 0.0, %v4471
        %v4473 = vpop.f32.mrf.mxu0
        %4474 = vmatprep.mubr.bf16.mxu0 0
        %4475 = vmatmul.mubr.bf16.gmra.mxu0 %v4348
        %v4476 = vpop.f32.mrf.mxu0
        %v4477 = vadd.f32 0.0, %v4476
        %v4478 = vpop.f32.mrf.mxu0
        %v4479 = vpop.f32.mrf.mxu0
        %v4480 = vadd.f32 0.0, %v4479
        %v4481 = vpop.f32.mrf.mxu0
        %4482 = vmatprep.mubr.bf16.mxu0 0
        %4483 = vmatmul.mubr.bf16.gmra.mxu0 %v4349
        %v4484 = vpop.f32.mrf.mxu0
        %v4485 = vadd.f32 0.0, %v4484
        %v4486 = vpop.f32.mrf.mxu0
        %v4487 = vpop.f32.mrf.mxu0
        %v4488 = vadd.f32 0.0, %v4487
        %v4489 = vpop.f32.mrf.mxu0
        %4490 = vmatprep.mubr.bf16.mxu0 0
        %4491 = vmatmul.mubr.bf16.gmra.mxu0 %v4350
        %v4492 = vpop.f32.mrf.mxu0
        %v4493 = vadd.f32 0.0, %v4492
        %v4494 = vpop.f32.mrf.mxu0
        %v4495 = vpop.f32.mrf.mxu0
        %v4496 = vadd.f32 0.0, %v4495
        %v4497 = vpop.f32.mrf.mxu0
        %4498 = vmatprep.mubr.bf16.mxu0 0
        %4499 = vmatmul.mubr.bf16.gmra.mxu0 %v4351
        %v4500 = vpop.f32.mrf.mxu0
        %v4501 = vadd.f32 0.0, %v4500
        %v4502 = vpop.f32.mrf.mxu0
        %v4503 = vpop.f32.mrf.mxu0
        %v4504 = vadd.f32 0.0, %v4503
        %v4505 = vpop.f32.mrf.mxu0
        %4506 = vmatprep.mubr.bf16.mxu0 0
        %4507 = vmatmul.mubr.bf16.gmra.mxu0 %v4352
        %v4508 = vpop.f32.mrf.mxu0
        %v4509 = vadd.f32 0.0, %v4508
        %v4510 = vpop.f32.mrf.mxu0
        %v4511 = vpop.f32.mrf.mxu0
        %v4512 = vadd.f32 0.0, %v4511
        %v4513 = vpop.f32.mrf.mxu0
        %4514 = vmatprep.mubr.bf16.mxu0 0
        %4515 = vmatmul.mubr.bf16.gmra.mxu0 %v4353
        %v4516 = vpop.f32.mrf.mxu0
        %v4517 = vadd.f32 0.0, %v4516
        %v4518 = vpop.f32.mrf.mxu0
        %v4519 = vpop.f32.mrf.mxu0
        %v4520 = vadd.f32 0.0, %v4519
        %v4521 = vpop.f32.mrf.mxu0
        %4522 = vmatprep.mubr.bf16.mxu0 0
        %4523 = vmatmul.mubr.bf16.gmra.mxu0 %v4354
        %v4524 = vpop.f32.mrf.mxu0
        %v4525 = vadd.f32 0.0, %v4524
        %v4526 = vpop.f32.mrf.mxu0
        %v4527 = vpop.f32.mrf.mxu0
        %v4528 = vadd.f32 0.0, %v4527
        %v4529 = vpop.f32.mrf.mxu0
        %4530 = vmatprep.mubr.bf16.mxu0 0
        %4531 = vmatmul.mubr.bf16.gmra.mxu0 %v4355
        %v4532 = vpop.f32.mrf.mxu0
        %v4533 = vadd.f32 0.0, %v4532
        %v4534 = vpop.f32.mrf.mxu0
        %v4535 = vpop.f32.mrf.mxu0
        %v4536 = vadd.f32 0.0, %v4535
        %v4537 = vpop.f32.mrf.mxu0
        %4538 = vmatprep.mubr.bf16.mxu0 0
        %4539 = vmatmul.mubr.bf16.gmra.mxu0 %v4356
        %v4540 = vpop.f32.mrf.mxu0
        %v4541 = vadd.f32 0.0, %v4540
        %v4542 = vpop.f32.mrf.mxu0
        %v4543 = vpop.f32.mrf.mxu0
        %v4544 = vadd.f32 0.0, %v4543
        %v4545 = vpop.f32.mrf.mxu0
        %4546 = vmatprep.mubr.bf16.mxu0 0
        %4547 = vmatmul.mubr.bf16.gmra.mxu0 %v4357
        %v4548 = vpop.f32.mrf.mxu0
        %v4549 = vadd.f32 0.0, %v4548
        %v4550 = vpop.f32.mrf.mxu0
        %v4551 = vpop.f32.mrf.mxu0
        %v4552 = vadd.f32 0.0, %v4551
        %v4553 = vpop.f32.mrf.mxu0
        %4554 = vmatprep.mubr.bf16.mxu0 0
        %4555 = vmatmul.mubr.bf16.gmra.mxu0 %v4358
        %v4556 = vpop.f32.mrf.mxu0
        %v4557 = vadd.f32 0.0, %v4556
        %v4558 = vpop.f32.mrf.mxu0
        %v4559 = vpop.f32.mrf.mxu0
        %v4560 = vadd.f32 0.0, %v4559
        %v4561 = vpop.f32.mrf.mxu0
        %4562 = vmatprep.mubr.bf16.mxu0 0
        %4563 = vmatmul.mubr.bf16.gmra.mxu0 %v4359
        %v4564 = vpop.f32.mrf.mxu0
        %v4565 = vadd.f32 0.0, %v4564
        %v4566 = vpop.f32.mrf.mxu0
        %v4567 = vpop.f32.mrf.mxu0
        %v4568 = vadd.f32 0.0, %v4567
        %v4569 = vpop.f32.mrf.mxu0
        %4570 = vmatprep.mubr.bf16.mxu0 0
        %4571 = vmatmul.mubr.bf16.gmra.mxu0 %v4360
        %v4572 = vpop.f32.mrf.mxu0
        %v4573 = vadd.f32 0.0, %v4572
        %v4574 = vpop.f32.mrf.mxu0
        %v4575 = vpop.f32.mrf.mxu0
        %v4576 = vadd.f32 0.0, %v4575
        %v4577 = vpop.f32.mrf.mxu0
        %4578 = vmatprep.mubr.bf16.mxu0 0
        %4579 = vmatmul.mubr.bf16.gmra.mxu0 %v4361
        %v4580 = vpop.f32.mrf.mxu0
        %v4581 = vadd.f32 0.0, %v4580
        %v4582 = vpop.f32.mrf.mxu0
        %v4583 = vpop.f32.mrf.mxu0
        %v4584 = vadd.f32 0.0, %v4583
        %v4585 = vpop.f32.mrf.mxu0
        %4586 = vdwg.mxu0
        %v4587 = vadd.f32 %v4089, %v4461
        %v4588 = vadd.f32 %v4090, %v4464
        %v4589 = vadd.f32 %v4091, %v4469
        %v4590 = vadd.f32 %v4092, %v4472
        %v4591 = vadd.f32 %v4093, %v4477
        %v4592 = vadd.f32 %v4094, %v4480
        %v4593 = vadd.f32 %v4095, %v4485
        %v4594 = vadd.f32 %v4096, %v4488
        %v4595 = vadd.f32 %v4097, %v4493
        %v4596 = vadd.f32 %v4098, %v4496
        %v4597 = vadd.f32 %v4099, %v4501
        %v4598 = vadd.f32 %v4100, %v4504
        %v4599 = vadd.f32 %v4101, %v4509
        %v4600 = vadd.f32 %v4102, %v4512
        %v4601 = vadd.f32 %v4103, %v4517
        %v4602 = vadd.f32 %v4104, %v4520
        %v4603 = vadd.f32 %v4105, %v4525
        %v4604 = vadd.f32 %v4106, %v4528
        %v4605 = vadd.f32 %v4107, %v4533
        %v4606 = vadd.f32 %v4108, %v4536
        %v4607 = vadd.f32 %v4109, %v4541
        %v4608 = vadd.f32 %v4110, %v4544
        %v4609 = vadd.f32 %v4111, %v4549
        %v4610 = vadd.f32 %v4112, %v4552
        %v4611 = vadd.f32 %v4113, %v4557
        %v4612 = vadd.f32 %v4114, %v4560
        %v4613 = vadd.f32 %v4115, %v4565
        %v4614 = vadd.f32 %v4116, %v4568
        %v4615 = vadd.f32 %v4117, %v4573
        %v4616 = vadd.f32 %v4118, %v4576
        %v4617 = vadd.f32 %v4119, %v4581
        %v4618 = vadd.f32 %v4120, %v4584
        %s4619 = scalar_lea.vmem [#allocation2], 24
        %v4620 = vld [vmem:[%s4619] sm:$0xf]
        %v4621 = vld [vmem:[%s4619 + $0x4] sm:$0xf]
        %v4622 = vld [vmem:[%s4619 + $0xc] sm:$0xf]
        %v4623 = vld [vmem:[%s4619 + $0x10] sm:$0xf]
        %v4624 = vld [vmem:[%s4619 + $0x18] sm:$0xf]
        %v4625 = vld [vmem:[%s4619 + $0x1c] sm:$0xf]
        %v4626 = vld [vmem:[%s4619 + $0x24] sm:$0xf]
        %v4627 = vld [vmem:[%s4619 + $0x28] sm:$0xf]
        %v4628 = vld [vmem:[%s4619 + $0x30] sm:$0xf]
        %v4629 = vld [vmem:[%s4619 + $0x34] sm:$0xf]
        %v4630 = vld [vmem:[%s4619 + $0x3c] sm:$0xf]
        %v4631 = vld [vmem:[%s4619 + $0x40] sm:$0xf]
        %v4632 = vld [vmem:[%s4619 + $0x48] sm:$0xf]
        %v4633 = vld [vmem:[%s4619 + $0x4c] sm:$0xf]
        %v4634 = vld [vmem:[%s4619 + $0x54] sm:$0xf]
        %v4635 = vld [vmem:[%s4619 + $0x58] sm:$0xf]
        %v4636 = vld [vmem:[%s4619 + $0x60] sm:$0xf]
        %v4637 = vld [vmem:[%s4619 + $0x64] sm:$0xf]
        %v4638 = vld [vmem:[%s4619 + $0x6c] sm:$0xf]
        %v4639 = vld [vmem:[%s4619 + $0x70] sm:$0xf]
        %v4640 = vld [vmem:[%s4619 + $0x78] sm:$0xf]
        %v4641 = vld [vmem:[%s4619 + $0x7c] sm:$0xf]
        %v4642 = vld [vmem:[%s4619 + $0x84] sm:$0xf]
        %v4643 = vld [vmem:[%s4619 + $0x88] sm:$0xf]
        %v4644 = vld [vmem:[%s4619 + $0x90] sm:$0xf]
        %v4645 = vld [vmem:[%s4619 + $0x94] sm:$0xf]
        %v4646 = vld [vmem:[%s4619 + $0x9c] sm:$0xf]
        %v4647 = vld [vmem:[%s4619 + $0xa0] sm:$0xf]
        %v4648 = vld [vmem:[%s4619 + $0xa8] sm:$0xf]
        %v4649 = vld [vmem:[%s4619 + $0xac] sm:$0xf]
        %v4650 = vld [vmem:[%s4619 + $0xb4] sm:$0xf]
        %v4651 = vld [vmem:[%s4619 + $0xb8] sm:$0xf]
        %s4652 = scalar_lea.vmem %s3, 384
        %v4653 = vld [vmem:[%s4652] sm:$0xf]
        %v4654 = vld [vmem:[%s4652 + $0x4] sm:$0xf]
        %v4655 = vld [vmem:[%s4652 + $0x8] sm:$0xf]
        %v4656 = vld [vmem:[%s4652 + $0xc] sm:$0xf]
        %v4657 = vld [vmem:[%s4652 + $0x10] sm:$0xf]
        %v4658 = vld [vmem:[%s4652 + $0x14] sm:$0xf]
        %v4659 = vld [vmem:[%s4652 + $0x18] sm:$0xf]
        %v4660 = vld [vmem:[%s4652 + $0x1c] sm:$0xf]
        %v4661 = vld [vmem:[%s4652 + $0x20] sm:$0xf]
        %v4662 = vld [vmem:[%s4652 + $0x24] sm:$0xf]
        %v4663 = vld [vmem:[%s4652 + $0x28] sm:$0xf]
        %v4664 = vld [vmem:[%s4652 + $0x2c] sm:$0xf]
        %v4665 = vld [vmem:[%s4652 + $0x30] sm:$0xf]
        %v4666 = vld [vmem:[%s4652 + $0x34] sm:$0xf]
        %v4667 = vld [vmem:[%s4652 + $0x38] sm:$0xf]
        %v4668 = vld [vmem:[%s4652 + $0x3c] sm:$0xf]
        %v4701 = vunpack.c.l.b16 %v4620
        %v4702 = vunpack.c.l.b16 %v4621
        %v4703 = vunpack.c.l.b16 %v4622
        %v4704 = vunpack.c.l.b16 %v4623
        %v4705 = vunpack.c.l.b16 %v4624
        %v4706 = vunpack.c.l.b16 %v4625
        %v4707 = vunpack.c.l.b16 %v4626
        %v4708 = vunpack.c.l.b16 %v4627
        %v4709 = vunpack.c.l.b16 %v4628
        %v4710 = vunpack.c.l.b16 %v4629
        %v4711 = vunpack.c.l.b16 %v4630
        %v4712 = vunpack.c.l.b16 %v4631
        %v4713 = vunpack.c.l.b16 %v4632
        %v4714 = vunpack.c.l.b16 %v4633
        %v4715 = vunpack.c.l.b16 %v4634
        %v4716 = vunpack.c.l.b16 %v4635
        %v4717 = vunpack.c.l.b16 %v4636
        %v4718 = vunpack.c.l.b16 %v4637
        %v4719 = vunpack.c.l.b16 %v4638
        %v4720 = vunpack.c.l.b16 %v4639
        %v4721 = vunpack.c.l.b16 %v4640
        %v4722 = vunpack.c.l.b16 %v4641
        %v4723 = vunpack.c.l.b16 %v4642
        %v4724 = vunpack.c.l.b16 %v4643
        %v4725 = vunpack.c.l.b16 %v4644
        %v4726 = vunpack.c.l.b16 %v4645
        %v4727 = vunpack.c.l.b16 %v4646
        %v4728 = vunpack.c.l.b16 %v4647
        %v4729 = vunpack.c.l.b16 %v4648
        %v4730 = vunpack.c.l.b16 %v4649
        %v4731 = vunpack.c.l.b16 %v4650
        %v4732 = vunpack.c.l.b16 %v4651
        %v4733 = vpack.c.b16 %v4702, %v4701
        %v4734 = vpack.c.b16 %v4704, %v4703
        %v4735 = vpack.c.b16 %v4706, %v4705
        %v4736 = vpack.c.b16 %v4708, %v4707
        %v4737 = vpack.c.b16 %v4710, %v4709
        %v4738 = vpack.c.b16 %v4712, %v4711
        %v4739 = vpack.c.b16 %v4714, %v4713
        %v4740 = vpack.c.b16 %v4716, %v4715
        %v4741 = vpack.c.b16 %v4718, %v4717
        %v4742 = vpack.c.b16 %v4720, %v4719
        %v4743 = vpack.c.b16 %v4722, %v4721
        %v4744 = vpack.c.b16 %v4724, %v4723
        %v4745 = vpack.c.b16 %v4726, %v4725
        %v4746 = vpack.c.b16 %v4728, %v4727
        %v4747 = vpack.c.b16 %v4730, %v4729
        %v4748 = vpack.c.b16 %v4732, %v4731
        %v4781 = vunpack.c.l.b16 %v4653
        %v4782 = vunpack.c.l.b16 %v4654
        %v4783 = vunpack.c.l.b16 %v4655
        %v4784 = vunpack.c.l.b16 %v4656
        %v4785 = vunpack.c.l.b16 %v4657
        %v4786 = vunpack.c.l.b16 %v4658
        %v4787 = vunpack.c.l.b16 %v4659
        %v4788 = vunpack.c.l.b16 %v4660
        %v4789 = vunpack.c.l.b16 %v4661
        %v4790 = vunpack.c.l.b16 %v4662
        %v4791 = vunpack.c.l.b16 %v4663
        %v4792 = vunpack.c.l.b16 %v4664
        %v4793 = vunpack.c.l.b16 %v4665
        %v4794 = vunpack.c.l.b16 %v4666
        %v4795 = vunpack.c.l.b16 %v4667
        %v4796 = vunpack.c.l.b16 %v4668
        %v4797 = vpack.c.b16 %v4782, %v4781
        %v4798 = vpack.c.b16 %v4784, %v4783
        %v4799 = vpack.c.b16 %v4786, %v4785
        %v4800 = vpack.c.b16 %v4788, %v4787
        %v4801 = vpack.c.b16 %v4790, %v4789
        %v4802 = vpack.c.b16 %v4792, %v4791
        %v4803 = vpack.c.b16 %v4794, %v4793
        %v4804 = vpack.c.b16 %v4796, %v4795
        %4813 = vmatprep.subr.bf16.mxu0 0
        %4814 = vmatpush1.bf16.msra.mxu0 %v4804
        %4815 = vmatprep.subr.bf16.mxu0 0
        %4816 = vmatpush1.bf16.msra.mxu0 %v4803
        %4817 = vmatprep.subr.bf16.mxu0 0
        %4818 = vmatpush1.bf16.msra.mxu0 %v4802
        %4819 = vmatprep.subr.bf16.mxu0 0
        %4820 = vmatpush1.bf16.msra.mxu0 %v4801
        %4821 = vmatprep.subr.bf16.mxu0 0
        %4822 = vmatpush1.bf16.msra.mxu0 %v4800
        %4823 = vmatprep.subr.bf16.mxu0 0
        %4824 = vmatpush1.bf16.msra.mxu0 %v4799
        %4825 = vmatprep.subr.bf16.mxu0 0
        %4826 = vmatpush1.bf16.msra.mxu0 %v4798
        %4827 = vmatprep.subr.bf16.mxu0 0
        %4828 = vmatpush1.bf16.msra.mxu0 %v4797
        %4829 = vmatprep.subr.bf16.mxu0 0
        %4830 = vmatpush2.bf16.msra.mxu0 0
        %4831 = vmatprep.subr.bf16.mxu0 0
        %4832 = vmatpush2.bf16.msra.mxu0 0
        %4833 = vmatprep.subr.bf16.mxu0 0
        %4834 = vmatpush2.bf16.msra.mxu0 0
        %4835 = vmatprep.subr.bf16.mxu0 0
        %4836 = vmatpush2.bf16.msra.mxu0 0
        %4837 = vmatprep.subr.bf16.mxu0 0
        %4838 = vmatpush2.bf16.msra.mxu0 0
        %4839 = vmatprep.subr.bf16.mxu0 0
        %4840 = vmatpush2.bf16.msra.mxu0 0
        %4841 = vmatprep.subr.bf16.mxu0 0
        %4842 = vmatpush2.bf16.msra.mxu0 0
        %4843 = vmatprep.subr.bf16.mxu0 0
        %4844 = vmatpush2.bf16.msra.mxu0 0
        %4845 = vmatprep.mubr.bf16.mxu0 0
        %4846 = vmatmul.mubr.bf16.gmra.mxu0 %v4733
        %v4847 = vpop.f32.mrf.mxu0
        %v4848 = vadd.f32 0.0, %v4847
        %v4849 = vpop.f32.mrf.mxu0
        %v4850 = vpop.f32.mrf.mxu0
        %v4851 = vadd.f32 0.0, %v4850
        %v4852 = vpop.f32.mrf.mxu0
        %4853 = vmatprep.mubr.bf16.mxu0 0
        %4854 = vmatmul.mubr.bf16.gmra.mxu0 %v4734
        %v4855 = vpop.f32.mrf.mxu0
        %v4856 = vadd.f32 0.0, %v4855
        %v4857 = vpop.f32.mrf.mxu0
        %v4858 = vpop.f32.mrf.mxu0
        %v4859 = vadd.f32 0.0, %v4858
        %v4860 = vpop.f32.mrf.mxu0
        %4861 = vmatprep.mubr.bf16.mxu0 0
        %4862 = vmatmul.mubr.bf16.gmra.mxu0 %v4735
        %v4863 = vpop.f32.mrf.mxu0
        %v4864 = vadd.f32 0.0, %v4863
        %v4865 = vpop.f32.mrf.mxu0
        %v4866 = vpop.f32.mrf.mxu0
        %v4867 = vadd.f32 0.0, %v4866
        %v4868 = vpop.f32.mrf.mxu0
        %4869 = vmatprep.mubr.bf16.mxu0 0
        %4870 = vmatmul.mubr.bf16.gmra.mxu0 %v4736
        %v4871 = vpop.f32.mrf.mxu0
        %v4872 = vadd.f32 0.0, %v4871
        %v4873 = vpop.f32.mrf.mxu0
        %v4874 = vpop.f32.mrf.mxu0
        %v4875 = vadd.f32 0.0, %v4874
        %v4876 = vpop.f32.mrf.mxu0
        %4877 = vmatprep.mubr.bf16.mxu0 0
        %4878 = vmatmul.mubr.bf16.gmra.mxu0 %v4737
        %v4879 = vpop.f32.mrf.mxu0
        %v4880 = vadd.f32 0.0, %v4879
        %v4881 = vpop.f32.mrf.mxu0
        %v4882 = vpop.f32.mrf.mxu0
        %v4883 = vadd.f32 0.0, %v4882
        %v4884 = vpop.f32.mrf.mxu0
        %4885 = vmatprep.mubr.bf16.mxu0 0
        %4886 = vmatmul.mubr.bf16.gmra.mxu0 %v4738
        %v4887 = vpop.f32.mrf.mxu0
        %v4888 = vadd.f32 0.0, %v4887
        %v4889 = vpop.f32.mrf.mxu0
        %v4890 = vpop.f32.mrf.mxu0
        %v4891 = vadd.f32 0.0, %v4890
        %v4892 = vpop.f32.mrf.mxu0
        %4893 = vmatprep.mubr.bf16.mxu0 0
        %4894 = vmatmul.mubr.bf16.gmra.mxu0 %v4739
        %v4895 = vpop.f32.mrf.mxu0
        %v4896 = vadd.f32 0.0, %v4895
        %v4897 = vpop.f32.mrf.mxu0
        %v4898 = vpop.f32.mrf.mxu0
        %v4899 = vadd.f32 0.0, %v4898
        %v4900 = vpop.f32.mrf.mxu0
        %4901 = vmatprep.mubr.bf16.mxu0 0
        %4902 = vmatmul.mubr.bf16.gmra.mxu0 %v4740
        %v4903 = vpop.f32.mrf.mxu0
        %v4904 = vadd.f32 0.0, %v4903
        %v4905 = vpop.f32.mrf.mxu0
        %v4906 = vpop.f32.mrf.mxu0
        %v4907 = vadd.f32 0.0, %v4906
        %v4908 = vpop.f32.mrf.mxu0
        %4909 = vmatprep.mubr.bf16.mxu0 0
        %4910 = vmatmul.mubr.bf16.gmra.mxu0 %v4741
        %v4911 = vpop.f32.mrf.mxu0
        %v4912 = vadd.f32 0.0, %v4911
        %v4913 = vpop.f32.mrf.mxu0
        %v4914 = vpop.f32.mrf.mxu0
        %v4915 = vadd.f32 0.0, %v4914
        %v4916 = vpop.f32.mrf.mxu0
        %4917 = vmatprep.mubr.bf16.mxu0 0
        %4918 = vmatmul.mubr.bf16.gmra.mxu0 %v4742
        %v4919 = vpop.f32.mrf.mxu0
        %v4920 = vadd.f32 0.0, %v4919
        %v4921 = vpop.f32.mrf.mxu0
        %v4922 = vpop.f32.mrf.mxu0
        %v4923 = vadd.f32 0.0, %v4922
        %v4924 = vpop.f32.mrf.mxu0
        %4925 = vmatprep.mubr.bf16.mxu0 0
        %4926 = vmatmul.mubr.bf16.gmra.mxu0 %v4743
        %v4927 = vpop.f32.mrf.mxu0
        %v4928 = vadd.f32 0.0, %v4927
        %v4929 = vpop.f32.mrf.mxu0
        %v4930 = vpop.f32.mrf.mxu0
        %v4931 = vadd.f32 0.0, %v4930
        %v4932 = vpop.f32.mrf.mxu0
        %4933 = vmatprep.mubr.bf16.mxu0 0
        %4934 = vmatmul.mubr.bf16.gmra.mxu0 %v4744
        %v4935 = vpop.f32.mrf.mxu0
        %v4936 = vadd.f32 0.0, %v4935
        %v4937 = vpop.f32.mrf.mxu0
        %v4938 = vpop.f32.mrf.mxu0
        %v4939 = vadd.f32 0.0, %v4938
        %v4940 = vpop.f32.mrf.mxu0
        %4941 = vmatprep.mubr.bf16.mxu0 0
        %4942 = vmatmul.mubr.bf16.gmra.mxu0 %v4745
        %v4943 = vpop.f32.mrf.mxu0
        %v4944 = vadd.f32 0.0, %v4943
        %v4945 = vpop.f32.mrf.mxu0
        %v4946 = vpop.f32.mrf.mxu0
        %v4947 = vadd.f32 0.0, %v4946
        %v4948 = vpop.f32.mrf.mxu0
        %4949 = vmatprep.mubr.bf16.mxu0 0
        %4950 = vmatmul.mubr.bf16.gmra.mxu0 %v4746
        %v4951 = vpop.f32.mrf.mxu0
        %v4952 = vadd.f32 0.0, %v4951
        %v4953 = vpop.f32.mrf.mxu0
        %v4954 = vpop.f32.mrf.mxu0
        %v4955 = vadd.f32 0.0, %v4954
        %v4956 = vpop.f32.mrf.mxu0
        %4957 = vmatprep.mubr.bf16.mxu0 0
        %4958 = vmatmul.mubr.bf16.gmra.mxu0 %v4747
        %v4959 = vpop.f32.mrf.mxu0
        %v4960 = vadd.f32 0.0, %v4959
        %v4961 = vpop.f32.mrf.mxu0
        %v4962 = vpop.f32.mrf.mxu0
        %v4963 = vadd.f32 0.0, %v4962
        %v4964 = vpop.f32.mrf.mxu0
        %4965 = vmatprep.mubr.bf16.mxu0 0
        %4966 = vmatmul.mubr.bf16.gmra.mxu0 %v4748
        %v4967 = vpop.f32.mrf.mxu0
        %v4968 = vadd.f32 0.0, %v4967
        %v4969 = vpop.f32.mrf.mxu0
        %v4970 = vpop.f32.mrf.mxu0
        %v4971 = vadd.f32 0.0, %v4970
        %v4972 = vpop.f32.mrf.mxu0
        %4973 = vdwg.mxu0
        %v4974 = vadd.f32 %v4587, %v4848
        %v4975 = vadd.f32 %v4588, %v4851
        %v4976 = vadd.f32 %v4589, %v4856
        %v4977 = vadd.f32 %v4590, %v4859
        %v4978 = vadd.f32 %v4591, %v4864
        %v4979 = vadd.f32 %v4592, %v4867
        %v4980 = vadd.f32 %v4593, %v4872
        %v4981 = vadd.f32 %v4594, %v4875
        %v4982 = vadd.f32 %v4595, %v4880
        %v4983 = vadd.f32 %v4596, %v4883
        %v4984 = vadd.f32 %v4597, %v4888
        %v4985 = vadd.f32 %v4598, %v4891
        %v4986 = vadd.f32 %v4599, %v4896
        %v4987 = vadd.f32 %v4600, %v4899
        %v4988 = vadd.f32 %v4601, %v4904
        %v4989 = vadd.f32 %v4602, %v4907
        %v4990 = vadd.f32 %v4603, %v4912
        %v4991 = vadd.f32 %v4604, %v4915
        %v4992 = vadd.f32 %v4605, %v4920
        %v4993 = vadd.f32 %v4606, %v4923
        %v4994 = vadd.f32 %v4607, %v4928
        %v4995 = vadd.f32 %v4608, %v4931
        %v4996 = vadd.f32 %v4609, %v4936
        %v4997 = vadd.f32 %v4610, %v4939
        %v4998 = vadd.f32 %v4611, %v4944
        %v4999 = vadd.f32 %v4612, %v4947
        %v5000 = vadd.f32 %v4613, %v4952
        %v5001 = vadd.f32 %v4614, %v4955
        %v5002 = vadd.f32 %v4615, %v4960
        %v5003 = vadd.f32 %v4616, %v4963
        %v5004 = vadd.f32 %v4617, %v4968
        %v5005 = vadd.f32 %v4618, %v4971
        %v5006 = vld [vmem:[%s4619] sm:$0xf]
        %v5007 = vld [vmem:[%s4619 + $0x4] sm:$0xf]
        %v5008 = vld [vmem:[%s4619 + $0x8] sm:$0x1]
        %v5009 = vld [vmem:[%s4619 + $0xc] sm:$0xf]
        %v5010 = vld [vmem:[%s4619 + $0x10] sm:$0xf]
        %v5011 = vld [vmem:[%s4619 + $0x14] sm:$0x1]
        %v5012 = vld [vmem:[%s4619 + $0x18] sm:$0xf]
        %v5013 = vld [vmem:[%s4619 + $0x1c] sm:$0xf]
        %v5014 = vld [vmem:[%s4619 + $0x20] sm:$0x1]
        %v5015 = vld [vmem:[%s4619 + $0x24] sm:$0xf]
        %v5016 = vld [vmem:[%s4619 + $0x28] sm:$0xf]
        %v5017 = vld [vmem:[%s4619 + $0x2c] sm:$0x1]
        %v5018 = vld [vmem:[%s4619 + $0x30] sm:$0xf]
        %v5019 = vld [vmem:[%s4619 + $0x34] sm:$0xf]
        %v5020 = vld [vmem:[%s4619 + $0x38] sm:$0x1]
        %v5021 = vld [vmem:[%s4619 + $0x3c] sm:$0xf]
        %v5022 = vld [vmem:[%s4619 + $0x40] sm:$0xf]
        %v5023 = vld [vmem:[%s4619 + $0x44] sm:$0x1]
        %v5024 = vld [vmem:[%s4619 + $0x48] sm:$0xf]
        %v5025 = vld [vmem:[%s4619 + $0x4c] sm:$0xf]
        %v5026 = vld [vmem:[%s4619 + $0x50] sm:$0x1]
        %v5027 = vld [vmem:[%s4619 + $0x54] sm:$0xf]
        %v5028 = vld [vmem:[%s4619 + $0x58] sm:$0xf]
        %v5029 = vld [vmem:[%s4619 + $0x5c] sm:$0x1]
        %v5030 = vld [vmem:[%s4619 + $0x60] sm:$0xf]
        %v5031 = vld [vmem:[%s4619 + $0x64] sm:$0xf]
        %v5032 = vld [vmem:[%s4619 + $0x68] sm:$0x1]
        %v5033 = vld [vmem:[%s4619 + $0x6c] sm:$0xf]
        %v5034 = vld [vmem:[%s4619 + $0x70] sm:$0xf]
        %v5035 = vld [vmem:[%s4619 + $0x74] sm:$0x1]
        %v5036 = vld [vmem:[%s4619 + $0x78] sm:$0xf]
        %v5037 = vld [vmem:[%s4619 + $0x7c] sm:$0xf]
        %v5038 = vld [vmem:[%s4619 + $0x80] sm:$0x1]
        %v5039 = vld [vmem:[%s4619 + $0x84] sm:$0xf]
        %v5040 = vld [vmem:[%s4619 + $0x88] sm:$0xf]
        %v5041 = vld [vmem:[%s4619 + $0x8c] sm:$0x1]
        %v5042 = vld [vmem:[%s4619 + $0x90] sm:$0xf]
        %v5043 = vld [vmem:[%s4619 + $0x94] sm:$0xf]
        %v5044 = vld [vmem:[%s4619 + $0x98] sm:$0x1]
        %v5045 = vld [vmem:[%s4619 + $0x9c] sm:$0xf]
        %v5046 = vld [vmem:[%s4619 + $0xa0] sm:$0xf]
        %v5047 = vld [vmem:[%s4619 + $0xa4] sm:$0x1]
        %v5048 = vld [vmem:[%s4619 + $0xa8] sm:$0xf]
        %v5049 = vld [vmem:[%s4619 + $0xac] sm:$0xf]
        %v5050 = vld [vmem:[%s4619 + $0xb0] sm:$0x1]
        %v5051 = vld [vmem:[%s4619 + $0xb4] sm:$0xf]
        %v5052 = vld [vmem:[%s4619 + $0xb8] sm:$0xf]
        %v5053 = vld [vmem:[%s4619 + $0xbc] sm:$0x1]
        %v5055 = vshrl.u32 %v5006, 16
        %v5057 = vrot.slane %v5055, 4
        %v5058 = vshll.u32 %v5006, 16
        %v5060 = vrot.slane %v5058, 5
        %v5061 = vor.u32 %v5057, %v5060
        %v5062 = vrot.slane %v5061, 4
        %v5064 = vshll.u32 %v5007, 16
        %v5066 = vrot.slane %v5064, 5
        %v5067 = vsel %vm1516, %v5062, %v5066
        %v5068 = vshrl.u32 %v5007, 16
        %v5070 = vrot.slane %v5068, 4
        %v5071 = vor.u32 %v5070, %v5066
        %v5072 = vrot.slane %v5071, 4
        %v5074 = vshll.u32 %v5008, 16
        %v5076 = vrot.slane %v5074, 5
        %v5077 = vsel %vm1516, %v5072, %v5076
        %v5079 = vshrl.u32 %v5009, 16
        %v5081 = vrot.slane %v5079, 4
        %v5082 = vshll.u32 %v5009, 16
        %v5084 = vrot.slane %v5082, 5
        %v5085 = vor.u32 %v5081, %v5084
        %v5086 = vrot.slane %v5085, 4
        %v5088 = vshll.u32 %v5010, 16
        %v5090 = vrot.slane %v5088, 5
        %v5091 = vsel %vm1516, %v5086, %v5090
        %v5092 = vshrl.u32 %v5010, 16
        %v5094 = vrot.slane %v5092, 4
        %v5095 = vor.u32 %v5094, %v5090
        %v5096 = vrot.slane %v5095, 4
        %v5098 = vshll.u32 %v5011, 16
        %v5100 = vrot.slane %v5098, 5
        %v5101 = vsel %vm1516, %v5096, %v5100
        %v5103 = vshrl.u32 %v5012, 16
        %v5105 = vrot.slane %v5103, 4
        %v5106 = vshll.u32 %v5012, 16
        %v5108 = vrot.slane %v5106, 5
        %v5109 = vor.u32 %v5105, %v5108
        %v5110 = vrot.slane %v5109, 4
        %v5112 = vshll.u32 %v5013, 16
        %v5114 = vrot.slane %v5112, 5
        %v5115 = vsel %vm1516, %v5110, %v5114
        %v5116 = vshrl.u32 %v5013, 16
        %v5118 = vrot.slane %v5116, 4
        %v5119 = vor.u32 %v5118, %v5114
        %v5120 = vrot.slane %v5119, 4
        %v5122 = vshll.u32 %v5014, 16
        %v5124 = vrot.slane %v5122, 5
        %v5125 = vsel %vm1516, %v5120, %v5124
        %v5127 = vshrl.u32 %v5015, 16
        %v5129 = vrot.slane %v5127, 4
        %v5130 = vshll.u32 %v5015, 16
        %v5132 = vrot.slane %v5130, 5
        %v5133 = vor.u32 %v5129, %v5132
        %v5134 = vrot.slane %v5133, 4
        %v5136 = vshll.u32 %v5016, 16
        %v5138 = vrot.slane %v5136, 5
        %v5139 = vsel %vm1516, %v5134, %v5138
        %v5140 = vshrl.u32 %v5016, 16
        %v5142 = vrot.slane %v5140, 4
        %v5143 = vor.u32 %v5142, %v5138
        %v5144 = vrot.slane %v5143, 4
        %v5146 = vshll.u32 %v5017, 16
        %v5148 = vrot.slane %v5146, 5
        %v5149 = vsel %vm1516, %v5144, %v5148
        %v5151 = vshrl.u32 %v5018, 16
        %v5153 = vrot.slane %v5151, 4
        %v5154 = vshll.u32 %v5018, 16
        %v5156 = vrot.slane %v5154, 5
        %v5157 = vor.u32 %v5153, %v5156
        %v5158 = vrot.slane %v5157, 4
        %v5160 = vshll.u32 %v5019, 16
        %v5162 = vrot.slane %v5160, 5
        %v5163 = vsel %vm1516, %v5158, %v5162
        %v5164 = vshrl.u32 %v5019, 16
        %v5166 = vrot.slane %v5164, 4
        %v5167 = vor.u32 %v5166, %v5162
        %v5168 = vrot.slane %v5167, 4
        %v5170 = vshll.u32 %v5020, 16
        %v5172 = vrot.slane %v5170, 5
        %v5173 = vsel %vm1516, %v5168, %v5172
        %v5175 = vshrl.u32 %v5021, 16
        %v5177 = vrot.slane %v5175, 4
        %v5178 = vshll.u32 %v5021, 16
        %v5180 = vrot.slane %v5178, 5
        %v5181 = vor.u32 %v5177, %v5180
        %v5182 = vrot.slane %v5181, 4
        %v5184 = vshll.u32 %v5022, 16
        %v5186 = vrot.slane %v5184, 5
        %v5187 = vsel %vm1516, %v5182, %v5186
        %v5188 = vshrl.u32 %v5022, 16
        %v5190 = vrot.slane %v5188, 4
        %v5191 = vor.u32 %v5190, %v5186
        %v5192 = vrot.slane %v5191, 4
        %v5194 = vshll.u32 %v5023, 16
        %v5196 = vrot.slane %v5194, 5
        %v5197 = vsel %vm1516, %v5192, %v5196
        %v5199 = vshrl.u32 %v5024, 16
        %v5201 = vrot.slane %v5199, 4
        %v5202 = vshll.u32 %v5024, 16
        %v5204 = vrot.slane %v5202, 5
        %v5205 = vor.u32 %v5201, %v5204
        %v5206 = vrot.slane %v5205, 4
        %v5208 = vshll.u32 %v5025, 16
        %v5210 = vrot.slane %v5208, 5
        %v5211 = vsel %vm1516, %v5206, %v5210
        %v5212 = vshrl.u32 %v5025, 16
        %v5214 = vrot.slane %v5212, 4
        %v5215 = vor.u32 %v5214, %v5210
        %v5216 = vrot.slane %v5215, 4
        %v5218 = vshll.u32 %v5026, 16
        %v5220 = vrot.slane %v5218, 5
        %v5221 = vsel %vm1516, %v5216, %v5220
        %v5223 = vshrl.u32 %v5027, 16
        %v5225 = vrot.slane %v5223, 4
        %v5226 = vshll.u32 %v5027, 16
        %v5228 = vrot.slane %v5226, 5
        %v5229 = vor.u32 %v5225, %v5228
        %v5230 = vrot.slane %v5229, 4
        %v5232 = vshll.u32 %v5028, 16
        %v5234 = vrot.slane %v5232, 5
        %v5235 = vsel %vm1516, %v5230, %v5234
        %v5236 = vshrl.u32 %v5028, 16
        %v5238 = vrot.slane %v5236, 4
        %v5239 = vor.u32 %v5238, %v5234
        %v5240 = vrot.slane %v5239, 4
        %v5242 = vshll.u32 %v5029, 16
        %v5244 = vrot.slane %v5242, 5
        %v5245 = vsel %vm1516, %v5240, %v5244
        %v5247 = vshrl.u32 %v5030, 16
        %v5249 = vrot.slane %v5247, 4
        %v5250 = vshll.u32 %v5030, 16
        %v5252 = vrot.slane %v5250, 5
        %v5253 = vor.u32 %v5249, %v5252
        %v5254 = vrot.slane %v5253, 4
        %v5256 = vshll.u32 %v5031, 16
        %v5258 = vrot.slane %v5256, 5
        %v5259 = vsel %vm1516, %v5254, %v5258
        %v5260 = vshrl.u32 %v5031, 16
        %v5262 = vrot.slane %v5260, 4
        %v5263 = vor.u32 %v5262, %v5258
        %v5264 = vrot.slane %v5263, 4
        %v5266 = vshll.u32 %v5032, 16
        %v5268 = vrot.slane %v5266, 5
        %v5269 = vsel %vm1516, %v5264, %v5268
        %v5271 = vshrl.u32 %v5033, 16
        %v5273 = vrot.slane %v5271, 4
        %v5274 = vshll.u32 %v5033, 16
        %v5276 = vrot.slane %v5274, 5
        %v5277 = vor.u32 %v5273, %v5276
        %v5278 = vrot.slane %v5277, 4
        %v5280 = vshll.u32 %v5034, 16
        %v5282 = vrot.slane %v5280, 5
        %v5283 = vsel %vm1516, %v5278, %v5282
        %v5284 = vshrl.u32 %v5034, 16
        %v5286 = vrot.slane %v5284, 4
        %v5287 = vor.u32 %v5286, %v5282
        %v5288 = vrot.slane %v5287, 4
        %v5290 = vshll.u32 %v5035, 16
        %v5292 = vrot.slane %v5290, 5
        %v5293 = vsel %vm1516, %v5288, %v5292
        %v5295 = vshrl.u32 %v5036, 16
        %v5297 = vrot.slane %v5295, 4
        %v5298 = vshll.u32 %v5036, 16
        %v5300 = vrot.slane %v5298, 5
        %v5301 = vor.u32 %v5297, %v5300
        %v5302 = vrot.slane %v5301, 4
        %v5304 = vshll.u32 %v5037, 16
        %v5306 = vrot.slane %v5304, 5
        %v5307 = vsel %vm1516, %v5302, %v5306
        %v5308 = vshrl.u32 %v5037, 16
        %v5310 = vrot.slane %v5308, 4
        %v5311 = vor.u32 %v5310, %v5306
        %v5312 = vrot.slane %v5311, 4
        %v5314 = vshll.u32 %v5038, 16
        %v5316 = vrot.slane %v5314, 5
        %v5317 = vsel %vm1516, %v5312, %v5316
        %v5319 = vshrl.u32 %v5039, 16
        %v5321 = vrot.slane %v5319, 4
        %v5322 = vshll.u32 %v5039, 16
        %v5324 = vrot.slane %v5322, 5
        %v5325 = vor.u32 %v5321, %v5324
        %v5326 = vrot.slane %v5325, 4
        %v5328 = vshll.u32 %v5040, 16
        %v5330 = vrot.slane %v5328, 5
        %v5331 = vsel %vm1516, %v5326, %v5330
        %v5332 = vshrl.u32 %v5040, 16
        %v5334 = vrot.slane %v5332, 4
        %v5335 = vor.u32 %v5334, %v5330
        %v5336 = vrot.slane %v5335, 4
        %v5338 = vshll.u32 %v5041, 16
        %v5340 = vrot.slane %v5338, 5
        %v5341 = vsel %vm1516, %v5336, %v5340
        %v5343 = vshrl.u32 %v5042, 16
        %v5345 = vrot.slane %v5343, 4
        %v5346 = vshll.u32 %v5042, 16
        %v5348 = vrot.slane %v5346, 5
        %v5349 = vor.u32 %v5345, %v5348
        %v5350 = vrot.slane %v5349, 4
        %v5352 = vshll.u32 %v5043, 16
        %v5354 = vrot.slane %v5352, 5
        %v5355 = vsel %vm1516, %v5350, %v5354
        %v5356 = vshrl.u32 %v5043, 16
        %v5358 = vrot.slane %v5356, 4
        %v5359 = vor.u32 %v5358, %v5354
        %v5360 = vrot.slane %v5359, 4
        %v5362 = vshll.u32 %v5044, 16
        %v5364 = vrot.slane %v5362, 5
        %v5365 = vsel %vm1516, %v5360, %v5364
        %v5367 = vshrl.u32 %v5045, 16
        %v5369 = vrot.slane %v5367, 4
        %v5370 = vshll.u32 %v5045, 16
        %v5372 = vrot.slane %v5370, 5
        %v5373 = vor.u32 %v5369, %v5372
        %v5374 = vrot.slane %v5373, 4
        %v5376 = vshll.u32 %v5046, 16
        %v5378 = vrot.slane %v5376, 5
        %v5379 = vsel %vm1516, %v5374, %v5378
        %v5380 = vshrl.u32 %v5046, 16
        %v5382 = vrot.slane %v5380, 4
        %v5383 = vor.u32 %v5382, %v5378
        %v5384 = vrot.slane %v5383, 4
        %v5386 = vshll.u32 %v5047, 16
        %v5388 = vrot.slane %v5386, 5
        %v5389 = vsel %vm1516, %v5384, %v5388
        %v5391 = vshrl.u32 %v5048, 16
        %v5393 = vrot.slane %v5391, 4
        %v5394 = vshll.u32 %v5048, 16
        %v5396 = vrot.slane %v5394, 5
        %v5397 = vor.u32 %v5393, %v5396
        %v5398 = vrot.slane %v5397, 4
        %v5400 = vshll.u32 %v5049, 16
        %v5402 = vrot.slane %v5400, 5
        %v5403 = vsel %vm1516, %v5398, %v5402
        %v5404 = vshrl.u32 %v5049, 16
        %v5406 = vrot.slane %v5404, 4
        %v5407 = vor.u32 %v5406, %v5402
        %v5408 = vrot.slane %v5407, 4
        %v5410 = vshll.u32 %v5050, 16
        %v5412 = vrot.slane %v5410, 5
        %v5413 = vsel %vm1516, %v5408, %v5412
        %v5415 = vshrl.u32 %v5051, 16
        %v5417 = vrot.slane %v5415, 4
        %v5418 = vshll.u32 %v5051, 16
        %v5420 = vrot.slane %v5418, 5
        %v5421 = vor.u32 %v5417, %v5420
        %v5422 = vrot.slane %v5421, 4
        %v5424 = vshll.u32 %v5052, 16
        %v5426 = vrot.slane %v5424, 5
        %v5427 = vsel %vm1516, %v5422, %v5426
        %v5428 = vshrl.u32 %v5052, 16
        %v5430 = vrot.slane %v5428, 4
        %v5431 = vor.u32 %v5430, %v5426
        %v5432 = vrot.slane %v5431, 4
        %v5434 = vshll.u32 %v5053, 16
        %v5436 = vrot.slane %v5434, 5
        %v5437 = vsel %vm1516, %v5432, %v5436
        %s5438 = scalar_lea.vmem %s3, 448
        %v5439 = vld [vmem:[%s5438] sm:$0xf]
        %v5440 = vld [vmem:[%s5438 + $0x4] sm:$0xf]
        %v5441 = vld [vmem:[%s5438 + $0x8] sm:$0xf]
        %v5442 = vld [vmem:[%s5438 + $0xc] sm:$0xf]
        %v5443 = vld [vmem:[%s5438 + $0x10] sm:$0xf]
        %v5444 = vld [vmem:[%s5438 + $0x14] sm:$0xf]
        %v5445 = vld [vmem:[%s5438 + $0x18] sm:$0xf]
        %v5446 = vld [vmem:[%s5438 + $0x1c] sm:$0xf]
        %v5447 = vld [vmem:[%s5438 + $0x20] sm:$0xf]
        %v5448 = vld [vmem:[%s5438 + $0x24] sm:$0xf]
        %v5449 = vld [vmem:[%s5438 + $0x28] sm:$0xf]
        %v5450 = vld [vmem:[%s5438 + $0x2c] sm:$0xf]
        %v5451 = vld [vmem:[%s5438 + $0x30] sm:$0xf]
        %v5452 = vld [vmem:[%s5438 + $0x34] sm:$0xf]
        %v5453 = vld [vmem:[%s5438 + $0x38] sm:$0xf]
        %v5454 = vld [vmem:[%s5438 + $0x3c] sm:$0xf]
        %v5455 = vunpack.c.l.b16 %v5067
        %v5456 = vunpack.c.l.b16 %v5077
        %v5457 = vunpack.c.l.b16 %v5091
        %v5458 = vunpack.c.l.b16 %v5101
        %v5459 = vunpack.c.l.b16 %v5115
        %v5460 = vunpack.c.l.b16 %v5125
        %v5461 = vunpack.c.l.b16 %v5139
        %v5462 = vunpack.c.l.b16 %v5149
        %v5463 = vunpack.c.l.b16 %v5163
        %v5464 = vunpack.c.l.b16 %v5173
        %v5465 = vunpack.c.l.b16 %v5187
        %v5466 = vunpack.c.l.b16 %v5197
        %v5467 = vunpack.c.l.b16 %v5211
        %v5468 = vunpack.c.l.b16 %v5221
        %v5469 = vunpack.c.l.b16 %v5235
        %v5470 = vunpack.c.l.b16 %v5245
        %v5471 = vunpack.c.l.b16 %v5259
        %v5472 = vunpack.c.l.b16 %v5269
        %v5473 = vunpack.c.l.b16 %v5283
        %v5474 = vunpack.c.l.b16 %v5293
        %v5475 = vunpack.c.l.b16 %v5307
        %v5476 = vunpack.c.l.b16 %v5317
        %v5477 = vunpack.c.l.b16 %v5331
        %v5478 = vunpack.c.l.b16 %v5341
        %v5479 = vunpack.c.l.b16 %v5355
        %v5480 = vunpack.c.l.b16 %v5365
        %v5481 = vunpack.c.l.b16 %v5379
        %v5482 = vunpack.c.l.b16 %v5389
        %v5483 = vunpack.c.l.b16 %v5403
        %v5484 = vunpack.c.l.b16 %v5413
        %v5485 = vunpack.c.l.b16 %v5427
        %v5486 = vunpack.c.l.b16 %v5437
        %v5487 = vpack.c.b16 %v5456, %v5455
        %v5488 = vpack.c.b16 %v5458, %v5457
        %v5489 = vpack.c.b16 %v5460, %v5459
        %v5490 = vpack.c.b16 %v5462, %v5461
        %v5491 = vpack.c.b16 %v5464, %v5463
        %v5492 = vpack.c.b16 %v5466, %v5465
        %v5493 = vpack.c.b16 %v5468, %v5467
        %v5494 = vpack.c.b16 %v5470, %v5469
        %v5495 = vpack.c.b16 %v5472, %v5471
        %v5496 = vpack.c.b16 %v5474, %v5473
        %v5497 = vpack.c.b16 %v5476, %v5475
        %v5498 = vpack.c.b16 %v5478, %v5477
        %v5499 = vpack.c.b16 %v5480, %v5479
        %v5500 = vpack.c.b16 %v5482, %v5481
        %v5501 = vpack.c.b16 %v5484, %v5483
        %v5502 = vpack.c.b16 %v5486, %v5485
        %v5535 = vunpack.c.l.b16 %v5439
        %v5536 = vunpack.c.l.b16 %v5440
        %v5537 = vunpack.c.l.b16 %v5441
        %v5538 = vunpack.c.l.b16 %v5442
        %v5539 = vunpack.c.l.b16 %v5443
        %v5540 = vunpack.c.l.b16 %v5444
        %v5541 = vunpack.c.l.b16 %v5445
        %v5542 = vunpack.c.l.b16 %v5446
        %v5543 = vunpack.c.l.b16 %v5447
        %v5544 = vunpack.c.l.b16 %v5448
        %v5545 = vunpack.c.l.b16 %v5449
        %v5546 = vunpack.c.l.b16 %v5450
        %v5547 = vunpack.c.l.b16 %v5451
        %v5548 = vunpack.c.l.b16 %v5452
        %v5549 = vunpack.c.l.b16 %v5453
        %v5550 = vunpack.c.l.b16 %v5454
        %v5551 = vpack.c.b16 %v5536, %v5535
        %v5552 = vpack.c.b16 %v5538, %v5537
        %v5553 = vpack.c.b16 %v5540, %v5539
        %v5554 = vpack.c.b16 %v5542, %v5541
        %v5555 = vpack.c.b16 %v5544, %v5543
        %v5556 = vpack.c.b16 %v5546, %v5545
        %v5557 = vpack.c.b16 %v5548, %v5547
        %v5558 = vpack.c.b16 %v5550, %v5549
        %5567 = vmatprep.subr.bf16.mxu0 0
        %5568 = vmatpush1.bf16.msra.mxu0 %v5558
        %5569 = vmatprep.subr.bf16.mxu0 0
        %5570 = vmatpush1.bf16.msra.mxu0 %v5557
        %5571 = vmatprep.subr.bf16.mxu0 0
        %5572 = vmatpush1.bf16.msra.mxu0 %v5556
        %5573 = vmatprep.subr.bf16.mxu0 0
        %5574 = vmatpush1.bf16.msra.mxu0 %v5555
        %5575 = vmatprep.subr.bf16.mxu0 0
        %5576 = vmatpush1.bf16.msra.mxu0 %v5554
        %5577 = vmatprep.subr.bf16.mxu0 0
        %5578 = vmatpush1.bf16.msra.mxu0 %v5553
        %5579 = vmatprep.subr.bf16.mxu0 0
        %5580 = vmatpush1.bf16.msra.mxu0 %v5552
        %5581 = vmatprep.subr.bf16.mxu0 0
        %5582 = vmatpush1.bf16.msra.mxu0 %v5551
        %5583 = vmatprep.subr.bf16.mxu0 0
        %5584 = vmatpush2.bf16.msra.mxu0 0
        %5585 = vmatprep.subr.bf16.mxu0 0
        %5586 = vmatpush2.bf16.msra.mxu0 0
        %5587 = vmatprep.subr.bf16.mxu0 0
        %5588 = vmatpush2.bf16.msra.mxu0 0
        %5589 = vmatprep.subr.bf16.mxu0 0
        %5590 = vmatpush2.bf16.msra.mxu0 0
        %5591 = vmatprep.subr.bf16.mxu0 0
        %5592 = vmatpush2.bf16.msra.mxu0 0
        %5593 = vmatprep.subr.bf16.mxu0 0
        %5594 = vmatpush2.bf16.msra.mxu0 0
        %5595 = vmatprep.subr.bf16.mxu0 0
        %5596 = vmatpush2.bf16.msra.mxu0 0
        %5597 = vmatprep.subr.bf16.mxu0 0
        %5598 = vmatpush2.bf16.msra.mxu0 0
        %5599 = vmatprep.mubr.bf16.mxu0 0
        %5600 = vmatmul.mubr.bf16.gmra.mxu0 %v5487
        %v5601 = vpop.f32.mrf.mxu0
        %v5602 = vadd.f32 0.0, %v5601
        %v5603 = vpop.f32.mrf.mxu0
        %v5604 = vpop.f32.mrf.mxu0
        %v5605 = vadd.f32 0.0, %v5604
        %v5606 = vpop.f32.mrf.mxu0
        %5607 = vmatprep.mubr.bf16.mxu0 0
        %5608 = vmatmul.mubr.bf16.gmra.mxu0 %v5488
        %v5609 = vpop.f32.mrf.mxu0
        %v5610 = vadd.f32 0.0, %v5609
        %v5611 = vpop.f32.mrf.mxu0
        %v5612 = vpop.f32.mrf.mxu0
        %v5613 = vadd.f32 0.0, %v5612
        %v5614 = vpop.f32.mrf.mxu0
        %5615 = vmatprep.mubr.bf16.mxu0 0
        %5616 = vmatmul.mubr.bf16.gmra.mxu0 %v5489
        %v5617 = vpop.f32.mrf.mxu0
        %v5618 = vadd.f32 0.0, %v5617
        %v5619 = vpop.f32.mrf.mxu0
        %v5620 = vpop.f32.mrf.mxu0
        %v5621 = vadd.f32 0.0, %v5620
        %v5622 = vpop.f32.mrf.mxu0
        %5623 = vmatprep.mubr.bf16.mxu0 0
        %5624 = vmatmul.mubr.bf16.gmra.mxu0 %v5490
        %v5625 = vpop.f32.mrf.mxu0
        %v5626 = vadd.f32 0.0, %v5625
        %v5627 = vpop.f32.mrf.mxu0
        %v5628 = vpop.f32.mrf.mxu0
        %v5629 = vadd.f32 0.0, %v5628
        %v5630 = vpop.f32.mrf.mxu0
        %5631 = vmatprep.mubr.bf16.mxu0 0
        %5632 = vmatmul.mubr.bf16.gmra.mxu0 %v5491
        %v5633 = vpop.f32.mrf.mxu0
        %v5634 = vadd.f32 0.0, %v5633
        %v5635 = vpop.f32.mrf.mxu0
        %v5636 = vpop.f32.mrf.mxu0
        %v5637 = vadd.f32 0.0, %v5636
        %v5638 = vpop.f32.mrf.mxu0
        %5639 = vmatprep.mubr.bf16.mxu0 0
        %5640 = vmatmul.mubr.bf16.gmra.mxu0 %v5492
        %v5641 = vpop.f32.mrf.mxu0
        %v5642 = vadd.f32 0.0, %v5641
        %v5643 = vpop.f32.mrf.mxu0
        %v5644 = vpop.f32.mrf.mxu0
        %v5645 = vadd.f32 0.0, %v5644
        %v5646 = vpop.f32.mrf.mxu0
        %5647 = vmatprep.mubr.bf16.mxu0 0
        %5648 = vmatmul.mubr.bf16.gmra.mxu0 %v5493
        %v5649 = vpop.f32.mrf.mxu0
        %v5650 = vadd.f32 0.0, %v5649
        %v5651 = vpop.f32.mrf.mxu0
        %v5652 = vpop.f32.mrf.mxu0
        %v5653 = vadd.f32 0.0, %v5652
        %v5654 = vpop.f32.mrf.mxu0
        %5655 = vmatprep.mubr.bf16.mxu0 0
        %5656 = vmatmul.mubr.bf16.gmra.mxu0 %v5494
        %v5657 = vpop.f32.mrf.mxu0
        %v5658 = vadd.f32 0.0, %v5657
        %v5659 = vpop.f32.mrf.mxu0
        %v5660 = vpop.f32.mrf.mxu0
        %v5661 = vadd.f32 0.0, %v5660
        %v5662 = vpop.f32.mrf.mxu0
        %5663 = vmatprep.mubr.bf16.mxu0 0
        %5664 = vmatmul.mubr.bf16.gmra.mxu0 %v5495
        %v5665 = vpop.f32.mrf.mxu0
        %v5666 = vadd.f32 0.0, %v5665
        %v5667 = vpop.f32.mrf.mxu0
        %v5668 = vpop.f32.mrf.mxu0
        %v5669 = vadd.f32 0.0, %v5668
        %v5670 = vpop.f32.mrf.mxu0
        %5671 = vmatprep.mubr.bf16.mxu0 0
        %5672 = vmatmul.mubr.bf16.gmra.mxu0 %v5496
        %v5673 = vpop.f32.mrf.mxu0
        %v5674 = vadd.f32 0.0, %v5673
        %v5675 = vpop.f32.mrf.mxu0
        %v5676 = vpop.f32.mrf.mxu0
        %v5677 = vadd.f32 0.0, %v5676
        %v5678 = vpop.f32.mrf.mxu0
        %5679 = vmatprep.mubr.bf16.mxu0 0
        %5680 = vmatmul.mubr.bf16.gmra.mxu0 %v5497
        %v5681 = vpop.f32.mrf.mxu0
        %v5682 = vadd.f32 0.0, %v5681
        %v5683 = vpop.f32.mrf.mxu0
        %v5684 = vpop.f32.mrf.mxu0
        %v5685 = vadd.f32 0.0, %v5684
        %v5686 = vpop.f32.mrf.mxu0
        %5687 = vmatprep.mubr.bf16.mxu0 0
        %5688 = vmatmul.mubr.bf16.gmra.mxu0 %v5498
        %v5689 = vpop.f32.mrf.mxu0
        %v5690 = vadd.f32 0.0, %v5689
        %v5691 = vpop.f32.mrf.mxu0
        %v5692 = vpop.f32.mrf.mxu0
        %v5693 = vadd.f32 0.0, %v5692
        %v5694 = vpop.f32.mrf.mxu0
        %5695 = vmatprep.mubr.bf16.mxu0 0
        %5696 = vmatmul.mubr.bf16.gmra.mxu0 %v5499
        %v5697 = vpop.f32.mrf.mxu0
        %v5698 = vadd.f32 0.0, %v5697
        %v5699 = vpop.f32.mrf.mxu0
        %v5700 = vpop.f32.mrf.mxu0
        %v5701 = vadd.f32 0.0, %v5700
        %v5702 = vpop.f32.mrf.mxu0
        %5703 = vmatprep.mubr.bf16.mxu0 0
        %5704 = vmatmul.mubr.bf16.gmra.mxu0 %v5500
        %v5705 = vpop.f32.mrf.mxu0
        %v5706 = vadd.f32 0.0, %v5705
        %v5707 = vpop.f32.mrf.mxu0
        %v5708 = vpop.f32.mrf.mxu0
        %v5709 = vadd.f32 0.0, %v5708
        %v5710 = vpop.f32.mrf.mxu0
        %5711 = vmatprep.mubr.bf16.mxu0 0
        %5712 = vmatmul.mubr.bf16.gmra.mxu0 %v5501
        %v5713 = vpop.f32.mrf.mxu0
        %v5714 = vadd.f32 0.0, %v5713
        %v5715 = vpop.f32.mrf.mxu0
        %v5716 = vpop.f32.mrf.mxu0
        %v5717 = vadd.f32 0.0, %v5716
        %v5718 = vpop.f32.mrf.mxu0
        %5719 = vmatprep.mubr.bf16.mxu0 0
        %5720 = vmatmul.mubr.bf16.gmra.mxu0 %v5502
        %v5721 = vpop.f32.mrf.mxu0
        %v5722 = vadd.f32 0.0, %v5721
        %v5723 = vpop.f32.mrf.mxu0
        %v5724 = vpop.f32.mrf.mxu0
        %v5725 = vadd.f32 0.0, %v5724
        %v5726 = vpop.f32.mrf.mxu0
        %5727 = vdwg.mxu0
        %v5728 = vadd.f32 %v4974, %v5602
        %v5729 = vadd.f32 %v4975, %v5605
        %v5730 = vadd.f32 %v4976, %v5610
        %v5731 = vadd.f32 %v4977, %v5613
        %v5732 = vadd.f32 %v4978, %v5618
        %v5733 = vadd.f32 %v4979, %v5621
        %v5734 = vadd.f32 %v4980, %v5626
        %v5735 = vadd.f32 %v4981, %v5629
        %v5736 = vadd.f32 %v4982, %v5634
        %v5737 = vadd.f32 %v4983, %v5637
        %v5738 = vadd.f32 %v4984, %v5642
        %v5739 = vadd.f32 %v4985, %v5645
        %v5740 = vadd.f32 %v4986, %v5650
        %v5741 = vadd.f32 %v4987, %v5653
        %v5742 = vadd.f32 %v4988, %v5658
        %v5743 = vadd.f32 %v4989, %v5661
        %v5744 = vadd.f32 %v4990, %v5666
        %v5745 = vadd.f32 %v4991, %v5669
        %v5746 = vadd.f32 %v4992, %v5674
        %v5747 = vadd.f32 %v4993, %v5677
        %v5748 = vadd.f32 %v4994, %v5682
        %v5749 = vadd.f32 %v4995, %v5685
        %v5750 = vadd.f32 %v4996, %v5690
        %v5751 = vadd.f32 %v4997, %v5693
        %v5752 = vadd.f32 %v4998, %v5698
        %v5753 = vadd.f32 %v4999, %v5701
        %v5754 = vadd.f32 %v5000, %v5706
        %v5755 = vadd.f32 %v5001, %v5709
        %v5756 = vadd.f32 %v5002, %v5714
        %v5757 = vadd.f32 %v5003, %v5717
        %v5758 = vadd.f32 %v5004, %v5722
        %v5759 = vadd.f32 %v5005, %v5725
        %v5760 = vld [vmem:[%s4619] sm:$0xe]
        %v5761 = vld [vmem:[%s4619 + $0xc] sm:$0xe]
        %v5762 = vld [vmem:[%s4619 + $0x18] sm:$0xe]
        %v5763 = vld [vmem:[%s4619 + $0x24] sm:$0xe]
        %v5764 = vld [vmem:[%s4619 + $0x30] sm:$0xe]
        %v5765 = vld [vmem:[%s4619 + $0x3c] sm:$0xe]
        %v5766 = vld [vmem:[%s4619 + $0x48] sm:$0xe]
        %v5767 = vld [vmem:[%s4619 + $0x54] sm:$0xe]
        %v5768 = vld [vmem:[%s4619 + $0x60] sm:$0xe]
        %v5769 = vld [vmem:[%s4619 + $0x6c] sm:$0xe]
        %v5770 = vld [vmem:[%s4619 + $0x78] sm:$0xe]
        %v5771 = vld [vmem:[%s4619 + $0x84] sm:$0xe]
        %v5772 = vld [vmem:[%s4619 + $0x90] sm:$0xe]
        %v5773 = vld [vmem:[%s4619 + $0x9c] sm:$0xe]
        %v5774 = vld [vmem:[%s4619 + $0xa8] sm:$0xe]
        %v5775 = vld [vmem:[%s4619 + $0xb4] sm:$0xe]
        %v5824 = vrot.slane %v5760, 5
        %v5825 = vrot.slane %v5824, 4
        %v5826 = vrot.slane %v5007, 5
        %v5827 = vsel %vm2546, %v5825, %v5826
        %v5828 = vrot.slane %v5826, 4
        %v5829 = vrot.slane %v5008, 5
        %v5830 = vsel %vm2546, %v5828, %v5829
        %v5831 = vrot.slane %v5761, 5
        %v5832 = vrot.slane %v5831, 4
        %v5833 = vrot.slane %v5010, 5
        %v5834 = vsel %vm2546, %v5832, %v5833
        %v5835 = vrot.slane %v5833, 4
        %v5836 = vrot.slane %v5011, 5
        %v5837 = vsel %vm2546, %v5835, %v5836
        %v5838 = vrot.slane %v5762, 5
        %v5839 = vrot.slane %v5838, 4
        %v5840 = vrot.slane %v5013, 5
        %v5841 = vsel %vm2546, %v5839, %v5840
        %v5842 = vrot.slane %v5840, 4
        %v5843 = vrot.slane %v5014, 5
        %v5844 = vsel %vm2546, %v5842, %v5843
        %v5845 = vrot.slane %v5763, 5
        %v5846 = vrot.slane %v5845, 4
        %v5847 = vrot.slane %v5016, 5
        %v5848 = vsel %vm2546, %v5846, %v5847
        %v5849 = vrot.slane %v5847, 4
        %v5850 = vrot.slane %v5017, 5
        %v5851 = vsel %vm2546, %v5849, %v5850
        %v5852 = vrot.slane %v5764, 5
        %v5853 = vrot.slane %v5852, 4
        %v5854 = vrot.slane %v5019, 5
        %v5855 = vsel %vm2546, %v5853, %v5854
        %v5856 = vrot.slane %v5854, 4
        %v5857 = vrot.slane %v5020, 5
        %v5858 = vsel %vm2546, %v5856, %v5857
        %v5859 = vrot.slane %v5765, 5
        %v5860 = vrot.slane %v5859, 4
        %v5861 = vrot.slane %v5022, 5
        %v5862 = vsel %vm2546, %v5860, %v5861
        %v5863 = vrot.slane %v5861, 4
        %v5864 = vrot.slane %v5023, 5
        %v5865 = vsel %vm2546, %v5863, %v5864
        %v5866 = vrot.slane %v5766, 5
        %v5867 = vrot.slane %v5866, 4
        %v5868 = vrot.slane %v5025, 5
        %v5869 = vsel %vm2546, %v5867, %v5868
        %v5870 = vrot.slane %v5868, 4
        %v5871 = vrot.slane %v5026, 5
        %v5872 = vsel %vm2546, %v5870, %v5871
        %v5873 = vrot.slane %v5767, 5
        %v5874 = vrot.slane %v5873, 4
        %v5875 = vrot.slane %v5028, 5
        %v5876 = vsel %vm2546, %v5874, %v5875
        %v5877 = vrot.slane %v5875, 4
        %v5878 = vrot.slane %v5029, 5
        %v5879 = vsel %vm2546, %v5877, %v5878
        %v5880 = vrot.slane %v5768, 5
        %v5881 = vrot.slane %v5880, 4
        %v5882 = vrot.slane %v5031, 5
        %v5883 = vsel %vm2546, %v5881, %v5882
        %v5884 = vrot.slane %v5882, 4
        %v5885 = vrot.slane %v5032, 5
        %v5886 = vsel %vm2546, %v5884, %v5885
        %v5887 = vrot.slane %v5769, 5
        %v5888 = vrot.slane %v5887, 4
        %v5889 = vrot.slane %v5034, 5
        %v5890 = vsel %vm2546, %v5888, %v5889
        %v5891 = vrot.slane %v5889, 4
        %v5892 = vrot.slane %v5035, 5
        %v5893 = vsel %vm2546, %v5891, %v5892
        %v5894 = vrot.slane %v5770, 5
        %v5895 = vrot.slane %v5894, 4
        %v5896 = vrot.slane %v5037, 5
        %v5897 = vsel %vm2546, %v5895, %v5896
        %v5898 = vrot.slane %v5896, 4
        %v5899 = vrot.slane %v5038, 5
        %v5900 = vsel %vm2546, %v5898, %v5899
        %v5901 = vrot.slane %v5771, 5
        %v5902 = vrot.slane %v5901, 4
        %v5903 = vrot.slane %v5040, 5
        %v5904 = vsel %vm2546, %v5902, %v5903
        %v5905 = vrot.slane %v5903, 4
        %v5906 = vrot.slane %v5041, 5
        %v5907 = vsel %vm2546, %v5905, %v5906
        %v5908 = vrot.slane %v5772, 5
        %v5909 = vrot.slane %v5908, 4
        %v5910 = vrot.slane %v5043, 5
        %v5911 = vsel %vm2546, %v5909, %v5910
        %v5912 = vrot.slane %v5910, 4
        %v5913 = vrot.slane %v5044, 5
        %v5914 = vsel %vm2546, %v5912, %v5913
        %v5915 = vrot.slane %v5773, 5
        %v5916 = vrot.slane %v5915, 4
        %v5917 = vrot.slane %v5046, 5
        %v5918 = vsel %vm2546, %v5916, %v5917
        %v5919 = vrot.slane %v5917, 4
        %v5920 = vrot.slane %v5047, 5
        %v5921 = vsel %vm2546, %v5919, %v5920
        %v5922 = vrot.slane %v5774, 5
        %v5923 = vrot.slane %v5922, 4
        %v5924 = vrot.slane %v5049, 5
        %v5925 = vsel %vm2546, %v5923, %v5924
        %v5926 = vrot.slane %v5924, 4
        %v5927 = vrot.slane %v5050, 5
        %v5928 = vsel %vm2546, %v5926, %v5927
        %v5929 = vrot.slane %v5775, 5
        %v5930 = vrot.slane %v5929, 4
        %v5931 = vrot.slane %v5052, 5
        %v5932 = vsel %vm2546, %v5930, %v5931
        %v5933 = vrot.slane %v5931, 4
        %v5934 = vrot.slane %v5053, 5
        %v5935 = vsel %vm2546, %v5933, %v5934
        %s5936 = scalar_lea.vmem %s3, 512
        %v5937 = vld [vmem:[%s5936] sm:$0xf]
        %v5938 = vld [vmem:[%s5936 + $0x4] sm:$0xf]
        %v5939 = vld [vmem:[%s5936 + $0x8] sm:$0xf]
        %v5940 = vld [vmem:[%s5936 + $0xc] sm:$0xf]
        %v5941 = vld [vmem:[%s5936 + $0x10] sm:$0xf]
        %v5942 = vld [vmem:[%s5936 + $0x14] sm:$0xf]
        %v5943 = vld [vmem:[%s5936 + $0x18] sm:$0xf]
        %v5944 = vld [vmem:[%s5936 + $0x1c] sm:$0xf]
        %v5945 = vld [vmem:[%s5936 + $0x20] sm:$0xf]
        %v5946 = vld [vmem:[%s5936 + $0x24] sm:$0xf]
        %v5947 = vld [vmem:[%s5936 + $0x28] sm:$0xf]
        %v5948 = vld [vmem:[%s5936 + $0x2c] sm:$0xf]
        %v5949 = vld [vmem:[%s5936 + $0x30] sm:$0xf]
        %v5950 = vld [vmem:[%s5936 + $0x34] sm:$0xf]
        %v5951 = vld [vmem:[%s5936 + $0x38] sm:$0xf]
        %v5952 = vld [vmem:[%s5936 + $0x3c] sm:$0xf]
        %v5953 = vunpack.c.l.b16 %v5827
        %v5954 = vunpack.c.l.b16 %v5830
        %v5955 = vunpack.c.l.b16 %v5834
        %v5956 = vunpack.c.l.b16 %v5837
        %v5957 = vunpack.c.l.b16 %v5841
        %v5958 = vunpack.c.l.b16 %v5844
        %v5959 = vunpack.c.l.b16 %v5848
        %v5960 = vunpack.c.l.b16 %v5851
        %v5961 = vunpack.c.l.b16 %v5855
        %v5962 = vunpack.c.l.b16 %v5858
        %v5963 = vunpack.c.l.b16 %v5862
        %v5964 = vunpack.c.l.b16 %v5865
        %v5965 = vunpack.c.l.b16 %v5869
        %v5966 = vunpack.c.l.b16 %v5872
        %v5967 = vunpack.c.l.b16 %v5876
        %v5968 = vunpack.c.l.b16 %v5879
        %v5969 = vunpack.c.l.b16 %v5883
        %v5970 = vunpack.c.l.b16 %v5886
        %v5971 = vunpack.c.l.b16 %v5890
        %v5972 = vunpack.c.l.b16 %v5893
        %v5973 = vunpack.c.l.b16 %v5897
        %v5974 = vunpack.c.l.b16 %v5900
        %v5975 = vunpack.c.l.b16 %v5904
        %v5976 = vunpack.c.l.b16 %v5907
        %v5977 = vunpack.c.l.b16 %v5911
        %v5978 = vunpack.c.l.b16 %v5914
        %v5979 = vunpack.c.l.b16 %v5918
        %v5980 = vunpack.c.l.b16 %v5921
        %v5981 = vunpack.c.l.b16 %v5925
        %v5982 = vunpack.c.l.b16 %v5928
        %v5983 = vunpack.c.l.b16 %v5932
        %v5984 = vunpack.c.l.b16 %v5935
        %v5985 = vpack.c.b16 %v5954, %v5953
        %v5986 = vpack.c.b16 %v5956, %v5955
        %v5987 = vpack.c.b16 %v5958, %v5957
        %v5988 = vpack.c.b16 %v5960, %v5959
        %v5989 = vpack.c.b16 %v5962, %v5961
        %v5990 = vpack.c.b16 %v5964, %v5963
        %v5991 = vpack.c.b16 %v5966, %v5965
        %v5992 = vpack.c.b16 %v5968, %v5967
        %v5993 = vpack.c.b16 %v5970, %v5969
        %v5994 = vpack.c.b16 %v5972, %v5971
        %v5995 = vpack.c.b16 %v5974, %v5973
        %v5996 = vpack.c.b16 %v5976, %v5975
        %v5997 = vpack.c.b16 %v5978, %v5977
        %v5998 = vpack.c.b16 %v5980, %v5979
        %v5999 = vpack.c.b16 %v5982, %v5981
        %v6000 = vpack.c.b16 %v5984, %v5983
        %v6033 = vunpack.c.l.b16 %v5937
        %v6034 = vunpack.c.l.b16 %v5938
        %v6035 = vunpack.c.l.b16 %v5939
        %v6036 = vunpack.c.l.b16 %v5940
        %v6037 = vunpack.c.l.b16 %v5941
        %v6038 = vunpack.c.l.b16 %v5942
        %v6039 = vunpack.c.l.b16 %v5943
        %v6040 = vunpack.c.l.b16 %v5944
        %v6041 = vunpack.c.l.b16 %v5945
        %v6042 = vunpack.c.l.b16 %v5946
        %v6043 = vunpack.c.l.b16 %v5947
        %v6044 = vunpack.c.l.b16 %v5948
        %v6045 = vunpack.c.l.b16 %v5949
        %v6046 = vunpack.c.l.b16 %v5950
        %v6047 = vunpack.c.l.b16 %v5951
        %v6048 = vunpack.c.l.b16 %v5952
        %v6049 = vpack.c.b16 %v6034, %v6033
        %v6050 = vpack.c.b16 %v6036, %v6035
        %v6051 = vpack.c.b16 %v6038, %v6037
        %v6052 = vpack.c.b16 %v6040, %v6039
        %v6053 = vpack.c.b16 %v6042, %v6041
        %v6054 = vpack.c.b16 %v6044, %v6043
        %v6055 = vpack.c.b16 %v6046, %v6045
        %v6056 = vpack.c.b16 %v6048, %v6047
        %6065 = vmatprep.subr.bf16.mxu0 0
        %6066 = vmatpush1.bf16.msra.mxu0 %v6056
        %6067 = vmatprep.subr.bf16.mxu0 0
        %6068 = vmatpush1.bf16.msra.mxu0 %v6055
        %6069 = vmatprep.subr.bf16.mxu0 0
        %6070 = vmatpush1.bf16.msra.mxu0 %v6054
        %6071 = vmatprep.subr.bf16.mxu0 0
        %6072 = vmatpush1.bf16.msra.mxu0 %v6053
        %6073 = vmatprep.subr.bf16.mxu0 0
        %6074 = vmatpush1.bf16.msra.mxu0 %v6052
        %6075 = vmatprep.subr.bf16.mxu0 0
        %6076 = vmatpush1.bf16.msra.mxu0 %v6051
        %6077 = vmatprep.subr.bf16.mxu0 0
        %6078 = vmatpush1.bf16.msra.mxu0 %v6050
        %6079 = vmatprep.subr.bf16.mxu0 0
        %6080 = vmatpush1.bf16.msra.mxu0 %v6049
        %6081 = vmatprep.subr.bf16.mxu0 0
        %6082 = vmatpush2.bf16.msra.mxu0 0
        %6083 = vmatprep.subr.bf16.mxu0 0
        %6084 = vmatpush2.bf16.msra.mxu0 0
        %6085 = vmatprep.subr.bf16.mxu0 0
        %6086 = vmatpush2.bf16.msra.mxu0 0
        %6087 = vmatprep.subr.bf16.mxu0 0
        %6088 = vmatpush2.bf16.msra.mxu0 0
        %6089 = vmatprep.subr.bf16.mxu0 0
        %6090 = vmatpush2.bf16.msra.mxu0 0
        %6091 = vmatprep.subr.bf16.mxu0 0
        %6092 = vmatpush2.bf16.msra.mxu0 0
        %6093 = vmatprep.subr.bf16.mxu0 0
        %6094 = vmatpush2.bf16.msra.mxu0 0
        %6095 = vmatprep.subr.bf16.mxu0 0
        %6096 = vmatpush2.bf16.msra.mxu0 0
        %6097 = vmatprep.mubr.bf16.mxu0 0
        %6098 = vmatmul.mubr.bf16.gmra.mxu0 %v5985
        %v6099 = vpop.f32.mrf.mxu0
        %v6100 = vadd.f32 0.0, %v6099
        %v6101 = vpop.f32.mrf.mxu0
        %v6102 = vpop.f32.mrf.mxu0
        %v6103 = vadd.f32 0.0, %v6102
        %v6104 = vpop.f32.mrf.mxu0
        %6105 = vmatprep.mubr.bf16.mxu0 0
        %6106 = vmatmul.mubr.bf16.gmra.mxu0 %v5986
        %v6107 = vpop.f32.mrf.mxu0
        %v6108 = vadd.f32 0.0, %v6107
        %v6109 = vpop.f32.mrf.mxu0
        %v6110 = vpop.f32.mrf.mxu0
        %v6111 = vadd.f32 0.0, %v6110
        %v6112 = vpop.f32.mrf.mxu0
        %6113 = vmatprep.mubr.bf16.mxu0 0
        %6114 = vmatmul.mubr.bf16.gmra.mxu0 %v5987
        %v6115 = vpop.f32.mrf.mxu0
        %v6116 = vadd.f32 0.0, %v6115
        %v6117 = vpop.f32.mrf.mxu0
        %v6118 = vpop.f32.mrf.mxu0
        %v6119 = vadd.f32 0.0, %v6118
        %v6120 = vpop.f32.mrf.mxu0
        %6121 = vmatprep.mubr.bf16.mxu0 0
        %6122 = vmatmul.mubr.bf16.gmra.mxu0 %v5988
        %v6123 = vpop.f32.mrf.mxu0
        %v6124 = vadd.f32 0.0, %v6123
        %v6125 = vpop.f32.mrf.mxu0
        %v6126 = vpop.f32.mrf.mxu0
        %v6127 = vadd.f32 0.0, %v6126
        %v6128 = vpop.f32.mrf.mxu0
        %6129 = vmatprep.mubr.bf16.mxu0 0
        %6130 = vmatmul.mubr.bf16.gmra.mxu0 %v5989
        %v6131 = vpop.f32.mrf.mxu0
        %v6132 = vadd.f32 0.0, %v6131
        %v6133 = vpop.f32.mrf.mxu0
        %v6134 = vpop.f32.mrf.mxu0
        %v6135 = vadd.f32 0.0, %v6134
        %v6136 = vpop.f32.mrf.mxu0
        %6137 = vmatprep.mubr.bf16.mxu0 0
        %6138 = vmatmul.mubr.bf16.gmra.mxu0 %v5990
        %v6139 = vpop.f32.mrf.mxu0
        %v6140 = vadd.f32 0.0, %v6139
        %v6141 = vpop.f32.mrf.mxu0
        %v6142 = vpop.f32.mrf.mxu0
        %v6143 = vadd.f32 0.0, %v6142
        %v6144 = vpop.f32.mrf.mxu0
        %6145 = vmatprep.mubr.bf16.mxu0 0
        %6146 = vmatmul.mubr.bf16.gmra.mxu0 %v5991
        %v6147 = vpop.f32.mrf.mxu0
        %v6148 = vadd.f32 0.0, %v6147
        %v6149 = vpop.f32.mrf.mxu0
        %v6150 = vpop.f32.mrf.mxu0
        %v6151 = vadd.f32 0.0, %v6150
        %v6152 = vpop.f32.mrf.mxu0
        %6153 = vmatprep.mubr.bf16.mxu0 0
        %6154 = vmatmul.mubr.bf16.gmra.mxu0 %v5992
        %v6155 = vpop.f32.mrf.mxu0
        %v6156 = vadd.f32 0.0, %v6155
        %v6157 = vpop.f32.mrf.mxu0
        %v6158 = vpop.f32.mrf.mxu0
        %v6159 = vadd.f32 0.0, %v6158
        %v6160 = vpop.f32.mrf.mxu0
        %6161 = vmatprep.mubr.bf16.mxu0 0
        %6162 = vmatmul.mubr.bf16.gmra.mxu0 %v5993
        %v6163 = vpop.f32.mrf.mxu0
        %v6164 = vadd.f32 0.0, %v6163
        %v6165 = vpop.f32.mrf.mxu0
        %v6166 = vpop.f32.mrf.mxu0
        %v6167 = vadd.f32 0.0, %v6166
        %v6168 = vpop.f32.mrf.mxu0
        %6169 = vmatprep.mubr.bf16.mxu0 0
        %6170 = vmatmul.mubr.bf16.gmra.mxu0 %v5994
        %v6171 = vpop.f32.mrf.mxu0
        %v6172 = vadd.f32 0.0, %v6171
        %v6173 = vpop.f32.mrf.mxu0
        %v6174 = vpop.f32.mrf.mxu0
        %v6175 = vadd.f32 0.0, %v6174
        %v6176 = vpop.f32.mrf.mxu0
        %6177 = vmatprep.mubr.bf16.mxu0 0
        %6178 = vmatmul.mubr.bf16.gmra.mxu0 %v5995
        %v6179 = vpop.f32.mrf.mxu0
        %v6180 = vadd.f32 0.0, %v6179
        %v6181 = vpop.f32.mrf.mxu0
        %v6182 = vpop.f32.mrf.mxu0
        %v6183 = vadd.f32 0.0, %v6182
        %v6184 = vpop.f32.mrf.mxu0
        %6185 = vmatprep.mubr.bf16.mxu0 0
        %6186 = vmatmul.mubr.bf16.gmra.mxu0 %v5996
        %v6187 = vpop.f32.mrf.mxu0
        %v6188 = vadd.f32 0.0, %v6187
        %v6189 = vpop.f32.mrf.mxu0
        %v6190 = vpop.f32.mrf.mxu0
        %v6191 = vadd.f32 0.0, %v6190
        %v6192 = vpop.f32.mrf.mxu0
        %6193 = vmatprep.mubr.bf16.mxu0 0
        %6194 = vmatmul.mubr.bf16.gmra.mxu0 %v5997
        %v6195 = vpop.f32.mrf.mxu0
        %v6196 = vadd.f32 0.0, %v6195
        %v6197 = vpop.f32.mrf.mxu0
        %v6198 = vpop.f32.mrf.mxu0
        %v6199 = vadd.f32 0.0, %v6198
        %v6200 = vpop.f32.mrf.mxu0
        %6201 = vmatprep.mubr.bf16.mxu0 0
        %6202 = vmatmul.mubr.bf16.gmra.mxu0 %v5998
        %v6203 = vpop.f32.mrf.mxu0
        %v6204 = vadd.f32 0.0, %v6203
        %v6205 = vpop.f32.mrf.mxu0
        %v6206 = vpop.f32.mrf.mxu0
        %v6207 = vadd.f32 0.0, %v6206
        %v6208 = vpop.f32.mrf.mxu0
        %6209 = vmatprep.mubr.bf16.mxu0 0
        %6210 = vmatmul.mubr.bf16.gmra.mxu0 %v5999
        %v6211 = vpop.f32.mrf.mxu0
        %v6212 = vadd.f32 0.0, %v6211
        %v6213 = vpop.f32.mrf.mxu0
        %v6214 = vpop.f32.mrf.mxu0
        %v6215 = vadd.f32 0.0, %v6214
        %v6216 = vpop.f32.mrf.mxu0
        %6217 = vmatprep.mubr.bf16.mxu0 0
        %6218 = vmatmul.mubr.bf16.gmra.mxu0 %v6000
        %v6219 = vpop.f32.mrf.mxu0
        %v6220 = vadd.f32 0.0, %v6219
        %v6221 = vpop.f32.mrf.mxu0
        %v6222 = vpop.f32.mrf.mxu0
        %v6223 = vadd.f32 0.0, %v6222
        %v6224 = vpop.f32.mrf.mxu0
        %6225 = vdwg.mxu0
        %v6226 = vadd.f32 %v5728, %v6100
        %v6227 = vadd.f32 %v5729, %v6103
        %v6228 = vadd.f32 %v5730, %v6108
        %v6229 = vadd.f32 %v5731, %v6111
        %v6230 = vadd.f32 %v5732, %v6116
        %v6231 = vadd.f32 %v5733, %v6119
        %v6232 = vadd.f32 %v5734, %v6124
        %v6233 = vadd.f32 %v5735, %v6127
        %v6234 = vadd.f32 %v5736, %v6132
        %v6235 = vadd.f32 %v5737, %v6135
        %v6236 = vadd.f32 %v5738, %v6140
        %v6237 = vadd.f32 %v5739, %v6143
        %v6238 = vadd.f32 %v5740, %v6148
        %v6239 = vadd.f32 %v5741, %v6151
        %v6240 = vadd.f32 %v5742, %v6156
        %v6241 = vadd.f32 %v5743, %v6159
        %v6242 = vadd.f32 %v5744, %v6164
        %v6243 = vadd.f32 %v5745, %v6167
        %v6244 = vadd.f32 %v5746, %v6172
        %v6245 = vadd.f32 %v5747, %v6175
        %v6246 = vadd.f32 %v5748, %v6180
        %v6247 = vadd.f32 %v5749, %v6183
        %v6248 = vadd.f32 %v5750, %v6188
        %v6249 = vadd.f32 %v5751, %v6191
        %v6250 = vadd.f32 %v5752, %v6196
        %v6251 = vadd.f32 %v5753, %v6199
        %v6252 = vadd.f32 %v5754, %v6204
        %v6253 = vadd.f32 %v5755, %v6207
        %v6254 = vadd.f32 %v5756, %v6212
        %v6255 = vadd.f32 %v5757, %v6215
        %v6256 = vadd.f32 %v5758, %v6220
        %v6257 = vadd.f32 %v5759, %v6223
        %v6258 = vld [vmem:[%s4] sm:$0x1]
        %v6260 = vlaneseq
        %v6261 = vshrl.u32 %v6260, 7
        %v6262 = vsub.s32 0, %v6261
        %v6263 = vrot.slane %v6258, %v6262
        %v6265 = vadd.f32 %v6226, %v6263
        %v6266 = vadd.f32 %v6227, %v6263
        %v6267 = vadd.f32 %v6228, %v6263
        %v6268 = vadd.f32 %v6229, %v6263
        %v6269 = vadd.f32 %v6230, %v6263
        %v6270 = vadd.f32 %v6231, %v6263
        %v6271 = vadd.f32 %v6232, %v6263
        %v6272 = vadd.f32 %v6233, %v6263
        %v6273 = vadd.f32 %v6234, %v6263
        %v6274 = vadd.f32 %v6235, %v6263
        %v6275 = vadd.f32 %v6236, %v6263
        %v6276 = vadd.f32 %v6237, %v6263
        %v6277 = vadd.f32 %v6238, %v6263
        %v6278 = vadd.f32 %v6239, %v6263
        %v6279 = vadd.f32 %v6240, %v6263
        %v6280 = vadd.f32 %v6241, %v6263
        %v6281 = vadd.f32 %v6242, %v6263
        %v6282 = vadd.f32 %v6243, %v6263
        %v6283 = vadd.f32 %v6244, %v6263
        %v6284 = vadd.f32 %v6245, %v6263
        %v6285 = vadd.f32 %v6246, %v6263
        %v6286 = vadd.f32 %v6247, %v6263
        %v6287 = vadd.f32 %v6248, %v6263
        %v6288 = vadd.f32 %v6249, %v6263
        %v6289 = vadd.f32 %v6250, %v6263
        %v6290 = vadd.f32 %v6251, %v6263
        %v6291 = vadd.f32 %v6252, %v6263
        %v6292 = vadd.f32 %v6253, %v6263
        %v6293 = vadd.f32 %v6254, %v6263
        %v6294 = vadd.f32 %v6255, %v6263
        %v6295 = vadd.f32 %v6256, %v6263
        %v6296 = vadd.f32 %v6257, %v6263
        %vm6297 = vcmp.gt.f32.partialorder %v6265, 0.0
        %vm6298 = vcmp.gt.f32.partialorder %v6266, 0.0
        %vm6299 = vcmp.gt.f32.partialorder %v6267, 0.0
        %vm6300 = vcmp.gt.f32.partialorder %v6268, 0.0
        %vm6301 = vcmp.gt.f32.partialorder %v6269, 0.0
        %vm6302 = vcmp.gt.f32.partialorder %v6270, 0.0
        %vm6303 = vcmp.gt.f32.partialorder %v6271, 0.0
        %vm6304 = vcmp.gt.f32.partialorder %v6272, 0.0
        %vm6305 = vcmp.gt.f32.partialorder %v6273, 0.0
        %vm6306 = vcmp.gt.f32.partialorder %v6274, 0.0
        %vm6307 = vcmp.gt.f32.partialorder %v6275, 0.0
        %vm6308 = vcmp.gt.f32.partialorder %v6276, 0.0
        %vm6309 = vcmp.gt.f32.partialorder %v6277, 0.0
        %vm6310 = vcmp.gt.f32.partialorder %v6278, 0.0
        %vm6311 = vcmp.gt.f32.partialorder %v6279, 0.0
        %vm6312 = vcmp.gt.f32.partialorder %v6280, 0.0
        %vm6313 = vcmp.gt.f32.partialorder %v6281, 0.0
        %vm6314 = vcmp.gt.f32.partialorder %v6282, 0.0
        %vm6315 = vcmp.gt.f32.partialorder %v6283, 0.0
        %vm6316 = vcmp.gt.f32.partialorder %v6284, 0.0
        %vm6317 = vcmp.gt.f32.partialorder %v6285, 0.0
        %vm6318 = vcmp.gt.f32.partialorder %v6286, 0.0
        %vm6319 = vcmp.gt.f32.partialorder %v6287, 0.0
        %vm6320 = vcmp.gt.f32.partialorder %v6288, 0.0
        %vm6321 = vcmp.gt.f32.partialorder %v6289, 0.0
        %vm6322 = vcmp.gt.f32.partialorder %v6290, 0.0
        %vm6323 = vcmp.gt.f32.partialorder %v6291, 0.0
        %vm6324 = vcmp.gt.f32.partialorder %v6292, 0.0
        %vm6325 = vcmp.gt.f32.partialorder %v6293, 0.0
        %vm6326 = vcmp.gt.f32.partialorder %v6294, 0.0
        %vm6327 = vcmp.gt.f32.partialorder %v6295, 0.0
        %vm6328 = vcmp.gt.f32.partialorder %v6296, 0.0
        %v6329 = vmul.f32 %v6265, 0.1
        %v6330 = vmul.f32 %v6266, 0.1
        %v6331 = vmul.f32 %v6267, 0.1
        %v6332 = vmul.f32 %v6268, 0.1
        %v6333 = vmul.f32 %v6269, 0.1
        %v6334 = vmul.f32 %v6270, 0.1
        %v6335 = vmul.f32 %v6271, 0.1
        %v6336 = vmul.f32 %v6272, 0.1
        %v6337 = vmul.f32 %v6273, 0.1
        %v6338 = vmul.f32 %v6274, 0.1
        %v6339 = vmul.f32 %v6275, 0.1
        %v6340 = vmul.f32 %v6276, 0.1
        %v6341 = vmul.f32 %v6277, 0.1
        %v6342 = vmul.f32 %v6278, 0.1
        %v6343 = vmul.f32 %v6279, 0.1
        %v6344 = vmul.f32 %v6280, 0.1
        %v6345 = vmul.f32 %v6281, 0.1
        %v6346 = vmul.f32 %v6282, 0.1
        %v6347 = vmul.f32 %v6283, 0.1
        %v6348 = vmul.f32 %v6284, 0.1
        %v6349 = vmul.f32 %v6285, 0.1
        %v6350 = vmul.f32 %v6286, 0.1
        %v6351 = vmul.f32 %v6287, 0.1
        %v6352 = vmul.f32 %v6288, 0.1
        %v6353 = vmul.f32 %v6289, 0.1
        %v6354 = vmul.f32 %v6290, 0.1
        %v6355 = vmul.f32 %v6291, 0.1
        %v6356 = vmul.f32 %v6292, 0.1
        %v6357 = vmul.f32 %v6293, 0.1
        %v6358 = vmul.f32 %v6294, 0.1
        %v6359 = vmul.f32 %v6295, 0.1
        %v6360 = vmul.f32 %v6296, 0.1
        %v6361 = vsel %vm6297, %v6265, %v6329
        %v6362 = vsel %vm6298, %v6266, %v6330
        %v6363 = vsel %vm6299, %v6267, %v6331
        %v6364 = vsel %vm6300, %v6268, %v6332
        %v6365 = vsel %vm6301, %v6269, %v6333
        %v6366 = vsel %vm6302, %v6270, %v6334
        %v6367 = vsel %vm6303, %v6271, %v6335
        %v6368 = vsel %vm6304, %v6272, %v6336
        %v6369 = vsel %vm6305, %v6273, %v6337
        %v6370 = vsel %vm6306, %v6274, %v6338
        %v6371 = vsel %vm6307, %v6275, %v6339
        %v6372 = vsel %vm6308, %v6276, %v6340
        %v6373 = vsel %vm6309, %v6277, %v6341
        %v6374 = vsel %vm6310, %v6278, %v6342
        %v6375 = vsel %vm6311, %v6279, %v6343
        %v6376 = vsel %vm6312, %v6280, %v6344
        %v6377 = vsel %vm6313, %v6281, %v6345
        %v6378 = vsel %vm6314, %v6282, %v6346
        %v6379 = vsel %vm6315, %v6283, %v6347
        %v6380 = vsel %vm6316, %v6284, %v6348
        %v6381 = vsel %vm6317, %v6285, %v6349
        %v6382 = vsel %vm6318, %v6286, %v6350
        %v6383 = vsel %vm6319, %v6287, %v6351
        %v6384 = vsel %vm6320, %v6288, %v6352
        %v6385 = vsel %vm6321, %v6289, %v6353
        %v6386 = vsel %vm6322, %v6290, %v6354
        %v6387 = vsel %vm6323, %v6291, %v6355
        %v6388 = vsel %vm6324, %v6292, %v6356
        %v6389 = vsel %vm6325, %v6293, %v6357
        %v6390 = vsel %vm6326, %v6294, %v6358
        %v6391 = vsel %vm6327, %v6295, %v6359
        %v6392 = vsel %vm6328, %v6296, %v6360
        %v6393 = vpack.c.bf16 %v6362, %v6361
        %v6394 = vpack.c.bf16 %v6364, %v6363
        %v6395 = vpack.c.bf16 %v6366, %v6365
        %v6396 = vpack.c.bf16 %v6368, %v6367
        %v6397 = vpack.c.bf16 %v6370, %v6369
        %v6398 = vpack.c.bf16 %v6372, %v6371
        %v6399 = vpack.c.bf16 %v6374, %v6373
        %v6400 = vpack.c.bf16 %v6376, %v6375
        %v6401 = vpack.c.bf16 %v6378, %v6377
        %v6402 = vpack.c.bf16 %v6380, %v6379
        %v6403 = vpack.c.bf16 %v6382, %v6381
        %v6404 = vpack.c.bf16 %v6384, %v6383
        %v6405 = vpack.c.bf16 %v6386, %v6385
        %v6406 = vpack.c.bf16 %v6388, %v6387
        %v6407 = vpack.c.bf16 %v6390, %v6389
        %v6408 = vpack.c.bf16 %v6392, %v6391
        %v6409 = vld [vmem:[%s5] sm:$0xf]
        %v6410 = vld [vmem:[%s5 + $0x4] sm:$0xf]
        %v6411 = vld [vmem:[%s5 + $0x8] sm:$0xf]
        %v6412 = vld [vmem:[%s5 + $0xc] sm:$0xf]
        %v6413 = vld [vmem:[%s5 + $0x10] sm:$0xf]
        %v6414 = vld [vmem:[%s5 + $0x14] sm:$0xf]
        %v6415 = vld [vmem:[%s5 + $0x18] sm:$0xf]
        %v6416 = vld [vmem:[%s5 + $0x1c] sm:$0xf]
        %v6417 = vld [vmem:[%s5 + $0x20] sm:$0xf]
        %v6418 = vld [vmem:[%s5 + $0x24] sm:$0xf]
        %v6419 = vld [vmem:[%s5 + $0x28] sm:$0xf]
        %v6420 = vld [vmem:[%s5 + $0x2c] sm:$0xf]
        %v6421 = vld [vmem:[%s5 + $0x30] sm:$0xf]
        %v6422 = vld [vmem:[%s5 + $0x34] sm:$0xf]
        %v6423 = vld [vmem:[%s5 + $0x38] sm:$0xf]
        %v6424 = vld [vmem:[%s5 + $0x3c] sm:$0xf]
        %v6425 = vld [vmem:[%s6] sm:$0x1]
        %v6427 = vlaneseq
        %v6428 = vshrl.u32 %v6427, 7
        %v6429 = vsub.s32 0, %v6428
        %v6430 = vrot.slane %v6425, %v6429
        %v6448 = vunpack.c.l.b16 %v6409
        %v6449 = vunpack.c.l.b16 %v6410
        %v6450 = vunpack.c.l.b16 %v6411
        %v6451 = vunpack.c.l.b16 %v6412
        %v6452 = vunpack.c.l.b16 %v6413
        %v6453 = vunpack.c.l.b16 %v6414
        %v6454 = vunpack.c.l.b16 %v6415
        %v6455 = vunpack.c.l.b16 %v6416
        %v6456 = vunpack.c.l.b16 %v6417
        %v6457 = vunpack.c.l.b16 %v6418
        %v6458 = vunpack.c.l.b16 %v6419
        %v6459 = vunpack.c.l.b16 %v6420
        %v6460 = vunpack.c.l.b16 %v6421
        %v6461 = vunpack.c.l.b16 %v6422
        %v6462 = vunpack.c.l.b16 %v6423
        %v6463 = vunpack.c.l.b16 %v6424
        %v6464 = vpack.c.b16 %v6449, %v6448
        %v6465 = vpack.c.b16 %v6451, %v6450
        %v6466 = vpack.c.b16 %v6453, %v6452
        %v6467 = vpack.c.b16 %v6455, %v6454
        %v6468 = vpack.c.b16 %v6457, %v6456
        %v6469 = vpack.c.b16 %v6459, %v6458
        %v6470 = vpack.c.b16 %v6461, %v6460
        %v6471 = vpack.c.b16 %v6463, %v6462
        %6480 = vmatprep.subr.bf16.mxu0 0
        %6481 = vmatpush1.bf16.msra.mxu0 %v6471
        %6482 = vmatprep.subr.bf16.mxu0 0
        %6483 = vmatpush1.bf16.msra.mxu0 %v6470
        %6484 = vmatprep.subr.bf16.mxu0 0
        %6485 = vmatpush1.bf16.msra.mxu0 %v6469
        %6486 = vmatprep.subr.bf16.mxu0 0
        %6487 = vmatpush1.bf16.msra.mxu0 %v6468
        %6488 = vmatprep.subr.bf16.mxu0 0
        %6489 = vmatpush1.bf16.msra.mxu0 %v6467
        %6490 = vmatprep.subr.bf16.mxu0 0
        %6491 = vmatpush1.bf16.msra.mxu0 %v6466
        %6492 = vmatprep.subr.bf16.mxu0 0
        %6493 = vmatpush1.bf16.msra.mxu0 %v6465
        %6494 = vmatprep.subr.bf16.mxu0 0
        %6495 = vmatpush1.bf16.msra.mxu0 %v6464
        %6496 = vmatprep.subr.bf16.mxu0 0
        %6497 = vmatpush2.bf16.msra.mxu0 0
        %6498 = vmatprep.subr.bf16.mxu0 0
        %6499 = vmatpush2.bf16.msra.mxu0 0
        %6500 = vmatprep.subr.bf16.mxu0 0
        %6501 = vmatpush2.bf16.msra.mxu0 0
        %6502 = vmatprep.subr.bf16.mxu0 0
        %6503 = vmatpush2.bf16.msra.mxu0 0
        %6504 = vmatprep.subr.bf16.mxu0 0
        %6505 = vmatpush2.bf16.msra.mxu0 0
        %6506 = vmatprep.subr.bf16.mxu0 0
        %6507 = vmatpush2.bf16.msra.mxu0 0
        %6508 = vmatprep.subr.bf16.mxu0 0
        %6509 = vmatpush2.bf16.msra.mxu0 0
        %6510 = vmatprep.subr.bf16.mxu0 0
        %6511 = vmatpush2.bf16.msra.mxu0 0
        %6512 = vmatprep.mubr.bf16.mxu0 0
        %6513 = vmatmul.mubr.bf16.gmra.mxu0 %v6393
        %v6514 = vpop.f32.mrf.mxu0
        %v6515 = vadd.f32 %v6430, %v6514
        %v6516 = vpop.f32.mrf.mxu0
        %v6517 = vpop.f32.mrf.mxu0
        %v6518 = vadd.f32 %v6430, %v6517
        %v6519 = vpop.f32.mrf.mxu0
        %6520 = vmatprep.mubr.bf16.mxu0 0
        %6521 = vmatmul.mubr.bf16.gmra.mxu0 %v6394
        %v6522 = vpop.f32.mrf.mxu0
        %v6523 = vadd.f32 %v6430, %v6522
        %v6524 = vpop.f32.mrf.mxu0
        %v6525 = vpop.f32.mrf.mxu0
        %v6526 = vadd.f32 %v6430, %v6525
        %v6527 = vpop.f32.mrf.mxu0
        %6528 = vmatprep.mubr.bf16.mxu0 0
        %6529 = vmatmul.mubr.bf16.gmra.mxu0 %v6395
        %v6530 = vpop.f32.mrf.mxu0
        %v6531 = vadd.f32 %v6430, %v6530
        %v6532 = vpop.f32.mrf.mxu0
        %v6533 = vpop.f32.mrf.mxu0
        %v6534 = vadd.f32 %v6430, %v6533
        %v6535 = vpop.f32.mrf.mxu0
        %6536 = vmatprep.mubr.bf16.mxu0 0
        %6537 = vmatmul.mubr.bf16.gmra.mxu0 %v6396
        %v6538 = vpop.f32.mrf.mxu0
        %v6539 = vadd.f32 %v6430, %v6538
        %v6540 = vpop.f32.mrf.mxu0
        %v6541 = vpop.f32.mrf.mxu0
        %v6542 = vadd.f32 %v6430, %v6541
        %v6543 = vpop.f32.mrf.mxu0
        %6544 = vmatprep.mubr.bf16.mxu0 0
        %6545 = vmatmul.mubr.bf16.gmra.mxu0 %v6397
        %v6546 = vpop.f32.mrf.mxu0
        %v6547 = vadd.f32 %v6430, %v6546
        %v6548 = vpop.f32.mrf.mxu0
        %v6549 = vpop.f32.mrf.mxu0
        %v6550 = vadd.f32 %v6430, %v6549
        %v6551 = vpop.f32.mrf.mxu0
        %6552 = vmatprep.mubr.bf16.mxu0 0
        %6553 = vmatmul.mubr.bf16.gmra.mxu0 %v6398
        %v6554 = vpop.f32.mrf.mxu0
        %v6555 = vadd.f32 %v6430, %v6554
        %v6556 = vpop.f32.mrf.mxu0
        %v6557 = vpop.f32.mrf.mxu0
        %v6558 = vadd.f32 %v6430, %v6557
        %v6559 = vpop.f32.mrf.mxu0
        %6560 = vmatprep.mubr.bf16.mxu0 0
        %6561 = vmatmul.mubr.bf16.gmra.mxu0 %v6399
        %v6562 = vpop.f32.mrf.mxu0
        %v6563 = vadd.f32 %v6430, %v6562
        %v6564 = vpop.f32.mrf.mxu0
        %v6565 = vpop.f32.mrf.mxu0
        %v6566 = vadd.f32 %v6430, %v6565
        %v6567 = vpop.f32.mrf.mxu0
        %6568 = vmatprep.mubr.bf16.mxu0 0
        %6569 = vmatmul.mubr.bf16.gmra.mxu0 %v6400
        %v6570 = vpop.f32.mrf.mxu0
        %v6571 = vadd.f32 %v6430, %v6570
        %v6572 = vpop.f32.mrf.mxu0
        %v6573 = vpop.f32.mrf.mxu0
        %v6574 = vadd.f32 %v6430, %v6573
        %v6575 = vpop.f32.mrf.mxu0
        %6576 = vmatprep.mubr.bf16.mxu0 0
        %6577 = vmatmul.mubr.bf16.gmra.mxu0 %v6401
        %v6578 = vpop.f32.mrf.mxu0
        %v6579 = vadd.f32 %v6430, %v6578
        %v6580 = vpop.f32.mrf.mxu0
        %v6581 = vpop.f32.mrf.mxu0
        %v6582 = vadd.f32 %v6430, %v6581
        %v6583 = vpop.f32.mrf.mxu0
        %6584 = vmatprep.mubr.bf16.mxu0 0
        %6585 = vmatmul.mubr.bf16.gmra.mxu0 %v6402
        %v6586 = vpop.f32.mrf.mxu0
        %v6587 = vadd.f32 %v6430, %v6586
        %v6588 = vpop.f32.mrf.mxu0
        %v6589 = vpop.f32.mrf.mxu0
        %v6590 = vadd.f32 %v6430, %v6589
        %v6591 = vpop.f32.mrf.mxu0
        %6592 = vmatprep.mubr.bf16.mxu0 0
        %6593 = vmatmul.mubr.bf16.gmra.mxu0 %v6403
        %v6594 = vpop.f32.mrf.mxu0
        %v6595 = vadd.f32 %v6430, %v6594
        %v6596 = vpop.f32.mrf.mxu0
        %v6597 = vpop.f32.mrf.mxu0
        %v6598 = vadd.f32 %v6430, %v6597
        %v6599 = vpop.f32.mrf.mxu0
        %6600 = vmatprep.mubr.bf16.mxu0 0
        %6601 = vmatmul.mubr.bf16.gmra.mxu0 %v6404
        %v6602 = vpop.f32.mrf.mxu0
        %v6603 = vadd.f32 %v6430, %v6602
        %v6604 = vpop.f32.mrf.mxu0
        %v6605 = vpop.f32.mrf.mxu0
        %v6606 = vadd.f32 %v6430, %v6605
        %v6607 = vpop.f32.mrf.mxu0
        %6608 = vmatprep.mubr.bf16.mxu0 0
        %6609 = vmatmul.mubr.bf16.gmra.mxu0 %v6405
        %v6610 = vpop.f32.mrf.mxu0
        %v6611 = vadd.f32 %v6430, %v6610
        %v6612 = vpop.f32.mrf.mxu0
        %v6613 = vpop.f32.mrf.mxu0
        %v6614 = vadd.f32 %v6430, %v6613
        %v6615 = vpop.f32.mrf.mxu0
        %6616 = vmatprep.mubr.bf16.mxu0 0
        %6617 = vmatmul.mubr.bf16.gmra.mxu0 %v6406
        %v6618 = vpop.f32.mrf.mxu0
        %v6619 = vadd.f32 %v6430, %v6618
        %v6620 = vpop.f32.mrf.mxu0
        %v6621 = vpop.f32.mrf.mxu0
        %v6622 = vadd.f32 %v6430, %v6621
        %v6623 = vpop.f32.mrf.mxu0
        %6624 = vmatprep.mubr.bf16.mxu0 0
        %6625 = vmatmul.mubr.bf16.gmra.mxu0 %v6407
        %v6626 = vpop.f32.mrf.mxu0
        %v6627 = vadd.f32 %v6430, %v6626
        %v6628 = vpop.f32.mrf.mxu0
        %v6629 = vpop.f32.mrf.mxu0
        %v6630 = vadd.f32 %v6430, %v6629
        %v6631 = vpop.f32.mrf.mxu0
        %6632 = vmatprep.mubr.bf16.mxu0 0
        %6633 = vmatmul.mubr.bf16.gmra.mxu0 %v6408
        %v6634 = vpop.f32.mrf.mxu0
        %v6635 = vadd.f32 %v6430, %v6634
        %v6636 = vpop.f32.mrf.mxu0
        %v6637 = vpop.f32.mrf.mxu0
        %v6638 = vadd.f32 %v6430, %v6637
        %v6639 = vpop.f32.mrf.mxu0
        %6640 = vdwg.mxu0
        %vm6641 = vcmp.gt.f32.partialorder %v6515, 0.0
        %vm6642 = vcmp.gt.f32.partialorder %v6518, 0.0
        %vm6643 = vcmp.gt.f32.partialorder %v6523, 0.0
        %vm6644 = vcmp.gt.f32.partialorder %v6526, 0.0
        %vm6645 = vcmp.gt.f32.partialorder %v6531, 0.0
        %vm6646 = vcmp.gt.f32.partialorder %v6534, 0.0
        %vm6647 = vcmp.gt.f32.partialorder %v6539, 0.0
        %vm6648 = vcmp.gt.f32.partialorder %v6542, 0.0
        %vm6649 = vcmp.gt.f32.partialorder %v6547, 0.0
        %vm6650 = vcmp.gt.f32.partialorder %v6550, 0.0
        %vm6651 = vcmp.gt.f32.partialorder %v6555, 0.0
        %vm6652 = vcmp.gt.f32.partialorder %v6558, 0.0
        %vm6653 = vcmp.gt.f32.partialorder %v6563, 0.0
        %vm6654 = vcmp.gt.f32.partialorder %v6566, 0.0
        %vm6655 = vcmp.gt.f32.partialorder %v6571, 0.0
        %vm6656 = vcmp.gt.f32.partialorder %v6574, 0.0
        %vm6657 = vcmp.gt.f32.partialorder %v6579, 0.0
        %vm6658 = vcmp.gt.f32.partialorder %v6582, 0.0
        %vm6659 = vcmp.gt.f32.partialorder %v6587, 0.0
        %vm6660 = vcmp.gt.f32.partialorder %v6590, 0.0
        %vm6661 = vcmp.gt.f32.partialorder %v6595, 0.0
        %vm6662 = vcmp.gt.f32.partialorder %v6598, 0.0
        %vm6663 = vcmp.gt.f32.partialorder %v6603, 0.0
        %vm6664 = vcmp.gt.f32.partialorder %v6606, 0.0
        %vm6665 = vcmp.gt.f32.partialorder %v6611, 0.0
        %vm6666 = vcmp.gt.f32.partialorder %v6614, 0.0
        %vm6667 = vcmp.gt.f32.partialorder %v6619, 0.0
        %vm6668 = vcmp.gt.f32.partialorder %v6622, 0.0
        %vm6669 = vcmp.gt.f32.partialorder %v6627, 0.0
        %vm6670 = vcmp.gt.f32.partialorder %v6630, 0.0
        %vm6671 = vcmp.gt.f32.partialorder %v6635, 0.0
        %vm6672 = vcmp.gt.f32.partialorder %v6638, 0.0
        %v6673 = vmul.f32 %v6515, 0.1
        %v6674 = vmul.f32 %v6518, 0.1
        %v6675 = vmul.f32 %v6523, 0.1
        %v6676 = vmul.f32 %v6526, 0.1
        %v6677 = vmul.f32 %v6531, 0.1
        %v6678 = vmul.f32 %v6534, 0.1
        %v6679 = vmul.f32 %v6539, 0.1
        %v6680 = vmul.f32 %v6542, 0.1
        %v6681 = vmul.f32 %v6547, 0.1
        %v6682 = vmul.f32 %v6550, 0.1
        %v6683 = vmul.f32 %v6555, 0.1
        %v6684 = vmul.f32 %v6558, 0.1
        %v6685 = vmul.f32 %v6563, 0.1
        %v6686 = vmul.f32 %v6566, 0.1
        %v6687 = vmul.f32 %v6571, 0.1
        %v6688 = vmul.f32 %v6574, 0.1
        %v6689 = vmul.f32 %v6579, 0.1
        %v6690 = vmul.f32 %v6582, 0.1
        %v6691 = vmul.f32 %v6587, 0.1
        %v6692 = vmul.f32 %v6590, 0.1
        %v6693 = vmul.f32 %v6595, 0.1
        %v6694 = vmul.f32 %v6598, 0.1
        %v6695 = vmul.f32 %v6603, 0.1
        %v6696 = vmul.f32 %v6606, 0.1
        %v6697 = vmul.f32 %v6611, 0.1
        %v6698 = vmul.f32 %v6614, 0.1
        %v6699 = vmul.f32 %v6619, 0.1
        %v6700 = vmul.f32 %v6622, 0.1
        %v6701 = vmul.f32 %v6627, 0.1
        %v6702 = vmul.f32 %v6630, 0.1
        %v6703 = vmul.f32 %v6635, 0.1
        %v6704 = vmul.f32 %v6638, 0.1
        %v6705 = vsel %vm6641, %v6515, %v6673
        %v6706 = vsel %vm6642, %v6518, %v6674
        %v6707 = vsel %vm6643, %v6523, %v6675
        %v6708 = vsel %vm6644, %v6526, %v6676
        %v6709 = vsel %vm6645, %v6531, %v6677
        %v6710 = vsel %vm6646, %v6534, %v6678
        %v6711 = vsel %vm6647, %v6539, %v6679
        %v6712 = vsel %vm6648, %v6542, %v6680
        %v6713 = vsel %vm6649, %v6547, %v6681
        %v6714 = vsel %vm6650, %v6550, %v6682
        %v6715 = vsel %vm6651, %v6555, %v6683
        %v6716 = vsel %vm6652, %v6558, %v6684
        %v6717 = vsel %vm6653, %v6563, %v6685
        %v6718 = vsel %vm6654, %v6566, %v6686
        %v6719 = vsel %vm6655, %v6571, %v6687
        %v6720 = vsel %vm6656, %v6574, %v6688
        %v6721 = vsel %vm6657, %v6579, %v6689
        %v6722 = vsel %vm6658, %v6582, %v6690
        %v6723 = vsel %vm6659, %v6587, %v6691
        %v6724 = vsel %vm6660, %v6590, %v6692
        %v6725 = vsel %vm6661, %v6595, %v6693
        %v6726 = vsel %vm6662, %v6598, %v6694
        %v6727 = vsel %vm6663, %v6603, %v6695
        %v6728 = vsel %vm6664, %v6606, %v6696
        %v6729 = vsel %vm6665, %v6611, %v6697
        %v6730 = vsel %vm6666, %v6614, %v6698
        %v6731 = vsel %vm6667, %v6619, %v6699
        %v6732 = vsel %vm6668, %v6622, %v6700
        %v6733 = vsel %vm6669, %v6627, %v6701
        %v6734 = vsel %vm6670, %v6630, %v6702
        %v6735 = vsel %vm6671, %v6635, %v6703
        %v6736 = vsel %vm6672, %v6638, %v6704
        %v6737 = vpack.c.bf16 %v6706, %v6705
        %v6738 = vpack.c.bf16 %v6708, %v6707
        %v6739 = vpack.c.bf16 %v6710, %v6709
        %v6740 = vpack.c.bf16 %v6712, %v6711
        %v6741 = vpack.c.bf16 %v6714, %v6713
        %v6742 = vpack.c.bf16 %v6716, %v6715
        %v6743 = vpack.c.bf16 %v6718, %v6717
        %v6744 = vpack.c.bf16 %v6720, %v6719
        %v6745 = vpack.c.bf16 %v6722, %v6721
        %v6746 = vpack.c.bf16 %v6724, %v6723
        %v6747 = vpack.c.bf16 %v6726, %v6725
        %v6748 = vpack.c.bf16 %v6728, %v6727
        %v6749 = vpack.c.bf16 %v6730, %v6729
        %v6750 = vpack.c.bf16 %v6732, %v6731
        %v6751 = vpack.c.bf16 %v6734, %v6733
        %v6752 = vpack.c.bf16 %v6736, %v6735
        %v6769 = vunpack.c.l.b16 %v6737
        %v6770 = vunpack.c.h.b16 %v6737
        %v6771 = vunpack.c.l.b16 %v6738
        %v6772 = vunpack.c.h.b16 %v6738
        %v6773 = vunpack.c.l.b16 %v6739
        %v6774 = vunpack.c.h.b16 %v6739
        %v6775 = vunpack.c.l.b16 %v6740
        %v6776 = vunpack.c.h.b16 %v6740
        %v6777 = vunpack.c.l.b16 %v6741
        %v6778 = vunpack.c.h.b16 %v6741
        %v6779 = vunpack.c.l.b16 %v6742
        %v6780 = vunpack.c.h.b16 %v6742
        %v6781 = vunpack.c.l.b16 %v6743
        %v6782 = vunpack.c.h.b16 %v6743
        %v6783 = vunpack.c.l.b16 %v6744
        %v6784 = vunpack.c.h.b16 %v6744
        %v6785 = vunpack.c.l.b16 %v6745
        %v6786 = vunpack.c.h.b16 %v6745
        %v6787 = vunpack.c.l.b16 %v6746
        %v6788 = vunpack.c.h.b16 %v6746
        %v6789 = vunpack.c.l.b16 %v6747
        %v6790 = vunpack.c.h.b16 %v6747
        %v6791 = vunpack.c.l.b16 %v6748
        %v6792 = vunpack.c.h.b16 %v6748
        %v6793 = vunpack.c.l.b16 %v6749
        %v6794 = vunpack.c.h.b16 %v6749
        %v6795 = vunpack.c.l.b16 %v6750
        %v6796 = vunpack.c.h.b16 %v6750
        %v6797 = vunpack.c.l.b16 %v6751
        %v6798 = vunpack.c.h.b16 %v6751
        %v6799 = vunpack.c.l.b16 %v6752
        %v6800 = vunpack.c.h.b16 %v6752
        %v6801 = vpack.c.b16 %v6769, %v6769
        %v6802 = vpack.c.b16 %v6770, %v6770
        %v6803 = vpack.c.b16 %v6771, %v6771
        %v6804 = vpack.c.b16 %v6772, %v6772
        %v6805 = vpack.c.b16 %v6773, %v6773
        %v6806 = vpack.c.b16 %v6774, %v6774
        %v6807 = vpack.c.b16 %v6775, %v6775
        %v6808 = vpack.c.b16 %v6776, %v6776
        %v6809 = vpack.c.b16 %v6777, %v6777
        %v6810 = vpack.c.b16 %v6778, %v6778
        %v6811 = vpack.c.b16 %v6779, %v6779
        %v6812 = vpack.c.b16 %v6780, %v6780
        %v6813 = vpack.c.b16 %v6781, %v6781
        %v6814 = vpack.c.b16 %v6782, %v6782
        %v6815 = vpack.c.b16 %v6783, %v6783
        %v6816 = vpack.c.b16 %v6784, %v6784
        %v6817 = vpack.c.b16 %v6785, %v6785
        %v6818 = vpack.c.b16 %v6786, %v6786
        %v6819 = vpack.c.b16 %v6787, %v6787
        %v6820 = vpack.c.b16 %v6788, %v6788
        %v6821 = vpack.c.b16 %v6789, %v6789
        %v6822 = vpack.c.b16 %v6790, %v6790
        %v6823 = vpack.c.b16 %v6791, %v6791
        %v6824 = vpack.c.b16 %v6792, %v6792
        %v6825 = vpack.c.b16 %v6793, %v6793
        %v6826 = vpack.c.b16 %v6794, %v6794
        %v6827 = vpack.c.b16 %v6795, %v6795
        %v6828 = vpack.c.b16 %v6796, %v6796
        %v6829 = vpack.c.b16 %v6797, %v6797
        %v6830 = vpack.c.b16 %v6798, %v6798
        %v6831 = vpack.c.b16 %v6799, %v6799
        %v6832 = vpack.c.b16 %v6800, %v6800
        %v6834 = vshrl.u32 %v6801, 16
        %v6836 = vrot.slane %v6834, 7
        %v6837 = vshll.u32 %v6801, 16
        %v6839 = vor.u32 %v6836, %v6837
        %v6840 = vrot.slane %v6836, 4
        %v6842 = vshrl.u32 %v6802, 16
        %v6844 = vrot.slane %v6842, 7
        %v6845 = vshll.u32 %v6802, 16
        %v6847 = vor.u32 %v6844, %v6845
        %v6848 = vsel %vm1011, %v6840, %v6847
        %v6849 = vrot.slane %v6844, 4
        %v6851 = vshrl.u32 %v6803, 16
        %v6853 = vrot.slane %v6851, 7
        %v6854 = vshll.u32 %v6803, 16
        %v6856 = vor.u32 %v6853, %v6854
        %v6857 = vrot.slane %v6853, 4
        %v6859 = vshrl.u32 %v6804, 16
        %v6861 = vrot.slane %v6859, 7
        %v6862 = vshll.u32 %v6804, 16
        %v6864 = vor.u32 %v6861, %v6862
        %v6865 = vsel %vm1011, %v6857, %v6864
        %v6866 = vrot.slane %v6861, 4
        %v6868 = vshrl.u32 %v6805, 16
        %v6870 = vrot.slane %v6868, 7
        %v6871 = vshll.u32 %v6805, 16
        %v6873 = vor.u32 %v6870, %v6871
        %v6874 = vrot.slane %v6870, 4
        %v6876 = vshrl.u32 %v6806, 16
        %v6878 = vrot.slane %v6876, 7
        %v6879 = vshll.u32 %v6806, 16
        %v6881 = vor.u32 %v6878, %v6879
        %v6882 = vsel %vm1011, %v6874, %v6881
        %v6883 = vrot.slane %v6878, 4
        %v6885 = vshrl.u32 %v6807, 16
        %v6887 = vrot.slane %v6885, 7
        %v6888 = vshll.u32 %v6807, 16
        %v6890 = vor.u32 %v6887, %v6888
        %v6891 = vrot.slane %v6887, 4
        %v6893 = vshrl.u32 %v6808, 16
        %v6895 = vrot.slane %v6893, 7
        %v6896 = vshll.u32 %v6808, 16
        %v6898 = vor.u32 %v6895, %v6896
        %v6899 = vsel %vm1011, %v6891, %v6898
        %v6900 = vrot.slane %v6895, 4
        %v6902 = vshrl.u32 %v6809, 16
        %v6904 = vrot.slane %v6902, 7
        %v6905 = vshll.u32 %v6809, 16
        %v6907 = vor.u32 %v6904, %v6905
        %v6908 = vrot.slane %v6904, 4
        %v6910 = vshrl.u32 %v6810, 16
        %v6912 = vrot.slane %v6910, 7
        %v6913 = vshll.u32 %v6810, 16
        %v6915 = vor.u32 %v6912, %v6913
        %v6916 = vsel %vm1011, %v6908, %v6915
        %v6917 = vrot.slane %v6912, 4
        %v6919 = vshrl.u32 %v6811, 16
        %v6921 = vrot.slane %v6919, 7
        %v6922 = vshll.u32 %v6811, 16
        %v6924 = vor.u32 %v6921, %v6922
        %v6925 = vrot.slane %v6921, 4
        %v6927 = vshrl.u32 %v6812, 16
        %v6929 = vrot.slane %v6927, 7
        %v6930 = vshll.u32 %v6812, 16
        %v6932 = vor.u32 %v6929, %v6930
        %v6933 = vsel %vm1011, %v6925, %v6932
        %v6934 = vrot.slane %v6929, 4
        %v6936 = vshrl.u32 %v6813, 16
        %v6938 = vrot.slane %v6936, 7
        %v6939 = vshll.u32 %v6813, 16
        %v6941 = vor.u32 %v6938, %v6939
        %v6942 = vrot.slane %v6938, 4
        %v6944 = vshrl.u32 %v6814, 16
        %v6946 = vrot.slane %v6944, 7
        %v6947 = vshll.u32 %v6814, 16
        %v6949 = vor.u32 %v6946, %v6947
        %v6950 = vsel %vm1011, %v6942, %v6949
        %v6951 = vrot.slane %v6946, 4
        %v6953 = vshrl.u32 %v6815, 16
        %v6955 = vrot.slane %v6953, 7
        %v6956 = vshll.u32 %v6815, 16
        %v6958 = vor.u32 %v6955, %v6956
        %v6959 = vrot.slane %v6955, 4
        %v6961 = vshrl.u32 %v6816, 16
        %v6963 = vrot.slane %v6961, 7
        %v6964 = vshll.u32 %v6816, 16
        %v6966 = vor.u32 %v6963, %v6964
        %v6967 = vsel %vm1011, %v6959, %v6966
        %v6968 = vrot.slane %v6963, 4
        %v6970 = vshrl.u32 %v6817, 16
        %v6972 = vrot.slane %v6970, 7
        %v6973 = vshll.u32 %v6817, 16
        %v6975 = vor.u32 %v6972, %v6973
        %v6976 = vrot.slane %v6972, 4
        %v6978 = vshrl.u32 %v6818, 16
        %v6980 = vrot.slane %v6978, 7
        %v6981 = vshll.u32 %v6818, 16
        %v6983 = vor.u32 %v6980, %v6981
        %v6984 = vsel %vm1011, %v6976, %v6983
        %v6985 = vrot.slane %v6980, 4
        %v6987 = vshrl.u32 %v6819, 16
        %v6989 = vrot.slane %v6987, 7
        %v6990 = vshll.u32 %v6819, 16
        %v6992 = vor.u32 %v6989, %v6990
        %v6993 = vrot.slane %v6989, 4
        %v6995 = vshrl.u32 %v6820, 16
        %v6997 = vrot.slane %v6995, 7
        %v6998 = vshll.u32 %v6820, 16
        %v7000 = vor.u32 %v6997, %v6998
        %v7001 = vsel %vm1011, %v6993, %v7000
        %v7002 = vrot.slane %v6997, 4
        %v7004 = vshrl.u32 %v6821, 16
        %v7006 = vrot.slane %v7004, 7
        %v7007 = vshll.u32 %v6821, 16
        %v7009 = vor.u32 %v7006, %v7007
        %v7010 = vrot.slane %v7006, 4
        %v7012 = vshrl.u32 %v6822, 16
        %v7014 = vrot.slane %v7012, 7
        %v7015 = vshll.u32 %v6822, 16
        %v7017 = vor.u32 %v7014, %v7015
        %v7018 = vsel %vm1011, %v7010, %v7017
        %v7019 = vrot.slane %v7014, 4
        %v7021 = vshrl.u32 %v6823, 16
        %v7023 = vrot.slane %v7021, 7
        %v7024 = vshll.u32 %v6823, 16
        %v7026 = vor.u32 %v7023, %v7024
        %v7027 = vrot.slane %v7023, 4
        %v7029 = vshrl.u32 %v6824, 16
        %v7031 = vrot.slane %v7029, 7
        %v7032 = vshll.u32 %v6824, 16
        %v7034 = vor.u32 %v7031, %v7032
        %v7035 = vsel %vm1011, %v7027, %v7034
        %v7036 = vrot.slane %v7031, 4
        %v7038 = vshrl.u32 %v6825, 16
        %v7040 = vrot.slane %v7038, 7
        %v7041 = vshll.u32 %v6825, 16
        %v7043 = vor.u32 %v7040, %v7041
        %v7044 = vrot.slane %v7040, 4
        %v7046 = vshrl.u32 %v6826, 16
        %v7048 = vrot.slane %v7046, 7
        %v7049 = vshll.u32 %v6826, 16
        %v7051 = vor.u32 %v7048, %v7049
        %v7052 = vsel %vm1011, %v7044, %v7051
        %v7053 = vrot.slane %v7048, 4
        %v7055 = vshrl.u32 %v6827, 16
        %v7057 = vrot.slane %v7055, 7
        %v7058 = vshll.u32 %v6827, 16
        %v7060 = vor.u32 %v7057, %v7058
        %v7061 = vrot.slane %v7057, 4
        %v7063 = vshrl.u32 %v6828, 16
        %v7065 = vrot.slane %v7063, 7
        %v7066 = vshll.u32 %v6828, 16
        %v7068 = vor.u32 %v7065, %v7066
        %v7069 = vsel %vm1011, %v7061, %v7068
        %v7070 = vrot.slane %v7065, 4
        %v7072 = vshrl.u32 %v6829, 16
        %v7074 = vrot.slane %v7072, 7
        %v7075 = vshll.u32 %v6829, 16
        %v7077 = vor.u32 %v7074, %v7075
        %v7078 = vrot.slane %v7074, 4
        %v7080 = vshrl.u32 %v6830, 16
        %v7082 = vrot.slane %v7080, 7
        %v7083 = vshll.u32 %v6830, 16
        %v7085 = vor.u32 %v7082, %v7083
        %v7086 = vsel %vm1011, %v7078, %v7085
        %v7087 = vrot.slane %v7082, 4
        %v7089 = vshrl.u32 %v6831, 16
        %v7091 = vrot.slane %v7089, 7
        %v7092 = vshll.u32 %v6831, 16
        %v7094 = vor.u32 %v7091, %v7092
        %v7095 = vrot.slane %v7091, 4
        %v7097 = vshrl.u32 %v6832, 16
        %v7099 = vrot.slane %v7097, 7
        %v7100 = vshll.u32 %v6832, 16
        %v7102 = vor.u32 %v7099, %v7100
        %v7103 = vsel %vm1011, %v7095, %v7102
        %v7104 = vrot.slane %v7099, 4
        %v7153 = vsel %vm1335, %v6839, %v3367
        %7154 = vst [vmem:[%s1332] sm:$0xf] %v7153
        %7155 = vst [vmem:[%s1332 + $0x4] sm:$0xf] %v6848
        %v7156 = vld [vmem:[%s1332 + $0x8] sm:$0x1]
        %v7157 = vsel %vm1341, %v6849, %v7156
        %7158 = vst [vmem:[%s1332 + $0x8] sm:$0x1] %v7157
        %v7159 = vld [vmem:[%s1332 + $0xc] sm:$0xf]
        %v7160 = vsel %vm1335, %v6856, %v7159
        %7161 = vst [vmem:[%s1332 + $0xc] sm:$0xf] %v7160
        %7162 = vst [vmem:[%s1332 + $0x10] sm:$0xf] %v6865
        %v7163 = vld [vmem:[%s1332 + $0x14] sm:$0x1]
        %v7164 = vsel %vm1341, %v6866, %v7163
        %7165 = vst [vmem:[%s1332 + $0x14] sm:$0x1] %v7164
        %v7166 = vld [vmem:[%s1332 + $0x18] sm:$0xf]
        %v7167 = vsel %vm1335, %v6873, %v7166
        %7168 = vst [vmem:[%s1332 + $0x18] sm:$0xf] %v7167
        %7169 = vst [vmem:[%s1332 + $0x1c] sm:$0xf] %v6882
        %v7170 = vld [vmem:[%s1332 + $0x20] sm:$0x1]
        %v7171 = vsel %vm1341, %v6883, %v7170
        %7172 = vst [vmem:[%s1332 + $0x20] sm:$0x1] %v7171
        %v7173 = vld [vmem:[%s1332 + $0x24] sm:$0xf]
        %v7174 = vsel %vm1335, %v6890, %v7173
        %7175 = vst [vmem:[%s1332 + $0x24] sm:$0xf] %v7174
        %7176 = vst [vmem:[%s1332 + $0x28] sm:$0xf] %v6899
        %v7177 = vld [vmem:[%s1332 + $0x2c] sm:$0x1]
        %v7178 = vsel %vm1341, %v6900, %v7177
        %7179 = vst [vmem:[%s1332 + $0x2c] sm:$0x1] %v7178
        %v7180 = vld [vmem:[%s1332 + $0x30] sm:$0xf]
        %v7181 = vsel %vm1335, %v6907, %v7180
        %7182 = vst [vmem:[%s1332 + $0x30] sm:$0xf] %v7181
        %7183 = vst [vmem:[%s1332 + $0x34] sm:$0xf] %v6916
        %v7184 = vld [vmem:[%s1332 + $0x38] sm:$0x1]
        %v7185 = vsel %vm1341, %v6917, %v7184
        %7186 = vst [vmem:[%s1332 + $0x38] sm:$0x1] %v7185
        %v7187 = vld [vmem:[%s1332 + $0x3c] sm:$0xf]
        %v7188 = vsel %vm1335, %v6924, %v7187
        %7189 = vst [vmem:[%s1332 + $0x3c] sm:$0xf] %v7188
        %7190 = vst [vmem:[%s1332 + $0x40] sm:$0xf] %v6933
        %v7191 = vld [vmem:[%s1332 + $0x44] sm:$0x1]
        %v7192 = vsel %vm1341, %v6934, %v7191
        %7193 = vst [vmem:[%s1332 + $0x44] sm:$0x1] %v7192
        %v7194 = vld [vmem:[%s1332 + $0x48] sm:$0xf]
        %v7195 = vsel %vm1335, %v6941, %v7194
        %7196 = vst [vmem:[%s1332 + $0x48] sm:$0xf] %v7195
        %7197 = vst [vmem:[%s1332 + $0x4c] sm:$0xf] %v6950
        %v7198 = vld [vmem:[%s1332 + $0x50] sm:$0x1]
        %v7199 = vsel %vm1341, %v6951, %v7198
        %7200 = vst [vmem:[%s1332 + $0x50] sm:$0x1] %v7199
        %v7201 = vld [vmem:[%s1332 + $0x54] sm:$0xf]
        %v7202 = vsel %vm1335, %v6958, %v7201
        %7203 = vst [vmem:[%s1332 + $0x54] sm:$0xf] %v7202
        %7204 = vst [vmem:[%s1332 + $0x58] sm:$0xf] %v6967
        %v7205 = vld [vmem:[%s1332 + $0x5c] sm:$0x1]
        %v7206 = vsel %vm1341, %v6968, %v7205
        %7207 = vst [vmem:[%s1332 + $0x5c] sm:$0x1] %v7206
        %v7208 = vld [vmem:[%s1332 + $0x60] sm:$0xf]
        %v7209 = vsel %vm1335, %v6975, %v7208
        %7210 = vst [vmem:[%s1332 + $0x60] sm:$0xf] %v7209
        %7211 = vst [vmem:[%s1332 + $0x64] sm:$0xf] %v6984
        %v7212 = vld [vmem:[%s1332 + $0x68] sm:$0x1]
        %v7213 = vsel %vm1341, %v6985, %v7212
        %7214 = vst [vmem:[%s1332 + $0x68] sm:$0x1] %v7213
        %v7215 = vld [vmem:[%s1332 + $0x6c] sm:$0xf]
        %v7216 = vsel %vm1335, %v6992, %v7215
        %7217 = vst [vmem:[%s1332 + $0x6c] sm:$0xf] %v7216
        %7218 = vst [vmem:[%s1332 + $0x70] sm:$0xf] %v7001
        %v7219 = vld [vmem:[%s1332 + $0x74] sm:$0x1]
        %v7220 = vsel %vm1341, %v7002, %v7219
        %7221 = vst [vmem:[%s1332 + $0x74] sm:$0x1] %v7220
        %v7222 = vld [vmem:[%s1332 + $0x78] sm:$0xf]
        %v7223 = vsel %vm1335, %v7009, %v7222
        %7224 = vst [vmem:[%s1332 + $0x78] sm:$0xf] %v7223
        %7225 = vst [vmem:[%s1332 + $0x7c] sm:$0xf] %v7018
        %v7226 = vld [vmem:[%s1332 + $0x80] sm:$0x1]
        %v7227 = vsel %vm1341, %v7019, %v7226
        %7228 = vst [vmem:[%s1332 + $0x80] sm:$0x1] %v7227
        %v7229 = vld [vmem:[%s1332 + $0x84] sm:$0xf]
        %v7230 = vsel %vm1335, %v7026, %v7229
        %7231 = vst [vmem:[%s1332 + $0x84] sm:$0xf] %v7230
        %7232 = vst [vmem:[%s1332 + $0x88] sm:$0xf] %v7035
        %v7233 = vld [vmem:[%s1332 + $0x8c] sm:$0x1]
        %v7234 = vsel %vm1341, %v7036, %v7233
        %7235 = vst [vmem:[%s1332 + $0x8c] sm:$0x1] %v7234
        %v7236 = vld [vmem:[%s1332 + $0x90] sm:$0xf]
        %v7237 = vsel %vm1335, %v7043, %v7236
        %7238 = vst [vmem:[%s1332 + $0x90] sm:$0xf] %v7237
        %7239 = vst [vmem:[%s1332 + $0x94] sm:$0xf] %v7052
        %v7240 = vld [vmem:[%s1332 + $0x98] sm:$0x1]
        %v7241 = vsel %vm1341, %v7053, %v7240
        %7242 = vst [vmem:[%s1332 + $0x98] sm:$0x1] %v7241
        %v7243 = vld [vmem:[%s1332 + $0x9c] sm:$0xf]
        %v7244 = vsel %vm1335, %v7060, %v7243
        %7245 = vst [vmem:[%s1332 + $0x9c] sm:$0xf] %v7244
        %7246 = vst [vmem:[%s1332 + $0xa0] sm:$0xf] %v7069
        %v7247 = vld [vmem:[%s1332 + $0xa4] sm:$0x1]
        %v7248 = vsel %vm1341, %v7070, %v7247
        %7249 = vst [vmem:[%s1332 + $0xa4] sm:$0x1] %v7248
        %v7250 = vld [vmem:[%s1332 + $0xa8] sm:$0xf]
        %v7251 = vsel %vm1335, %v7077, %v7250
        %7252 = vst [vmem:[%s1332 + $0xa8] sm:$0xf] %v7251
        %7253 = vst [vmem:[%s1332 + $0xac] sm:$0xf] %v7086
        %v7254 = vld [vmem:[%s1332 + $0xb0] sm:$0x1]
        %v7255 = vsel %vm1341, %v7087, %v7254
        %7256 = vst [vmem:[%s1332 + $0xb0] sm:$0x1] %v7255
        %v7257 = vld [vmem:[%s1332 + $0xb4] sm:$0xf]
        %v7258 = vsel %vm1335, %v7094, %v7257
        %7259 = vst [vmem:[%s1332 + $0xb4] sm:$0xf] %v7258
        %7260 = vst [vmem:[%s1332 + $0xb8] sm:$0xf] %v7103
        %v7261 = vld [vmem:[%s1332 + $0xbc] sm:$0x1]
        %v7262 = vsel %vm1341, %v7104, %v7261
        %7263 = vst [vmem:[%s1332 + $0xbc] sm:$0x1] %v7262
        %v7264 = vld [vmem:[#allocation2] sm:$0xf]
        %v7265 = vld [vmem:[#allocation2 + $0x4] sm:$0xf]
        %v7266 = vld [vmem:[#allocation2 + $0xc] sm:$0xf]
        %v7267 = vld [vmem:[#allocation2 + $0x10] sm:$0xf]
        %v7268 = vld [vmem:[#allocation2 + $0x18] sm:$0xf]
        %v7269 = vld [vmem:[#allocation2 + $0x1c] sm:$0xf]
        %v7270 = vld [vmem:[#allocation2 + $0x24] sm:$0xf]
        %v7271 = vld [vmem:[#allocation2 + $0x28] sm:$0xf]
        %v7272 = vld [vmem:[#allocation2 + $0x30] sm:$0xf]
        %v7273 = vld [vmem:[#allocation2 + $0x34] sm:$0xf]
        %v7274 = vld [vmem:[#allocation2 + $0x3c] sm:$0xf]
        %v7275 = vld [vmem:[#allocation2 + $0x40] sm:$0xf]
        %v7276 = vld [vmem:[#allocation2 + $0x48] sm:$0xf]
        %v7277 = vld [vmem:[#allocation2 + $0x4c] sm:$0xf]
        %v7278 = vld [vmem:[#allocation2 + $0x54] sm:$0xf]
        %v7279 = vld [vmem:[#allocation2 + $0x58] sm:$0xf]
        %v7280 = vld [vmem:[#allocation2 + $0x60] sm:$0xf]
        %v7281 = vld [vmem:[#allocation2 + $0x64] sm:$0xf]
        %v7282 = vld [vmem:[#allocation2 + $0x6c] sm:$0xf]
        %v7283 = vld [vmem:[#allocation2 + $0x70] sm:$0xf]
        %v7284 = vld [vmem:[#allocation2 + $0x78] sm:$0xf]
        %v7285 = vld [vmem:[#allocation2 + $0x7c] sm:$0xf]
        %v7286 = vld [vmem:[#allocation2 + $0x84] sm:$0xf]
        %v7287 = vld [vmem:[#allocation2 + $0x88] sm:$0xf]
        %v7288 = vld [vmem:[#allocation2 + $0x90] sm:$0xf]
        %v7289 = vld [vmem:[#allocation2 + $0x94] sm:$0xf]
        %v7290 = vld [vmem:[#allocation2 + $0x9c] sm:$0xf]
        %v7291 = vld [vmem:[#allocation2 + $0xa0] sm:$0xf]
        %v7292 = vld [vmem:[#allocation2 + $0xa8] sm:$0xf]
        %v7293 = vld [vmem:[#allocation2 + $0xac] sm:$0xf]
        %v7294 = vld [vmem:[#allocation2 + $0xb4] sm:$0xf]
        %v7295 = vld [vmem:[#allocation2 + $0xb8] sm:$0xf]
        %v7296 = vld [vmem:[#allocation3] sm:$0xf]
        %v7297 = vld [vmem:[#allocation3 + $0x4] sm:$0xf]
        %v7298 = vld [vmem:[#allocation3 + $0x8] sm:$0xf]
        %v7299 = vld [vmem:[#allocation3 + $0xc] sm:$0xf]
        %v7300 = vld [vmem:[#allocation3 + $0x10] sm:$0xf]
        %v7301 = vld [vmem:[#allocation3 + $0x14] sm:$0xf]
        %v7302 = vld [vmem:[#allocation3 + $0x18] sm:$0xf]
        %v7303 = vld [vmem:[#allocation3 + $0x1c] sm:$0xf]
        %v7304 = vld [vmem:[#allocation3 + $0x20] sm:$0xf]
        %v7305 = vld [vmem:[#allocation3 + $0x24] sm:$0xf]
        %v7306 = vld [vmem:[#allocation3 + $0x28] sm:$0xf]
        %v7307 = vld [vmem:[#allocation3 + $0x2c] sm:$0xf]
        %v7308 = vld [vmem:[#allocation3 + $0x30] sm:$0xf]
        %v7309 = vld [vmem:[#allocation3 + $0x34] sm:$0xf]
        %v7310 = vld [vmem:[#allocation3 + $0x38] sm:$0xf]
        %v7311 = vld [vmem:[#allocation3 + $0x3c] sm:$0xf]
        %v7312 = vld [vmem:[#allocation2 + $0x8] sm:$0x1]
        %v7313 = vld [vmem:[#allocation2 + $0x14] sm:$0x1]
        %v7314 = vld [vmem:[#allocation2 + $0x20] sm:$0x1]
        %v7315 = vld [vmem:[#allocation2 + $0x2c] sm:$0x1]
        %v7316 = vld [vmem:[#allocation2 + $0x38] sm:$0x1]
        %v7317 = vld [vmem:[#allocation2 + $0x44] sm:$0x1]
        %v7318 = vld [vmem:[#allocation2 + $0x50] sm:$0x1]
        %v7319 = vld [vmem:[#allocation2 + $0x5c] sm:$0x1]
        %v7320 = vld [vmem:[#allocation2 + $0x68] sm:$0x1]
        %v7321 = vld [vmem:[#allocation2 + $0x74] sm:$0x1]
        %v7322 = vld [vmem:[#allocation2 + $0x80] sm:$0x1]
        %v7323 = vld [vmem:[#allocation2 + $0x8c] sm:$0x1]
        %v7324 = vld [vmem:[#allocation2 + $0x98] sm:$0x1]
        %v7325 = vld [vmem:[#allocation2 + $0xa4] sm:$0x1]
        %v7326 = vld [vmem:[#allocation2 + $0xb0] sm:$0x1]
        %v7327 = vld [vmem:[#allocation2 + $0xbc] sm:$0x1]
        %v7329 = vshrl.u32 %v7264, 16
        %v7331 = vrot.slane %v7329, 4
        %v7332 = vshll.u32 %v7264, 16
        %v7334 = vrot.slane %v7332, 5
        %v7335 = vor.u32 %v7331, %v7334
        %v7336 = vrot.slane %v7335, 4
        %v7338 = vshll.u32 %v7265, 16
        %v7340 = vrot.slane %v7338, 5
        %v7341 = vsel %vm1516, %v7336, %v7340
        %v7342 = vshrl.u32 %v7265, 16
        %v7344 = vrot.slane %v7342, 4
        %v7345 = vor.u32 %v7344, %v7340
        %v7346 = vrot.slane %v7345, 4
        %v7348 = vshll.u32 %v7312, 16
        %v7350 = vrot.slane %v7348, 5
        %v7351 = vsel %vm1516, %v7346, %v7350
        %v7353 = vshrl.u32 %v7266, 16
        %v7355 = vrot.slane %v7353, 4
        %v7356 = vshll.u32 %v7266, 16
        %v7358 = vrot.slane %v7356, 5
        %v7359 = vor.u32 %v7355, %v7358
        %v7360 = vrot.slane %v7359, 4
        %v7362 = vshll.u32 %v7267, 16
        %v7364 = vrot.slane %v7362, 5
        %v7365 = vsel %vm1516, %v7360, %v7364
        %v7366 = vshrl.u32 %v7267, 16
        %v7368 = vrot.slane %v7366, 4
        %v7369 = vor.u32 %v7368, %v7364
        %v7370 = vrot.slane %v7369, 4
        %v7372 = vshll.u32 %v7313, 16
        %v7374 = vrot.slane %v7372, 5
        %v7375 = vsel %vm1516, %v7370, %v7374
        %v7377 = vshrl.u32 %v7268, 16
        %v7379 = vrot.slane %v7377, 4
        %v7380 = vshll.u32 %v7268, 16
        %v7382 = vrot.slane %v7380, 5
        %v7383 = vor.u32 %v7379, %v7382
        %v7384 = vrot.slane %v7383, 4
        %v7386 = vshll.u32 %v7269, 16
        %v7388 = vrot.slane %v7386, 5
        %v7389 = vsel %vm1516, %v7384, %v7388
        %v7390 = vshrl.u32 %v7269, 16
        %v7392 = vrot.slane %v7390, 4
        %v7393 = vor.u32 %v7392, %v7388
        %v7394 = vrot.slane %v7393, 4
        %v7396 = vshll.u32 %v7314, 16
        %v7398 = vrot.slane %v7396, 5
        %v7399 = vsel %vm1516, %v7394, %v7398
        %v7401 = vshrl.u32 %v7270, 16
        %v7403 = vrot.slane %v7401, 4
        %v7404 = vshll.u32 %v7270, 16
        %v7406 = vrot.slane %v7404, 5
        %v7407 = vor.u32 %v7403, %v7406
        %v7408 = vrot.slane %v7407, 4
        %v7410 = vshll.u32 %v7271, 16
        %v7412 = vrot.slane %v7410, 5
        %v7413 = vsel %vm1516, %v7408, %v7412
        %v7414 = vshrl.u32 %v7271, 16
        %v7416 = vrot.slane %v7414, 4
        %v7417 = vor.u32 %v7416, %v7412
        %v7418 = vrot.slane %v7417, 4
        %v7420 = vshll.u32 %v7315, 16
        %v7422 = vrot.slane %v7420, 5
        %v7423 = vsel %vm1516, %v7418, %v7422
        %v7425 = vshrl.u32 %v7272, 16
        %v7427 = vrot.slane %v7425, 4
        %v7428 = vshll.u32 %v7272, 16
        %v7430 = vrot.slane %v7428, 5
        %v7431 = vor.u32 %v7427, %v7430
        %v7432 = vrot.slane %v7431, 4
        %v7434 = vshll.u32 %v7273, 16
        %v7436 = vrot.slane %v7434, 5
        %v7437 = vsel %vm1516, %v7432, %v7436
        %v7438 = vshrl.u32 %v7273, 16
        %v7440 = vrot.slane %v7438, 4
        %v7441 = vor.u32 %v7440, %v7436
        %v7442 = vrot.slane %v7441, 4
        %v7444 = vshll.u32 %v7316, 16
        %v7446 = vrot.slane %v7444, 5
        %v7447 = vsel %vm1516, %v7442, %v7446
        %v7449 = vshrl.u32 %v7274, 16
        %v7451 = vrot.slane %v7449, 4
        %v7452 = vshll.u32 %v7274, 16
        %v7454 = vrot.slane %v7452, 5
        %v7455 = vor.u32 %v7451, %v7454
        %v7456 = vrot.slane %v7455, 4
        %v7458 = vshll.u32 %v7275, 16
        %v7460 = vrot.slane %v7458, 5
        %v7461 = vsel %vm1516, %v7456, %v7460
        %v7462 = vshrl.u32 %v7275, 16
        %v7464 = vrot.slane %v7462, 4
        %v7465 = vor.u32 %v7464, %v7460
        %v7466 = vrot.slane %v7465, 4
        %v7468 = vshll.u32 %v7317, 16
        %v7470 = vrot.slane %v7468, 5
        %v7471 = vsel %vm1516, %v7466, %v7470
        %v7473 = vshrl.u32 %v7276, 16
        %v7475 = vrot.slane %v7473, 4
        %v7476 = vshll.u32 %v7276, 16
        %v7478 = vrot.slane %v7476, 5
        %v7479 = vor.u32 %v7475, %v7478
        %v7480 = vrot.slane %v7479, 4
        %v7482 = vshll.u32 %v7277, 16
        %v7484 = vrot.slane %v7482, 5
        %v7485 = vsel %vm1516, %v7480, %v7484
        %v7486 = vshrl.u32 %v7277, 16
        %v7488 = vrot.slane %v7486, 4
        %v7489 = vor.u32 %v7488, %v7484
        %v7490 = vrot.slane %v7489, 4
        %v7492 = vshll.u32 %v7318, 16
        %v7494 = vrot.slane %v7492, 5
        %v7495 = vsel %vm1516, %v7490, %v7494
        %v7497 = vshrl.u32 %v7278, 16
        %v7499 = vrot.slane %v7497, 4
        %v7500 = vshll.u32 %v7278, 16
        %v7502 = vrot.slane %v7500, 5
        %v7503 = vor.u32 %v7499, %v7502
        %v7504 = vrot.slane %v7503, 4
        %v7506 = vshll.u32 %v7279, 16
        %v7508 = vrot.slane %v7506, 5
        %v7509 = vsel %vm1516, %v7504, %v7508
        %v7510 = vshrl.u32 %v7279, 16
        %v7512 = vrot.slane %v7510, 4
        %v7513 = vor.u32 %v7512, %v7508
        %v7514 = vrot.slane %v7513, 4
        %v7516 = vshll.u32 %v7319, 16
        %v7518 = vrot.slane %v7516, 5
        %v7519 = vsel %vm1516, %v7514, %v7518
        %v7521 = vshrl.u32 %v7280, 16
        %v7523 = vrot.slane %v7521, 4
        %v7524 = vshll.u32 %v7280, 16
        %v7526 = vrot.slane %v7524, 5
        %v7527 = vor.u32 %v7523, %v7526
        %v7528 = vrot.slane %v7527, 4
        %v7530 = vshll.u32 %v7281, 16
        %v7532 = vrot.slane %v7530, 5
        %v7533 = vsel %vm1516, %v7528, %v7532
        %v7534 = vshrl.u32 %v7281, 16
        %v7536 = vrot.slane %v7534, 4
        %v7537 = vor.u32 %v7536, %v7532
        %v7538 = vrot.slane %v7537, 4
        %v7540 = vshll.u32 %v7320, 16
        %v7542 = vrot.slane %v7540, 5
        %v7543 = vsel %vm1516, %v7538, %v7542
        %v7545 = vshrl.u32 %v7282, 16
        %v7547 = vrot.slane %v7545, 4
        %v7548 = vshll.u32 %v7282, 16
        %v7550 = vrot.slane %v7548, 5
        %v7551 = vor.u32 %v7547, %v7550
        %v7552 = vrot.slane %v7551, 4
        %v7554 = vshll.u32 %v7283, 16
        %v7556 = vrot.slane %v7554, 5
        %v7557 = vsel %vm1516, %v7552, %v7556
        %v7558 = vshrl.u32 %v7283, 16
        %v7560 = vrot.slane %v7558, 4
        %v7561 = vor.u32 %v7560, %v7556
        %v7562 = vrot.slane %v7561, 4
        %v7564 = vshll.u32 %v7321, 16
        %v7566 = vrot.slane %v7564, 5
        %v7567 = vsel %vm1516, %v7562, %v7566
        %v7569 = vshrl.u32 %v7284, 16
        %v7571 = vrot.slane %v7569, 4
        %v7572 = vshll.u32 %v7284, 16
        %v7574 = vrot.slane %v7572, 5
        %v7575 = vor.u32 %v7571, %v7574
        %v7576 = vrot.slane %v7575, 4
        %v7578 = vshll.u32 %v7285, 16
        %v7580 = vrot.slane %v7578, 5
        %v7581 = vsel %vm1516, %v7576, %v7580
        %v7582 = vshrl.u32 %v7285, 16
        %v7584 = vrot.slane %v7582, 4
        %v7585 = vor.u32 %v7584, %v7580
        %v7586 = vrot.slane %v7585, 4
        %v7588 = vshll.u32 %v7322, 16
        %v7590 = vrot.slane %v7588, 5
        %v7591 = vsel %vm1516, %v7586, %v7590
        %v7593 = vshrl.u32 %v7286, 16
        %v7595 = vrot.slane %v7593, 4
        %v7596 = vshll.u32 %v7286, 16
        %v7598 = vrot.slane %v7596, 5
        %v7599 = vor.u32 %v7595, %v7598
        %v7600 = vrot.slane %v7599, 4
        %v7602 = vshll.u32 %v7287, 16
        %v7604 = vrot.slane %v7602, 5
        %v7605 = vsel %vm1516, %v7600, %v7604
        %v7606 = vshrl.u32 %v7287, 16
        %v7608 = vrot.slane %v7606, 4
        %v7609 = vor.u32 %v7608, %v7604
        %v7610 = vrot.slane %v7609, 4
        %v7612 = vshll.u32 %v7323, 16
        %v7614 = vrot.slane %v7612, 5
        %v7615 = vsel %vm1516, %v7610, %v7614
        %v7617 = vshrl.u32 %v7288, 16
        %v7619 = vrot.slane %v7617, 4
        %v7620 = vshll.u32 %v7288, 16
        %v7622 = vrot.slane %v7620, 5
        %v7623 = vor.u32 %v7619, %v7622
        %v7624 = vrot.slane %v7623, 4
        %v7626 = vshll.u32 %v7289, 16
        %v7628 = vrot.slane %v7626, 5
        %v7629 = vsel %vm1516, %v7624, %v7628
        %v7630 = vshrl.u32 %v7289, 16
        %v7632 = vrot.slane %v7630, 4
        %v7633 = vor.u32 %v7632, %v7628
        %v7634 = vrot.slane %v7633, 4
        %v7636 = vshll.u32 %v7324, 16
        %v7638 = vrot.slane %v7636, 5
        %v7639 = vsel %vm1516, %v7634, %v7638
        %v7641 = vshrl.u32 %v7290, 16
        %v7643 = vrot.slane %v7641, 4
        %v7644 = vshll.u32 %v7290, 16
        %v7646 = vrot.slane %v7644, 5
        %v7647 = vor.u32 %v7643, %v7646
        %v7648 = vrot.slane %v7647, 4
        %v7650 = vshll.u32 %v7291, 16
        %v7652 = vrot.slane %v7650, 5
        %v7653 = vsel %vm1516, %v7648, %v7652
        %v7654 = vshrl.u32 %v7291, 16
        %v7656 = vrot.slane %v7654, 4
        %v7657 = vor.u32 %v7656, %v7652
        %v7658 = vrot.slane %v7657, 4
        %v7660 = vshll.u32 %v7325, 16
        %v7662 = vrot.slane %v7660, 5
        %v7663 = vsel %vm1516, %v7658, %v7662
        %v7665 = vshrl.u32 %v7292, 16
        %v7667 = vrot.slane %v7665, 4
        %v7668 = vshll.u32 %v7292, 16
        %v7670 = vrot.slane %v7668, 5
        %v7671 = vor.u32 %v7667, %v7670
        %v7672 = vrot.slane %v7671, 4
        %v7674 = vshll.u32 %v7293, 16
        %v7676 = vrot.slane %v7674, 5
        %v7677 = vsel %vm1516, %v7672, %v7676
        %v7678 = vshrl.u32 %v7293, 16
        %v7680 = vrot.slane %v7678, 4
        %v7681 = vor.u32 %v7680, %v7676
        %v7682 = vrot.slane %v7681, 4
        %v7684 = vshll.u32 %v7326, 16
        %v7686 = vrot.slane %v7684, 5
        %v7687 = vsel %vm1516, %v7682, %v7686
        %v7689 = vshrl.u32 %v7294, 16
        %v7691 = vrot.slane %v7689, 4
        %v7692 = vshll.u32 %v7294, 16
        %v7694 = vrot.slane %v7692, 5
        %v7695 = vor.u32 %v7691, %v7694
        %v7696 = vrot.slane %v7695, 4
        %v7698 = vshll.u32 %v7295, 16
        %v7700 = vrot.slane %v7698, 5
        %v7701 = vsel %vm1516, %v7696, %v7700
        %v7702 = vshrl.u32 %v7295, 16
        %v7704 = vrot.slane %v7702, 4
        %v7705 = vor.u32 %v7704, %v7700
        %v7706 = vrot.slane %v7705, 4
        %v7708 = vshll.u32 %v7327, 16
        %v7710 = vrot.slane %v7708, 5
        %v7711 = vsel %vm1516, %v7706, %v7710
        %s7712 = scalar_lea.vmem [#allocation3], 64
        %v7713 = vld [vmem:[%s7712] sm:$0xf]
        %v7714 = vld [vmem:[%s7712 + $0x4] sm:$0xf]
        %v7715 = vld [vmem:[%s7712 + $0x8] sm:$0xf]
        %v7716 = vld [vmem:[%s7712 + $0xc] sm:$0xf]
        %v7717 = vld [vmem:[%s7712 + $0x10] sm:$0xf]
        %v7718 = vld [vmem:[%s7712 + $0x14] sm:$0xf]
        %v7719 = vld [vmem:[%s7712 + $0x18] sm:$0xf]
        %v7720 = vld [vmem:[%s7712 + $0x1c] sm:$0xf]
        %v7721 = vld [vmem:[%s7712 + $0x20] sm:$0xf]
        %v7722 = vld [vmem:[%s7712 + $0x24] sm:$0xf]
        %v7723 = vld [vmem:[%s7712 + $0x28] sm:$0xf]
        %v7724 = vld [vmem:[%s7712 + $0x2c] sm:$0xf]
        %v7725 = vld [vmem:[%s7712 + $0x30] sm:$0xf]
        %v7726 = vld [vmem:[%s7712 + $0x34] sm:$0xf]
        %v7727 = vld [vmem:[%s7712 + $0x38] sm:$0xf]
        %v7728 = vld [vmem:[%s7712 + $0x3c] sm:$0xf]
        %v7729 = vunpack.c.l.b16 %v7341
        %v7730 = vunpack.c.l.b16 %v7351
        %v7731 = vunpack.c.l.b16 %v7365
        %v7732 = vunpack.c.l.b16 %v7375
        %v7733 = vunpack.c.l.b16 %v7389
        %v7734 = vunpack.c.l.b16 %v7399
        %v7735 = vunpack.c.l.b16 %v7413
        %v7736 = vunpack.c.l.b16 %v7423
        %v7737 = vunpack.c.l.b16 %v7437
        %v7738 = vunpack.c.l.b16 %v7447
        %v7739 = vunpack.c.l.b16 %v7461
        %v7740 = vunpack.c.l.b16 %v7471
        %v7741 = vunpack.c.l.b16 %v7485
        %v7742 = vunpack.c.l.b16 %v7495
        %v7743 = vunpack.c.l.b16 %v7509
        %v7744 = vunpack.c.l.b16 %v7519
        %v7745 = vunpack.c.l.b16 %v7533
        %v7746 = vunpack.c.l.b16 %v7543
        %v7747 = vunpack.c.l.b16 %v7557
        %v7748 = vunpack.c.l.b16 %v7567
        %v7749 = vunpack.c.l.b16 %v7581
        %v7750 = vunpack.c.l.b16 %v7591
        %v7751 = vunpack.c.l.b16 %v7605
        %v7752 = vunpack.c.l.b16 %v7615
        %v7753 = vunpack.c.l.b16 %v7629
        %v7754 = vunpack.c.l.b16 %v7639
        %v7755 = vunpack.c.l.b16 %v7653
        %v7756 = vunpack.c.l.b16 %v7663
        %v7757 = vunpack.c.l.b16 %v7677
        %v7758 = vunpack.c.l.b16 %v7687
        %v7759 = vunpack.c.l.b16 %v7701
        %v7760 = vunpack.c.l.b16 %v7711
        %v7761 = vpack.c.b16 %v7730, %v7729
        %v7762 = vpack.c.b16 %v7732, %v7731
        %v7763 = vpack.c.b16 %v7734, %v7733
        %v7764 = vpack.c.b16 %v7736, %v7735
        %v7765 = vpack.c.b16 %v7738, %v7737
        %v7766 = vpack.c.b16 %v7740, %v7739
        %v7767 = vpack.c.b16 %v7742, %v7741
        %v7768 = vpack.c.b16 %v7744, %v7743
        %v7769 = vpack.c.b16 %v7746, %v7745
        %v7770 = vpack.c.b16 %v7748, %v7747
        %v7771 = vpack.c.b16 %v7750, %v7749
        %v7772 = vpack.c.b16 %v7752, %v7751
        %v7773 = vpack.c.b16 %v7754, %v7753
        %v7774 = vpack.c.b16 %v7756, %v7755
        %v7775 = vpack.c.b16 %v7758, %v7757
        %v7776 = vpack.c.b16 %v7760, %v7759
        %v7809 = vunpack.c.l.b16 %v7713
        %v7810 = vunpack.c.l.b16 %v7714
        %v7811 = vunpack.c.l.b16 %v7715
        %v7812 = vunpack.c.l.b16 %v7716
        %v7813 = vunpack.c.l.b16 %v7717
        %v7814 = vunpack.c.l.b16 %v7718
        %v7815 = vunpack.c.l.b16 %v7719
        %v7816 = vunpack.c.l.b16 %v7720
        %v7817 = vunpack.c.l.b16 %v7721
        %v7818 = vunpack.c.l.b16 %v7722
        %v7819 = vunpack.c.l.b16 %v7723
        %v7820 = vunpack.c.l.b16 %v7724
        %v7821 = vunpack.c.l.b16 %v7725
        %v7822 = vunpack.c.l.b16 %v7726
        %v7823 = vunpack.c.l.b16 %v7727
        %v7824 = vunpack.c.l.b16 %v7728
        %v7825 = vpack.c.b16 %v7810, %v7809
        %v7826 = vpack.c.b16 %v7812, %v7811
        %v7827 = vpack.c.b16 %v7814, %v7813
        %v7828 = vpack.c.b16 %v7816, %v7815
        %v7829 = vpack.c.b16 %v7818, %v7817
        %v7830 = vpack.c.b16 %v7820, %v7819
        %v7831 = vpack.c.b16 %v7822, %v7821
        %v7832 = vpack.c.b16 %v7824, %v7823
        %7841 = vmatprep.subr.bf16.mxu0 0
        %7842 = vmatpush1.bf16.msra.mxu0 %v7832
        %7843 = vmatprep.subr.bf16.mxu0 0
        %7844 = vmatpush1.bf16.msra.mxu0 %v7831
        %7845 = vmatprep.subr.bf16.mxu0 0
        %7846 = vmatpush1.bf16.msra.mxu0 %v7830
        %7847 = vmatprep.subr.bf16.mxu0 0
        %7848 = vmatpush1.bf16.msra.mxu0 %v7829
        %7849 = vmatprep.subr.bf16.mxu0 0
        %7850 = vmatpush1.bf16.msra.mxu0 %v7828
        %7851 = vmatprep.subr.bf16.mxu0 0
        %7852 = vmatpush1.bf16.msra.mxu0 %v7827
        %7853 = vmatprep.subr.bf16.mxu0 0
        %7854 = vmatpush1.bf16.msra.mxu0 %v7826
        %7855 = vmatprep.subr.bf16.mxu0 0
        %7856 = vmatpush1.bf16.msra.mxu0 %v7825
        %7857 = vmatprep.subr.bf16.mxu0 0
        %7858 = vmatpush2.bf16.msra.mxu0 0
        %7859 = vmatprep.subr.bf16.mxu0 0
        %7860 = vmatpush2.bf16.msra.mxu0 0
        %7861 = vmatprep.subr.bf16.mxu0 0
        %7862 = vmatpush2.bf16.msra.mxu0 0
        %7863 = vmatprep.subr.bf16.mxu0 0
        %7864 = vmatpush2.bf16.msra.mxu0 0
        %7865 = vmatprep.subr.bf16.mxu0 0
        %7866 = vmatpush2.bf16.msra.mxu0 0
        %7867 = vmatprep.subr.bf16.mxu0 0
        %7868 = vmatpush2.bf16.msra.mxu0 0
        %7869 = vmatprep.subr.bf16.mxu0 0
        %7870 = vmatpush2.bf16.msra.mxu0 0
        %7871 = vmatprep.subr.bf16.mxu0 0
        %7872 = vmatpush2.bf16.msra.mxu0 0
        %7873 = vmatprep.mubr.bf16.mxu0 0
        %7874 = vmatmul.mubr.bf16.gmra.mxu0 %v7761
        %v7875 = vpop.f32.mrf.mxu0
        %v7876 = vadd.f32 0.0, %v7875
        %v7877 = vpop.f32.mrf.mxu0
        %v7878 = vpop.f32.mrf.mxu0
        %v7879 = vadd.f32 0.0, %v7878
        %v7880 = vpop.f32.mrf.mxu0
        %7881 = vmatprep.mubr.bf16.mxu0 0
        %7882 = vmatmul.mubr.bf16.gmra.mxu0 %v7762
        %v7883 = vpop.f32.mrf.mxu0
        %v7884 = vadd.f32 0.0, %v7883
        %v7885 = vpop.f32.mrf.mxu0
        %v7886 = vpop.f32.mrf.mxu0
        %v7887 = vadd.f32 0.0, %v7886
        %v7888 = vpop.f32.mrf.mxu0
        %7889 = vmatprep.mubr.bf16.mxu0 0
        %7890 = vmatmul.mubr.bf16.gmra.mxu0 %v7763
        %v7891 = vpop.f32.mrf.mxu0
        %v7892 = vadd.f32 0.0, %v7891
        %v7893 = vpop.f32.mrf.mxu0
        %v7894 = vpop.f32.mrf.mxu0
        %v7895 = vadd.f32 0.0, %v7894
        %v7896 = vpop.f32.mrf.mxu0
        %7897 = vmatprep.mubr.bf16.mxu0 0
        %7898 = vmatmul.mubr.bf16.gmra.mxu0 %v7764
        %v7899 = vpop.f32.mrf.mxu0
        %v7900 = vadd.f32 0.0, %v7899
        %v7901 = vpop.f32.mrf.mxu0
        %v7902 = vpop.f32.mrf.mxu0
        %v7903 = vadd.f32 0.0, %v7902
        %v7904 = vpop.f32.mrf.mxu0
        %7905 = vmatprep.mubr.bf16.mxu0 0
        %7906 = vmatmul.mubr.bf16.gmra.mxu0 %v7765
        %v7907 = vpop.f32.mrf.mxu0
        %v7908 = vadd.f32 0.0, %v7907
        %v7909 = vpop.f32.mrf.mxu0
        %v7910 = vpop.f32.mrf.mxu0
        %v7911 = vadd.f32 0.0, %v7910
        %v7912 = vpop.f32.mrf.mxu0
        %7913 = vmatprep.mubr.bf16.mxu0 0
        %7914 = vmatmul.mubr.bf16.gmra.mxu0 %v7766
        %v7915 = vpop.f32.mrf.mxu0
        %v7916 = vadd.f32 0.0, %v7915
        %v7917 = vpop.f32.mrf.mxu0
        %v7918 = vpop.f32.mrf.mxu0
        %v7919 = vadd.f32 0.0, %v7918
        %v7920 = vpop.f32.mrf.mxu0
        %7921 = vmatprep.mubr.bf16.mxu0 0
        %7922 = vmatmul.mubr.bf16.gmra.mxu0 %v7767
        %v7923 = vpop.f32.mrf.mxu0
        %v7924 = vadd.f32 0.0, %v7923
        %v7925 = vpop.f32.mrf.mxu0
        %v7926 = vpop.f32.mrf.mxu0
        %v7927 = vadd.f32 0.0, %v7926
        %v7928 = vpop.f32.mrf.mxu0
        %7929 = vmatprep.mubr.bf16.mxu0 0
        %7930 = vmatmul.mubr.bf16.gmra.mxu0 %v7768
        %v7931 = vpop.f32.mrf.mxu0
        %v7932 = vadd.f32 0.0, %v7931
        %v7933 = vpop.f32.mrf.mxu0
        %v7934 = vpop.f32.mrf.mxu0
        %v7935 = vadd.f32 0.0, %v7934
        %v7936 = vpop.f32.mrf.mxu0
        %7937 = vmatprep.mubr.bf16.mxu0 0
        %7938 = vmatmul.mubr.bf16.gmra.mxu0 %v7769
        %v7939 = vpop.f32.mrf.mxu0
        %v7940 = vadd.f32 0.0, %v7939
        %v7941 = vpop.f32.mrf.mxu0
        %v7942 = vpop.f32.mrf.mxu0
        %v7943 = vadd.f32 0.0, %v7942
        %v7944 = vpop.f32.mrf.mxu0
        %7945 = vmatprep.mubr.bf16.mxu0 0
        %7946 = vmatmul.mubr.bf16.gmra.mxu0 %v7770
        %v7947 = vpop.f32.mrf.mxu0
        %v7948 = vadd.f32 0.0, %v7947
        %v7949 = vpop.f32.mrf.mxu0
        %v7950 = vpop.f32.mrf.mxu0
        %v7951 = vadd.f32 0.0, %v7950
        %v7952 = vpop.f32.mrf.mxu0
        %7953 = vmatprep.mubr.bf16.mxu0 0
        %7954 = vmatmul.mubr.bf16.gmra.mxu0 %v7771
        %v7955 = vpop.f32.mrf.mxu0
        %v7956 = vadd.f32 0.0, %v7955
        %v7957 = vpop.f32.mrf.mxu0
        %v7958 = vpop.f32.mrf.mxu0
        %v7959 = vadd.f32 0.0, %v7958
        %v7960 = vpop.f32.mrf.mxu0
        %7961 = vmatprep.mubr.bf16.mxu0 0
        %7962 = vmatmul.mubr.bf16.gmra.mxu0 %v7772
        %v7963 = vpop.f32.mrf.mxu0
        %v7964 = vadd.f32 0.0, %v7963
        %v7965 = vpop.f32.mrf.mxu0
        %v7966 = vpop.f32.mrf.mxu0
        %v7967 = vadd.f32 0.0, %v7966
        %v7968 = vpop.f32.mrf.mxu0
        %7969 = vmatprep.mubr.bf16.mxu0 0
        %7970 = vmatmul.mubr.bf16.gmra.mxu0 %v7773
        %v7971 = vpop.f32.mrf.mxu0
        %v7972 = vadd.f32 0.0, %v7971
        %v7973 = vpop.f32.mrf.mxu0
        %v7974 = vpop.f32.mrf.mxu0
        %v7975 = vadd.f32 0.0, %v7974
        %v7976 = vpop.f32.mrf.mxu0
        %7977 = vmatprep.mubr.bf16.mxu0 0
        %7978 = vmatmul.mubr.bf16.gmra.mxu0 %v7774
        %v7979 = vpop.f32.mrf.mxu0
        %v7980 = vadd.f32 0.0, %v7979
        %v7981 = vpop.f32.mrf.mxu0
        %v7982 = vpop.f32.mrf.mxu0
        %v7983 = vadd.f32 0.0, %v7982
        %v7984 = vpop.f32.mrf.mxu0
        %7985 = vmatprep.mubr.bf16.mxu0 0
        %7986 = vmatmul.mubr.bf16.gmra.mxu0 %v7775
        %v7987 = vpop.f32.mrf.mxu0
        %v7988 = vadd.f32 0.0, %v7987
        %v7989 = vpop.f32.mrf.mxu0
        %v7990 = vpop.f32.mrf.mxu0
        %v7991 = vadd.f32 0.0, %v7990
        %v7992 = vpop.f32.mrf.mxu0
        %7993 = vmatprep.mubr.bf16.mxu0 0
        %7994 = vmatmul.mubr.bf16.gmra.mxu0 %v7776
        %v7995 = vpop.f32.mrf.mxu0
        %v7996 = vadd.f32 0.0, %v7995
        %v7997 = vpop.f32.mrf.mxu0
        %v7998 = vpop.f32.mrf.mxu0
        %v7999 = vadd.f32 0.0, %v7998
        %v8000 = vpop.f32.mrf.mxu0
        %8001 = vdwg.mxu0
        %v8034 = vunpack.c.l.b16 %v7264
        %v8035 = vunpack.c.l.b16 %v7265
        %v8036 = vunpack.c.l.b16 %v7266
        %v8037 = vunpack.c.l.b16 %v7267
        %v8038 = vunpack.c.l.b16 %v7268
        %v8039 = vunpack.c.l.b16 %v7269
        %v8040 = vunpack.c.l.b16 %v7270
        %v8041 = vunpack.c.l.b16 %v7271
        %v8042 = vunpack.c.l.b16 %v7272
        %v8043 = vunpack.c.l.b16 %v7273
        %v8044 = vunpack.c.l.b16 %v7274
        %v8045 = vunpack.c.l.b16 %v7275
        %v8046 = vunpack.c.l.b16 %v7276
        %v8047 = vunpack.c.l.b16 %v7277
        %v8048 = vunpack.c.l.b16 %v7278
        %v8049 = vunpack.c.l.b16 %v7279
        %v8050 = vunpack.c.l.b16 %v7280
        %v8051 = vunpack.c.l.b16 %v7281
        %v8052 = vunpack.c.l.b16 %v7282
        %v8053 = vunpack.c.l.b16 %v7283
        %v8054 = vunpack.c.l.b16 %v7284
        %v8055 = vunpack.c.l.b16 %v7285
        %v8056 = vunpack.c.l.b16 %v7286
        %v8057 = vunpack.c.l.b16 %v7287
        %v8058 = vunpack.c.l.b16 %v7288
        %v8059 = vunpack.c.l.b16 %v7289
        %v8060 = vunpack.c.l.b16 %v7290
        %v8061 = vunpack.c.l.b16 %v7291
        %v8062 = vunpack.c.l.b16 %v7292
        %v8063 = vunpack.c.l.b16 %v7293
        %v8064 = vunpack.c.l.b16 %v7294
        %v8065 = vunpack.c.l.b16 %v7295
        %v8066 = vpack.c.b16 %v8035, %v8034
        %v8067 = vpack.c.b16 %v8037, %v8036
        %v8068 = vpack.c.b16 %v8039, %v8038
        %v8069 = vpack.c.b16 %v8041, %v8040
        %v8070 = vpack.c.b16 %v8043, %v8042
        %v8071 = vpack.c.b16 %v8045, %v8044
        %v8072 = vpack.c.b16 %v8047, %v8046
        %v8073 = vpack.c.b16 %v8049, %v8048
        %v8074 = vpack.c.b16 %v8051, %v8050
        %v8075 = vpack.c.b16 %v8053, %v8052
        %v8076 = vpack.c.b16 %v8055, %v8054
        %v8077 = vpack.c.b16 %v8057, %v8056
        %v8078 = vpack.c.b16 %v8059, %v8058
        %v8079 = vpack.c.b16 %v8061, %v8060
        %v8080 = vpack.c.b16 %v8063, %v8062
        %v8081 = vpack.c.b16 %v8065, %v8064
        %v8114 = vunpack.c.l.b16 %v7296
        %v8115 = vunpack.c.l.b16 %v7297
        %v8116 = vunpack.c.l.b16 %v7298
        %v8117 = vunpack.c.l.b16 %v7299
        %v8118 = vunpack.c.l.b16 %v7300
        %v8119 = vunpack.c.l.b16 %v7301
        %v8120 = vunpack.c.l.b16 %v7302
        %v8121 = vunpack.c.l.b16 %v7303
        %v8122 = vunpack.c.l.b16 %v7304
        %v8123 = vunpack.c.l.b16 %v7305
        %v8124 = vunpack.c.l.b16 %v7306
        %v8125 = vunpack.c.l.b16 %v7307
        %v8126 = vunpack.c.l.b16 %v7308
        %v8127 = vunpack.c.l.b16 %v7309
        %v8128 = vunpack.c.l.b16 %v7310
        %v8129 = vunpack.c.l.b16 %v7311
        %v8130 = vpack.c.b16 %v8115, %v8114
        %v8131 = vpack.c.b16 %v8117, %v8116
        %v8132 = vpack.c.b16 %v8119, %v8118
        %v8133 = vpack.c.b16 %v8121, %v8120
        %v8134 = vpack.c.b16 %v8123, %v8122
        %v8135 = vpack.c.b16 %v8125, %v8124
        %v8136 = vpack.c.b16 %v8127, %v8126
        %v8137 = vpack.c.b16 %v8129, %v8128
        %8146 = vmatprep.subr.bf16.mxu0 0
        %8147 = vmatpush1.bf16.msra.mxu0 %v8137
        %8148 = vmatprep.subr.bf16.mxu0 0
        %8149 = vmatpush1.bf16.msra.mxu0 %v8136
        %8150 = vmatprep.subr.bf16.mxu0 0
        %8151 = vmatpush1.bf16.msra.mxu0 %v8135
        %8152 = vmatprep.subr.bf16.mxu0 0
        %8153 = vmatpush1.bf16.msra.mxu0 %v8134
        %8154 = vmatprep.subr.bf16.mxu0 0
        %8155 = vmatpush1.bf16.msra.mxu0 %v8133
        %8156 = vmatprep.subr.bf16.mxu0 0
        %8157 = vmatpush1.bf16.msra.mxu0 %v8132
        %8158 = vmatprep.subr.bf16.mxu0 0
        %8159 = vmatpush1.bf16.msra.mxu0 %v8131
        %8160 = vmatprep.subr.bf16.mxu0 0
        %8161 = vmatpush1.bf16.msra.mxu0 %v8130
        %8162 = vmatprep.subr.bf16.mxu0 0
        %8163 = vmatpush2.bf16.msra.mxu0 0
        %8164 = vmatprep.subr.bf16.mxu0 0
        %8165 = vmatpush2.bf16.msra.mxu0 0
        %8166 = vmatprep.subr.bf16.mxu0 0
        %8167 = vmatpush2.bf16.msra.mxu0 0
        %8168 = vmatprep.subr.bf16.mxu0 0
        %8169 = vmatpush2.bf16.msra.mxu0 0
        %8170 = vmatprep.subr.bf16.mxu0 0
        %8171 = vmatpush2.bf16.msra.mxu0 0
        %8172 = vmatprep.subr.bf16.mxu0 0
        %8173 = vmatpush2.bf16.msra.mxu0 0
        %8174 = vmatprep.subr.bf16.mxu0 0
        %8175 = vmatpush2.bf16.msra.mxu0 0
        %8176 = vmatprep.subr.bf16.mxu0 0
        %8177 = vmatpush2.bf16.msra.mxu0 0
        %8178 = vmatprep.mubr.bf16.mxu0 0
        %8179 = vmatmul.mubr.bf16.gmra.mxu0 %v8066
        %v8180 = vpop.f32.mrf.mxu0
        %v8181 = vadd.f32 %v7876, %v8180
        %v8182 = vpop.f32.mrf.mxu0
        %v8183 = vpop.f32.mrf.mxu0
        %v8184 = vadd.f32 %v7879, %v8183
        %v8185 = vpop.f32.mrf.mxu0
        %8186 = vmatprep.mubr.bf16.mxu0 0
        %8187 = vmatmul.mubr.bf16.gmra.mxu0 %v8067
        %v8188 = vpop.f32.mrf.mxu0
        %v8189 = vadd.f32 %v7884, %v8188
        %v8190 = vpop.f32.mrf.mxu0
        %v8191 = vpop.f32.mrf.mxu0
        %v8192 = vadd.f32 %v7887, %v8191
        %v8193 = vpop.f32.mrf.mxu0
        %8194 = vmatprep.mubr.bf16.mxu0 0
        %8195 = vmatmul.mubr.bf16.gmra.mxu0 %v8068
        %v8196 = vpop.f32.mrf.mxu0
        %v8197 = vadd.f32 %v7892, %v8196
        %v8198 = vpop.f32.mrf.mxu0
        %v8199 = vpop.f32.mrf.mxu0
        %v8200 = vadd.f32 %v7895, %v8199
        %v8201 = vpop.f32.mrf.mxu0
        %8202 = vmatprep.mubr.bf16.mxu0 0
        %8203 = vmatmul.mubr.bf16.gmra.mxu0 %v8069
        %v8204 = vpop.f32.mrf.mxu0
        %v8205 = vadd.f32 %v7900, %v8204
        %v8206 = vpop.f32.mrf.mxu0
        %v8207 = vpop.f32.mrf.mxu0
        %v8208 = vadd.f32 %v7903, %v8207
        %v8209 = vpop.f32.mrf.mxu0
        %8210 = vmatprep.mubr.bf16.mxu0 0
        %8211 = vmatmul.mubr.bf16.gmra.mxu0 %v8070
        %v8212 = vpop.f32.mrf.mxu0
        %v8213 = vadd.f32 %v7908, %v8212
        %v8214 = vpop.f32.mrf.mxu0
        %v8215 = vpop.f32.mrf.mxu0
        %v8216 = vadd.f32 %v7911, %v8215
        %v8217 = vpop.f32.mrf.mxu0
        %8218 = vmatprep.mubr.bf16.mxu0 0
        %8219 = vmatmul.mubr.bf16.gmra.mxu0 %v8071
        %v8220 = vpop.f32.mrf.mxu0
        %v8221 = vadd.f32 %v7916, %v8220
        %v8222 = vpop.f32.mrf.mxu0
        %v8223 = vpop.f32.mrf.mxu0
        %v8224 = vadd.f32 %v7919, %v8223
        %v8225 = vpop.f32.mrf.mxu0
        %8226 = vmatprep.mubr.bf16.mxu0 0
        %8227 = vmatmul.mubr.bf16.gmra.mxu0 %v8072
        %v8228 = vpop.f32.mrf.mxu0
        %v8229 = vadd.f32 %v7924, %v8228
        %v8230 = vpop.f32.mrf.mxu0
        %v8231 = vpop.f32.mrf.mxu0
        %v8232 = vadd.f32 %v7927, %v8231
        %v8233 = vpop.f32.mrf.mxu0
        %8234 = vmatprep.mubr.bf16.mxu0 0
        %8235 = vmatmul.mubr.bf16.gmra.mxu0 %v8073
        %v8236 = vpop.f32.mrf.mxu0
        %v8237 = vadd.f32 %v7932, %v8236
        %v8238 = vpop.f32.mrf.mxu0
        %v8239 = vpop.f32.mrf.mxu0
        %v8240 = vadd.f32 %v7935, %v8239
        %v8241 = vpop.f32.mrf.mxu0
        %8242 = vmatprep.mubr.bf16.mxu0 0
        %8243 = vmatmul.mubr.bf16.gmra.mxu0 %v8074
        %v8244 = vpop.f32.mrf.mxu0
        %v8245 = vadd.f32 %v7940, %v8244
        %v8246 = vpop.f32.mrf.mxu0
        %v8247 = vpop.f32.mrf.mxu0
        %v8248 = vadd.f32 %v7943, %v8247
        %v8249 = vpop.f32.mrf.mxu0
        %8250 = vmatprep.mubr.bf16.mxu0 0
        %8251 = vmatmul.mubr.bf16.gmra.mxu0 %v8075
        %v8252 = vpop.f32.mrf.mxu0
        %v8253 = vadd.f32 %v7948, %v8252
        %v8254 = vpop.f32.mrf.mxu0
        %v8255 = vpop.f32.mrf.mxu0
        %v8256 = vadd.f32 %v7951, %v8255
        %v8257 = vpop.f32.mrf.mxu0
        %8258 = vmatprep.mubr.bf16.mxu0 0
        %8259 = vmatmul.mubr.bf16.gmra.mxu0 %v8076
        %v8260 = vpop.f32.mrf.mxu0
        %v8261 = vadd.f32 %v7956, %v8260
        %v8262 = vpop.f32.mrf.mxu0
        %v8263 = vpop.f32.mrf.mxu0
        %v8264 = vadd.f32 %v7959, %v8263
        %v8265 = vpop.f32.mrf.mxu0
        %8266 = vmatprep.mubr.bf16.mxu0 0
        %8267 = vmatmul.mubr.bf16.gmra.mxu0 %v8077
        %v8268 = vpop.f32.mrf.mxu0
        %v8269 = vadd.f32 %v7964, %v8268
        %v8270 = vpop.f32.mrf.mxu0
        %v8271 = vpop.f32.mrf.mxu0
        %v8272 = vadd.f32 %v7967, %v8271
        %v8273 = vpop.f32.mrf.mxu0
        %8274 = vmatprep.mubr.bf16.mxu0 0
        %8275 = vmatmul.mubr.bf16.gmra.mxu0 %v8078
        %v8276 = vpop.f32.mrf.mxu0
        %v8277 = vadd.f32 %v7972, %v8276
        %v8278 = vpop.f32.mrf.mxu0
        %v8279 = vpop.f32.mrf.mxu0
        %v8280 = vadd.f32 %v7975, %v8279
        %v8281 = vpop.f32.mrf.mxu0
        %8282 = vmatprep.mubr.bf16.mxu0 0
        %8283 = vmatmul.mubr.bf16.gmra.mxu0 %v8079
        %v8284 = vpop.f32.mrf.mxu0
        %v8285 = vadd.f32 %v7980, %v8284
        %v8286 = vpop.f32.mrf.mxu0
        %v8287 = vpop.f32.mrf.mxu0
        %v8288 = vadd.f32 %v7983, %v8287
        %v8289 = vpop.f32.mrf.mxu0
        %8290 = vmatprep.mubr.bf16.mxu0 0
        %8291 = vmatmul.mubr.bf16.gmra.mxu0 %v8080
        %v8292 = vpop.f32.mrf.mxu0
        %v8293 = vadd.f32 %v7988, %v8292
        %v8294 = vpop.f32.mrf.mxu0
        %v8295 = vpop.f32.mrf.mxu0
        %v8296 = vadd.f32 %v7991, %v8295
        %v8297 = vpop.f32.mrf.mxu0
        %8298 = vmatprep.mubr.bf16.mxu0 0
        %8299 = vmatmul.mubr.bf16.gmra.mxu0 %v8081
        %v8300 = vpop.f32.mrf.mxu0
        %v8301 = vadd.f32 %v7996, %v8300
        %v8302 = vpop.f32.mrf.mxu0
        %v8303 = vpop.f32.mrf.mxu0
        %v8304 = vadd.f32 %v7999, %v8303
        %v8305 = vpop.f32.mrf.mxu0
        %8306 = vdwg.mxu0
        %v8307 = vld [vmem:[#allocation2] sm:$0xe]
        %v8308 = vld [vmem:[#allocation2 + $0xc] sm:$0xe]
        %v8309 = vld [vmem:[#allocation2 + $0x18] sm:$0xe]
        %v8310 = vld [vmem:[#allocation2 + $0x24] sm:$0xe]
        %v8311 = vld [vmem:[#allocation2 + $0x30] sm:$0xe]
        %v8312 = vld [vmem:[#allocation2 + $0x3c] sm:$0xe]
        %v8313 = vld [vmem:[#allocation2 + $0x48] sm:$0xe]
        %v8314 = vld [vmem:[#allocation2 + $0x54] sm:$0xe]
        %v8315 = vld [vmem:[#allocation2 + $0x60] sm:$0xe]
        %v8316 = vld [vmem:[#allocation2 + $0x6c] sm:$0xe]
        %v8317 = vld [vmem:[#allocation2 + $0x78] sm:$0xe]
        %v8318 = vld [vmem:[#allocation2 + $0x84] sm:$0xe]
        %v8319 = vld [vmem:[#allocation2 + $0x90] sm:$0xe]
        %v8320 = vld [vmem:[#allocation2 + $0x9c] sm:$0xe]
        %v8321 = vld [vmem:[#allocation2 + $0xa8] sm:$0xe]
        %v8322 = vld [vmem:[#allocation2 + $0xb4] sm:$0xe]
        %v8355 = vrot.slane %v8307, 5
        %v8356 = vrot.slane %v8355, 4
        %v8357 = vrot.slane %v7265, 5
        %v8358 = vsel %vm2546, %v8356, %v8357
        %v8359 = vrot.slane %v8357, 4
        %v8360 = vrot.slane %v7312, 5
        %v8361 = vsel %vm2546, %v8359, %v8360
        %v8362 = vrot.slane %v8308, 5
        %v8363 = vrot.slane %v8362, 4
        %v8364 = vrot.slane %v7267, 5
        %v8365 = vsel %vm2546, %v8363, %v8364
        %v8366 = vrot.slane %v8364, 4
        %v8367 = vrot.slane %v7313, 5
        %v8368 = vsel %vm2546, %v8366, %v8367
        %v8369 = vrot.slane %v8309, 5
        %v8370 = vrot.slane %v8369, 4
        %v8371 = vrot.slane %v7269, 5
        %v8372 = vsel %vm2546, %v8370, %v8371
        %v8373 = vrot.slane %v8371, 4
        %v8374 = vrot.slane %v7314, 5
        %v8375 = vsel %vm2546, %v8373, %v8374
        %v8376 = vrot.slane %v8310, 5
        %v8377 = vrot.slane %v8376, 4
        %v8378 = vrot.slane %v7271, 5
        %v8379 = vsel %vm2546, %v8377, %v8378
        %v8380 = vrot.slane %v8378, 4
        %v8381 = vrot.slane %v7315, 5
        %v8382 = vsel %vm2546, %v8380, %v8381
        %v8383 = vrot.slane %v8311, 5
        %v8384 = vrot.slane %v8383, 4
        %v8385 = vrot.slane %v7273, 5
        %v8386 = vsel %vm2546, %v8384, %v8385
        %v8387 = vrot.slane %v8385, 4
        %v8388 = vrot.slane %v7316, 5
        %v8389 = vsel %vm2546, %v8387, %v8388
        %v8390 = vrot.slane %v8312, 5
        %v8391 = vrot.slane %v8390, 4
        %v8392 = vrot.slane %v7275, 5
        %v8393 = vsel %vm2546, %v8391, %v8392
        %v8394 = vrot.slane %v8392, 4
        %v8395 = vrot.slane %v7317, 5
        %v8396 = vsel %vm2546, %v8394, %v8395
        %v8397 = vrot.slane %v8313, 5
        %v8398 = vrot.slane %v8397, 4
        %v8399 = vrot.slane %v7277, 5
        %v8400 = vsel %vm2546, %v8398, %v8399
        %v8401 = vrot.slane %v8399, 4
        %v8402 = vrot.slane %v7318, 5
        %v8403 = vsel %vm2546, %v8401, %v8402
        %v8404 = vrot.slane %v8314, 5
        %v8405 = vrot.slane %v8404, 4
        %v8406 = vrot.slane %v7279, 5
        %v8407 = vsel %vm2546, %v8405, %v8406
        %v8408 = vrot.slane %v8406, 4
        %v8409 = vrot.slane %v7319, 5
        %v8410 = vsel %vm2546, %v8408, %v8409
        %v8411 = vrot.slane %v8315, 5
        %v8412 = vrot.slane %v8411, 4
        %v8413 = vrot.slane %v7281, 5
        %v8414 = vsel %vm2546, %v8412, %v8413
        %v8415 = vrot.slane %v8413, 4
        %v8416 = vrot.slane %v7320, 5
        %v8417 = vsel %vm2546, %v8415, %v8416
        %v8418 = vrot.slane %v8316, 5
        %v8419 = vrot.slane %v8418, 4
        %v8420 = vrot.slane %v7283, 5
        %v8421 = vsel %vm2546, %v8419, %v8420
        %v8422 = vrot.slane %v8420, 4
        %v8423 = vrot.slane %v7321, 5
        %v8424 = vsel %vm2546, %v8422, %v8423
        %v8425 = vrot.slane %v8317, 5
        %v8426 = vrot.slane %v8425, 4
        %v8427 = vrot.slane %v7285, 5
        %v8428 = vsel %vm2546, %v8426, %v8427
        %v8429 = vrot.slane %v8427, 4
        %v8430 = vrot.slane %v7322, 5
        %v8431 = vsel %vm2546, %v8429, %v8430
        %v8432 = vrot.slane %v8318, 5
        %v8433 = vrot.slane %v8432, 4
        %v8434 = vrot.slane %v7287, 5
        %v8435 = vsel %vm2546, %v8433, %v8434
        %v8436 = vrot.slane %v8434, 4
        %v8437 = vrot.slane %v7323, 5
        %v8438 = vsel %vm2546, %v8436, %v8437
        %v8439 = vrot.slane %v8319, 5
        %v8440 = vrot.slane %v8439, 4
        %v8441 = vrot.slane %v7289, 5
        %v8442 = vsel %vm2546, %v8440, %v8441
        %v8443 = vrot.slane %v8441, 4
        %v8444 = vrot.slane %v7324, 5
        %v8445 = vsel %vm2546, %v8443, %v8444
        %v8446 = vrot.slane %v8320, 5
        %v8447 = vrot.slane %v8446, 4
        %v8448 = vrot.slane %v7291, 5
        %v8449 = vsel %vm2546, %v8447, %v8448
        %v8450 = vrot.slane %v8448, 4
        %v8451 = vrot.slane %v7325, 5
        %v8452 = vsel %vm2546, %v8450, %v8451
        %v8453 = vrot.slane %v8321, 5
        %v8454 = vrot.slane %v8453, 4
        %v8455 = vrot.slane %v7293, 5
        %v8456 = vsel %vm2546, %v8454, %v8455
        %v8457 = vrot.slane %v8455, 4
        %v8458 = vrot.slane %v7326, 5
        %v8459 = vsel %vm2546, %v8457, %v8458
        %v8460 = vrot.slane %v8322, 5
        %v8461 = vrot.slane %v8460, 4
        %v8462 = vrot.slane %v7295, 5
        %v8463 = vsel %vm2546, %v8461, %v8462
        %v8464 = vrot.slane %v8462, 4
        %v8465 = vrot.slane %v7327, 5
        %v8466 = vsel %vm2546, %v8464, %v8465
        %s8467 = scalar_lea.vmem [#allocation3], 128
        %v8468 = vld [vmem:[%s8467] sm:$0xf]
        %v8469 = vld [vmem:[%s8467 + $0x4] sm:$0xf]
        %v8470 = vld [vmem:[%s8467 + $0x8] sm:$0xf]
        %v8471 = vld [vmem:[%s8467 + $0xc] sm:$0xf]
        %v8472 = vld [vmem:[%s8467 + $0x10] sm:$0xf]
        %v8473 = vld [vmem:[%s8467 + $0x14] sm:$0xf]
        %v8474 = vld [vmem:[%s8467 + $0x18] sm:$0xf]
        %v8475 = vld [vmem:[%s8467 + $0x1c] sm:$0xf]
        %v8476 = vld [vmem:[%s8467 + $0x20] sm:$0xf]
        %v8477 = vld [vmem:[%s8467 + $0x24] sm:$0xf]
        %v8478 = vld [vmem:[%s8467 + $0x28] sm:$0xf]
        %v8479 = vld [vmem:[%s8467 + $0x2c] sm:$0xf]
        %v8480 = vld [vmem:[%s8467 + $0x30] sm:$0xf]
        %v8481 = vld [vmem:[%s8467 + $0x34] sm:$0xf]
        %v8482 = vld [vmem:[%s8467 + $0x38] sm:$0xf]
        %v8483 = vld [vmem:[%s8467 + $0x3c] sm:$0xf]
        %v8484 = vunpack.c.l.b16 %v8358
        %v8485 = vunpack.c.l.b16 %v8361
        %v8486 = vunpack.c.l.b16 %v8365
        %v8487 = vunpack.c.l.b16 %v8368
        %v8488 = vunpack.c.l.b16 %v8372
        %v8489 = vunpack.c.l.b16 %v8375
        %v8490 = vunpack.c.l.b16 %v8379
        %v8491 = vunpack.c.l.b16 %v8382
        %v8492 = vunpack.c.l.b16 %v8386
        %v8493 = vunpack.c.l.b16 %v8389
        %v8494 = vunpack.c.l.b16 %v8393
        %v8495 = vunpack.c.l.b16 %v8396
        %v8496 = vunpack.c.l.b16 %v8400
        %v8497 = vunpack.c.l.b16 %v8403
        %v8498 = vunpack.c.l.b16 %v8407
        %v8499 = vunpack.c.l.b16 %v8410
        %v8500 = vunpack.c.l.b16 %v8414
        %v8501 = vunpack.c.l.b16 %v8417
        %v8502 = vunpack.c.l.b16 %v8421
        %v8503 = vunpack.c.l.b16 %v8424
        %v8504 = vunpack.c.l.b16 %v8428
        %v8505 = vunpack.c.l.b16 %v8431
        %v8506 = vunpack.c.l.b16 %v8435
        %v8507 = vunpack.c.l.b16 %v8438
        %v8508 = vunpack.c.l.b16 %v8442
        %v8509 = vunpack.c.l.b16 %v8445
        %v8510 = vunpack.c.l.b16 %v8449
        %v8511 = vunpack.c.l.b16 %v8452
        %v8512 = vunpack.c.l.b16 %v8456
        %v8513 = vunpack.c.l.b16 %v8459
        %v8514 = vunpack.c.l.b16 %v8463
        %v8515 = vunpack.c.l.b16 %v8466
        %v8516 = vpack.c.b16 %v8485, %v8484
        %v8517 = vpack.c.b16 %v8487, %v8486
        %v8518 = vpack.c.b16 %v8489, %v8488
        %v8519 = vpack.c.b16 %v8491, %v8490
        %v8520 = vpack.c.b16 %v8493, %v8492
        %v8521 = vpack.c.b16 %v8495, %v8494
        %v8522 = vpack.c.b16 %v8497, %v8496
        %v8523 = vpack.c.b16 %v8499, %v8498
        %v8524 = vpack.c.b16 %v8501, %v8500
        %v8525 = vpack.c.b16 %v8503, %v8502
        %v8526 = vpack.c.b16 %v8505, %v8504
        %v8527 = vpack.c.b16 %v8507, %v8506
        %v8528 = vpack.c.b16 %v8509, %v8508
        %v8529 = vpack.c.b16 %v8511, %v8510
        %v8530 = vpack.c.b16 %v8513, %v8512
        %v8531 = vpack.c.b16 %v8515, %v8514
        %v8564 = vunpack.c.l.b16 %v8468
        %v8565 = vunpack.c.l.b16 %v8469
        %v8566 = vunpack.c.l.b16 %v8470
        %v8567 = vunpack.c.l.b16 %v8471
        %v8568 = vunpack.c.l.b16 %v8472
        %v8569 = vunpack.c.l.b16 %v8473
        %v8570 = vunpack.c.l.b16 %v8474
        %v8571 = vunpack.c.l.b16 %v8475
        %v8572 = vunpack.c.l.b16 %v8476
        %v8573 = vunpack.c.l.b16 %v8477
        %v8574 = vunpack.c.l.b16 %v8478
        %v8575 = vunpack.c.l.b16 %v8479
        %v8576 = vunpack.c.l.b16 %v8480
        %v8577 = vunpack.c.l.b16 %v8481
        %v8578 = vunpack.c.l.b16 %v8482
        %v8579 = vunpack.c.l.b16 %v8483
        %v8580 = vpack.c.b16 %v8565, %v8564
        %v8581 = vpack.c.b16 %v8567, %v8566
        %v8582 = vpack.c.b16 %v8569, %v8568
        %v8583 = vpack.c.b16 %v8571, %v8570
        %v8584 = vpack.c.b16 %v8573, %v8572
        %v8585 = vpack.c.b16 %v8575, %v8574
        %v8586 = vpack.c.b16 %v8577, %v8576
        %v8587 = vpack.c.b16 %v8579, %v8578
        %8596 = vmatprep.subr.bf16.mxu0 0
        %8597 = vmatpush1.bf16.msra.mxu0 %v8587
        %8598 = vmatprep.subr.bf16.mxu0 0
        %8599 = vmatpush1.bf16.msra.mxu0 %v8586
        %8600 = vmatprep.subr.bf16.mxu0 0
        %8601 = vmatpush1.bf16.msra.mxu0 %v8585
        %8602 = vmatprep.subr.bf16.mxu0 0
        %8603 = vmatpush1.bf16.msra.mxu0 %v8584
        %8604 = vmatprep.subr.bf16.mxu0 0
        %8605 = vmatpush1.bf16.msra.mxu0 %v8583
        %8606 = vmatprep.subr.bf16.mxu0 0
        %8607 = vmatpush1.bf16.msra.mxu0 %v8582
        %8608 = vmatprep.subr.bf16.mxu0 0
        %8609 = vmatpush1.bf16.msra.mxu0 %v8581
        %8610 = vmatprep.subr.bf16.mxu0 0
        %8611 = vmatpush1.bf16.msra.mxu0 %v8580
        %8612 = vmatprep.subr.bf16.mxu0 0
        %8613 = vmatpush2.bf16.msra.mxu0 0
        %8614 = vmatprep.subr.bf16.mxu0 0
        %8615 = vmatpush2.bf16.msra.mxu0 0
        %8616 = vmatprep.subr.bf16.mxu0 0
        %8617 = vmatpush2.bf16.msra.mxu0 0
        %8618 = vmatprep.subr.bf16.mxu0 0
        %8619 = vmatpush2.bf16.msra.mxu0 0
        %8620 = vmatprep.subr.bf16.mxu0 0
        %8621 = vmatpush2.bf16.msra.mxu0 0
        %8622 = vmatprep.subr.bf16.mxu0 0
        %8623 = vmatpush2.bf16.msra.mxu0 0
        %8624 = vmatprep.subr.bf16.mxu0 0
        %8625 = vmatpush2.bf16.msra.mxu0 0
        %8626 = vmatprep.subr.bf16.mxu0 0
        %8627 = vmatpush2.bf16.msra.mxu0 0
        %8628 = vmatprep.mubr.bf16.mxu0 0
        %8629 = vmatmul.mubr.bf16.gmra.mxu0 %v8516
        %v8630 = vpop.f32.mrf.mxu0
        %v8631 = vadd.f32 0.0, %v8630
        %v8632 = vpop.f32.mrf.mxu0
        %v8633 = vpop.f32.mrf.mxu0
        %v8634 = vadd.f32 0.0, %v8633
        %v8635 = vpop.f32.mrf.mxu0
        %8636 = vmatprep.mubr.bf16.mxu0 0
        %8637 = vmatmul.mubr.bf16.gmra.mxu0 %v8517
        %v8638 = vpop.f32.mrf.mxu0
        %v8639 = vadd.f32 0.0, %v8638
        %v8640 = vpop.f32.mrf.mxu0
        %v8641 = vpop.f32.mrf.mxu0
        %v8642 = vadd.f32 0.0, %v8641
        %v8643 = vpop.f32.mrf.mxu0
        %8644 = vmatprep.mubr.bf16.mxu0 0
        %8645 = vmatmul.mubr.bf16.gmra.mxu0 %v8518
        %v8646 = vpop.f32.mrf.mxu0
        %v8647 = vadd.f32 0.0, %v8646
        %v8648 = vpop.f32.mrf.mxu0
        %v8649 = vpop.f32.mrf.mxu0
        %v8650 = vadd.f32 0.0, %v8649
        %v8651 = vpop.f32.mrf.mxu0
        %8652 = vmatprep.mubr.bf16.mxu0 0
        %8653 = vmatmul.mubr.bf16.gmra.mxu0 %v8519
        %v8654 = vpop.f32.mrf.mxu0
        %v8655 = vadd.f32 0.0, %v8654
        %v8656 = vpop.f32.mrf.mxu0
        %v8657 = vpop.f32.mrf.mxu0
        %v8658 = vadd.f32 0.0, %v8657
        %v8659 = vpop.f32.mrf.mxu0
        %8660 = vmatprep.mubr.bf16.mxu0 0
        %8661 = vmatmul.mubr.bf16.gmra.mxu0 %v8520
        %v8662 = vpop.f32.mrf.mxu0
        %v8663 = vadd.f32 0.0, %v8662
        %v8664 = vpop.f32.mrf.mxu0
        %v8665 = vpop.f32.mrf.mxu0
        %v8666 = vadd.f32 0.0, %v8665
        %v8667 = vpop.f32.mrf.mxu0
        %8668 = vmatprep.mubr.bf16.mxu0 0
        %8669 = vmatmul.mubr.bf16.gmra.mxu0 %v8521
        %v8670 = vpop.f32.mrf.mxu0
        %v8671 = vadd.f32 0.0, %v8670
        %v8672 = vpop.f32.mrf.mxu0
        %v8673 = vpop.f32.mrf.mxu0
        %v8674 = vadd.f32 0.0, %v8673
        %v8675 = vpop.f32.mrf.mxu0
        %8676 = vmatprep.mubr.bf16.mxu0 0
        %8677 = vmatmul.mubr.bf16.gmra.mxu0 %v8522
        %v8678 = vpop.f32.mrf.mxu0
        %v8679 = vadd.f32 0.0, %v8678
        %v8680 = vpop.f32.mrf.mxu0
        %v8681 = vpop.f32.mrf.mxu0
        %v8682 = vadd.f32 0.0, %v8681
        %v8683 = vpop.f32.mrf.mxu0
        %8684 = vmatprep.mubr.bf16.mxu0 0
        %8685 = vmatmul.mubr.bf16.gmra.mxu0 %v8523
        %v8686 = vpop.f32.mrf.mxu0
        %v8687 = vadd.f32 0.0, %v8686
        %v8688 = vpop.f32.mrf.mxu0
        %v8689 = vpop.f32.mrf.mxu0
        %v8690 = vadd.f32 0.0, %v8689
        %v8691 = vpop.f32.mrf.mxu0
        %8692 = vmatprep.mubr.bf16.mxu0 0
        %8693 = vmatmul.mubr.bf16.gmra.mxu0 %v8524
        %v8694 = vpop.f32.mrf.mxu0
        %v8695 = vadd.f32 0.0, %v8694
        %v8696 = vpop.f32.mrf.mxu0
        %v8697 = vpop.f32.mrf.mxu0
        %v8698 = vadd.f32 0.0, %v8697
        %v8699 = vpop.f32.mrf.mxu0
        %8700 = vmatprep.mubr.bf16.mxu0 0
        %8701 = vmatmul.mubr.bf16.gmra.mxu0 %v8525
        %v8702 = vpop.f32.mrf.mxu0
        %v8703 = vadd.f32 0.0, %v8702
        %v8704 = vpop.f32.mrf.mxu0
        %v8705 = vpop.f32.mrf.mxu0
        %v8706 = vadd.f32 0.0, %v8705
        %v8707 = vpop.f32.mrf.mxu0
        %8708 = vmatprep.mubr.bf16.mxu0 0
        %8709 = vmatmul.mubr.bf16.gmra.mxu0 %v8526
        %v8710 = vpop.f32.mrf.mxu0
        %v8711 = vadd.f32 0.0, %v8710
        %v8712 = vpop.f32.mrf.mxu0
        %v8713 = vpop.f32.mrf.mxu0
        %v8714 = vadd.f32 0.0, %v8713
        %v8715 = vpop.f32.mrf.mxu0
        %8716 = vmatprep.mubr.bf16.mxu0 0
        %8717 = vmatmul.mubr.bf16.gmra.mxu0 %v8527
        %v8718 = vpop.f32.mrf.mxu0
        %v8719 = vadd.f32 0.0, %v8718
        %v8720 = vpop.f32.mrf.mxu0
        %v8721 = vpop.f32.mrf.mxu0
        %v8722 = vadd.f32 0.0, %v8721
        %v8723 = vpop.f32.mrf.mxu0
        %8724 = vmatprep.mubr.bf16.mxu0 0
        %8725 = vmatmul.mubr.bf16.gmra.mxu0 %v8528
        %v8726 = vpop.f32.mrf.mxu0
        %v8727 = vadd.f32 0.0, %v8726
        %v8728 = vpop.f32.mrf.mxu0
        %v8729 = vpop.f32.mrf.mxu0
        %v8730 = vadd.f32 0.0, %v8729
        %v8731 = vpop.f32.mrf.mxu0
        %8732 = vmatprep.mubr.bf16.mxu0 0
        %8733 = vmatmul.mubr.bf16.gmra.mxu0 %v8529
        %v8734 = vpop.f32.mrf.mxu0
        %v8735 = vadd.f32 0.0, %v8734
        %v8736 = vpop.f32.mrf.mxu0
        %v8737 = vpop.f32.mrf.mxu0
        %v8738 = vadd.f32 0.0, %v8737
        %v8739 = vpop.f32.mrf.mxu0
        %8740 = vmatprep.mubr.bf16.mxu0 0
        %8741 = vmatmul.mubr.bf16.gmra.mxu0 %v8530
        %v8742 = vpop.f32.mrf.mxu0
        %v8743 = vadd.f32 0.0, %v8742
        %v8744 = vpop.f32.mrf.mxu0
        %v8745 = vpop.f32.mrf.mxu0
        %v8746 = vadd.f32 0.0, %v8745
        %v8747 = vpop.f32.mrf.mxu0
        %8748 = vmatprep.mubr.bf16.mxu0 0
        %8749 = vmatmul.mubr.bf16.gmra.mxu0 %v8531
        %v8750 = vpop.f32.mrf.mxu0
        %v8751 = vadd.f32 0.0, %v8750
        %v8752 = vpop.f32.mrf.mxu0
        %v8753 = vpop.f32.mrf.mxu0
        %v8754 = vadd.f32 0.0, %v8753
        %v8755 = vpop.f32.mrf.mxu0
        %8756 = vdwg.mxu0
        %v8757 = vadd.f32 %v8181, %v8631
        %v8758 = vadd.f32 %v8184, %v8634
        %v8759 = vadd.f32 %v8189, %v8639
        %v8760 = vadd.f32 %v8192, %v8642
        %v8761 = vadd.f32 %v8197, %v8647
        %v8762 = vadd.f32 %v8200, %v8650
        %v8763 = vadd.f32 %v8205, %v8655
        %v8764 = vadd.f32 %v8208, %v8658
        %v8765 = vadd.f32 %v8213, %v8663
        %v8766 = vadd.f32 %v8216, %v8666
        %v8767 = vadd.f32 %v8221, %v8671
        %v8768 = vadd.f32 %v8224, %v8674
        %v8769 = vadd.f32 %v8229, %v8679
        %v8770 = vadd.f32 %v8232, %v8682
        %v8771 = vadd.f32 %v8237, %v8687
        %v8772 = vadd.f32 %v8240, %v8690
        %v8773 = vadd.f32 %v8245, %v8695
        %v8774 = vadd.f32 %v8248, %v8698
        %v8775 = vadd.f32 %v8253, %v8703
        %v8776 = vadd.f32 %v8256, %v8706
        %v8777 = vadd.f32 %v8261, %v8711
        %v8778 = vadd.f32 %v8264, %v8714
        %v8779 = vadd.f32 %v8269, %v8719
        %v8780 = vadd.f32 %v8272, %v8722
        %v8781 = vadd.f32 %v8277, %v8727
        %v8782 = vadd.f32 %v8280, %v8730
        %v8783 = vadd.f32 %v8285, %v8735
        %v8784 = vadd.f32 %v8288, %v8738
        %v8785 = vadd.f32 %v8293, %v8743
        %v8786 = vadd.f32 %v8296, %v8746
        %v8787 = vadd.f32 %v8301, %v8751
        %v8788 = vadd.f32 %v8304, %v8754
        %v8789 = vld [vmem:[%s1332] sm:$0xf]
        %v8790 = vld [vmem:[%s1332 + $0x4] sm:$0xf]
        %v8791 = vld [vmem:[%s1332 + $0xc] sm:$0xf]
        %v8792 = vld [vmem:[%s1332 + $0x10] sm:$0xf]
        %v8793 = vld [vmem:[%s1332 + $0x18] sm:$0xf]
        %v8794 = vld [vmem:[%s1332 + $0x1c] sm:$0xf]
        %v8795 = vld [vmem:[%s1332 + $0x24] sm:$0xf]
        %v8796 = vld [vmem:[%s1332 + $0x28] sm:$0xf]
        %v8797 = vld [vmem:[%s1332 + $0x30] sm:$0xf]
        %v8798 = vld [vmem:[%s1332 + $0x34] sm:$0xf]
        %v8799 = vld [vmem:[%s1332 + $0x3c] sm:$0xf]
        %v8800 = vld [vmem:[%s1332 + $0x40] sm:$0xf]
        %v8801 = vld [vmem:[%s1332 + $0x48] sm:$0xf]
        %v8802 = vld [vmem:[%s1332 + $0x4c] sm:$0xf]
        %v8803 = vld [vmem:[%s1332 + $0x54] sm:$0xf]
        %v8804 = vld [vmem:[%s1332 + $0x58] sm:$0xf]
        %v8805 = vld [vmem:[%s1332 + $0x60] sm:$0xf]
        %v8806 = vld [vmem:[%s1332 + $0x64] sm:$0xf]
        %v8807 = vld [vmem:[%s1332 + $0x6c] sm:$0xf]
        %v8808 = vld [vmem:[%s1332 + $0x70] sm:$0xf]
        %v8809 = vld [vmem:[%s1332 + $0x78] sm:$0xf]
        %v8810 = vld [vmem:[%s1332 + $0x7c] sm:$0xf]
        %v8811 = vld [vmem:[%s1332 + $0x84] sm:$0xf]
        %v8812 = vld [vmem:[%s1332 + $0x88] sm:$0xf]
        %v8813 = vld [vmem:[%s1332 + $0x90] sm:$0xf]
        %v8814 = vld [vmem:[%s1332 + $0x94] sm:$0xf]
        %v8815 = vld [vmem:[%s1332 + $0x9c] sm:$0xf]
        %v8816 = vld [vmem:[%s1332 + $0xa0] sm:$0xf]
        %v8817 = vld [vmem:[%s1332 + $0xa8] sm:$0xf]
        %v8818 = vld [vmem:[%s1332 + $0xac] sm:$0xf]
        %v8819 = vld [vmem:[%s1332 + $0xb4] sm:$0xf]
        %v8820 = vld [vmem:[%s1332 + $0xb8] sm:$0xf]
        %s8821 = scalar_lea.vmem [#allocation3], 192
        %v8822 = vld [vmem:[%s8821] sm:$0xf]
        %v8823 = vld [vmem:[%s8821 + $0x4] sm:$0xf]
        %v8824 = vld [vmem:[%s8821 + $0x8] sm:$0xf]
        %v8825 = vld [vmem:[%s8821 + $0xc] sm:$0xf]
        %v8826 = vld [vmem:[%s8821 + $0x10] sm:$0xf]
        %v8827 = vld [vmem:[%s8821 + $0x14] sm:$0xf]
        %v8828 = vld [vmem:[%s8821 + $0x18] sm:$0xf]
        %v8829 = vld [vmem:[%s8821 + $0x1c] sm:$0xf]
        %v8830 = vld [vmem:[%s8821 + $0x20] sm:$0xf]
        %v8831 = vld [vmem:[%s8821 + $0x24] sm:$0xf]
        %v8832 = vld [vmem:[%s8821 + $0x28] sm:$0xf]
        %v8833 = vld [vmem:[%s8821 + $0x2c] sm:$0xf]
        %v8834 = vld [vmem:[%s8821 + $0x30] sm:$0xf]
        %v8835 = vld [vmem:[%s8821 + $0x34] sm:$0xf]
        %v8836 = vld [vmem:[%s8821 + $0x38] sm:$0xf]
        %v8837 = vld [vmem:[%s8821 + $0x3c] sm:$0xf]
        %v8870 = vunpack.c.l.b16 %v8789
        %v8871 = vunpack.c.l.b16 %v8790
        %v8872 = vunpack.c.l.b16 %v8791
        %v8873 = vunpack.c.l.b16 %v8792
        %v8874 = vunpack.c.l.b16 %v8793
        %v8875 = vunpack.c.l.b16 %v8794
        %v8876 = vunpack.c.l.b16 %v8795
        %v8877 = vunpack.c.l.b16 %v8796
        %v8878 = vunpack.c.l.b16 %v8797
        %v8879 = vunpack.c.l.b16 %v8798
        %v8880 = vunpack.c.l.b16 %v8799
        %v8881 = vunpack.c.l.b16 %v8800
        %v8882 = vunpack.c.l.b16 %v8801
        %v8883 = vunpack.c.l.b16 %v8802
        %v8884 = vunpack.c.l.b16 %v8803
        %v8885 = vunpack.c.l.b16 %v8804
        %v8886 = vunpack.c.l.b16 %v8805
        %v8887 = vunpack.c.l.b16 %v8806
        %v8888 = vunpack.c.l.b16 %v8807
        %v8889 = vunpack.c.l.b16 %v8808
        %v8890 = vunpack.c.l.b16 %v8809
        %v8891 = vunpack.c.l.b16 %v8810
        %v8892 = vunpack.c.l.b16 %v8811
        %v8893 = vunpack.c.l.b16 %v8812
        %v8894 = vunpack.c.l.b16 %v8813
        %v8895 = vunpack.c.l.b16 %v8814
        %v8896 = vunpack.c.l.b16 %v8815
        %v8897 = vunpack.c.l.b16 %v8816
        %v8898 = vunpack.c.l.b16 %v8817
        %v8899 = vunpack.c.l.b16 %v8818
        %v8900 = vunpack.c.l.b16 %v8819
        %v8901 = vunpack.c.l.b16 %v8820
        %v8902 = vpack.c.b16 %v8871, %v8870
        %v8903 = vpack.c.b16 %v8873, %v8872
        %v8904 = vpack.c.b16 %v8875, %v8874
        %v8905 = vpack.c.b16 %v8877, %v8876
        %v8906 = vpack.c.b16 %v8879, %v8878
        %v8907 = vpack.c.b16 %v8881, %v8880
        %v8908 = vpack.c.b16 %v8883, %v8882
        %v8909 = vpack.c.b16 %v8885, %v8884
        %v8910 = vpack.c.b16 %v8887, %v8886
        %v8911 = vpack.c.b16 %v8889, %v8888
        %v8912 = vpack.c.b16 %v8891, %v8890
        %v8913 = vpack.c.b16 %v8893, %v8892
        %v8914 = vpack.c.b16 %v8895, %v8894
        %v8915 = vpack.c.b16 %v8897, %v8896
        %v8916 = vpack.c.b16 %v8899, %v8898
        %v8917 = vpack.c.b16 %v8901, %v8900
        %v8950 = vunpack.c.l.b16 %v8822
        %v8951 = vunpack.c.l.b16 %v8823
        %v8952 = vunpack.c.l.b16 %v8824
        %v8953 = vunpack.c.l.b16 %v8825
        %v8954 = vunpack.c.l.b16 %v8826
        %v8955 = vunpack.c.l.b16 %v8827
        %v8956 = vunpack.c.l.b16 %v8828
        %v8957 = vunpack.c.l.b16 %v8829
        %v8958 = vunpack.c.l.b16 %v8830
        %v8959 = vunpack.c.l.b16 %v8831
        %v8960 = vunpack.c.l.b16 %v8832
        %v8961 = vunpack.c.l.b16 %v8833
        %v8962 = vunpack.c.l.b16 %v8834
        %v8963 = vunpack.c.l.b16 %v8835
        %v8964 = vunpack.c.l.b16 %v8836
        %v8965 = vunpack.c.l.b16 %v8837
        %v8966 = vpack.c.b16 %v8951, %v8950
        %v8967 = vpack.c.b16 %v8953, %v8952
        %v8968 = vpack.c.b16 %v8955, %v8954
        %v8969 = vpack.c.b16 %v8957, %v8956
        %v8970 = vpack.c.b16 %v8959, %v8958
        %v8971 = vpack.c.b16 %v8961, %v8960
        %v8972 = vpack.c.b16 %v8963, %v8962
        %v8973 = vpack.c.b16 %v8965, %v8964
        %8982 = vmatprep.subr.bf16.mxu0 0
        %8983 = vmatpush1.bf16.msra.mxu0 %v8973
        %8984 = vmatprep.subr.bf16.mxu0 0
        %8985 = vmatpush1.bf16.msra.mxu0 %v8972
        %8986 = vmatprep.subr.bf16.mxu0 0
        %8987 = vmatpush1.bf16.msra.mxu0 %v8971
        %8988 = vmatprep.subr.bf16.mxu0 0
        %8989 = vmatpush1.bf16.msra.mxu0 %v8970
        %8990 = vmatprep.subr.bf16.mxu0 0
        %8991 = vmatpush1.bf16.msra.mxu0 %v8969
        %8992 = vmatprep.subr.bf16.mxu0 0
        %8993 = vmatpush1.bf16.msra.mxu0 %v8968
        %8994 = vmatprep.subr.bf16.mxu0 0
        %8995 = vmatpush1.bf16.msra.mxu0 %v8967
        %8996 = vmatprep.subr.bf16.mxu0 0
        %8997 = vmatpush1.bf16.msra.mxu0 %v8966
        %8998 = vmatprep.subr.bf16.mxu0 0
        %8999 = vmatpush2.bf16.msra.mxu0 0
        %9000 = vmatprep.subr.bf16.mxu0 0
        %9001 = vmatpush2.bf16.msra.mxu0 0
        %9002 = vmatprep.subr.bf16.mxu0 0
        %9003 = vmatpush2.bf16.msra.mxu0 0
        %9004 = vmatprep.subr.bf16.mxu0 0
        %9005 = vmatpush2.bf16.msra.mxu0 0
        %9006 = vmatprep.subr.bf16.mxu0 0
        %9007 = vmatpush2.bf16.msra.mxu0 0
        %9008 = vmatprep.subr.bf16.mxu0 0
        %9009 = vmatpush2.bf16.msra.mxu0 0
        %9010 = vmatprep.subr.bf16.mxu0 0
        %9011 = vmatpush2.bf16.msra.mxu0 0
        %9012 = vmatprep.subr.bf16.mxu0 0
        %9013 = vmatpush2.bf16.msra.mxu0 0
        %9014 = vmatprep.mubr.bf16.mxu0 0
        %9015 = vmatmul.mubr.bf16.gmra.mxu0 %v8902
        %v9016 = vpop.f32.mrf.mxu0
        %v9017 = vadd.f32 0.0, %v9016
        %v9018 = vpop.f32.mrf.mxu0
        %v9019 = vpop.f32.mrf.mxu0
        %v9020 = vadd.f32 0.0, %v9019
        %v9021 = vpop.f32.mrf.mxu0
        %9022 = vmatprep.mubr.bf16.mxu0 0
        %9023 = vmatmul.mubr.bf16.gmra.mxu0 %v8903
        %v9024 = vpop.f32.mrf.mxu0
        %v9025 = vadd.f32 0.0, %v9024
        %v9026 = vpop.f32.mrf.mxu0
        %v9027 = vpop.f32.mrf.mxu0
        %v9028 = vadd.f32 0.0, %v9027
        %v9029 = vpop.f32.mrf.mxu0
        %9030 = vmatprep.mubr.bf16.mxu0 0
        %9031 = vmatmul.mubr.bf16.gmra.mxu0 %v8904
        %v9032 = vpop.f32.mrf.mxu0
        %v9033 = vadd.f32 0.0, %v9032
        %v9034 = vpop.f32.mrf.mxu0
        %v9035 = vpop.f32.mrf.mxu0
        %v9036 = vadd.f32 0.0, %v9035
        %v9037 = vpop.f32.mrf.mxu0
        %9038 = vmatprep.mubr.bf16.mxu0 0
        %9039 = vmatmul.mubr.bf16.gmra.mxu0 %v8905
        %v9040 = vpop.f32.mrf.mxu0
        %v9041 = vadd.f32 0.0, %v9040
        %v9042 = vpop.f32.mrf.mxu0
        %v9043 = vpop.f32.mrf.mxu0
        %v9044 = vadd.f32 0.0, %v9043
        %v9045 = vpop.f32.mrf.mxu0
        %9046 = vmatprep.mubr.bf16.mxu0 0
        %9047 = vmatmul.mubr.bf16.gmra.mxu0 %v8906
        %v9048 = vpop.f32.mrf.mxu0
        %v9049 = vadd.f32 0.0, %v9048
        %v9050 = vpop.f32.mrf.mxu0
        %v9051 = vpop.f32.mrf.mxu0
        %v9052 = vadd.f32 0.0, %v9051
        %v9053 = vpop.f32.mrf.mxu0
        %9054 = vmatprep.mubr.bf16.mxu0 0
        %9055 = vmatmul.mubr.bf16.gmra.mxu0 %v8907
        %v9056 = vpop.f32.mrf.mxu0
        %v9057 = vadd.f32 0.0, %v9056
        %v9058 = vpop.f32.mrf.mxu0
        %v9059 = vpop.f32.mrf.mxu0
        %v9060 = vadd.f32 0.0, %v9059
        %v9061 = vpop.f32.mrf.mxu0
        %9062 = vmatprep.mubr.bf16.mxu0 0
        %9063 = vmatmul.mubr.bf16.gmra.mxu0 %v8908
        %v9064 = vpop.f32.mrf.mxu0
        %v9065 = vadd.f32 0.0, %v9064
        %v9066 = vpop.f32.mrf.mxu0
        %v9067 = vpop.f32.mrf.mxu0
        %v9068 = vadd.f32 0.0, %v9067
        %v9069 = vpop.f32.mrf.mxu0
        %9070 = vmatprep.mubr.bf16.mxu0 0
        %9071 = vmatmul.mubr.bf16.gmra.mxu0 %v8909
        %v9072 = vpop.f32.mrf.mxu0
        %v9073 = vadd.f32 0.0, %v9072
        %v9074 = vpop.f32.mrf.mxu0
        %v9075 = vpop.f32.mrf.mxu0
        %v9076 = vadd.f32 0.0, %v9075
        %v9077 = vpop.f32.mrf.mxu0
        %9078 = vmatprep.mubr.bf16.mxu0 0
        %9079 = vmatmul.mubr.bf16.gmra.mxu0 %v8910
        %v9080 = vpop.f32.mrf.mxu0
        %v9081 = vadd.f32 0.0, %v9080
        %v9082 = vpop.f32.mrf.mxu0
        %v9083 = vpop.f32.mrf.mxu0
        %v9084 = vadd.f32 0.0, %v9083
        %v9085 = vpop.f32.mrf.mxu0
        %9086 = vmatprep.mubr.bf16.mxu0 0
        %9087 = vmatmul.mubr.bf16.gmra.mxu0 %v8911
        %v9088 = vpop.f32.mrf.mxu0
        %v9089 = vadd.f32 0.0, %v9088
        %v9090 = vpop.f32.mrf.mxu0
        %v9091 = vpop.f32.mrf.mxu0
        %v9092 = vadd.f32 0.0, %v9091
        %v9093 = vpop.f32.mrf.mxu0
        %9094 = vmatprep.mubr.bf16.mxu0 0
        %9095 = vmatmul.mubr.bf16.gmra.mxu0 %v8912
        %v9096 = vpop.f32.mrf.mxu0
        %v9097 = vadd.f32 0.0, %v9096
        %v9098 = vpop.f32.mrf.mxu0
        %v9099 = vpop.f32.mrf.mxu0
        %v9100 = vadd.f32 0.0, %v9099
        %v9101 = vpop.f32.mrf.mxu0
        %9102 = vmatprep.mubr.bf16.mxu0 0
        %9103 = vmatmul.mubr.bf16.gmra.mxu0 %v8913
        %v9104 = vpop.f32.mrf.mxu0
        %v9105 = vadd.f32 0.0, %v9104
        %v9106 = vpop.f32.mrf.mxu0
        %v9107 = vpop.f32.mrf.mxu0
        %v9108 = vadd.f32 0.0, %v9107
        %v9109 = vpop.f32.mrf.mxu0
        %9110 = vmatprep.mubr.bf16.mxu0 0
        %9111 = vmatmul.mubr.bf16.gmra.mxu0 %v8914
        %v9112 = vpop.f32.mrf.mxu0
        %v9113 = vadd.f32 0.0, %v9112
        %v9114 = vpop.f32.mrf.mxu0
        %v9115 = vpop.f32.mrf.mxu0
        %v9116 = vadd.f32 0.0, %v9115
        %v9117 = vpop.f32.mrf.mxu0
        %9118 = vmatprep.mubr.bf16.mxu0 0
        %9119 = vmatmul.mubr.bf16.gmra.mxu0 %v8915
        %v9120 = vpop.f32.mrf.mxu0
        %v9121 = vadd.f32 0.0, %v9120
        %v9122 = vpop.f32.mrf.mxu0
        %v9123 = vpop.f32.mrf.mxu0
        %v9124 = vadd.f32 0.0, %v9123
        %v9125 = vpop.f32.mrf.mxu0
        %9126 = vmatprep.mubr.bf16.mxu0 0
        %9127 = vmatmul.mubr.bf16.gmra.mxu0 %v8916
        %v9128 = vpop.f32.mrf.mxu0
        %v9129 = vadd.f32 0.0, %v9128
        %v9130 = vpop.f32.mrf.mxu0
        %v9131 = vpop.f32.mrf.mxu0
        %v9132 = vadd.f32 0.0, %v9131
        %v9133 = vpop.f32.mrf.mxu0
        %9134 = vmatprep.mubr.bf16.mxu0 0
        %9135 = vmatmul.mubr.bf16.gmra.mxu0 %v8917
        %v9136 = vpop.f32.mrf.mxu0
        %v9137 = vadd.f32 0.0, %v9136
        %v9138 = vpop.f32.mrf.mxu0
        %v9139 = vpop.f32.mrf.mxu0
        %v9140 = vadd.f32 0.0, %v9139
        %v9141 = vpop.f32.mrf.mxu0
        %9142 = vdwg.mxu0
        %v9143 = vadd.f32 %v8757, %v9017
        %v9144 = vadd.f32 %v8758, %v9020
        %v9145 = vadd.f32 %v8759, %v9025
        %v9146 = vadd.f32 %v8760, %v9028
        %v9147 = vadd.f32 %v8761, %v9033
        %v9148 = vadd.f32 %v8762, %v9036
        %v9149 = vadd.f32 %v8763, %v9041
        %v9150 = vadd.f32 %v8764, %v9044
        %v9151 = vadd.f32 %v8765, %v9049
        %v9152 = vadd.f32 %v8766, %v9052
        %v9153 = vadd.f32 %v8767, %v9057
        %v9154 = vadd.f32 %v8768, %v9060
        %v9155 = vadd.f32 %v8769, %v9065
        %v9156 = vadd.f32 %v8770, %v9068
        %v9157 = vadd.f32 %v8771, %v9073
        %v9158 = vadd.f32 %v8772, %v9076
        %v9159 = vadd.f32 %v8773, %v9081
        %v9160 = vadd.f32 %v8774, %v9084
        %v9161 = vadd.f32 %v8775, %v9089
        %v9162 = vadd.f32 %v8776, %v9092
        %v9163 = vadd.f32 %v8777, %v9097
        %v9164 = vadd.f32 %v8778, %v9100
        %v9165 = vadd.f32 %v8779, %v9105
        %v9166 = vadd.f32 %v8780, %v9108
        %v9167 = vadd.f32 %v8781, %v9113
        %v9168 = vadd.f32 %v8782, %v9116
        %v9169 = vadd.f32 %v8783, %v9121
        %v9170 = vadd.f32 %v8784, %v9124
        %v9171 = vadd.f32 %v8785, %v9129
        %v9172 = vadd.f32 %v8786, %v9132
        %v9173 = vadd.f32 %v8787, %v9137
        %v9174 = vadd.f32 %v8788, %v9140
        %v9175 = vld [vmem:[%s1332] sm:$0xf]
        %v9176 = vld [vmem:[%s1332 + $0x4] sm:$0xf]
        %v9177 = vld [vmem:[%s1332 + $0x8] sm:$0x1]
        %v9178 = vld [vmem:[%s1332 + $0xc] sm:$0xf]
        %v9179 = vld [vmem:[%s1332 + $0x10] sm:$0xf]
        %v9180 = vld [vmem:[%s1332 + $0x14] sm:$0x1]
        %v9181 = vld [vmem:[%s1332 + $0x18] sm:$0xf]
        %v9182 = vld [vmem:[%s1332 + $0x1c] sm:$0xf]
        %v9183 = vld [vmem:[%s1332 + $0x20] sm:$0x1]
        %v9184 = vld [vmem:[%s1332 + $0x24] sm:$0xf]
        %v9185 = vld [vmem:[%s1332 + $0x28] sm:$0xf]
        %v9186 = vld [vmem:[%s1332 + $0x2c] sm:$0x1]
        %v9187 = vld [vmem:[%s1332 + $0x30] sm:$0xf]
        %v9188 = vld [vmem:[%s1332 + $0x34] sm:$0xf]
        %v9189 = vld [vmem:[%s1332 + $0x38] sm:$0x1]
        %v9190 = vld [vmem:[%s1332 + $0x3c] sm:$0xf]
        %v9191 = vld [vmem:[%s1332 + $0x40] sm:$0xf]
        %v9192 = vld [vmem:[%s1332 + $0x44] sm:$0x1]
        %v9193 = vld [vmem:[%s1332 + $0x48] sm:$0xf]
        %v9194 = vld [vmem:[%s1332 + $0x4c] sm:$0xf]
        %v9195 = vld [vmem:[%s1332 + $0x50] sm:$0x1]
        %v9196 = vld [vmem:[%s1332 + $0x54] sm:$0xf]
        %v9197 = vld [vmem:[%s1332 + $0x58] sm:$0xf]
        %v9198 = vld [vmem:[%s1332 + $0x5c] sm:$0x1]
        %v9199 = vld [vmem:[%s1332 + $0x60] sm:$0xf]
        %v9200 = vld [vmem:[%s1332 + $0x64] sm:$0xf]
        %v9201 = vld [vmem:[%s1332 + $0x68] sm:$0x1]
        %v9202 = vld [vmem:[%s1332 + $0x6c] sm:$0xf]
        %v9203 = vld [vmem:[%s1332 + $0x70] sm:$0xf]
        %v9204 = vld [vmem:[%s1332 + $0x74] sm:$0x1]
        %v9205 = vld [vmem:[%s1332 + $0x78] sm:$0xf]
        %v9206 = vld [vmem:[%s1332 + $0x7c] sm:$0xf]
        %v9207 = vld [vmem:[%s1332 + $0x80] sm:$0x1]
        %v9208 = vld [vmem:[%s1332 + $0x84] sm:$0xf]
        %v9209 = vld [vmem:[%s1332 + $0x88] sm:$0xf]
        %v9210 = vld [vmem:[%s1332 + $0x8c] sm:$0x1]
        %v9211 = vld [vmem:[%s1332 + $0x90] sm:$0xf]
        %v9212 = vld [vmem:[%s1332 + $0x94] sm:$0xf]
        %v9213 = vld [vmem:[%s1332 + $0x98] sm:$0x1]
        %v9214 = vld [vmem:[%s1332 + $0x9c] sm:$0xf]
        %v9215 = vld [vmem:[%s1332 + $0xa0] sm:$0xf]
        %v9216 = vld [vmem:[%s1332 + $0xa4] sm:$0x1]
        %v9217 = vld [vmem:[%s1332 + $0xa8] sm:$0xf]
        %v9218 = vld [vmem:[%s1332 + $0xac] sm:$0xf]
        %v9219 = vld [vmem:[%s1332 + $0xb0] sm:$0x1]
        %v9220 = vld [vmem:[%s1332 + $0xb4] sm:$0xf]
        %v9221 = vld [vmem:[%s1332 + $0xb8] sm:$0xf]
        %v9222 = vld [vmem:[%s1332 + $0xbc] sm:$0x1]
        %v9224 = vshrl.u32 %v9175, 16
        %v9226 = vrot.slane %v9224, 4
        %v9227 = vshll.u32 %v9175, 16
        %v9229 = vrot.slane %v9227, 5
        %v9230 = vor.u32 %v9226, %v9229
        %v9231 = vrot.slane %v9230, 4
        %v9233 = vshll.u32 %v9176, 16
        %v9235 = vrot.slane %v9233, 5
        %v9236 = vsel %vm1516, %v9231, %v9235
        %v9237 = vshrl.u32 %v9176, 16
        %v9239 = vrot.slane %v9237, 4
        %v9240 = vor.u32 %v9239, %v9235
        %v9241 = vrot.slane %v9240, 4
        %v9243 = vshll.u32 %v9177, 16
        %v9245 = vrot.slane %v9243, 5
        %v9246 = vsel %vm1516, %v9241, %v9245
        %v9248 = vshrl.u32 %v9178, 16
        %v9250 = vrot.slane %v9248, 4
        %v9251 = vshll.u32 %v9178, 16
        %v9253 = vrot.slane %v9251, 5
        %v9254 = vor.u32 %v9250, %v9253
        %v9255 = vrot.slane %v9254, 4
        %v9257 = vshll.u32 %v9179, 16
        %v9259 = vrot.slane %v9257, 5
        %v9260 = vsel %vm1516, %v9255, %v9259
        %v9261 = vshrl.u32 %v9179, 16
        %v9263 = vrot.slane %v9261, 4
        %v9264 = vor.u32 %v9263, %v9259
        %v9265 = vrot.slane %v9264, 4
        %v9267 = vshll.u32 %v9180, 16
        %v9269 = vrot.slane %v9267, 5
        %v9270 = vsel %vm1516, %v9265, %v9269
        %v9272 = vshrl.u32 %v9181, 16
        %v9274 = vrot.slane %v9272, 4
        %v9275 = vshll.u32 %v9181, 16
        %v9277 = vrot.slane %v9275, 5
        %v9278 = vor.u32 %v9274, %v9277
        %v9279 = vrot.slane %v9278, 4
        %v9281 = vshll.u32 %v9182, 16
        %v9283 = vrot.slane %v9281, 5
        %v9284 = vsel %vm1516, %v9279, %v9283
        %v9285 = vshrl.u32 %v9182, 16
        %v9287 = vrot.slane %v9285, 4
        %v9288 = vor.u32 %v9287, %v9283
        %v9289 = vrot.slane %v9288, 4
        %v9291 = vshll.u32 %v9183, 16
        %v9293 = vrot.slane %v9291, 5
        %v9294 = vsel %vm1516, %v9289, %v9293
        %v9296 = vshrl.u32 %v9184, 16
        %v9298 = vrot.slane %v9296, 4
        %v9299 = vshll.u32 %v9184, 16
        %v9301 = vrot.slane %v9299, 5
        %v9302 = vor.u32 %v9298, %v9301
        %v9303 = vrot.slane %v9302, 4
        %v9305 = vshll.u32 %v9185, 16
        %v9307 = vrot.slane %v9305, 5
        %v9308 = vsel %vm1516, %v9303, %v9307
        %v9309 = vshrl.u32 %v9185, 16
        %v9311 = vrot.slane %v9309, 4
        %v9312 = vor.u32 %v9311, %v9307
        %v9313 = vrot.slane %v9312, 4
        %v9315 = vshll.u32 %v9186, 16
        %v9317 = vrot.slane %v9315, 5
        %v9318 = vsel %vm1516, %v9313, %v9317
        %v9320 = vshrl.u32 %v9187, 16
        %v9322 = vrot.slane %v9320, 4
        %v9323 = vshll.u32 %v9187, 16
        %v9325 = vrot.slane %v9323, 5
        %v9326 = vor.u32 %v9322, %v9325
        %v9327 = vrot.slane %v9326, 4
        %v9329 = vshll.u32 %v9188, 16
        %v9331 = vrot.slane %v9329, 5
        %v9332 = vsel %vm1516, %v9327, %v9331
        %v9333 = vshrl.u32 %v9188, 16
        %v9335 = vrot.slane %v9333, 4
        %v9336 = vor.u32 %v9335, %v9331
        %v9337 = vrot.slane %v9336, 4
        %v9339 = vshll.u32 %v9189, 16
        %v9341 = vrot.slane %v9339, 5
        %v9342 = vsel %vm1516, %v9337, %v9341
        %v9344 = vshrl.u32 %v9190, 16
        %v9346 = vrot.slane %v9344, 4
        %v9347 = vshll.u32 %v9190, 16
        %v9349 = vrot.slane %v9347, 5
        %v9350 = vor.u32 %v9346, %v9349
        %v9351 = vrot.slane %v9350, 4
        %v9353 = vshll.u32 %v9191, 16
        %v9355 = vrot.slane %v9353, 5
        %v9356 = vsel %vm1516, %v9351, %v9355
        %v9357 = vshrl.u32 %v9191, 16
        %v9359 = vrot.slane %v9357, 4
        %v9360 = vor.u32 %v9359, %v9355
        %v9361 = vrot.slane %v9360, 4
        %v9363 = vshll.u32 %v9192, 16
        %v9365 = vrot.slane %v9363, 5
        %v9366 = vsel %vm1516, %v9361, %v9365
        %v9368 = vshrl.u32 %v9193, 16
        %v9370 = vrot.slane %v9368, 4
        %v9371 = vshll.u32 %v9193, 16
        %v9373 = vrot.slane %v9371, 5
        %v9374 = vor.u32 %v9370, %v9373
        %v9375 = vrot.slane %v9374, 4
        %v9377 = vshll.u32 %v9194, 16
        %v9379 = vrot.slane %v9377, 5
        %v9380 = vsel %vm1516, %v9375, %v9379
        %v9381 = vshrl.u32 %v9194, 16
        %v9383 = vrot.slane %v9381, 4
        %v9384 = vor.u32 %v9383, %v9379
        %v9385 = vrot.slane %v9384, 4
        %v9387 = vshll.u32 %v9195, 16
        %v9389 = vrot.slane %v9387, 5
        %v9390 = vsel %vm1516, %v9385, %v9389
        %v9392 = vshrl.u32 %v9196, 16
        %v9394 = vrot.slane %v9392, 4
        %v9395 = vshll.u32 %v9196, 16
        %v9397 = vrot.slane %v9395, 5
        %v9398 = vor.u32 %v9394, %v9397
        %v9399 = vrot.slane %v9398, 4
        %v9401 = vshll.u32 %v9197, 16
        %v9403 = vrot.slane %v9401, 5
        %v9404 = vsel %vm1516, %v9399, %v9403
        %v9405 = vshrl.u32 %v9197, 16
        %v9407 = vrot.slane %v9405, 4
        %v9408 = vor.u32 %v9407, %v9403
        %v9409 = vrot.slane %v9408, 4
        %v9411 = vshll.u32 %v9198, 16
        %v9413 = vrot.slane %v9411, 5
        %v9414 = vsel %vm1516, %v9409, %v9413
        %v9416 = vshrl.u32 %v9199, 16
        %v9418 = vrot.slane %v9416, 4
        %v9419 = vshll.u32 %v9199, 16
        %v9421 = vrot.slane %v9419, 5
        %v9422 = vor.u32 %v9418, %v9421
        %v9423 = vrot.slane %v9422, 4
        %v9425 = vshll.u32 %v9200, 16
        %v9427 = vrot.slane %v9425, 5
        %v9428 = vsel %vm1516, %v9423, %v9427
        %v9429 = vshrl.u32 %v9200, 16
        %v9431 = vrot.slane %v9429, 4
        %v9432 = vor.u32 %v9431, %v9427
        %v9433 = vrot.slane %v9432, 4
        %v9435 = vshll.u32 %v9201, 16
        %v9437 = vrot.slane %v9435, 5
        %v9438 = vsel %vm1516, %v9433, %v9437
        %v9440 = vshrl.u32 %v9202, 16
        %v9442 = vrot.slane %v9440, 4
        %v9443 = vshll.u32 %v9202, 16
        %v9445 = vrot.slane %v9443, 5
        %v9446 = vor.u32 %v9442, %v9445
        %v9447 = vrot.slane %v9446, 4
        %v9449 = vshll.u32 %v9203, 16
        %v9451 = vrot.slane %v9449, 5
        %v9452 = vsel %vm1516, %v9447, %v9451
        %v9453 = vshrl.u32 %v9203, 16
        %v9455 = vrot.slane %v9453, 4
        %v9456 = vor.u32 %v9455, %v9451
        %v9457 = vrot.slane %v9456, 4
        %v9459 = vshll.u32 %v9204, 16
        %v9461 = vrot.slane %v9459, 5
        %v9462 = vsel %vm1516, %v9457, %v9461
        %v9464 = vshrl.u32 %v9205, 16
        %v9466 = vrot.slane %v9464, 4
        %v9467 = vshll.u32 %v9205, 16
        %v9469 = vrot.slane %v9467, 5
        %v9470 = vor.u32 %v9466, %v9469
        %v9471 = vrot.slane %v9470, 4
        %v9473 = vshll.u32 %v9206, 16
        %v9475 = vrot.slane %v9473, 5
        %v9476 = vsel %vm1516, %v9471, %v9475
        %v9477 = vshrl.u32 %v9206, 16
        %v9479 = vrot.slane %v9477, 4
        %v9480 = vor.u32 %v9479, %v9475
        %v9481 = vrot.slane %v9480, 4
        %v9483 = vshll.u32 %v9207, 16
        %v9485 = vrot.slane %v9483, 5
        %v9486 = vsel %vm1516, %v9481, %v9485
        %v9488 = vshrl.u32 %v9208, 16
        %v9490 = vrot.slane %v9488, 4
        %v9491 = vshll.u32 %v9208, 16
        %v9493 = vrot.slane %v9491, 5
        %v9494 = vor.u32 %v9490, %v9493
        %v9495 = vrot.slane %v9494, 4
        %v9497 = vshll.u32 %v9209, 16
        %v9499 = vrot.slane %v9497, 5
        %v9500 = vsel %vm1516, %v9495, %v9499
        %v9501 = vshrl.u32 %v9209, 16
        %v9503 = vrot.slane %v9501, 4
        %v9504 = vor.u32 %v9503, %v9499
        %v9505 = vrot.slane %v9504, 4
        %v9507 = vshll.u32 %v9210, 16
        %v9509 = vrot.slane %v9507, 5
        %v9510 = vsel %vm1516, %v9505, %v9509
        %v9512 = vshrl.u32 %v9211, 16
        %v9514 = vrot.slane %v9512, 4
        %v9515 = vshll.u32 %v9211, 16
        %v9517 = vrot.slane %v9515, 5
        %v9518 = vor.u32 %v9514, %v9517
        %v9519 = vrot.slane %v9518, 4
        %v9521 = vshll.u32 %v9212, 16
        %v9523 = vrot.slane %v9521, 5
        %v9524 = vsel %vm1516, %v9519, %v9523
        %v9525 = vshrl.u32 %v9212, 16
        %v9527 = vrot.slane %v9525, 4
        %v9528 = vor.u32 %v9527, %v9523
        %v9529 = vrot.slane %v9528, 4
        %v9531 = vshll.u32 %v9213, 16
        %v9533 = vrot.slane %v9531, 5
        %v9534 = vsel %vm1516, %v9529, %v9533
        %v9536 = vshrl.u32 %v9214, 16
        %v9538 = vrot.slane %v9536, 4
        %v9539 = vshll.u32 %v9214, 16
        %v9541 = vrot.slane %v9539, 5
        %v9542 = vor.u32 %v9538, %v9541
        %v9543 = vrot.slane %v9542, 4
        %v9545 = vshll.u32 %v9215, 16
        %v9547 = vrot.slane %v9545, 5
        %v9548 = vsel %vm1516, %v9543, %v9547
        %v9549 = vshrl.u32 %v9215, 16
        %v9551 = vrot.slane %v9549, 4
        %v9552 = vor.u32 %v9551, %v9547
        %v9553 = vrot.slane %v9552, 4
        %v9555 = vshll.u32 %v9216, 16
        %v9557 = vrot.slane %v9555, 5
        %v9558 = vsel %vm1516, %v9553, %v9557
        %v9560 = vshrl.u32 %v9217, 16
        %v9562 = vrot.slane %v9560, 4
        %v9563 = vshll.u32 %v9217, 16
        %v9565 = vrot.slane %v9563, 5
        %v9566 = vor.u32 %v9562, %v9565
        %v9567 = vrot.slane %v9566, 4
        %v9569 = vshll.u32 %v9218, 16
        %v9571 = vrot.slane %v9569, 5
        %v9572 = vsel %vm1516, %v9567, %v9571
        %v9573 = vshrl.u32 %v9218, 16
        %v9575 = vrot.slane %v9573, 4
        %v9576 = vor.u32 %v9575, %v9571
        %v9577 = vrot.slane %v9576, 4
        %v9579 = vshll.u32 %v9219, 16
        %v9581 = vrot.slane %v9579, 5
        %v9582 = vsel %vm1516, %v9577, %v9581
        %v9584 = vshrl.u32 %v9220, 16
        %v9586 = vrot.slane %v9584, 4
        %v9587 = vshll.u32 %v9220, 16
        %v9589 = vrot.slane %v9587, 5
        %v9590 = vor.u32 %v9586, %v9589
        %v9591 = vrot.slane %v9590, 4
        %v9593 = vshll.u32 %v9221, 16
        %v9595 = vrot.slane %v9593, 5
        %v9596 = vsel %vm1516, %v9591, %v9595
        %v9597 = vshrl.u32 %v9221, 16
        %v9599 = vrot.slane %v9597, 4
        %v9600 = vor.u32 %v9599, %v9595
        %v9601 = vrot.slane %v9600, 4
        %v9603 = vshll.u32 %v9222, 16
        %v9605 = vrot.slane %v9603, 5
        %v9606 = vsel %vm1516, %v9601, %v9605
        %s9607 = scalar_lea.vmem [#allocation3], 256
        %v9608 = vld [vmem:[%s9607] sm:$0xf]
        %v9609 = vld [vmem:[%s9607 + $0x4] sm:$0xf]
        %v9610 = vld [vmem:[%s9607 + $0x8] sm:$0xf]
        %v9611 = vld [vmem:[%s9607 + $0xc] sm:$0xf]
        %v9612 = vld [vmem:[%s9607 + $0x10] sm:$0xf]
        %v9613 = vld [vmem:[%s9607 + $0x14] sm:$0xf]
        %v9614 = vld [vmem:[%s9607 + $0x18] sm:$0xf]
        %v9615 = vld [vmem:[%s9607 + $0x1c] sm:$0xf]
        %v9616 = vld [vmem:[%s9607 + $0x20] sm:$0xf]
        %v9617 = vld [vmem:[%s9607 + $0x24] sm:$0xf]
        %v9618 = vld [vmem:[%s9607 + $0x28] sm:$0xf]
        %v9619 = vld [vmem:[%s9607 + $0x2c] sm:$0xf]
        %v9620 = vld [vmem:[%s9607 + $0x30] sm:$0xf]
        %v9621 = vld [vmem:[%s9607 + $0x34] sm:$0xf]
        %v9622 = vld [vmem:[%s9607 + $0x38] sm:$0xf]
        %v9623 = vld [vmem:[%s9607 + $0x3c] sm:$0xf]
        %v9624 = vunpack.c.l.b16 %v9236
        %v9625 = vunpack.c.l.b16 %v9246
        %v9626 = vunpack.c.l.b16 %v9260
        %v9627 = vunpack.c.l.b16 %v9270
        %v9628 = vunpack.c.l.b16 %v9284
        %v9629 = vunpack.c.l.b16 %v9294
        %v9630 = vunpack.c.l.b16 %v9308
        %v9631 = vunpack.c.l.b16 %v9318
        %v9632 = vunpack.c.l.b16 %v9332
        %v9633 = vunpack.c.l.b16 %v9342
        %v9634 = vunpack.c.l.b16 %v9356
        %v9635 = vunpack.c.l.b16 %v9366
        %v9636 = vunpack.c.l.b16 %v9380
        %v9637 = vunpack.c.l.b16 %v9390
        %v9638 = vunpack.c.l.b16 %v9404
        %v9639 = vunpack.c.l.b16 %v9414
        %v9640 = vunpack.c.l.b16 %v9428
        %v9641 = vunpack.c.l.b16 %v9438
        %v9642 = vunpack.c.l.b16 %v9452
        %v9643 = vunpack.c.l.b16 %v9462
        %v9644 = vunpack.c.l.b16 %v9476
        %v9645 = vunpack.c.l.b16 %v9486
        %v9646 = vunpack.c.l.b16 %v9500
        %v9647 = vunpack.c.l.b16 %v9510
        %v9648 = vunpack.c.l.b16 %v9524
        %v9649 = vunpack.c.l.b16 %v9534
        %v9650 = vunpack.c.l.b16 %v9548
        %v9651 = vunpack.c.l.b16 %v9558
        %v9652 = vunpack.c.l.b16 %v9572
        %v9653 = vunpack.c.l.b16 %v9582
        %v9654 = vunpack.c.l.b16 %v9596
        %v9655 = vunpack.c.l.b16 %v9606
        %v9656 = vpack.c.b16 %v9625, %v9624
        %v9657 = vpack.c.b16 %v9627, %v9626
        %v9658 = vpack.c.b16 %v9629, %v9628
        %v9659 = vpack.c.b16 %v9631, %v9630
        %v9660 = vpack.c.b16 %v9633, %v9632
        %v9661 = vpack.c.b16 %v9635, %v9634
        %v9662 = vpack.c.b16 %v9637, %v9636
        %v9663 = vpack.c.b16 %v9639, %v9638
        %v9664 = vpack.c.b16 %v9641, %v9640
        %v9665 = vpack.c.b16 %v9643, %v9642
        %v9666 = vpack.c.b16 %v9645, %v9644
        %v9667 = vpack.c.b16 %v9647, %v9646
        %v9668 = vpack.c.b16 %v9649, %v9648
        %v9669 = vpack.c.b16 %v9651, %v9650
        %v9670 = vpack.c.b16 %v9653, %v9652
        %v9671 = vpack.c.b16 %v9655, %v9654
        %v9704 = vunpack.c.l.b16 %v9608
        %v9705 = vunpack.c.l.b16 %v9609
        %v9706 = vunpack.c.l.b16 %v9610
        %v9707 = vunpack.c.l.b16 %v9611
        %v9708 = vunpack.c.l.b16 %v9612
        %v9709 = vunpack.c.l.b16 %v9613
        %v9710 = vunpack.c.l.b16 %v9614
        %v9711 = vunpack.c.l.b16 %v9615
        %v9712 = vunpack.c.l.b16 %v9616
        %v9713 = vunpack.c.l.b16 %v9617
        %v9714 = vunpack.c.l.b16 %v9618
        %v9715 = vunpack.c.l.b16 %v9619
        %v9716 = vunpack.c.l.b16 %v9620
        %v9717 = vunpack.c.l.b16 %v9621
        %v9718 = vunpack.c.l.b16 %v9622
        %v9719 = vunpack.c.l.b16 %v9623
        %v9720 = vpack.c.b16 %v9705, %v9704
        %v9721 = vpack.c.b16 %v9707, %v9706
        %v9722 = vpack.c.b16 %v9709, %v9708
        %v9723 = vpack.c.b16 %v9711, %v9710
        %v9724 = vpack.c.b16 %v9713, %v9712
        %v9725 = vpack.c.b16 %v9715, %v9714
        %v9726 = vpack.c.b16 %v9717, %v9716
        %v9727 = vpack.c.b16 %v9719, %v9718
        %9736 = vmatprep.subr.bf16.mxu0 0
        %9737 = vmatpush1.bf16.msra.mxu0 %v9727
        %9738 = vmatprep.subr.bf16.mxu0 0
        %9739 = vmatpush1.bf16.msra.mxu0 %v9726
        %9740 = vmatprep.subr.bf16.mxu0 0
        %9741 = vmatpush1.bf16.msra.mxu0 %v9725
        %9742 = vmatprep.subr.bf16.mxu0 0
        %9743 = vmatpush1.bf16.msra.mxu0 %v9724
        %9744 = vmatprep.subr.bf16.mxu0 0
        %9745 = vmatpush1.bf16.msra.mxu0 %v9723
        %9746 = vmatprep.subr.bf16.mxu0 0
        %9747 = vmatpush1.bf16.msra.mxu0 %v9722
        %9748 = vmatprep.subr.bf16.mxu0 0
        %9749 = vmatpush1.bf16.msra.mxu0 %v9721
        %9750 = vmatprep.subr.bf16.mxu0 0
        %9751 = vmatpush1.bf16.msra.mxu0 %v9720
        %9752 = vmatprep.subr.bf16.mxu0 0
        %9753 = vmatpush2.bf16.msra.mxu0 0
        %9754 = vmatprep.subr.bf16.mxu0 0
        %9755 = vmatpush2.bf16.msra.mxu0 0
        %9756 = vmatprep.subr.bf16.mxu0 0
        %9757 = vmatpush2.bf16.msra.mxu0 0
        %9758 = vmatprep.subr.bf16.mxu0 0
        %9759 = vmatpush2.bf16.msra.mxu0 0
        %9760 = vmatprep.subr.bf16.mxu0 0
        %9761 = vmatpush2.bf16.msra.mxu0 0
        %9762 = vmatprep.subr.bf16.mxu0 0
        %9763 = vmatpush2.bf16.msra.mxu0 0
        %9764 = vmatprep.subr.bf16.mxu0 0
        %9765 = vmatpush2.bf16.msra.mxu0 0
        %9766 = vmatprep.subr.bf16.mxu0 0
        %9767 = vmatpush2.bf16.msra.mxu0 0
        %9768 = vmatprep.mubr.bf16.mxu0 0
        %9769 = vmatmul.mubr.bf16.gmra.mxu0 %v9656
        %v9770 = vpop.f32.mrf.mxu0
        %v9771 = vadd.f32 0.0, %v9770
        %v9772 = vpop.f32.mrf.mxu0
        %v9773 = vpop.f32.mrf.mxu0
        %v9774 = vadd.f32 0.0, %v9773
        %v9775 = vpop.f32.mrf.mxu0
        %9776 = vmatprep.mubr.bf16.mxu0 0
        %9777 = vmatmul.mubr.bf16.gmra.mxu0 %v9657
        %v9778 = vpop.f32.mrf.mxu0
        %v9779 = vadd.f32 0.0, %v9778
        %v9780 = vpop.f32.mrf.mxu0
        %v9781 = vpop.f32.mrf.mxu0
        %v9782 = vadd.f32 0.0, %v9781
        %v9783 = vpop.f32.mrf.mxu0
        %9784 = vmatprep.mubr.bf16.mxu0 0
        %9785 = vmatmul.mubr.bf16.gmra.mxu0 %v9658
        %v9786 = vpop.f32.mrf.mxu0
        %v9787 = vadd.f32 0.0, %v9786
        %v9788 = vpop.f32.mrf.mxu0
        %v9789 = vpop.f32.mrf.mxu0
        %v9790 = vadd.f32 0.0, %v9789
        %v9791 = vpop.f32.mrf.mxu0
        %9792 = vmatprep.mubr.bf16.mxu0 0
        %9793 = vmatmul.mubr.bf16.gmra.mxu0 %v9659
        %v9794 = vpop.f32.mrf.mxu0
        %v9795 = vadd.f32 0.0, %v9794
        %v9796 = vpop.f32.mrf.mxu0
        %v9797 = vpop.f32.mrf.mxu0
        %v9798 = vadd.f32 0.0, %v9797
        %v9799 = vpop.f32.mrf.mxu0
        %9800 = vmatprep.mubr.bf16.mxu0 0
        %9801 = vmatmul.mubr.bf16.gmra.mxu0 %v9660
        %v9802 = vpop.f32.mrf.mxu0
        %v9803 = vadd.f32 0.0, %v9802
        %v9804 = vpop.f32.mrf.mxu0
        %v9805 = vpop.f32.mrf.mxu0
        %v9806 = vadd.f32 0.0, %v9805
        %v9807 = vpop.f32.mrf.mxu0
        %9808 = vmatprep.mubr.bf16.mxu0 0
        %9809 = vmatmul.mubr.bf16.gmra.mxu0 %v9661
        %v9810 = vpop.f32.mrf.mxu0
        %v9811 = vadd.f32 0.0, %v9810
        %v9812 = vpop.f32.mrf.mxu0
        %v9813 = vpop.f32.mrf.mxu0
        %v9814 = vadd.f32 0.0, %v9813
        %v9815 = vpop.f32.mrf.mxu0
        %9816 = vmatprep.mubr.bf16.mxu0 0
        %9817 = vmatmul.mubr.bf16.gmra.mxu0 %v9662
        %v9818 = vpop.f32.mrf.mxu0
        %v9819 = vadd.f32 0.0, %v9818
        %v9820 = vpop.f32.mrf.mxu0
        %v9821 = vpop.f32.mrf.mxu0
        %v9822 = vadd.f32 0.0, %v9821
        %v9823 = vpop.f32.mrf.mxu0
        %9824 = vmatprep.mubr.bf16.mxu0 0
        %9825 = vmatmul.mubr.bf16.gmra.mxu0 %v9663
        %v9826 = vpop.f32.mrf.mxu0
        %v9827 = vadd.f32 0.0, %v9826
        %v9828 = vpop.f32.mrf.mxu0
        %v9829 = vpop.f32.mrf.mxu0
        %v9830 = vadd.f32 0.0, %v9829
        %v9831 = vpop.f32.mrf.mxu0
        %9832 = vmatprep.mubr.bf16.mxu0 0
        %9833 = vmatmul.mubr.bf16.gmra.mxu0 %v9664
        %v9834 = vpop.f32.mrf.mxu0
        %v9835 = vadd.f32 0.0, %v9834
        %v9836 = vpop.f32.mrf.mxu0
        %v9837 = vpop.f32.mrf.mxu0
        %v9838 = vadd.f32 0.0, %v9837
        %v9839 = vpop.f32.mrf.mxu0
        %9840 = vmatprep.mubr.bf16.mxu0 0
        %9841 = vmatmul.mubr.bf16.gmra.mxu0 %v9665
        %v9842 = vpop.f32.mrf.mxu0
        %v9843 = vadd.f32 0.0, %v9842
        %v9844 = vpop.f32.mrf.mxu0
        %v9845 = vpop.f32.mrf.mxu0
        %v9846 = vadd.f32 0.0, %v9845
        %v9847 = vpop.f32.mrf.mxu0
        %9848 = vmatprep.mubr.bf16.mxu0 0
        %9849 = vmatmul.mubr.bf16.gmra.mxu0 %v9666
        %v9850 = vpop.f32.mrf.mxu0
        %v9851 = vadd.f32 0.0, %v9850
        %v9852 = vpop.f32.mrf.mxu0
        %v9853 = vpop.f32.mrf.mxu0
        %v9854 = vadd.f32 0.0, %v9853
        %v9855 = vpop.f32.mrf.mxu0
        %9856 = vmatprep.mubr.bf16.mxu0 0
        %9857 = vmatmul.mubr.bf16.gmra.mxu0 %v9667
        %v9858 = vpop.f32.mrf.mxu0
        %v9859 = vadd.f32 0.0, %v9858
        %v9860 = vpop.f32.mrf.mxu0
        %v9861 = vpop.f32.mrf.mxu0
        %v9862 = vadd.f32 0.0, %v9861
        %v9863 = vpop.f32.mrf.mxu0
        %9864 = vmatprep.mubr.bf16.mxu0 0
        %9865 = vmatmul.mubr.bf16.gmra.mxu0 %v9668
        %v9866 = vpop.f32.mrf.mxu0
        %v9867 = vadd.f32 0.0, %v9866
        %v9868 = vpop.f32.mrf.mxu0
        %v9869 = vpop.f32.mrf.mxu0
        %v9870 = vadd.f32 0.0, %v9869
        %v9871 = vpop.f32.mrf.mxu0
        %9872 = vmatprep.mubr.bf16.mxu0 0
        %9873 = vmatmul.mubr.bf16.gmra.mxu0 %v9669
        %v9874 = vpop.f32.mrf.mxu0
        %v9875 = vadd.f32 0.0, %v9874
        %v9876 = vpop.f32.mrf.mxu0
        %v9877 = vpop.f32.mrf.mxu0
        %v9878 = vadd.f32 0.0, %v9877
        %v9879 = vpop.f32.mrf.mxu0
        %9880 = vmatprep.mubr.bf16.mxu0 0
        %9881 = vmatmul.mubr.bf16.gmra.mxu0 %v9670
        %v9882 = vpop.f32.mrf.mxu0
        %v9883 = vadd.f32 0.0, %v9882
        %v9884 = vpop.f32.mrf.mxu0
        %v9885 = vpop.f32.mrf.mxu0
        %v9886 = vadd.f32 0.0, %v9885
        %v9887 = vpop.f32.mrf.mxu0
        %9888 = vmatprep.mubr.bf16.mxu0 0
        %9889 = vmatmul.mubr.bf16.gmra.mxu0 %v9671
        %v9890 = vpop.f32.mrf.mxu0
        %v9891 = vadd.f32 0.0, %v9890
        %v9892 = vpop.f32.mrf.mxu0
        %v9893 = vpop.f32.mrf.mxu0
        %v9894 = vadd.f32 0.0, %v9893
        %v9895 = vpop.f32.mrf.mxu0
        %9896 = vdwg.mxu0
        %v9897 = vadd.f32 %v9143, %v9771
        %v9898 = vadd.f32 %v9144, %v9774
        %v9899 = vadd.f32 %v9145, %v9779
        %v9900 = vadd.f32 %v9146, %v9782
        %v9901 = vadd.f32 %v9147, %v9787
        %v9902 = vadd.f32 %v9148, %v9790
        %v9903 = vadd.f32 %v9149, %v9795
        %v9904 = vadd.f32 %v9150, %v9798
        %v9905 = vadd.f32 %v9151, %v9803
        %v9906 = vadd.f32 %v9152, %v9806
        %v9907 = vadd.f32 %v9153, %v9811
        %v9908 = vadd.f32 %v9154, %v9814
        %v9909 = vadd.f32 %v9155, %v9819
        %v9910 = vadd.f32 %v9156, %v9822
        %v9911 = vadd.f32 %v9157, %v9827
        %v9912 = vadd.f32 %v9158, %v9830
        %v9913 = vadd.f32 %v9159, %v9835
        %v9914 = vadd.f32 %v9160, %v9838
        %v9915 = vadd.f32 %v9161, %v9843
        %v9916 = vadd.f32 %v9162, %v9846
        %v9917 = vadd.f32 %v9163, %v9851
        %v9918 = vadd.f32 %v9164, %v9854
        %v9919 = vadd.f32 %v9165, %v9859
        %v9920 = vadd.f32 %v9166, %v9862
        %v9921 = vadd.f32 %v9167, %v9867
        %v9922 = vadd.f32 %v9168, %v9870
        %v9923 = vadd.f32 %v9169, %v9875
        %v9924 = vadd.f32 %v9170, %v9878
        %v9925 = vadd.f32 %v9171, %v9883
        %v9926 = vadd.f32 %v9172, %v9886
        %v9927 = vadd.f32 %v9173, %v9891
        %v9928 = vadd.f32 %v9174, %v9894
        %v9929 = vld [vmem:[%s1332] sm:$0xe]
        %v9930 = vld [vmem:[%s1332 + $0xc] sm:$0xe]
        %v9931 = vld [vmem:[%s1332 + $0x18] sm:$0xe]
        %v9932 = vld [vmem:[%s1332 + $0x24] sm:$0xe]
        %v9933 = vld [vmem:[%s1332 + $0x30] sm:$0xe]
        %v9934 = vld [vmem:[%s1332 + $0x3c] sm:$0xe]
        %v9935 = vld [vmem:[%s1332 + $0x48] sm:$0xe]
        %v9936 = vld [vmem:[%s1332 + $0x54] sm:$0xe]
        %v9937 = vld [vmem:[%s1332 + $0x60] sm:$0xe]
        %v9938 = vld [vmem:[%s1332 + $0x6c] sm:$0xe]
        %v9939 = vld [vmem:[%s1332 + $0x78] sm:$0xe]
        %v9940 = vld [vmem:[%s1332 + $0x84] sm:$0xe]
        %v9941 = vld [vmem:[%s1332 + $0x90] sm:$0xe]
        %v9942 = vld [vmem:[%s1332 + $0x9c] sm:$0xe]
        %v9943 = vld [vmem:[%s1332 + $0xa8] sm:$0xe]
        %v9944 = vld [vmem:[%s1332 + $0xb4] sm:$0xe]
        %v9993 = vrot.slane %v9929, 5
        %v9994 = vrot.slane %v9993, 4
        %v9995 = vrot.slane %v9176, 5
        %v9996 = vsel %vm2546, %v9994, %v9995
        %v9997 = vrot.slane %v9995, 4
        %v9998 = vrot.slane %v9177, 5
        %v9999 = vsel %vm2546, %v9997, %v9998
        %v10000 = vrot.slane %v9930, 5
        %v10001 = vrot.slane %v10000, 4
        %v10002 = vrot.slane %v9179, 5
        %v10003 = vsel %vm2546, %v10001, %v10002
        %v10004 = vrot.slane %v10002, 4
        %v10005 = vrot.slane %v9180, 5
        %v10006 = vsel %vm2546, %v10004, %v10005
        %v10007 = vrot.slane %v9931, 5
        %v10008 = vrot.slane %v10007, 4
        %v10009 = vrot.slane %v9182, 5
        %v10010 = vsel %vm2546, %v10008, %v10009
        %v10011 = vrot.slane %v10009, 4
        %v10012 = vrot.slane %v9183, 5
        %v10013 = vsel %vm2546, %v10011, %v10012
        %v10014 = vrot.slane %v9932, 5
        %v10015 = vrot.slane %v10014, 4
        %v10016 = vrot.slane %v9185, 5
        %v10017 = vsel %vm2546, %v10015, %v10016
        %v10018 = vrot.slane %v10016, 4
        %v10019 = vrot.slane %v9186, 5
        %v10020 = vsel %vm2546, %v10018, %v10019
        %v10021 = vrot.slane %v9933, 5
        %v10022 = vrot.slane %v10021, 4
        %v10023 = vrot.slane %v9188, 5
        %v10024 = vsel %vm2546, %v10022, %v10023
        %v10025 = vrot.slane %v10023, 4
        %v10026 = vrot.slane %v9189, 5
        %v10027 = vsel %vm2546, %v10025, %v10026
        %v10028 = vrot.slane %v9934, 5
        %v10029 = vrot.slane %v10028, 4
        %v10030 = vrot.slane %v9191, 5
        %v10031 = vsel %vm2546, %v10029, %v10030
        %v10032 = vrot.slane %v10030, 4
        %v10033 = vrot.slane %v9192, 5
        %v10034 = vsel %vm2546, %v10032, %v10033
        %v10035 = vrot.slane %v9935, 5
        %v10036 = vrot.slane %v10035, 4
        %v10037 = vrot.slane %v9194, 5
        %v10038 = vsel %vm2546, %v10036, %v10037
        %v10039 = vrot.slane %v10037, 4
        %v10040 = vrot.slane %v9195, 5
        %v10041 = vsel %vm2546, %v10039, %v10040
        %v10042 = vrot.slane %v9936, 5
        %v10043 = vrot.slane %v10042, 4
        %v10044 = vrot.slane %v9197, 5
        %v10045 = vsel %vm2546, %v10043, %v10044
        %v10046 = vrot.slane %v10044, 4
        %v10047 = vrot.slane %v9198, 5
        %v10048 = vsel %vm2546, %v10046, %v10047
        %v10049 = vrot.slane %v9937, 5
        %v10050 = vrot.slane %v10049, 4
        %v10051 = vrot.slane %v9200, 5
        %v10052 = vsel %vm2546, %v10050, %v10051
        %v10053 = vrot.slane %v10051, 4
        %v10054 = vrot.slane %v9201, 5
        %v10055 = vsel %vm2546, %v10053, %v10054
        %v10056 = vrot.slane %v9938, 5
        %v10057 = vrot.slane %v10056, 4
        %v10058 = vrot.slane %v9203, 5
        %v10059 = vsel %vm2546, %v10057, %v10058
        %v10060 = vrot.slane %v10058, 4
        %v10061 = vrot.slane %v9204, 5
        %v10062 = vsel %vm2546, %v10060, %v10061
        %v10063 = vrot.slane %v9939, 5
        %v10064 = vrot.slane %v10063, 4
        %v10065 = vrot.slane %v9206, 5
        %v10066 = vsel %vm2546, %v10064, %v10065
        %v10067 = vrot.slane %v10065, 4
        %v10068 = vrot.slane %v9207, 5
        %v10069 = vsel %vm2546, %v10067, %v10068
        %v10070 = vrot.slane %v9940, 5
        %v10071 = vrot.slane %v10070, 4
        %v10072 = vrot.slane %v9209, 5
        %v10073 = vsel %vm2546, %v10071, %v10072
        %v10074 = vrot.slane %v10072, 4
        %v10075 = vrot.slane %v9210, 5
        %v10076 = vsel %vm2546, %v10074, %v10075
        %v10077 = vrot.slane %v9941, 5
        %v10078 = vrot.slane %v10077, 4
        %v10079 = vrot.slane %v9212, 5
        %v10080 = vsel %vm2546, %v10078, %v10079
        %v10081 = vrot.slane %v10079, 4
        %v10082 = vrot.slane %v9213, 5
        %v10083 = vsel %vm2546, %v10081, %v10082
        %v10084 = vrot.slane %v9942, 5
        %v10085 = vrot.slane %v10084, 4
        %v10086 = vrot.slane %v9215, 5
        %v10087 = vsel %vm2546, %v10085, %v10086
        %v10088 = vrot.slane %v10086, 4
        %v10089 = vrot.slane %v9216, 5
        %v10090 = vsel %vm2546, %v10088, %v10089
        %v10091 = vrot.slane %v9943, 5
        %v10092 = vrot.slane %v10091, 4
        %v10093 = vrot.slane %v9218, 5
        %v10094 = vsel %vm2546, %v10092, %v10093
        %v10095 = vrot.slane %v10093, 4
        %v10096 = vrot.slane %v9219, 5
        %v10097 = vsel %vm2546, %v10095, %v10096
        %v10098 = vrot.slane %v9944, 5
        %v10099 = vrot.slane %v10098, 4
        %v10100 = vrot.slane %v9221, 5
        %v10101 = vsel %vm2546, %v10099, %v10100
        %v10102 = vrot.slane %v10100, 4
        %v10103 = vrot.slane %v9222, 5
        %v10104 = vsel %vm2546, %v10102, %v10103
        %s10105 = scalar_lea.vmem [#allocation3], 320
        %v10106 = vld [vmem:[%s10105] sm:$0xf]
        %v10107 = vld [vmem:[%s10105 + $0x4] sm:$0xf]
        %v10108 = vld [vmem:[%s10105 + $0x8] sm:$0xf]
        %v10109 = vld [vmem:[%s10105 + $0xc] sm:$0xf]
        %v10110 = vld [vmem:[%s10105 + $0x10] sm:$0xf]
        %v10111 = vld [vmem:[%s10105 + $0x14] sm:$0xf]
        %v10112 = vld [vmem:[%s10105 + $0x18] sm:$0xf]
        %v10113 = vld [vmem:[%s10105 + $0x1c] sm:$0xf]
        %v10114 = vld [vmem:[%s10105 + $0x20] sm:$0xf]
        %v10115 = vld [vmem:[%s10105 + $0x24] sm:$0xf]
        %v10116 = vld [vmem:[%s10105 + $0x28] sm:$0xf]
        %v10117 = vld [vmem:[%s10105 + $0x2c] sm:$0xf]
        %v10118 = vld [vmem:[%s10105 + $0x30] sm:$0xf]
        %v10119 = vld [vmem:[%s10105 + $0x34] sm:$0xf]
        %v10120 = vld [vmem:[%s10105 + $0x38] sm:$0xf]
        %v10121 = vld [vmem:[%s10105 + $0x3c] sm:$0xf]
        %v10122 = vunpack.c.l.b16 %v9996
        %v10123 = vunpack.c.l.b16 %v9999
        %v10124 = vunpack.c.l.b16 %v10003
        %v10125 = vunpack.c.l.b16 %v10006
        %v10126 = vunpack.c.l.b16 %v10010
        %v10127 = vunpack.c.l.b16 %v10013
        %v10128 = vunpack.c.l.b16 %v10017
        %v10129 = vunpack.c.l.b16 %v10020
        %v10130 = vunpack.c.l.b16 %v10024
        %v10131 = vunpack.c.l.b16 %v10027
        %v10132 = vunpack.c.l.b16 %v10031
        %v10133 = vunpack.c.l.b16 %v10034
        %v10134 = vunpack.c.l.b16 %v10038
        %v10135 = vunpack.c.l.b16 %v10041
        %v10136 = vunpack.c.l.b16 %v10045
        %v10137 = vunpack.c.l.b16 %v10048
        %v10138 = vunpack.c.l.b16 %v10052
        %v10139 = vunpack.c.l.b16 %v10055
        %v10140 = vunpack.c.l.b16 %v10059
        %v10141 = vunpack.c.l.b16 %v10062
        %v10142 = vunpack.c.l.b16 %v10066
        %v10143 = vunpack.c.l.b16 %v10069
        %v10144 = vunpack.c.l.b16 %v10073
        %v10145 = vunpack.c.l.b16 %v10076
        %v10146 = vunpack.c.l.b16 %v10080
        %v10147 = vunpack.c.l.b16 %v10083
        %v10148 = vunpack.c.l.b16 %v10087
        %v10149 = vunpack.c.l.b16 %v10090
        %v10150 = vunpack.c.l.b16 %v10094
        %v10151 = vunpack.c.l.b16 %v10097
        %v10152 = vunpack.c.l.b16 %v10101
        %v10153 = vunpack.c.l.b16 %v10104
        %v10154 = vpack.c.b16 %v10123, %v10122
        %v10155 = vpack.c.b16 %v10125, %v10124
        %v10156 = vpack.c.b16 %v10127, %v10126
        %v10157 = vpack.c.b16 %v10129, %v10128
        %v10158 = vpack.c.b16 %v10131, %v10130
        %v10159 = vpack.c.b16 %v10133, %v10132
        %v10160 = vpack.c.b16 %v10135, %v10134
        %v10161 = vpack.c.b16 %v10137, %v10136
        %v10162 = vpack.c.b16 %v10139, %v10138
        %v10163 = vpack.c.b16 %v10141, %v10140
        %v10164 = vpack.c.b16 %v10143, %v10142
        %v10165 = vpack.c.b16 %v10145, %v10144
        %v10166 = vpack.c.b16 %v10147, %v10146
        %v10167 = vpack.c.b16 %v10149, %v10148
        %v10168 = vpack.c.b16 %v10151, %v10150
        %v10169 = vpack.c.b16 %v10153, %v10152
        %v10202 = vunpack.c.l.b16 %v10106
        %v10203 = vunpack.c.l.b16 %v10107
        %v10204 = vunpack.c.l.b16 %v10108
        %v10205 = vunpack.c.l.b16 %v10109
        %v10206 = vunpack.c.l.b16 %v10110
        %v10207 = vunpack.c.l.b16 %v10111
        %v10208 = vunpack.c.l.b16 %v10112
        %v10209 = vunpack.c.l.b16 %v10113
        %v10210 = vunpack.c.l.b16 %v10114
        %v10211 = vunpack.c.l.b16 %v10115
        %v10212 = vunpack.c.l.b16 %v10116
        %v10213 = vunpack.c.l.b16 %v10117
        %v10214 = vunpack.c.l.b16 %v10118
        %v10215 = vunpack.c.l.b16 %v10119
        %v10216 = vunpack.c.l.b16 %v10120
        %v10217 = vunpack.c.l.b16 %v10121
        %v10218 = vpack.c.b16 %v10203, %v10202
        %v10219 = vpack.c.b16 %v10205, %v10204
        %v10220 = vpack.c.b16 %v10207, %v10206
        %v10221 = vpack.c.b16 %v10209, %v10208
        %v10222 = vpack.c.b16 %v10211, %v10210
        %v10223 = vpack.c.b16 %v10213, %v10212
        %v10224 = vpack.c.b16 %v10215, %v10214
        %v10225 = vpack.c.b16 %v10217, %v10216
        %10234 = vmatprep.subr.bf16.mxu0 0
        %10235 = vmatpush1.bf16.msra.mxu0 %v10225
        %10236 = vmatprep.subr.bf16.mxu0 0
        %10237 = vmatpush1.bf16.msra.mxu0 %v10224
        %10238 = vmatprep.subr.bf16.mxu0 0
        %10239 = vmatpush1.bf16.msra.mxu0 %v10223
        %10240 = vmatprep.subr.bf16.mxu0 0
        %10241 = vmatpush1.bf16.msra.mxu0 %v10222
        %10242 = vmatprep.subr.bf16.mxu0 0
        %10243 = vmatpush1.bf16.msra.mxu0 %v10221
        %10244 = vmatprep.subr.bf16.mxu0 0
        %10245 = vmatpush1.bf16.msra.mxu0 %v10220
        %10246 = vmatprep.subr.bf16.mxu0 0
        %10247 = vmatpush1.bf16.msra.mxu0 %v10219
        %10248 = vmatprep.subr.bf16.mxu0 0
        %10249 = vmatpush1.bf16.msra.mxu0 %v10218
        %10250 = vmatprep.subr.bf16.mxu0 0
        %10251 = vmatpush2.bf16.msra.mxu0 0
        %10252 = vmatprep.subr.bf16.mxu0 0
        %10253 = vmatpush2.bf16.msra.mxu0 0
        %10254 = vmatprep.subr.bf16.mxu0 0
        %10255 = vmatpush2.bf16.msra.mxu0 0
        %10256 = vmatprep.subr.bf16.mxu0 0
        %10257 = vmatpush2.bf16.msra.mxu0 0
        %10258 = vmatprep.subr.bf16.mxu0 0
        %10259 = vmatpush2.bf16.msra.mxu0 0
        %10260 = vmatprep.subr.bf16.mxu0 0
        %10261 = vmatpush2.bf16.msra.mxu0 0
        %10262 = vmatprep.subr.bf16.mxu0 0
        %10263 = vmatpush2.bf16.msra.mxu0 0
        %10264 = vmatprep.subr.bf16.mxu0 0
        %10265 = vmatpush2.bf16.msra.mxu0 0
        %10266 = vmatprep.mubr.bf16.mxu0 0
        %10267 = vmatmul.mubr.bf16.gmra.mxu0 %v10154
        %v10268 = vpop.f32.mrf.mxu0
        %v10269 = vadd.f32 0.0, %v10268
        %v10270 = vpop.f32.mrf.mxu0
        %v10271 = vpop.f32.mrf.mxu0
        %v10272 = vadd.f32 0.0, %v10271
        %v10273 = vpop.f32.mrf.mxu0
        %10274 = vmatprep.mubr.bf16.mxu0 0
        %10275 = vmatmul.mubr.bf16.gmra.mxu0 %v10155
        %v10276 = vpop.f32.mrf.mxu0
        %v10277 = vadd.f32 0.0, %v10276
        %v10278 = vpop.f32.mrf.mxu0
        %v10279 = vpop.f32.mrf.mxu0
        %v10280 = vadd.f32 0.0, %v10279
        %v10281 = vpop.f32.mrf.mxu0
        %10282 = vmatprep.mubr.bf16.mxu0 0
        %10283 = vmatmul.mubr.bf16.gmra.mxu0 %v10156
        %v10284 = vpop.f32.mrf.mxu0
        %v10285 = vadd.f32 0.0, %v10284
        %v10286 = vpop.f32.mrf.mxu0
        %v10287 = vpop.f32.mrf.mxu0
        %v10288 = vadd.f32 0.0, %v10287
        %v10289 = vpop.f32.mrf.mxu0
        %10290 = vmatprep.mubr.bf16.mxu0 0
        %10291 = vmatmul.mubr.bf16.gmra.mxu0 %v10157
        %v10292 = vpop.f32.mrf.mxu0
        %v10293 = vadd.f32 0.0, %v10292
        %v10294 = vpop.f32.mrf.mxu0
        %v10295 = vpop.f32.mrf.mxu0
        %v10296 = vadd.f32 0.0, %v10295
        %v10297 = vpop.f32.mrf.mxu0
        %10298 = vmatprep.mubr.bf16.mxu0 0
        %10299 = vmatmul.mubr.bf16.gmra.mxu0 %v10158
        %v10300 = vpop.f32.mrf.mxu0
        %v10301 = vadd.f32 0.0, %v10300
        %v10302 = vpop.f32.mrf.mxu0
        %v10303 = vpop.f32.mrf.mxu0
        %v10304 = vadd.f32 0.0, %v10303
        %v10305 = vpop.f32.mrf.mxu0
        %10306 = vmatprep.mubr.bf16.mxu0 0
        %10307 = vmatmul.mubr.bf16.gmra.mxu0 %v10159
        %v10308 = vpop.f32.mrf.mxu0
        %v10309 = vadd.f32 0.0, %v10308
        %v10310 = vpop.f32.mrf.mxu0
        %v10311 = vpop.f32.mrf.mxu0
        %v10312 = vadd.f32 0.0, %v10311
        %v10313 = vpop.f32.mrf.mxu0
        %10314 = vmatprep.mubr.bf16.mxu0 0
        %10315 = vmatmul.mubr.bf16.gmra.mxu0 %v10160
        %v10316 = vpop.f32.mrf.mxu0
        %v10317 = vadd.f32 0.0, %v10316
        %v10318 = vpop.f32.mrf.mxu0
        %v10319 = vpop.f32.mrf.mxu0
        %v10320 = vadd.f32 0.0, %v10319
        %v10321 = vpop.f32.mrf.mxu0
        %10322 = vmatprep.mubr.bf16.mxu0 0
        %10323 = vmatmul.mubr.bf16.gmra.mxu0 %v10161
        %v10324 = vpop.f32.mrf.mxu0
        %v10325 = vadd.f32 0.0, %v10324
        %v10326 = vpop.f32.mrf.mxu0
        %v10327 = vpop.f32.mrf.mxu0
        %v10328 = vadd.f32 0.0, %v10327
        %v10329 = vpop.f32.mrf.mxu0
        %10330 = vmatprep.mubr.bf16.mxu0 0
        %10331 = vmatmul.mubr.bf16.gmra.mxu0 %v10162
        %v10332 = vpop.f32.mrf.mxu0
        %v10333 = vadd.f32 0.0, %v10332
        %v10334 = vpop.f32.mrf.mxu0
        %v10335 = vpop.f32.mrf.mxu0
        %v10336 = vadd.f32 0.0, %v10335
        %v10337 = vpop.f32.mrf.mxu0
        %10338 = vmatprep.mubr.bf16.mxu0 0
        %10339 = vmatmul.mubr.bf16.gmra.mxu0 %v10163
        %v10340 = vpop.f32.mrf.mxu0
        %v10341 = vadd.f32 0.0, %v10340
        %v10342 = vpop.f32.mrf.mxu0
        %v10343 = vpop.f32.mrf.mxu0
        %v10344 = vadd.f32 0.0, %v10343
        %v10345 = vpop.f32.mrf.mxu0
        %10346 = vmatprep.mubr.bf16.mxu0 0
        %10347 = vmatmul.mubr.bf16.gmra.mxu0 %v10164
        %v10348 = vpop.f32.mrf.mxu0
        %v10349 = vadd.f32 0.0, %v10348
        %v10350 = vpop.f32.mrf.mxu0
        %v10351 = vpop.f32.mrf.mxu0
        %v10352 = vadd.f32 0.0, %v10351
        %v10353 = vpop.f32.mrf.mxu0
        %10354 = vmatprep.mubr.bf16.mxu0 0
        %10355 = vmatmul.mubr.bf16.gmra.mxu0 %v10165
        %v10356 = vpop.f32.mrf.mxu0
        %v10357 = vadd.f32 0.0, %v10356
        %v10358 = vpop.f32.mrf.mxu0
        %v10359 = vpop.f32.mrf.mxu0
        %v10360 = vadd.f32 0.0, %v10359
        %v10361 = vpop.f32.mrf.mxu0
        %10362 = vmatprep.mubr.bf16.mxu0 0
        %10363 = vmatmul.mubr.bf16.gmra.mxu0 %v10166
        %v10364 = vpop.f32.mrf.mxu0
        %v10365 = vadd.f32 0.0, %v10364
        %v10366 = vpop.f32.mrf.mxu0
        %v10367 = vpop.f32.mrf.mxu0
        %v10368 = vadd.f32 0.0, %v10367
        %v10369 = vpop.f32.mrf.mxu0
        %10370 = vmatprep.mubr.bf16.mxu0 0
        %10371 = vmatmul.mubr.bf16.gmra.mxu0 %v10167
        %v10372 = vpop.f32.mrf.mxu0
        %v10373 = vadd.f32 0.0, %v10372
        %v10374 = vpop.f32.mrf.mxu0
        %v10375 = vpop.f32.mrf.mxu0
        %v10376 = vadd.f32 0.0, %v10375
        %v10377 = vpop.f32.mrf.mxu0
        %10378 = vmatprep.mubr.bf16.mxu0 0
        %10379 = vmatmul.mubr.bf16.gmra.mxu0 %v10168
        %v10380 = vpop.f32.mrf.mxu0
        %v10381 = vadd.f32 0.0, %v10380
        %v10382 = vpop.f32.mrf.mxu0
        %v10383 = vpop.f32.mrf.mxu0
        %v10384 = vadd.f32 0.0, %v10383
        %v10385 = vpop.f32.mrf.mxu0
        %10386 = vmatprep.mubr.bf16.mxu0 0
        %10387 = vmatmul.mubr.bf16.gmra.mxu0 %v10169
        %v10388 = vpop.f32.mrf.mxu0
        %v10389 = vadd.f32 0.0, %v10388
        %v10390 = vpop.f32.mrf.mxu0
        %v10391 = vpop.f32.mrf.mxu0
        %v10392 = vadd.f32 0.0, %v10391
        %v10393 = vpop.f32.mrf.mxu0
        %10394 = vdwg.mxu0
        %v10395 = vadd.f32 %v9897, %v10269
        %v10396 = vadd.f32 %v9898, %v10272
        %v10397 = vadd.f32 %v9899, %v10277
        %v10398 = vadd.f32 %v9900, %v10280
        %v10399 = vadd.f32 %v9901, %v10285
        %v10400 = vadd.f32 %v9902, %v10288
        %v10401 = vadd.f32 %v9903, %v10293
        %v10402 = vadd.f32 %v9904, %v10296
        %v10403 = vadd.f32 %v9905, %v10301
        %v10404 = vadd.f32 %v9906, %v10304
        %v10405 = vadd.f32 %v9907, %v10309
        %v10406 = vadd.f32 %v9908, %v10312
        %v10407 = vadd.f32 %v9909, %v10317
        %v10408 = vadd.f32 %v9910, %v10320
        %v10409 = vadd.f32 %v9911, %v10325
        %v10410 = vadd.f32 %v9912, %v10328
        %v10411 = vadd.f32 %v9913, %v10333
        %v10412 = vadd.f32 %v9914, %v10336
        %v10413 = vadd.f32 %v9915, %v10341
        %v10414 = vadd.f32 %v9916, %v10344
        %v10415 = vadd.f32 %v9917, %v10349
        %v10416 = vadd.f32 %v9918, %v10352
        %v10417 = vadd.f32 %v9919, %v10357
        %v10418 = vadd.f32 %v9920, %v10360
        %v10419 = vadd.f32 %v9921, %v10365
        %v10420 = vadd.f32 %v9922, %v10368
        %v10421 = vadd.f32 %v9923, %v10373
        %v10422 = vadd.f32 %v9924, %v10376
        %v10423 = vadd.f32 %v9925, %v10381
        %v10424 = vadd.f32 %v9926, %v10384
        %v10425 = vadd.f32 %v9927, %v10389
        %v10426 = vadd.f32 %v9928, %v10392
        %v10427 = vld [vmem:[%s4619] sm:$0xf]
        %v10428 = vld [vmem:[%s4619 + $0x4] sm:$0xf]
        %v10429 = vld [vmem:[%s4619 + $0xc] sm:$0xf]
        %v10430 = vld [vmem:[%s4619 + $0x10] sm:$0xf]
        %v10431 = vld [vmem:[%s4619 + $0x18] sm:$0xf]
        %v10432 = vld [vmem:[%s4619 + $0x1c] sm:$0xf]
        %v10433 = vld [vmem:[%s4619 + $0x24] sm:$0xf]
        %v10434 = vld [vmem:[%s4619 + $0x28] sm:$0xf]
        %v10435 = vld [vmem:[%s4619 + $0x30] sm:$0xf]
        %v10436 = vld [vmem:[%s4619 + $0x34] sm:$0xf]
        %v10437 = vld [vmem:[%s4619 + $0x3c] sm:$0xf]
        %v10438 = vld [vmem:[%s4619 + $0x40] sm:$0xf]
        %v10439 = vld [vmem:[%s4619 + $0x48] sm:$0xf]
        %v10440 = vld [vmem:[%s4619 + $0x4c] sm:$0xf]
        %v10441 = vld [vmem:[%s4619 + $0x54] sm:$0xf]
        %v10442 = vld [vmem:[%s4619 + $0x58] sm:$0xf]
        %v10443 = vld [vmem:[%s4619 + $0x60] sm:$0xf]
        %v10444 = vld [vmem:[%s4619 + $0x64] sm:$0xf]
        %v10445 = vld [vmem:[%s4619 + $0x6c] sm:$0xf]
        %v10446 = vld [vmem:[%s4619 + $0x70] sm:$0xf]
        %v10447 = vld [vmem:[%s4619 + $0x78] sm:$0xf]
        %v10448 = vld [vmem:[%s4619 + $0x7c] sm:$0xf]
        %v10449 = vld [vmem:[%s4619 + $0x84] sm:$0xf]
        %v10450 = vld [vmem:[%s4619 + $0x88] sm:$0xf]
        %v10451 = vld [vmem:[%s4619 + $0x90] sm:$0xf]
        %v10452 = vld [vmem:[%s4619 + $0x94] sm:$0xf]
        %v10453 = vld [vmem:[%s4619 + $0x9c] sm:$0xf]
        %v10454 = vld [vmem:[%s4619 + $0xa0] sm:$0xf]
        %v10455 = vld [vmem:[%s4619 + $0xa8] sm:$0xf]
        %v10456 = vld [vmem:[%s4619 + $0xac] sm:$0xf]
        %v10457 = vld [vmem:[%s4619 + $0xb4] sm:$0xf]
        %v10458 = vld [vmem:[%s4619 + $0xb8] sm:$0xf]
        %s10459 = scalar_lea.vmem [#allocation3], 384
        %v10460 = vld [vmem:[%s10459] sm:$0xf]
        %v10461 = vld [vmem:[%s10459 + $0x4] sm:$0xf]
        %v10462 = vld [vmem:[%s10459 + $0x8] sm:$0xf]
        %v10463 = vld [vmem:[%s10459 + $0xc] sm:$0xf]
        %v10464 = vld [vmem:[%s10459 + $0x10] sm:$0xf]
        %v10465 = vld [vmem:[%s10459 + $0x14] sm:$0xf]
        %v10466 = vld [vmem:[%s10459 + $0x18] sm:$0xf]
        %v10467 = vld [vmem:[%s10459 + $0x1c] sm:$0xf]
        %v10468 = vld [vmem:[%s10459 + $0x20] sm:$0xf]
        %v10469 = vld [vmem:[%s10459 + $0x24] sm:$0xf]
        %v10470 = vld [vmem:[%s10459 + $0x28] sm:$0xf]
        %v10471 = vld [vmem:[%s10459 + $0x2c] sm:$0xf]
        %v10472 = vld [vmem:[%s10459 + $0x30] sm:$0xf]
        %v10473 = vld [vmem:[%s10459 + $0x34] sm:$0xf]
        %v10474 = vld [vmem:[%s10459 + $0x38] sm:$0xf]
        %v10475 = vld [vmem:[%s10459 + $0x3c] sm:$0xf]
        %v10508 = vunpack.c.l.b16 %v10427
        %v10509 = vunpack.c.l.b16 %v10428
        %v10510 = vunpack.c.l.b16 %v10429
        %v10511 = vunpack.c.l.b16 %v10430
        %v10512 = vunpack.c.l.b16 %v10431
        %v10513 = vunpack.c.l.b16 %v10432
        %v10514 = vunpack.c.l.b16 %v10433
        %v10515 = vunpack.c.l.b16 %v10434
        %v10516 = vunpack.c.l.b16 %v10435
        %v10517 = vunpack.c.l.b16 %v10436
        %v10518 = vunpack.c.l.b16 %v10437
        %v10519 = vunpack.c.l.b16 %v10438
        %v10520 = vunpack.c.l.b16 %v10439
        %v10521 = vunpack.c.l.b16 %v10440
        %v10522 = vunpack.c.l.b16 %v10441
        %v10523 = vunpack.c.l.b16 %v10442
        %v10524 = vunpack.c.l.b16 %v10443
        %v10525 = vunpack.c.l.b16 %v10444
        %v10526 = vunpack.c.l.b16 %v10445
        %v10527 = vunpack.c.l.b16 %v10446
        %v10528 = vunpack.c.l.b16 %v10447
        %v10529 = vunpack.c.l.b16 %v10448
        %v10530 = vunpack.c.l.b16 %v10449
        %v10531 = vunpack.c.l.b16 %v10450
        %v10532 = vunpack.c.l.b16 %v10451
        %v10533 = vunpack.c.l.b16 %v10452
        %v10534 = vunpack.c.l.b16 %v10453
        %v10535 = vunpack.c.l.b16 %v10454
        %v10536 = vunpack.c.l.b16 %v10455
        %v10537 = vunpack.c.l.b16 %v10456
        %v10538 = vunpack.c.l.b16 %v10457
        %v10539 = vunpack.c.l.b16 %v10458
        %v10540 = vpack.c.b16 %v10509, %v10508
        %v10541 = vpack.c.b16 %v10511, %v10510
        %v10542 = vpack.c.b16 %v10513, %v10512
        %v10543 = vpack.c.b16 %v10515, %v10514
        %v10544 = vpack.c.b16 %v10517, %v10516
        %v10545 = vpack.c.b16 %v10519, %v10518
        %v10546 = vpack.c.b16 %v10521, %v10520
        %v10547 = vpack.c.b16 %v10523, %v10522
        %v10548 = vpack.c.b16 %v10525, %v10524
        %v10549 = vpack.c.b16 %v10527, %v10526
        %v10550 = vpack.c.b16 %v10529, %v10528
        %v10551 = vpack.c.b16 %v10531, %v10530
        %v10552 = vpack.c.b16 %v10533, %v10532
        %v10553 = vpack.c.b16 %v10535, %v10534
        %v10554 = vpack.c.b16 %v10537, %v10536
        %v10555 = vpack.c.b16 %v10539, %v10538
        %v10588 = vunpack.c.l.b16 %v10460
        %v10589 = vunpack.c.l.b16 %v10461
        %v10590 = vunpack.c.l.b16 %v10462
        %v10591 = vunpack.c.l.b16 %v10463
        %v10592 = vunpack.c.l.b16 %v10464
        %v10593 = vunpack.c.l.b16 %v10465
        %v10594 = vunpack.c.l.b16 %v10466
        %v10595 = vunpack.c.l.b16 %v10467
        %v10596 = vunpack.c.l.b16 %v10468
        %v10597 = vunpack.c.l.b16 %v10469
        %v10598 = vunpack.c.l.b16 %v10470
        %v10599 = vunpack.c.l.b16 %v10471
        %v10600 = vunpack.c.l.b16 %v10472
        %v10601 = vunpack.c.l.b16 %v10473
        %v10602 = vunpack.c.l.b16 %v10474
        %v10603 = vunpack.c.l.b16 %v10475
        %v10604 = vpack.c.b16 %v10589, %v10588
        %v10605 = vpack.c.b16 %v10591, %v10590
        %v10606 = vpack.c.b16 %v10593, %v10592
        %v10607 = vpack.c.b16 %v10595, %v10594
        %v10608 = vpack.c.b16 %v10597, %v10596
        %v10609 = vpack.c.b16 %v10599, %v10598
        %v10610 = vpack.c.b16 %v10601, %v10600
        %v10611 = vpack.c.b16 %v10603, %v10602
        %10620 = vmatprep.subr.bf16.mxu0 0
        %10621 = vmatpush1.bf16.msra.mxu0 %v10611
        %10622 = vmatprep.subr.bf16.mxu0 0
        %10623 = vmatpush1.bf16.msra.mxu0 %v10610
        %10624 = vmatprep.subr.bf16.mxu0 0
        %10625 = vmatpush1.bf16.msra.mxu0 %v10609
        %10626 = vmatprep.subr.bf16.mxu0 0
        %10627 = vmatpush1.bf16.msra.mxu0 %v10608
        %10628 = vmatprep.subr.bf16.mxu0 0
        %10629 = vmatpush1.bf16.msra.mxu0 %v10607
        %10630 = vmatprep.subr.bf16.mxu0 0
        %10631 = vmatpush1.bf16.msra.mxu0 %v10606
        %10632 = vmatprep.subr.bf16.mxu0 0
        %10633 = vmatpush1.bf16.msra.mxu0 %v10605
        %10634 = vmatprep.subr.bf16.mxu0 0
        %10635 = vmatpush1.bf16.msra.mxu0 %v10604
        %10636 = vmatprep.subr.bf16.mxu0 0
        %10637 = vmatpush2.bf16.msra.mxu0 0
        %10638 = vmatprep.subr.bf16.mxu0 0
        %10639 = vmatpush2.bf16.msra.mxu0 0
        %10640 = vmatprep.subr.bf16.mxu0 0
        %10641 = vmatpush2.bf16.msra.mxu0 0
        %10642 = vmatprep.subr.bf16.mxu0 0
        %10643 = vmatpush2.bf16.msra.mxu0 0
        %10644 = vmatprep.subr.bf16.mxu0 0
        %10645 = vmatpush2.bf16.msra.mxu0 0
        %10646 = vmatprep.subr.bf16.mxu0 0
        %10647 = vmatpush2.bf16.msra.mxu0 0
        %10648 = vmatprep.subr.bf16.mxu0 0
        %10649 = vmatpush2.bf16.msra.mxu0 0
        %10650 = vmatprep.subr.bf16.mxu0 0
        %10651 = vmatpush2.bf16.msra.mxu0 0
        %10652 = vmatprep.mubr.bf16.mxu0 0
        %10653 = vmatmul.mubr.bf16.gmra.mxu0 %v10540
        %v10654 = vpop.f32.mrf.mxu0
        %v10655 = vadd.f32 0.0, %v10654
        %v10656 = vpop.f32.mrf.mxu0
        %v10657 = vpop.f32.mrf.mxu0
        %v10658 = vadd.f32 0.0, %v10657
        %v10659 = vpop.f32.mrf.mxu0
        %10660 = vmatprep.mubr.bf16.mxu0 0
        %10661 = vmatmul.mubr.bf16.gmra.mxu0 %v10541
        %v10662 = vpop.f32.mrf.mxu0
        %v10663 = vadd.f32 0.0, %v10662
        %v10664 = vpop.f32.mrf.mxu0
        %v10665 = vpop.f32.mrf.mxu0
        %v10666 = vadd.f32 0.0, %v10665
        %v10667 = vpop.f32.mrf.mxu0
        %10668 = vmatprep.mubr.bf16.mxu0 0
        %10669 = vmatmul.mubr.bf16.gmra.mxu0 %v10542
        %v10670 = vpop.f32.mrf.mxu0
        %v10671 = vadd.f32 0.0, %v10670
        %v10672 = vpop.f32.mrf.mxu0
        %v10673 = vpop.f32.mrf.mxu0
        %v10674 = vadd.f32 0.0, %v10673
        %v10675 = vpop.f32.mrf.mxu0
        %10676 = vmatprep.mubr.bf16.mxu0 0
        %10677 = vmatmul.mubr.bf16.gmra.mxu0 %v10543
        %v10678 = vpop.f32.mrf.mxu0
        %v10679 = vadd.f32 0.0, %v10678
        %v10680 = vpop.f32.mrf.mxu0
        %v10681 = vpop.f32.mrf.mxu0
        %v10682 = vadd.f32 0.0, %v10681
        %v10683 = vpop.f32.mrf.mxu0
        %10684 = vmatprep.mubr.bf16.mxu0 0
        %10685 = vmatmul.mubr.bf16.gmra.mxu0 %v10544
        %v10686 = vpop.f32.mrf.mxu0
        %v10687 = vadd.f32 0.0, %v10686
        %v10688 = vpop.f32.mrf.mxu0
        %v10689 = vpop.f32.mrf.mxu0
        %v10690 = vadd.f32 0.0, %v10689
        %v10691 = vpop.f32.mrf.mxu0
        %10692 = vmatprep.mubr.bf16.mxu0 0
        %10693 = vmatmul.mubr.bf16.gmra.mxu0 %v10545
        %v10694 = vpop.f32.mrf.mxu0
        %v10695 = vadd.f32 0.0, %v10694
        %v10696 = vpop.f32.mrf.mxu0
        %v10697 = vpop.f32.mrf.mxu0
        %v10698 = vadd.f32 0.0, %v10697
        %v10699 = vpop.f32.mrf.mxu0
        %10700 = vmatprep.mubr.bf16.mxu0 0
        %10701 = vmatmul.mubr.bf16.gmra.mxu0 %v10546
        %v10702 = vpop.f32.mrf.mxu0
        %v10703 = vadd.f32 0.0, %v10702
        %v10704 = vpop.f32.mrf.mxu0
        %v10705 = vpop.f32.mrf.mxu0
        %v10706 = vadd.f32 0.0, %v10705
        %v10707 = vpop.f32.mrf.mxu0
        %10708 = vmatprep.mubr.bf16.mxu0 0
        %10709 = vmatmul.mubr.bf16.gmra.mxu0 %v10547
        %v10710 = vpop.f32.mrf.mxu0
        %v10711 = vadd.f32 0.0, %v10710
        %v10712 = vpop.f32.mrf.mxu0
        %v10713 = vpop.f32.mrf.mxu0
        %v10714 = vadd.f32 0.0, %v10713
        %v10715 = vpop.f32.mrf.mxu0
        %10716 = vmatprep.mubr.bf16.mxu0 0
        %10717 = vmatmul.mubr.bf16.gmra.mxu0 %v10548
        %v10718 = vpop.f32.mrf.mxu0
        %v10719 = vadd.f32 0.0, %v10718
        %v10720 = vpop.f32.mrf.mxu0
        %v10721 = vpop.f32.mrf.mxu0
        %v10722 = vadd.f32 0.0, %v10721
        %v10723 = vpop.f32.mrf.mxu0
        %10724 = vmatprep.mubr.bf16.mxu0 0
        %10725 = vmatmul.mubr.bf16.gmra.mxu0 %v10549
        %v10726 = vpop.f32.mrf.mxu0
        %v10727 = vadd.f32 0.0, %v10726
        %v10728 = vpop.f32.mrf.mxu0
        %v10729 = vpop.f32.mrf.mxu0
        %v10730 = vadd.f32 0.0, %v10729
        %v10731 = vpop.f32.mrf.mxu0
        %10732 = vmatprep.mubr.bf16.mxu0 0
        %10733 = vmatmul.mubr.bf16.gmra.mxu0 %v10550
        %v10734 = vpop.f32.mrf.mxu0
        %v10735 = vadd.f32 0.0, %v10734
        %v10736 = vpop.f32.mrf.mxu0
        %v10737 = vpop.f32.mrf.mxu0
        %v10738 = vadd.f32 0.0, %v10737
        %v10739 = vpop.f32.mrf.mxu0
        %10740 = vmatprep.mubr.bf16.mxu0 0
        %10741 = vmatmul.mubr.bf16.gmra.mxu0 %v10551
        %v10742 = vpop.f32.mrf.mxu0
        %v10743 = vadd.f32 0.0, %v10742
        %v10744 = vpop.f32.mrf.mxu0
        %v10745 = vpop.f32.mrf.mxu0
        %v10746 = vadd.f32 0.0, %v10745
        %v10747 = vpop.f32.mrf.mxu0
        %10748 = vmatprep.mubr.bf16.mxu0 0
        %10749 = vmatmul.mubr.bf16.gmra.mxu0 %v10552
        %v10750 = vpop.f32.mrf.mxu0
        %v10751 = vadd.f32 0.0, %v10750
        %v10752 = vpop.f32.mrf.mxu0
        %v10753 = vpop.f32.mrf.mxu0
        %v10754 = vadd.f32 0.0, %v10753
        %v10755 = vpop.f32.mrf.mxu0
        %10756 = vmatprep.mubr.bf16.mxu0 0
        %10757 = vmatmul.mubr.bf16.gmra.mxu0 %v10553
        %v10758 = vpop.f32.mrf.mxu0
        %v10759 = vadd.f32 0.0, %v10758
        %v10760 = vpop.f32.mrf.mxu0
        %v10761 = vpop.f32.mrf.mxu0
        %v10762 = vadd.f32 0.0, %v10761
        %v10763 = vpop.f32.mrf.mxu0
        %10764 = vmatprep.mubr.bf16.mxu0 0
        %10765 = vmatmul.mubr.bf16.gmra.mxu0 %v10554
        %v10766 = vpop.f32.mrf.mxu0
        %v10767 = vadd.f32 0.0, %v10766
        %v10768 = vpop.f32.mrf.mxu0
        %v10769 = vpop.f32.mrf.mxu0
        %v10770 = vadd.f32 0.0, %v10769
        %v10771 = vpop.f32.mrf.mxu0
        %10772 = vmatprep.mubr.bf16.mxu0 0
        %10773 = vmatmul.mubr.bf16.gmra.mxu0 %v10555
        %v10774 = vpop.f32.mrf.mxu0
        %v10775 = vadd.f32 0.0, %v10774
        %v10776 = vpop.f32.mrf.mxu0
        %v10777 = vpop.f32.mrf.mxu0
        %v10778 = vadd.f32 0.0, %v10777
        %v10779 = vpop.f32.mrf.mxu0
        %10780 = vdwg.mxu0
        %v10781 = vadd.f32 %v10395, %v10655
        %v10782 = vadd.f32 %v10396, %v10658
        %v10783 = vadd.f32 %v10397, %v10663
        %v10784 = vadd.f32 %v10398, %v10666
        %v10785 = vadd.f32 %v10399, %v10671
        %v10786 = vadd.f32 %v10400, %v10674
        %v10787 = vadd.f32 %v10401, %v10679
        %v10788 = vadd.f32 %v10402, %v10682
        %v10789 = vadd.f32 %v10403, %v10687
        %v10790 = vadd.f32 %v10404, %v10690
        %v10791 = vadd.f32 %v10405, %v10695
        %v10792 = vadd.f32 %v10406, %v10698
        %v10793 = vadd.f32 %v10407, %v10703
        %v10794 = vadd.f32 %v10408, %v10706
        %v10795 = vadd.f32 %v10409, %v10711
        %v10796 = vadd.f32 %v10410, %v10714
        %v10797 = vadd.f32 %v10411, %v10719
        %v10798 = vadd.f32 %v10412, %v10722
        %v10799 = vadd.f32 %v10413, %v10727
        %v10800 = vadd.f32 %v10414, %v10730
        %v10801 = vadd.f32 %v10415, %v10735
        %v10802 = vadd.f32 %v10416, %v10738
        %v10803 = vadd.f32 %v10417, %v10743
        %v10804 = vadd.f32 %v10418, %v10746
        %v10805 = vadd.f32 %v10419, %v10751
        %v10806 = vadd.f32 %v10420, %v10754
        %v10807 = vadd.f32 %v10421, %v10759
        %v10808 = vadd.f32 %v10422, %v10762
        %v10809 = vadd.f32 %v10423, %v10767
        %v10810 = vadd.f32 %v10424, %v10770
        %v10811 = vadd.f32 %v10425, %v10775
        %v10812 = vadd.f32 %v10426, %v10778
        %v10813 = vld [vmem:[%s4619] sm:$0xf]
        %v10814 = vld [vmem:[%s4619 + $0x4] sm:$0xf]
        %v10815 = vld [vmem:[%s4619 + $0x8] sm:$0x1]
        %v10816 = vld [vmem:[%s4619 + $0xc] sm:$0xf]
        %v10817 = vld [vmem:[%s4619 + $0x10] sm:$0xf]
        %v10818 = vld [vmem:[%s4619 + $0x14] sm:$0x1]
        %v10819 = vld [vmem:[%s4619 + $0x18] sm:$0xf]
        %v10820 = vld [vmem:[%s4619 + $0x1c] sm:$0xf]
        %v10821 = vld [vmem:[%s4619 + $0x20] sm:$0x1]
        %v10822 = vld [vmem:[%s4619 + $0x24] sm:$0xf]
        %v10823 = vld [vmem:[%s4619 + $0x28] sm:$0xf]
        %v10824 = vld [vmem:[%s4619 + $0x2c] sm:$0x1]
        %v10825 = vld [vmem:[%s4619 + $0x30] sm:$0xf]
        %v10826 = vld [vmem:[%s4619 + $0x34] sm:$0xf]
        %v10827 = vld [vmem:[%s4619 + $0x38] sm:$0x1]
        %v10828 = vld [vmem:[%s4619 + $0x3c] sm:$0xf]
        %v10829 = vld [vmem:[%s4619 + $0x40] sm:$0xf]
        %v10830 = vld [vmem:[%s4619 + $0x44] sm:$0x1]
        %v10831 = vld [vmem:[%s4619 + $0x48] sm:$0xf]
        %v10832 = vld [vmem:[%s4619 + $0x4c] sm:$0xf]
        %v10833 = vld [vmem:[%s4619 + $0x50] sm:$0x1]
        %v10834 = vld [vmem:[%s4619 + $0x54] sm:$0xf]
        %v10835 = vld [vmem:[%s4619 + $0x58] sm:$0xf]
        %v10836 = vld [vmem:[%s4619 + $0x5c] sm:$0x1]
        %v10837 = vld [vmem:[%s4619 + $0x60] sm:$0xf]
        %v10838 = vld [vmem:[%s4619 + $0x64] sm:$0xf]
        %v10839 = vld [vmem:[%s4619 + $0x68] sm:$0x1]
        %v10840 = vld [vmem:[%s4619 + $0x6c] sm:$0xf]
        %v10841 = vld [vmem:[%s4619 + $0x70] sm:$0xf]
        %v10842 = vld [vmem:[%s4619 + $0x74] sm:$0x1]
        %v10843 = vld [vmem:[%s4619 + $0x78] sm:$0xf]
        %v10844 = vld [vmem:[%s4619 + $0x7c] sm:$0xf]
        %v10845 = vld [vmem:[%s4619 + $0x80] sm:$0x1]
        %v10846 = vld [vmem:[%s4619 + $0x84] sm:$0xf]
        %v10847 = vld [vmem:[%s4619 + $0x88] sm:$0xf]
        %v10848 = vld [vmem:[%s4619 + $0x8c] sm:$0x1]
        %v10849 = vld [vmem:[%s4619 + $0x90] sm:$0xf]
        %v10850 = vld [vmem:[%s4619 + $0x94] sm:$0xf]
        %v10851 = vld [vmem:[%s4619 + $0x98] sm:$0x1]
        %v10852 = vld [vmem:[%s4619 + $0x9c] sm:$0xf]
        %v10853 = vld [vmem:[%s4619 + $0xa0] sm:$0xf]
        %v10854 = vld [vmem:[%s4619 + $0xa4] sm:$0x1]
        %v10855 = vld [vmem:[%s4619 + $0xa8] sm:$0xf]
        %v10856 = vld [vmem:[%s4619 + $0xac] sm:$0xf]
        %v10857 = vld [vmem:[%s4619 + $0xb0] sm:$0x1]
        %v10858 = vld [vmem:[%s4619 + $0xb4] sm:$0xf]
        %v10859 = vld [vmem:[%s4619 + $0xb8] sm:$0xf]
        %v10860 = vld [vmem:[%s4619 + $0xbc] sm:$0x1]
        %v10862 = vshrl.u32 %v10813, 16
        %v10864 = vrot.slane %v10862, 4
        %v10865 = vshll.u32 %v10813, 16
        %v10867 = vrot.slane %v10865, 5
        %v10868 = vor.u32 %v10864, %v10867
        %v10869 = vrot.slane %v10868, 4
        %v10871 = vshll.u32 %v10814, 16
        %v10873 = vrot.slane %v10871, 5
        %v10874 = vsel %vm1516, %v10869, %v10873
        %v10875 = vshrl.u32 %v10814, 16
        %v10877 = vrot.slane %v10875, 4
        %v10878 = vor.u32 %v10877, %v10873
        %v10879 = vrot.slane %v10878, 4
        %v10881 = vshll.u32 %v10815, 16
        %v10883 = vrot.slane %v10881, 5
        %v10884 = vsel %vm1516, %v10879, %v10883
        %v10886 = vshrl.u32 %v10816, 16
        %v10888 = vrot.slane %v10886, 4
        %v10889 = vshll.u32 %v10816, 16
        %v10891 = vrot.slane %v10889, 5
        %v10892 = vor.u32 %v10888, %v10891
        %v10893 = vrot.slane %v10892, 4
        %v10895 = vshll.u32 %v10817, 16
        %v10897 = vrot.slane %v10895, 5
        %v10898 = vsel %vm1516, %v10893, %v10897
        %v10899 = vshrl.u32 %v10817, 16
        %v10901 = vrot.slane %v10899, 4
        %v10902 = vor.u32 %v10901, %v10897
        %v10903 = vrot.slane %v10902, 4
        %v10905 = vshll.u32 %v10818, 16
        %v10907 = vrot.slane %v10905, 5
        %v10908 = vsel %vm1516, %v10903, %v10907
        %v10910 = vshrl.u32 %v10819, 16
        %v10912 = vrot.slane %v10910, 4
        %v10913 = vshll.u32 %v10819, 16
        %v10915 = vrot.slane %v10913, 5
        %v10916 = vor.u32 %v10912, %v10915
        %v10917 = vrot.slane %v10916, 4
        %v10919 = vshll.u32 %v10820, 16
        %v10921 = vrot.slane %v10919, 5
        %v10922 = vsel %vm1516, %v10917, %v10921
        %v10923 = vshrl.u32 %v10820, 16
        %v10925 = vrot.slane %v10923, 4
        %v10926 = vor.u32 %v10925, %v10921
        %v10927 = vrot.slane %v10926, 4
        %v10929 = vshll.u32 %v10821, 16
        %v10931 = vrot.slane %v10929, 5
        %v10932 = vsel %vm1516, %v10927, %v10931
        %v10934 = vshrl.u32 %v10822, 16
        %v10936 = vrot.slane %v10934, 4
        %v10937 = vshll.u32 %v10822, 16
        %v10939 = vrot.slane %v10937, 5
        %v10940 = vor.u32 %v10936, %v10939
        %v10941 = vrot.slane %v10940, 4
        %v10943 = vshll.u32 %v10823, 16
        %v10945 = vrot.slane %v10943, 5
        %v10946 = vsel %vm1516, %v10941, %v10945
        %v10947 = vshrl.u32 %v10823, 16
        %v10949 = vrot.slane %v10947, 4
        %v10950 = vor.u32 %v10949, %v10945
        %v10951 = vrot.slane %v10950, 4
        %v10953 = vshll.u32 %v10824, 16
        %v10955 = vrot.slane %v10953, 5
        %v10956 = vsel %vm1516, %v10951, %v10955
        %v10958 = vshrl.u32 %v10825, 16
        %v10960 = vrot.slane %v10958, 4
        %v10961 = vshll.u32 %v10825, 16
        %v10963 = vrot.slane %v10961, 5
        %v10964 = vor.u32 %v10960, %v10963
        %v10965 = vrot.slane %v10964, 4
        %v10967 = vshll.u32 %v10826, 16
        %v10969 = vrot.slane %v10967, 5
        %v10970 = vsel %vm1516, %v10965, %v10969
        %v10971 = vshrl.u32 %v10826, 16
        %v10973 = vrot.slane %v10971, 4
        %v10974 = vor.u32 %v10973, %v10969
        %v10975 = vrot.slane %v10974, 4
        %v10977 = vshll.u32 %v10827, 16
        %v10979 = vrot.slane %v10977, 5
        %v10980 = vsel %vm1516, %v10975, %v10979
        %v10982 = vshrl.u32 %v10828, 16
        %v10984 = vrot.slane %v10982, 4
        %v10985 = vshll.u32 %v10828, 16
        %v10987 = vrot.slane %v10985, 5
        %v10988 = vor.u32 %v10984, %v10987
        %v10989 = vrot.slane %v10988, 4
        %v10991 = vshll.u32 %v10829, 16
        %v10993 = vrot.slane %v10991, 5
        %v10994 = vsel %vm1516, %v10989, %v10993
        %v10995 = vshrl.u32 %v10829, 16
        %v10997 = vrot.slane %v10995, 4
        %v10998 = vor.u32 %v10997, %v10993
        %v10999 = vrot.slane %v10998, 4
        %v11001 = vshll.u32 %v10830, 16
        %v11003 = vrot.slane %v11001, 5
        %v11004 = vsel %vm1516, %v10999, %v11003
        %v11006 = vshrl.u32 %v10831, 16
        %v11008 = vrot.slane %v11006, 4
        %v11009 = vshll.u32 %v10831, 16
        %v11011 = vrot.slane %v11009, 5
        %v11012 = vor.u32 %v11008, %v11011
        %v11013 = vrot.slane %v11012, 4
        %v11015 = vshll.u32 %v10832, 16
        %v11017 = vrot.slane %v11015, 5
        %v11018 = vsel %vm1516, %v11013, %v11017
        %v11019 = vshrl.u32 %v10832, 16
        %v11021 = vrot.slane %v11019, 4
        %v11022 = vor.u32 %v11021, %v11017
        %v11023 = vrot.slane %v11022, 4
        %v11025 = vshll.u32 %v10833, 16
        %v11027 = vrot.slane %v11025, 5
        %v11028 = vsel %vm1516, %v11023, %v11027
        %v11030 = vshrl.u32 %v10834, 16
        %v11032 = vrot.slane %v11030, 4
        %v11033 = vshll.u32 %v10834, 16
        %v11035 = vrot.slane %v11033, 5
        %v11036 = vor.u32 %v11032, %v11035
        %v11037 = vrot.slane %v11036, 4
        %v11039 = vshll.u32 %v10835, 16
        %v11041 = vrot.slane %v11039, 5
        %v11042 = vsel %vm1516, %v11037, %v11041
        %v11043 = vshrl.u32 %v10835, 16
        %v11045 = vrot.slane %v11043, 4
        %v11046 = vor.u32 %v11045, %v11041
        %v11047 = vrot.slane %v11046, 4
        %v11049 = vshll.u32 %v10836, 16
        %v11051 = vrot.slane %v11049, 5
        %v11052 = vsel %vm1516, %v11047, %v11051
        %v11054 = vshrl.u32 %v10837, 16
        %v11056 = vrot.slane %v11054, 4
        %v11057 = vshll.u32 %v10837, 16
        %v11059 = vrot.slane %v11057, 5
        %v11060 = vor.u32 %v11056, %v11059
        %v11061 = vrot.slane %v11060, 4
        %v11063 = vshll.u32 %v10838, 16
        %v11065 = vrot.slane %v11063, 5
        %v11066 = vsel %vm1516, %v11061, %v11065
        %v11067 = vshrl.u32 %v10838, 16
        %v11069 = vrot.slane %v11067, 4
        %v11070 = vor.u32 %v11069, %v11065
        %v11071 = vrot.slane %v11070, 4
        %v11073 = vshll.u32 %v10839, 16
        %v11075 = vrot.slane %v11073, 5
        %v11076 = vsel %vm1516, %v11071, %v11075
        %v11078 = vshrl.u32 %v10840, 16
        %v11080 = vrot.slane %v11078, 4
        %v11081 = vshll.u32 %v10840, 16
        %v11083 = vrot.slane %v11081, 5
        %v11084 = vor.u32 %v11080, %v11083
        %v11085 = vrot.slane %v11084, 4
        %v11087 = vshll.u32 %v10841, 16
        %v11089 = vrot.slane %v11087, 5
        %v11090 = vsel %vm1516, %v11085, %v11089
        %v11091 = vshrl.u32 %v10841, 16
        %v11093 = vrot.slane %v11091, 4
        %v11094 = vor.u32 %v11093, %v11089
        %v11095 = vrot.slane %v11094, 4
        %v11097 = vshll.u32 %v10842, 16
        %v11099 = vrot.slane %v11097, 5
        %v11100 = vsel %vm1516, %v11095, %v11099
        %v11102 = vshrl.u32 %v10843, 16
        %v11104 = vrot.slane %v11102, 4
        %v11105 = vshll.u32 %v10843, 16
        %v11107 = vrot.slane %v11105, 5
        %v11108 = vor.u32 %v11104, %v11107
        %v11109 = vrot.slane %v11108, 4
        %v11111 = vshll.u32 %v10844, 16
        %v11113 = vrot.slane %v11111, 5
        %v11114 = vsel %vm1516, %v11109, %v11113
        %v11115 = vshrl.u32 %v10844, 16
        %v11117 = vrot.slane %v11115, 4
        %v11118 = vor.u32 %v11117, %v11113
        %v11119 = vrot.slane %v11118, 4
        %v11121 = vshll.u32 %v10845, 16
        %v11123 = vrot.slane %v11121, 5
        %v11124 = vsel %vm1516, %v11119, %v11123
        %v11126 = vshrl.u32 %v10846, 16
        %v11128 = vrot.slane %v11126, 4
        %v11129 = vshll.u32 %v10846, 16
        %v11131 = vrot.slane %v11129, 5
        %v11132 = vor.u32 %v11128, %v11131
        %v11133 = vrot.slane %v11132, 4
        %v11135 = vshll.u32 %v10847, 16
        %v11137 = vrot.slane %v11135, 5
        %v11138 = vsel %vm1516, %v11133, %v11137
        %v11139 = vshrl.u32 %v10847, 16
        %v11141 = vrot.slane %v11139, 4
        %v11142 = vor.u32 %v11141, %v11137
        %v11143 = vrot.slane %v11142, 4
        %v11145 = vshll.u32 %v10848, 16
        %v11147 = vrot.slane %v11145, 5
        %v11148 = vsel %vm1516, %v11143, %v11147
        %v11150 = vshrl.u32 %v10849, 16
        %v11152 = vrot.slane %v11150, 4
        %v11153 = vshll.u32 %v10849, 16
        %v11155 = vrot.slane %v11153, 5
        %v11156 = vor.u32 %v11152, %v11155
        %v11157 = vrot.slane %v11156, 4
        %v11159 = vshll.u32 %v10850, 16
        %v11161 = vrot.slane %v11159, 5
        %v11162 = vsel %vm1516, %v11157, %v11161
        %v11163 = vshrl.u32 %v10850, 16
        %v11165 = vrot.slane %v11163, 4
        %v11166 = vor.u32 %v11165, %v11161
        %v11167 = vrot.slane %v11166, 4
        %v11169 = vshll.u32 %v10851, 16
        %v11171 = vrot.slane %v11169, 5
        %v11172 = vsel %vm1516, %v11167, %v11171
        %v11174 = vshrl.u32 %v10852, 16
        %v11176 = vrot.slane %v11174, 4
        %v11177 = vshll.u32 %v10852, 16
        %v11179 = vrot.slane %v11177, 5
        %v11180 = vor.u32 %v11176, %v11179
        %v11181 = vrot.slane %v11180, 4
        %v11183 = vshll.u32 %v10853, 16
        %v11185 = vrot.slane %v11183, 5
        %v11186 = vsel %vm1516, %v11181, %v11185
        %v11187 = vshrl.u32 %v10853, 16
        %v11189 = vrot.slane %v11187, 4
        %v11190 = vor.u32 %v11189, %v11185
        %v11191 = vrot.slane %v11190, 4
        %v11193 = vshll.u32 %v10854, 16
        %v11195 = vrot.slane %v11193, 5
        %v11196 = vsel %vm1516, %v11191, %v11195
        %v11198 = vshrl.u32 %v10855, 16
        %v11200 = vrot.slane %v11198, 4
        %v11201 = vshll.u32 %v10855, 16
        %v11203 = vrot.slane %v11201, 5
        %v11204 = vor.u32 %v11200, %v11203
        %v11205 = vrot.slane %v11204, 4
        %v11207 = vshll.u32 %v10856, 16
        %v11209 = vrot.slane %v11207, 5
        %v11210 = vsel %vm1516, %v11205, %v11209
        %v11211 = vshrl.u32 %v10856, 16
        %v11213 = vrot.slane %v11211, 4
        %v11214 = vor.u32 %v11213, %v11209
        %v11215 = vrot.slane %v11214, 4
        %v11217 = vshll.u32 %v10857, 16
        %v11219 = vrot.slane %v11217, 5
        %v11220 = vsel %vm1516, %v11215, %v11219
        %v11222 = vshrl.u32 %v10858, 16
        %v11224 = vrot.slane %v11222, 4
        %v11225 = vshll.u32 %v10858, 16
        %v11227 = vrot.slane %v11225, 5
        %v11228 = vor.u32 %v11224, %v11227
        %v11229 = vrot.slane %v11228, 4
        %v11231 = vshll.u32 %v10859, 16
        %v11233 = vrot.slane %v11231, 5
        %v11234 = vsel %vm1516, %v11229, %v11233
        %v11235 = vshrl.u32 %v10859, 16
        %v11237 = vrot.slane %v11235, 4
        %v11238 = vor.u32 %v11237, %v11233
        %v11239 = vrot.slane %v11238, 4
        %v11241 = vshll.u32 %v10860, 16
        %v11243 = vrot.slane %v11241, 5
        %v11244 = vsel %vm1516, %v11239, %v11243
        %s11245 = scalar_lea.vmem [#allocation3], 448
        %v11246 = vld [vmem:[%s11245] sm:$0xf]
        %v11247 = vld [vmem:[%s11245 + $0x4] sm:$0xf]
        %v11248 = vld [vmem:[%s11245 + $0x8] sm:$0xf]
        %v11249 = vld [vmem:[%s11245 + $0xc] sm:$0xf]
        %v11250 = vld [vmem:[%s11245 + $0x10] sm:$0xf]
        %v11251 = vld [vmem:[%s11245 + $0x14] sm:$0xf]
        %v11252 = vld [vmem:[%s11245 + $0x18] sm:$0xf]
        %v11253 = vld [vmem:[%s11245 + $0x1c] sm:$0xf]
        %v11254 = vld [vmem:[%s11245 + $0x20] sm:$0xf]
        %v11255 = vld [vmem:[%s11245 + $0x24] sm:$0xf]
        %v11256 = vld [vmem:[%s11245 + $0x28] sm:$0xf]
        %v11257 = vld [vmem:[%s11245 + $0x2c] sm:$0xf]
        %v11258 = vld [vmem:[%s11245 + $0x30] sm:$0xf]
        %v11259 = vld [vmem:[%s11245 + $0x34] sm:$0xf]
        %v11260 = vld [vmem:[%s11245 + $0x38] sm:$0xf]
        %v11261 = vld [vmem:[%s11245 + $0x3c] sm:$0xf]
        %v11262 = vunpack.c.l.b16 %v10874
        %v11263 = vunpack.c.l.b16 %v10884
        %v11264 = vunpack.c.l.b16 %v10898
        %v11265 = vunpack.c.l.b16 %v10908
        %v11266 = vunpack.c.l.b16 %v10922
        %v11267 = vunpack.c.l.b16 %v10932
        %v11268 = vunpack.c.l.b16 %v10946
        %v11269 = vunpack.c.l.b16 %v10956
        %v11270 = vunpack.c.l.b16 %v10970
        %v11271 = vunpack.c.l.b16 %v10980
        %v11272 = vunpack.c.l.b16 %v10994
        %v11273 = vunpack.c.l.b16 %v11004
        %v11274 = vunpack.c.l.b16 %v11018
        %v11275 = vunpack.c.l.b16 %v11028
        %v11276 = vunpack.c.l.b16 %v11042
        %v11277 = vunpack.c.l.b16 %v11052
        %v11278 = vunpack.c.l.b16 %v11066
        %v11279 = vunpack.c.l.b16 %v11076
        %v11280 = vunpack.c.l.b16 %v11090
        %v11281 = vunpack.c.l.b16 %v11100
        %v11282 = vunpack.c.l.b16 %v11114
        %v11283 = vunpack.c.l.b16 %v11124
        %v11284 = vunpack.c.l.b16 %v11138
        %v11285 = vunpack.c.l.b16 %v11148
        %v11286 = vunpack.c.l.b16 %v11162
        %v11287 = vunpack.c.l.b16 %v11172
        %v11288 = vunpack.c.l.b16 %v11186
        %v11289 = vunpack.c.l.b16 %v11196
        %v11290 = vunpack.c.l.b16 %v11210
        %v11291 = vunpack.c.l.b16 %v11220
        %v11292 = vunpack.c.l.b16 %v11234
        %v11293 = vunpack.c.l.b16 %v11244
        %v11294 = vpack.c.b16 %v11263, %v11262
        %v11295 = vpack.c.b16 %v11265, %v11264
        %v11296 = vpack.c.b16 %v11267, %v11266
        %v11297 = vpack.c.b16 %v11269, %v11268
        %v11298 = vpack.c.b16 %v11271, %v11270
        %v11299 = vpack.c.b16 %v11273, %v11272
        %v11300 = vpack.c.b16 %v11275, %v11274
        %v11301 = vpack.c.b16 %v11277, %v11276
        %v11302 = vpack.c.b16 %v11279, %v11278
        %v11303 = vpack.c.b16 %v11281, %v11280
        %v11304 = vpack.c.b16 %v11283, %v11282
        %v11305 = vpack.c.b16 %v11285, %v11284
        %v11306 = vpack.c.b16 %v11287, %v11286
        %v11307 = vpack.c.b16 %v11289, %v11288
        %v11308 = vpack.c.b16 %v11291, %v11290
        %v11309 = vpack.c.b16 %v11293, %v11292
        %v11342 = vunpack.c.l.b16 %v11246
        %v11343 = vunpack.c.l.b16 %v11247
        %v11344 = vunpack.c.l.b16 %v11248
        %v11345 = vunpack.c.l.b16 %v11249
        %v11346 = vunpack.c.l.b16 %v11250
        %v11347 = vunpack.c.l.b16 %v11251
        %v11348 = vunpack.c.l.b16 %v11252
        %v11349 = vunpack.c.l.b16 %v11253
        %v11350 = vunpack.c.l.b16 %v11254
        %v11351 = vunpack.c.l.b16 %v11255
        %v11352 = vunpack.c.l.b16 %v11256
        %v11353 = vunpack.c.l.b16 %v11257
        %v11354 = vunpack.c.l.b16 %v11258
        %v11355 = vunpack.c.l.b16 %v11259
        %v11356 = vunpack.c.l.b16 %v11260
        %v11357 = vunpack.c.l.b16 %v11261
        %v11358 = vpack.c.b16 %v11343, %v11342
        %v11359 = vpack.c.b16 %v11345, %v11344
        %v11360 = vpack.c.b16 %v11347, %v11346
        %v11361 = vpack.c.b16 %v11349, %v11348
        %v11362 = vpack.c.b16 %v11351, %v11350
        %v11363 = vpack.c.b16 %v11353, %v11352
        %v11364 = vpack.c.b16 %v11355, %v11354
        %v11365 = vpack.c.b16 %v11357, %v11356
        %11374 = vmatprep.subr.bf16.mxu0 0
        %11375 = vmatpush1.bf16.msra.mxu0 %v11365
        %11376 = vmatprep.subr.bf16.mxu0 0
        %11377 = vmatpush1.bf16.msra.mxu0 %v11364
        %11378 = vmatprep.subr.bf16.mxu0 0
        %11379 = vmatpush1.bf16.msra.mxu0 %v11363
        %11380 = vmatprep.subr.bf16.mxu0 0
        %11381 = vmatpush1.bf16.msra.mxu0 %v11362
        %11382 = vmatprep.subr.bf16.mxu0 0
        %11383 = vmatpush1.bf16.msra.mxu0 %v11361
        %11384 = vmatprep.subr.bf16.mxu0 0
        %11385 = vmatpush1.bf16.msra.mxu0 %v11360
        %11386 = vmatprep.subr.bf16.mxu0 0
        %11387 = vmatpush1.bf16.msra.mxu0 %v11359
        %11388 = vmatprep.subr.bf16.mxu0 0
        %11389 = vmatpush1.bf16.msra.mxu0 %v11358
        %11390 = vmatprep.subr.bf16.mxu0 0
        %11391 = vmatpush2.bf16.msra.mxu0 0
        %11392 = vmatprep.subr.bf16.mxu0 0
        %11393 = vmatpush2.bf16.msra.mxu0 0
        %11394 = vmatprep.subr.bf16.mxu0 0
        %11395 = vmatpush2.bf16.msra.mxu0 0
        %11396 = vmatprep.subr.bf16.mxu0 0
        %11397 = vmatpush2.bf16.msra.mxu0 0
        %11398 = vmatprep.subr.bf16.mxu0 0
        %11399 = vmatpush2.bf16.msra.mxu0 0
        %11400 = vmatprep.subr.bf16.mxu0 0
        %11401 = vmatpush2.bf16.msra.mxu0 0
        %11402 = vmatprep.subr.bf16.mxu0 0
        %11403 = vmatpush2.bf16.msra.mxu0 0
        %11404 = vmatprep.subr.bf16.mxu0 0
        %11405 = vmatpush2.bf16.msra.mxu0 0
        %11406 = vmatprep.mubr.bf16.mxu0 0
        %11407 = vmatmul.mubr.bf16.gmra.mxu0 %v11294
        %v11408 = vpop.f32.mrf.mxu0
        %v11409 = vadd.f32 0.0, %v11408
        %v11410 = vpop.f32.mrf.mxu0
        %v11411 = vpop.f32.mrf.mxu0
        %v11412 = vadd.f32 0.0, %v11411
        %v11413 = vpop.f32.mrf.mxu0
        %11414 = vmatprep.mubr.bf16.mxu0 0
        %11415 = vmatmul.mubr.bf16.gmra.mxu0 %v11295
        %v11416 = vpop.f32.mrf.mxu0
        %v11417 = vadd.f32 0.0, %v11416
        %v11418 = vpop.f32.mrf.mxu0
        %v11419 = vpop.f32.mrf.mxu0
        %v11420 = vadd.f32 0.0, %v11419
        %v11421 = vpop.f32.mrf.mxu0
        %11422 = vmatprep.mubr.bf16.mxu0 0
        %11423 = vmatmul.mubr.bf16.gmra.mxu0 %v11296
        %v11424 = vpop.f32.mrf.mxu0
        %v11425 = vadd.f32 0.0, %v11424
        %v11426 = vpop.f32.mrf.mxu0
        %v11427 = vpop.f32.mrf.mxu0
        %v11428 = vadd.f32 0.0, %v11427
        %v11429 = vpop.f32.mrf.mxu0
        %11430 = vmatprep.mubr.bf16.mxu0 0
        %11431 = vmatmul.mubr.bf16.gmra.mxu0 %v11297
        %v11432 = vpop.f32.mrf.mxu0
        %v11433 = vadd.f32 0.0, %v11432
        %v11434 = vpop.f32.mrf.mxu0
        %v11435 = vpop.f32.mrf.mxu0
        %v11436 = vadd.f32 0.0, %v11435
        %v11437 = vpop.f32.mrf.mxu0
        %11438 = vmatprep.mubr.bf16.mxu0 0
        %11439 = vmatmul.mubr.bf16.gmra.mxu0 %v11298
        %v11440 = vpop.f32.mrf.mxu0
        %v11441 = vadd.f32 0.0, %v11440
        %v11442 = vpop.f32.mrf.mxu0
        %v11443 = vpop.f32.mrf.mxu0
        %v11444 = vadd.f32 0.0, %v11443
        %v11445 = vpop.f32.mrf.mxu0
        %11446 = vmatprep.mubr.bf16.mxu0 0
        %11447 = vmatmul.mubr.bf16.gmra.mxu0 %v11299
        %v11448 = vpop.f32.mrf.mxu0
        %v11449 = vadd.f32 0.0, %v11448
        %v11450 = vpop.f32.mrf.mxu0
        %v11451 = vpop.f32.mrf.mxu0
        %v11452 = vadd.f32 0.0, %v11451
        %v11453 = vpop.f32.mrf.mxu0
        %11454 = vmatprep.mubr.bf16.mxu0 0
        %11455 = vmatmul.mubr.bf16.gmra.mxu0 %v11300
        %v11456 = vpop.f32.mrf.mxu0
        %v11457 = vadd.f32 0.0, %v11456
        %v11458 = vpop.f32.mrf.mxu0
        %v11459 = vpop.f32.mrf.mxu0
        %v11460 = vadd.f32 0.0, %v11459
        %v11461 = vpop.f32.mrf.mxu0
        %11462 = vmatprep.mubr.bf16.mxu0 0
        %11463 = vmatmul.mubr.bf16.gmra.mxu0 %v11301
        %v11464 = vpop.f32.mrf.mxu0
        %v11465 = vadd.f32 0.0, %v11464
        %v11466 = vpop.f32.mrf.mxu0
        %v11467 = vpop.f32.mrf.mxu0
        %v11468 = vadd.f32 0.0, %v11467
        %v11469 = vpop.f32.mrf.mxu0
        %11470 = vmatprep.mubr.bf16.mxu0 0
        %11471 = vmatmul.mubr.bf16.gmra.mxu0 %v11302
        %v11472 = vpop.f32.mrf.mxu0
        %v11473 = vadd.f32 0.0, %v11472
        %v11474 = vpop.f32.mrf.mxu0
        %v11475 = vpop.f32.mrf.mxu0
        %v11476 = vadd.f32 0.0, %v11475
        %v11477 = vpop.f32.mrf.mxu0
        %11478 = vmatprep.mubr.bf16.mxu0 0
        %11479 = vmatmul.mubr.bf16.gmra.mxu0 %v11303
        %v11480 = vpop.f32.mrf.mxu0
        %v11481 = vadd.f32 0.0, %v11480
        %v11482 = vpop.f32.mrf.mxu0
        %v11483 = vpop.f32.mrf.mxu0
        %v11484 = vadd.f32 0.0, %v11483
        %v11485 = vpop.f32.mrf.mxu0
        %11486 = vmatprep.mubr.bf16.mxu0 0
        %11487 = vmatmul.mubr.bf16.gmra.mxu0 %v11304
        %v11488 = vpop.f32.mrf.mxu0
        %v11489 = vadd.f32 0.0, %v11488
        %v11490 = vpop.f32.mrf.mxu0
        %v11491 = vpop.f32.mrf.mxu0
        %v11492 = vadd.f32 0.0, %v11491
        %v11493 = vpop.f32.mrf.mxu0
        %11494 = vmatprep.mubr.bf16.mxu0 0
        %11495 = vmatmul.mubr.bf16.gmra.mxu0 %v11305
        %v11496 = vpop.f32.mrf.mxu0
        %v11497 = vadd.f32 0.0, %v11496
        %v11498 = vpop.f32.mrf.mxu0
        %v11499 = vpop.f32.mrf.mxu0
        %v11500 = vadd.f32 0.0, %v11499
        %v11501 = vpop.f32.mrf.mxu0
        %11502 = vmatprep.mubr.bf16.mxu0 0
        %11503 = vmatmul.mubr.bf16.gmra.mxu0 %v11306
        %v11504 = vpop.f32.mrf.mxu0
        %v11505 = vadd.f32 0.0, %v11504
        %v11506 = vpop.f32.mrf.mxu0
        %v11507 = vpop.f32.mrf.mxu0
        %v11508 = vadd.f32 0.0, %v11507
        %v11509 = vpop.f32.mrf.mxu0
        %11510 = vmatprep.mubr.bf16.mxu0 0
        %11511 = vmatmul.mubr.bf16.gmra.mxu0 %v11307
        %v11512 = vpop.f32.mrf.mxu0
        %v11513 = vadd.f32 0.0, %v11512
        %v11514 = vpop.f32.mrf.mxu0
        %v11515 = vpop.f32.mrf.mxu0
        %v11516 = vadd.f32 0.0, %v11515
        %v11517 = vpop.f32.mrf.mxu0
        %11518 = vmatprep.mubr.bf16.mxu0 0
        %11519 = vmatmul.mubr.bf16.gmra.mxu0 %v11308
        %v11520 = vpop.f32.mrf.mxu0
        %v11521 = vadd.f32 0.0, %v11520
        %v11522 = vpop.f32.mrf.mxu0
        %v11523 = vpop.f32.mrf.mxu0
        %v11524 = vadd.f32 0.0, %v11523
        %v11525 = vpop.f32.mrf.mxu0
        %11526 = vmatprep.mubr.bf16.mxu0 0
        %11527 = vmatmul.mubr.bf16.gmra.mxu0 %v11309
        %v11528 = vpop.f32.mrf.mxu0
        %v11529 = vadd.f32 0.0, %v11528
        %v11530 = vpop.f32.mrf.mxu0
        %v11531 = vpop.f32.mrf.mxu0
        %v11532 = vadd.f32 0.0, %v11531
        %v11533 = vpop.f32.mrf.mxu0
        %11534 = vdwg.mxu0
        %v11535 = vadd.f32 %v10781, %v11409
        %v11536 = vadd.f32 %v10782, %v11412
        %v11537 = vadd.f32 %v10783, %v11417
        %v11538 = vadd.f32 %v10784, %v11420
        %v11539 = vadd.f32 %v10785, %v11425
        %v11540 = vadd.f32 %v10786, %v11428
        %v11541 = vadd.f32 %v10787, %v11433
        %v11542 = vadd.f32 %v10788, %v11436
        %v11543 = vadd.f32 %v10789, %v11441
        %v11544 = vadd.f32 %v10790, %v11444
        %v11545 = vadd.f32 %v10791, %v11449
        %v11546 = vadd.f32 %v10792, %v11452
        %v11547 = vadd.f32 %v10793, %v11457
        %v11548 = vadd.f32 %v10794, %v11460
        %v11549 = vadd.f32 %v10795, %v11465
        %v11550 = vadd.f32 %v10796, %v11468
        %v11551 = vadd.f32 %v10797, %v11473
        %v11552 = vadd.f32 %v10798, %v11476
        %v11553 = vadd.f32 %v10799, %v11481
        %v11554 = vadd.f32 %v10800, %v11484
        %v11555 = vadd.f32 %v10801, %v11489
        %v11556 = vadd.f32 %v10802, %v11492
        %v11557 = vadd.f32 %v10803, %v11497
        %v11558 = vadd.f32 %v10804, %v11500
        %v11559 = vadd.f32 %v10805, %v11505
        %v11560 = vadd.f32 %v10806, %v11508
        %v11561 = vadd.f32 %v10807, %v11513
        %v11562 = vadd.f32 %v10808, %v11516
        %v11563 = vadd.f32 %v10809, %v11521
        %v11564 = vadd.f32 %v10810, %v11524
        %v11565 = vadd.f32 %v10811, %v11529
        %v11566 = vadd.f32 %v10812, %v11532
        %v11567 = vld [vmem:[%s4619] sm:$0xe]
        %v11568 = vld [vmem:[%s4619 + $0xc] sm:$0xe]
        %v11569 = vld [vmem:[%s4619 + $0x18] sm:$0xe]
        %v11570 = vld [vmem:[%s4619 + $0x24] sm:$0xe]
        %v11571 = vld [vmem:[%s4619 + $0x30] sm:$0xe]
        %v11572 = vld [vmem:[%s4619 + $0x3c] sm:$0xe]
        %v11573 = vld [vmem:[%s4619 + $0x48] sm:$0xe]
        %v11574 = vld [vmem:[%s4619 + $0x54] sm:$0xe]
        %v11575 = vld [vmem:[%s4619 + $0x60] sm:$0xe]
        %v11576 = vld [vmem:[%s4619 + $0x6c] sm:$0xe]
        %v11577 = vld [vmem:[%s4619 + $0x78] sm:$0xe]
        %v11578 = vld [vmem:[%s4619 + $0x84] sm:$0xe]
        %v11579 = vld [vmem:[%s4619 + $0x90] sm:$0xe]
        %v11580 = vld [vmem:[%s4619 + $0x9c] sm:$0xe]
        %v11581 = vld [vmem:[%s4619 + $0xa8] sm:$0xe]
        %v11582 = vld [vmem:[%s4619 + $0xb4] sm:$0xe]
        %v11631 = vrot.slane %v11567, 5
        %v11632 = vrot.slane %v11631, 4
        %v11633 = vrot.slane %v10814, 5
        %v11634 = vsel %vm2546, %v11632, %v11633
        %v11635 = vrot.slane %v11633, 4
        %v11636 = vrot.slane %v10815, 5
        %v11637 = vsel %vm2546, %v11635, %v11636
        %v11638 = vrot.slane %v11568, 5
        %v11639 = vrot.slane %v11638, 4
        %v11640 = vrot.slane %v10817, 5
        %v11641 = vsel %vm2546, %v11639, %v11640
        %v11642 = vrot.slane %v11640, 4
        %v11643 = vrot.slane %v10818, 5
        %v11644 = vsel %vm2546, %v11642, %v11643
        %v11645 = vrot.slane %v11569, 5
        %v11646 = vrot.slane %v11645, 4
        %v11647 = vrot.slane %v10820, 5
        %v11648 = vsel %vm2546, %v11646, %v11647
        %v11649 = vrot.slane %v11647, 4
        %v11650 = vrot.slane %v10821, 5
        %v11651 = vsel %vm2546, %v11649, %v11650
        %v11652 = vrot.slane %v11570, 5
        %v11653 = vrot.slane %v11652, 4
        %v11654 = vrot.slane %v10823, 5
        %v11655 = vsel %vm2546, %v11653, %v11654
        %v11656 = vrot.slane %v11654, 4
        %v11657 = vrot.slane %v10824, 5
        %v11658 = vsel %vm2546, %v11656, %v11657
        %v11659 = vrot.slane %v11571, 5
        %v11660 = vrot.slane %v11659, 4
        %v11661 = vrot.slane %v10826, 5
        %v11662 = vsel %vm2546, %v11660, %v11661
        %v11663 = vrot.slane %v11661, 4
        %v11664 = vrot.slane %v10827, 5
        %v11665 = vsel %vm2546, %v11663, %v11664
        %v11666 = vrot.slane %v11572, 5
        %v11667 = vrot.slane %v11666, 4
        %v11668 = vrot.slane %v10829, 5
        %v11669 = vsel %vm2546, %v11667, %v11668
        %v11670 = vrot.slane %v11668, 4
        %v11671 = vrot.slane %v10830, 5
        %v11672 = vsel %vm2546, %v11670, %v11671
        %v11673 = vrot.slane %v11573, 5
        %v11674 = vrot.slane %v11673, 4
        %v11675 = vrot.slane %v10832, 5
        %v11676 = vsel %vm2546, %v11674, %v11675
        %v11677 = vrot.slane %v11675, 4
        %v11678 = vrot.slane %v10833, 5
        %v11679 = vsel %vm2546, %v11677, %v11678
        %v11680 = vrot.slane %v11574, 5
        %v11681 = vrot.slane %v11680, 4
        %v11682 = vrot.slane %v10835, 5
        %v11683 = vsel %vm2546, %v11681, %v11682
        %v11684 = vrot.slane %v11682, 4
        %v11685 = vrot.slane %v10836, 5
        %v11686 = vsel %vm2546, %v11684, %v11685
        %v11687 = vrot.slane %v11575, 5
        %v11688 = vrot.slane %v11687, 4
        %v11689 = vrot.slane %v10838, 5
        %v11690 = vsel %vm2546, %v11688, %v11689
        %v11691 = vrot.slane %v11689, 4
        %v11692 = vrot.slane %v10839, 5
        %v11693 = vsel %vm2546, %v11691, %v11692
        %v11694 = vrot.slane %v11576, 5
        %v11695 = vrot.slane %v11694, 4
        %v11696 = vrot.slane %v10841, 5
        %v11697 = vsel %vm2546, %v11695, %v11696
        %v11698 = vrot.slane %v11696, 4
        %v11699 = vrot.slane %v10842, 5
        %v11700 = vsel %vm2546, %v11698, %v11699
        %v11701 = vrot.slane %v11577, 5
        %v11702 = vrot.slane %v11701, 4
        %v11703 = vrot.slane %v10844, 5
        %v11704 = vsel %vm2546, %v11702, %v11703
        %v11705 = vrot.slane %v11703, 4
        %v11706 = vrot.slane %v10845, 5
        %v11707 = vsel %vm2546, %v11705, %v11706
        %v11708 = vrot.slane %v11578, 5
        %v11709 = vrot.slane %v11708, 4
        %v11710 = vrot.slane %v10847, 5
        %v11711 = vsel %vm2546, %v11709, %v11710
        %v11712 = vrot.slane %v11710, 4
        %v11713 = vrot.slane %v10848, 5
        %v11714 = vsel %vm2546, %v11712, %v11713
        %v11715 = vrot.slane %v11579, 5
        %v11716 = vrot.slane %v11715, 4
        %v11717 = vrot.slane %v10850, 5
        %v11718 = vsel %vm2546, %v11716, %v11717
        %v11719 = vrot.slane %v11717, 4
        %v11720 = vrot.slane %v10851, 5
        %v11721 = vsel %vm2546, %v11719, %v11720
        %v11722 = vrot.slane %v11580, 5
        %v11723 = vrot.slane %v11722, 4
        %v11724 = vrot.slane %v10853, 5
        %v11725 = vsel %vm2546, %v11723, %v11724
        %v11726 = vrot.slane %v11724, 4
        %v11727 = vrot.slane %v10854, 5
        %v11728 = vsel %vm2546, %v11726, %v11727
        %v11729 = vrot.slane %v11581, 5
        %v11730 = vrot.slane %v11729, 4
        %v11731 = vrot.slane %v10856, 5
        %v11732 = vsel %vm2546, %v11730, %v11731
        %v11733 = vrot.slane %v11731, 4
        %v11734 = vrot.slane %v10857, 5
        %v11735 = vsel %vm2546, %v11733, %v11734
        %v11736 = vrot.slane %v11582, 5
        %v11737 = vrot.slane %v11736, 4
        %v11738 = vrot.slane %v10859, 5
        %v11739 = vsel %vm2546, %v11737, %v11738
        %v11740 = vrot.slane %v11738, 4
        %v11741 = vrot.slane %v10860, 5
        %v11742 = vsel %vm2546, %v11740, %v11741
        %s11743 = scalar_lea.vmem [#allocation3], 512
        %v11744 = vld [vmem:[%s11743] sm:$0xf]
        %v11745 = vld [vmem:[%s11743 + $0x4] sm:$0xf]
        %v11746 = vld [vmem:[%s11743 + $0x8] sm:$0xf]
        %v11747 = vld [vmem:[%s11743 + $0xc] sm:$0xf]
        %v11748 = vld [vmem:[%s11743 + $0x10] sm:$0xf]
        %v11749 = vld [vmem:[%s11743 + $0x14] sm:$0xf]
        %v11750 = vld [vmem:[%s11743 + $0x18] sm:$0xf]
        %v11751 = vld [vmem:[%s11743 + $0x1c] sm:$0xf]
        %v11752 = vld [vmem:[%s11743 + $0x20] sm:$0xf]
        %v11753 = vld [vmem:[%s11743 + $0x24] sm:$0xf]
        %v11754 = vld [vmem:[%s11743 + $0x28] sm:$0xf]
        %v11755 = vld [vmem:[%s11743 + $0x2c] sm:$0xf]
        %v11756 = vld [vmem:[%s11743 + $0x30] sm:$0xf]
        %v11757 = vld [vmem:[%s11743 + $0x34] sm:$0xf]
        %v11758 = vld [vmem:[%s11743 + $0x38] sm:$0xf]
        %v11759 = vld [vmem:[%s11743 + $0x3c] sm:$0xf]
        %v11760 = vunpack.c.l.b16 %v11634
        %v11761 = vunpack.c.l.b16 %v11637
        %v11762 = vunpack.c.l.b16 %v11641
        %v11763 = vunpack.c.l.b16 %v11644
        %v11764 = vunpack.c.l.b16 %v11648
        %v11765 = vunpack.c.l.b16 %v11651
        %v11766 = vunpack.c.l.b16 %v11655
        %v11767 = vunpack.c.l.b16 %v11658
        %v11768 = vunpack.c.l.b16 %v11662
        %v11769 = vunpack.c.l.b16 %v11665
        %v11770 = vunpack.c.l.b16 %v11669
        %v11771 = vunpack.c.l.b16 %v11672
        %v11772 = vunpack.c.l.b16 %v11676
        %v11773 = vunpack.c.l.b16 %v11679
        %v11774 = vunpack.c.l.b16 %v11683
        %v11775 = vunpack.c.l.b16 %v11686
        %v11776 = vunpack.c.l.b16 %v11690
        %v11777 = vunpack.c.l.b16 %v11693
        %v11778 = vunpack.c.l.b16 %v11697
        %v11779 = vunpack.c.l.b16 %v11700
        %v11780 = vunpack.c.l.b16 %v11704
        %v11781 = vunpack.c.l.b16 %v11707
        %v11782 = vunpack.c.l.b16 %v11711
        %v11783 = vunpack.c.l.b16 %v11714
        %v11784 = vunpack.c.l.b16 %v11718
        %v11785 = vunpack.c.l.b16 %v11721
        %v11786 = vunpack.c.l.b16 %v11725
        %v11787 = vunpack.c.l.b16 %v11728
        %v11788 = vunpack.c.l.b16 %v11732
        %v11789 = vunpack.c.l.b16 %v11735
        %v11790 = vunpack.c.l.b16 %v11739
        %v11791 = vunpack.c.l.b16 %v11742
        %v11792 = vpack.c.b16 %v11761, %v11760
        %v11793 = vpack.c.b16 %v11763, %v11762
        %v11794 = vpack.c.b16 %v11765, %v11764
        %v11795 = vpack.c.b16 %v11767, %v11766
        %v11796 = vpack.c.b16 %v11769, %v11768
        %v11797 = vpack.c.b16 %v11771, %v11770
        %v11798 = vpack.c.b16 %v11773, %v11772
        %v11799 = vpack.c.b16 %v11775, %v11774
        %v11800 = vpack.c.b16 %v11777, %v11776
        %v11801 = vpack.c.b16 %v11779, %v11778
        %v11802 = vpack.c.b16 %v11781, %v11780
        %v11803 = vpack.c.b16 %v11783, %v11782
        %v11804 = vpack.c.b16 %v11785, %v11784
        %v11805 = vpack.c.b16 %v11787, %v11786
        %v11806 = vpack.c.b16 %v11789, %v11788
        %v11807 = vpack.c.b16 %v11791, %v11790
        %v11840 = vunpack.c.l.b16 %v11744
        %v11841 = vunpack.c.l.b16 %v11745
        %v11842 = vunpack.c.l.b16 %v11746
        %v11843 = vunpack.c.l.b16 %v11747
        %v11844 = vunpack.c.l.b16 %v11748
        %v11845 = vunpack.c.l.b16 %v11749
        %v11846 = vunpack.c.l.b16 %v11750
        %v11847 = vunpack.c.l.b16 %v11751
        %v11848 = vunpack.c.l.b16 %v11752
        %v11849 = vunpack.c.l.b16 %v11753
        %v11850 = vunpack.c.l.b16 %v11754
        %v11851 = vunpack.c.l.b16 %v11755
        %v11852 = vunpack.c.l.b16 %v11756
        %v11853 = vunpack.c.l.b16 %v11757
        %v11854 = vunpack.c.l.b16 %v11758
        %v11855 = vunpack.c.l.b16 %v11759
        %v11856 = vpack.c.b16 %v11841, %v11840
        %v11857 = vpack.c.b16 %v11843, %v11842
        %v11858 = vpack.c.b16 %v11845, %v11844
        %v11859 = vpack.c.b16 %v11847, %v11846
        %v11860 = vpack.c.b16 %v11849, %v11848
        %v11861 = vpack.c.b16 %v11851, %v11850
        %v11862 = vpack.c.b16 %v11853, %v11852
        %v11863 = vpack.c.b16 %v11855, %v11854
        %11872 = vmatprep.subr.bf16.mxu0 0
        %11873 = vmatpush1.bf16.msra.mxu0 %v11863
        %11874 = vmatprep.subr.bf16.mxu0 0
        %11875 = vmatpush1.bf16.msra.mxu0 %v11862
        %11876 = vmatprep.subr.bf16.mxu0 0
        %11877 = vmatpush1.bf16.msra.mxu0 %v11861
        %11878 = vmatprep.subr.bf16.mxu0 0
        %11879 = vmatpush1.bf16.msra.mxu0 %v11860
        %11880 = vmatprep.subr.bf16.mxu0 0
        %11881 = vmatpush1.bf16.msra.mxu0 %v11859
        %11882 = vmatprep.subr.bf16.mxu0 0
        %11883 = vmatpush1.bf16.msra.mxu0 %v11858
        %11884 = vmatprep.subr.bf16.mxu0 0
        %11885 = vmatpush1.bf16.msra.mxu0 %v11857
        %11886 = vmatprep.subr.bf16.mxu0 0
        %11887 = vmatpush1.bf16.msra.mxu0 %v11856
        %11888 = vmatprep.subr.bf16.mxu0 0
        %11889 = vmatpush2.bf16.msra.mxu0 0
        %11890 = vmatprep.subr.bf16.mxu0 0
        %11891 = vmatpush2.bf16.msra.mxu0 0
        %11892 = vmatprep.subr.bf16.mxu0 0
        %11893 = vmatpush2.bf16.msra.mxu0 0
        %11894 = vmatprep.subr.bf16.mxu0 0
        %11895 = vmatpush2.bf16.msra.mxu0 0
        %11896 = vmatprep.subr.bf16.mxu0 0
        %11897 = vmatpush2.bf16.msra.mxu0 0
        %11898 = vmatprep.subr.bf16.mxu0 0
        %11899 = vmatpush2.bf16.msra.mxu0 0
        %11900 = vmatprep.subr.bf16.mxu0 0
        %11901 = vmatpush2.bf16.msra.mxu0 0
        %11902 = vmatprep.subr.bf16.mxu0 0
        %11903 = vmatpush2.bf16.msra.mxu0 0
        %11904 = vmatprep.mubr.bf16.mxu0 0
        %11905 = vmatmul.mubr.bf16.gmra.mxu0 %v11792
        %v11906 = vpop.f32.mrf.mxu0
        %v11907 = vadd.f32 0.0, %v11906
        %v11908 = vpop.f32.mrf.mxu0
        %v11909 = vpop.f32.mrf.mxu0
        %v11910 = vadd.f32 0.0, %v11909
        %v11911 = vpop.f32.mrf.mxu0
        %11912 = vmatprep.mubr.bf16.mxu0 0
        %11913 = vmatmul.mubr.bf16.gmra.mxu0 %v11793
        %v11914 = vpop.f32.mrf.mxu0
        %v11915 = vadd.f32 0.0, %v11914
        %v11916 = vpop.f32.mrf.mxu0
        %v11917 = vpop.f32.mrf.mxu0
        %v11918 = vadd.f32 0.0, %v11917
        %v11919 = vpop.f32.mrf.mxu0
        %11920 = vmatprep.mubr.bf16.mxu0 0
        %11921 = vmatmul.mubr.bf16.gmra.mxu0 %v11794
        %v11922 = vpop.f32.mrf.mxu0
        %v11923 = vadd.f32 0.0, %v11922
        %v11924 = vpop.f32.mrf.mxu0
        %v11925 = vpop.f32.mrf.mxu0
        %v11926 = vadd.f32 0.0, %v11925
        %v11927 = vpop.f32.mrf.mxu0
        %11928 = vmatprep.mubr.bf16.mxu0 0
        %11929 = vmatmul.mubr.bf16.gmra.mxu0 %v11795
        %v11930 = vpop.f32.mrf.mxu0
        %v11931 = vadd.f32 0.0, %v11930
        %v11932 = vpop.f32.mrf.mxu0
        %v11933 = vpop.f32.mrf.mxu0
        %v11934 = vadd.f32 0.0, %v11933
        %v11935 = vpop.f32.mrf.mxu0
        %11936 = vmatprep.mubr.bf16.mxu0 0
        %11937 = vmatmul.mubr.bf16.gmra.mxu0 %v11796
        %v11938 = vpop.f32.mrf.mxu0
        %v11939 = vadd.f32 0.0, %v11938
        %v11940 = vpop.f32.mrf.mxu0
        %v11941 = vpop.f32.mrf.mxu0
        %v11942 = vadd.f32 0.0, %v11941
        %v11943 = vpop.f32.mrf.mxu0
        %11944 = vmatprep.mubr.bf16.mxu0 0
        %11945 = vmatmul.mubr.bf16.gmra.mxu0 %v11797
        %v11946 = vpop.f32.mrf.mxu0
        %v11947 = vadd.f32 0.0, %v11946
        %v11948 = vpop.f32.mrf.mxu0
        %v11949 = vpop.f32.mrf.mxu0
        %v11950 = vadd.f32 0.0, %v11949
        %v11951 = vpop.f32.mrf.mxu0
        %11952 = vmatprep.mubr.bf16.mxu0 0
        %11953 = vmatmul.mubr.bf16.gmra.mxu0 %v11798
        %v11954 = vpop.f32.mrf.mxu0
        %v11955 = vadd.f32 0.0, %v11954
        %v11956 = vpop.f32.mrf.mxu0
        %v11957 = vpop.f32.mrf.mxu0
        %v11958 = vadd.f32 0.0, %v11957
        %v11959 = vpop.f32.mrf.mxu0
        %11960 = vmatprep.mubr.bf16.mxu0 0
        %11961 = vmatmul.mubr.bf16.gmra.mxu0 %v11799
        %v11962 = vpop.f32.mrf.mxu0
        %v11963 = vadd.f32 0.0, %v11962
        %v11964 = vpop.f32.mrf.mxu0
        %v11965 = vpop.f32.mrf.mxu0
        %v11966 = vadd.f32 0.0, %v11965
        %v11967 = vpop.f32.mrf.mxu0
        %11968 = vmatprep.mubr.bf16.mxu0 0
        %11969 = vmatmul.mubr.bf16.gmra.mxu0 %v11800
        %v11970 = vpop.f32.mrf.mxu0
        %v11971 = vadd.f32 0.0, %v11970
        %v11972 = vpop.f32.mrf.mxu0
        %v11973 = vpop.f32.mrf.mxu0
        %v11974 = vadd.f32 0.0, %v11973
        %v11975 = vpop.f32.mrf.mxu0
        %11976 = vmatprep.mubr.bf16.mxu0 0
        %11977 = vmatmul.mubr.bf16.gmra.mxu0 %v11801
        %v11978 = vpop.f32.mrf.mxu0
        %v11979 = vadd.f32 0.0, %v11978
        %v11980 = vpop.f32.mrf.mxu0
        %v11981 = vpop.f32.mrf.mxu0
        %v11982 = vadd.f32 0.0, %v11981
        %v11983 = vpop.f32.mrf.mxu0
        %11984 = vmatprep.mubr.bf16.mxu0 0
        %11985 = vmatmul.mubr.bf16.gmra.mxu0 %v11802
        %v11986 = vpop.f32.mrf.mxu0
        %v11987 = vadd.f32 0.0, %v11986
        %v11988 = vpop.f32.mrf.mxu0
        %v11989 = vpop.f32.mrf.mxu0
        %v11990 = vadd.f32 0.0, %v11989
        %v11991 = vpop.f32.mrf.mxu0
        %11992 = vmatprep.mubr.bf16.mxu0 0
        %11993 = vmatmul.mubr.bf16.gmra.mxu0 %v11803
        %v11994 = vpop.f32.mrf.mxu0
        %v11995 = vadd.f32 0.0, %v11994
        %v11996 = vpop.f32.mrf.mxu0
        %v11997 = vpop.f32.mrf.mxu0
        %v11998 = vadd.f32 0.0, %v11997
        %v11999 = vpop.f32.mrf.mxu0
        %12000 = vmatprep.mubr.bf16.mxu0 0
        %12001 = vmatmul.mubr.bf16.gmra.mxu0 %v11804
        %v12002 = vpop.f32.mrf.mxu0
        %v12003 = vadd.f32 0.0, %v12002
        %v12004 = vpop.f32.mrf.mxu0
        %v12005 = vpop.f32.mrf.mxu0
        %v12006 = vadd.f32 0.0, %v12005
        %v12007 = vpop.f32.mrf.mxu0
        %12008 = vmatprep.mubr.bf16.mxu0 0
        %12009 = vmatmul.mubr.bf16.gmra.mxu0 %v11805
        %v12010 = vpop.f32.mrf.mxu0
        %v12011 = vadd.f32 0.0, %v12010
        %v12012 = vpop.f32.mrf.mxu0
        %v12013 = vpop.f32.mrf.mxu0
        %v12014 = vadd.f32 0.0, %v12013
        %v12015 = vpop.f32.mrf.mxu0
        %12016 = vmatprep.mubr.bf16.mxu0 0
        %12017 = vmatmul.mubr.bf16.gmra.mxu0 %v11806
        %v12018 = vpop.f32.mrf.mxu0
        %v12019 = vadd.f32 0.0, %v12018
        %v12020 = vpop.f32.mrf.mxu0
        %v12021 = vpop.f32.mrf.mxu0
        %v12022 = vadd.f32 0.0, %v12021
        %v12023 = vpop.f32.mrf.mxu0
        %12024 = vmatprep.mubr.bf16.mxu0 0
        %12025 = vmatmul.mubr.bf16.gmra.mxu0 %v11807
        %v12026 = vpop.f32.mrf.mxu0
        %v12027 = vadd.f32 0.0, %v12026
        %v12028 = vpop.f32.mrf.mxu0
        %v12029 = vpop.f32.mrf.mxu0
        %v12030 = vadd.f32 0.0, %v12029
        %v12031 = vpop.f32.mrf.mxu0
        %12032 = vdwg.mxu0
        %v12033 = vadd.f32 %v11535, %v11907
        %v12034 = vadd.f32 %v11536, %v11910
        %v12035 = vadd.f32 %v11537, %v11915
        %v12036 = vadd.f32 %v11538, %v11918
        %v12037 = vadd.f32 %v11539, %v11923
        %v12038 = vadd.f32 %v11540, %v11926
        %v12039 = vadd.f32 %v11541, %v11931
        %v12040 = vadd.f32 %v11542, %v11934
        %v12041 = vadd.f32 %v11543, %v11939
        %v12042 = vadd.f32 %v11544, %v11942
        %v12043 = vadd.f32 %v11545, %v11947
        %v12044 = vadd.f32 %v11546, %v11950
        %v12045 = vadd.f32 %v11547, %v11955
        %v12046 = vadd.f32 %v11548, %v11958
        %v12047 = vadd.f32 %v11549, %v11963
        %v12048 = vadd.f32 %v11550, %v11966
        %v12049 = vadd.f32 %v11551, %v11971
        %v12050 = vadd.f32 %v11552, %v11974
        %v12051 = vadd.f32 %v11553, %v11979
        %v12052 = vadd.f32 %v11554, %v11982
        %v12053 = vadd.f32 %v11555, %v11987
        %v12054 = vadd.f32 %v11556, %v11990
        %v12055 = vadd.f32 %v11557, %v11995
        %v12056 = vadd.f32 %v11558, %v11998
        %v12057 = vadd.f32 %v11559, %v12003
        %v12058 = vadd.f32 %v11560, %v12006
        %v12059 = vadd.f32 %v11561, %v12011
        %v12060 = vadd.f32 %v11562, %v12014
        %v12061 = vadd.f32 %v11563, %v12019
        %v12062 = vadd.f32 %v11564, %v12022
        %v12063 = vadd.f32 %v11565, %v12027
        %v12064 = vadd.f32 %v11566, %v12030
        %v12065 = vld [vmem:[%s8] sm:$0x1]
        %v12067 = vlaneseq
        %v12068 = vshrl.u32 %v12067, 7
        %v12069 = vsub.s32 0, %v12068
        %v12070 = vrot.slane %v12065, %v12069
        %v12072 = vadd.f32 %v12033, %v12070
        %v12073 = vadd.f32 %v12034, %v12070
        %v12074 = vadd.f32 %v12035, %v12070
        %v12075 = vadd.f32 %v12036, %v12070
        %v12076 = vadd.f32 %v12037, %v12070
        %v12077 = vadd.f32 %v12038, %v12070
        %v12078 = vadd.f32 %v12039, %v12070
        %v12079 = vadd.f32 %v12040, %v12070
        %v12080 = vadd.f32 %v12041, %v12070
        %v12081 = vadd.f32 %v12042, %v12070
        %v12082 = vadd.f32 %v12043, %v12070
        %v12083 = vadd.f32 %v12044, %v12070
        %v12084 = vadd.f32 %v12045, %v12070
        %v12085 = vadd.f32 %v12046, %v12070
        %v12086 = vadd.f32 %v12047, %v12070
        %v12087 = vadd.f32 %v12048, %v12070
        %v12088 = vadd.f32 %v12049, %v12070
        %v12089 = vadd.f32 %v12050, %v12070
        %v12090 = vadd.f32 %v12051, %v12070
        %v12091 = vadd.f32 %v12052, %v12070
        %v12092 = vadd.f32 %v12053, %v12070
        %v12093 = vadd.f32 %v12054, %v12070
        %v12094 = vadd.f32 %v12055, %v12070
        %v12095 = vadd.f32 %v12056, %v12070
        %v12096 = vadd.f32 %v12057, %v12070
        %v12097 = vadd.f32 %v12058, %v12070
        %v12098 = vadd.f32 %v12059, %v12070
        %v12099 = vadd.f32 %v12060, %v12070
        %v12100 = vadd.f32 %v12061, %v12070
        %v12101 = vadd.f32 %v12062, %v12070
        %v12102 = vadd.f32 %v12063, %v12070
        %v12103 = vadd.f32 %v12064, %v12070
        %vm12104 = vcmp.gt.f32.partialorder %v12072, 0.0
        %vm12105 = vcmp.gt.f32.partialorder %v12073, 0.0
        %vm12106 = vcmp.gt.f32.partialorder %v12074, 0.0
        %vm12107 = vcmp.gt.f32.partialorder %v12075, 0.0
        %vm12108 = vcmp.gt.f32.partialorder %v12076, 0.0
        %vm12109 = vcmp.gt.f32.partialorder %v12077, 0.0
        %vm12110 = vcmp.gt.f32.partialorder %v12078, 0.0
        %vm12111 = vcmp.gt.f32.partialorder %v12079, 0.0
        %vm12112 = vcmp.gt.f32.partialorder %v12080, 0.0
        %vm12113 = vcmp.gt.f32.partialorder %v12081, 0.0
        %vm12114 = vcmp.gt.f32.partialorder %v12082, 0.0
        %vm12115 = vcmp.gt.f32.partialorder %v12083, 0.0
        %vm12116 = vcmp.gt.f32.partialorder %v12084, 0.0
        %vm12117 = vcmp.gt.f32.partialorder %v12085, 0.0
        %vm12118 = vcmp.gt.f32.partialorder %v12086, 0.0
        %vm12119 = vcmp.gt.f32.partialorder %v12087, 0.0
        %vm12120 = vcmp.gt.f32.partialorder %v12088, 0.0
        %vm12121 = vcmp.gt.f32.partialorder %v12089, 0.0
        %vm12122 = vcmp.gt.f32.partialorder %v12090, 0.0
        %vm12123 = vcmp.gt.f32.partialorder %v12091, 0.0
        %vm12124 = vcmp.gt.f32.partialorder %v12092, 0.0
        %vm12125 = vcmp.gt.f32.partialorder %v12093, 0.0
        %vm12126 = vcmp.gt.f32.partialorder %v12094, 0.0
        %vm12127 = vcmp.gt.f32.partialorder %v12095, 0.0
        %vm12128 = vcmp.gt.f32.partialorder %v12096, 0.0
        %vm12129 = vcmp.gt.f32.partialorder %v12097, 0.0
        %vm12130 = vcmp.gt.f32.partialorder %v12098, 0.0
        %vm12131 = vcmp.gt.f32.partialorder %v12099, 0.0
        %vm12132 = vcmp.gt.f32.partialorder %v12100, 0.0
        %vm12133 = vcmp.gt.f32.partialorder %v12101, 0.0
        %vm12134 = vcmp.gt.f32.partialorder %v12102, 0.0
        %vm12135 = vcmp.gt.f32.partialorder %v12103, 0.0
        %v12136 = vmul.f32 %v12072, 0.1
        %v12137 = vmul.f32 %v12073, 0.1
        %v12138 = vmul.f32 %v12074, 0.1
        %v12139 = vmul.f32 %v12075, 0.1
        %v12140 = vmul.f32 %v12076, 0.1
        %v12141 = vmul.f32 %v12077, 0.1
        %v12142 = vmul.f32 %v12078, 0.1
        %v12143 = vmul.f32 %v12079, 0.1
        %v12144 = vmul.f32 %v12080, 0.1
        %v12145 = vmul.f32 %v12081, 0.1
        %v12146 = vmul.f32 %v12082, 0.1
        %v12147 = vmul.f32 %v12083, 0.1
        %v12148 = vmul.f32 %v12084, 0.1
        %v12149 = vmul.f32 %v12085, 0.1
        %v12150 = vmul.f32 %v12086, 0.1
        %v12151 = vmul.f32 %v12087, 0.1
        %v12152 = vmul.f32 %v12088, 0.1
        %v12153 = vmul.f32 %v12089, 0.1
        %v12154 = vmul.f32 %v12090, 0.1
        %v12155 = vmul.f32 %v12091, 0.1
        %v12156 = vmul.f32 %v12092, 0.1
        %v12157 = vmul.f32 %v12093, 0.1
        %v12158 = vmul.f32 %v12094, 0.1
        %v12159 = vmul.f32 %v12095, 0.1
        %v12160 = vmul.f32 %v12096, 0.1
        %v12161 = vmul.f32 %v12097, 0.1
        %v12162 = vmul.f32 %v12098, 0.1
        %v12163 = vmul.f32 %v12099, 0.1
        %v12164 = vmul.f32 %v12100, 0.1
        %v12165 = vmul.f32 %v12101, 0.1
        %v12166 = vmul.f32 %v12102, 0.1
        %v12167 = vmul.f32 %v12103, 0.1
        %v12168 = vsel %vm12104, %v12072, %v12136
        %v12169 = vsel %vm12105, %v12073, %v12137
        %v12170 = vsel %vm12106, %v12074, %v12138
        %v12171 = vsel %vm12107, %v12075, %v12139
        %v12172 = vsel %vm12108, %v12076, %v12140
        %v12173 = vsel %vm12109, %v12077, %v12141
        %v12174 = vsel %vm12110, %v12078, %v12142
        %v12175 = vsel %vm12111, %v12079, %v12143
        %v12176 = vsel %vm12112, %v12080, %v12144
        %v12177 = vsel %vm12113, %v12081, %v12145
        %v12178 = vsel %vm12114, %v12082, %v12146
        %v12179 = vsel %vm12115, %v12083, %v12147
        %v12180 = vsel %vm12116, %v12084, %v12148
        %v12181 = vsel %vm12117, %v12085, %v12149
        %v12182 = vsel %vm12118, %v12086, %v12150
        %v12183 = vsel %vm12119, %v12087, %v12151
        %v12184 = vsel %vm12120, %v12088, %v12152
        %v12185 = vsel %vm12121, %v12089, %v12153
        %v12186 = vsel %vm12122, %v12090, %v12154
        %v12187 = vsel %vm12123, %v12091, %v12155
        %v12188 = vsel %vm12124, %v12092, %v12156
        %v12189 = vsel %vm12125, %v12093, %v12157
        %v12190 = vsel %vm12126, %v12094, %v12158
        %v12191 = vsel %vm12127, %v12095, %v12159
        %v12192 = vsel %vm12128, %v12096, %v12160
        %v12193 = vsel %vm12129, %v12097, %v12161
        %v12194 = vsel %vm12130, %v12098, %v12162
        %v12195 = vsel %vm12131, %v12099, %v12163
        %v12196 = vsel %vm12132, %v12100, %v12164
        %v12197 = vsel %vm12133, %v12101, %v12165
        %v12198 = vsel %vm12134, %v12102, %v12166
        %v12199 = vsel %vm12135, %v12103, %v12167
        %v12200 = vpack.c.bf16 %v12169, %v12168
        %v12201 = vpack.c.bf16 %v12171, %v12170
        %v12202 = vpack.c.bf16 %v12173, %v12172
        %v12203 = vpack.c.bf16 %v12175, %v12174
        %v12204 = vpack.c.bf16 %v12177, %v12176
        %v12205 = vpack.c.bf16 %v12179, %v12178
        %v12206 = vpack.c.bf16 %v12181, %v12180
        %v12207 = vpack.c.bf16 %v12183, %v12182
        %v12208 = vpack.c.bf16 %v12185, %v12184
        %v12209 = vpack.c.bf16 %v12187, %v12186
        %v12210 = vpack.c.bf16 %v12189, %v12188
        %v12211 = vpack.c.bf16 %v12191, %v12190
        %v12212 = vpack.c.bf16 %v12193, %v12192
        %v12213 = vpack.c.bf16 %v12195, %v12194
        %v12214 = vpack.c.bf16 %v12197, %v12196
        %v12215 = vpack.c.bf16 %v12199, %v12198
        %v12216 = vld [vmem:[%s9] sm:$0xf]
        %v12217 = vld [vmem:[%s9 + $0x4] sm:$0xf]
        %v12218 = vld [vmem:[%s9 + $0x8] sm:$0xf]
        %v12219 = vld [vmem:[%s9 + $0xc] sm:$0xf]
        %v12220 = vld [vmem:[%s9 + $0x10] sm:$0xf]
        %v12221 = vld [vmem:[%s9 + $0x14] sm:$0xf]
        %v12222 = vld [vmem:[%s9 + $0x18] sm:$0xf]
        %v12223 = vld [vmem:[%s9 + $0x1c] sm:$0xf]
        %v12224 = vld [vmem:[%s9 + $0x20] sm:$0xf]
        %v12225 = vld [vmem:[%s9 + $0x24] sm:$0xf]
        %v12226 = vld [vmem:[%s9 + $0x28] sm:$0xf]
        %v12227 = vld [vmem:[%s9 + $0x2c] sm:$0xf]
        %v12228 = vld [vmem:[%s9 + $0x30] sm:$0xf]
        %v12229 = vld [vmem:[%s9 + $0x34] sm:$0xf]
        %v12230 = vld [vmem:[%s9 + $0x38] sm:$0xf]
        %v12231 = vld [vmem:[%s9 + $0x3c] sm:$0xf]
        %v12232 = vld [vmem:[%s10] sm:$0x1]
        %v12234 = vlaneseq
        %v12235 = vshrl.u32 %v12234, 7
        %v12236 = vsub.s32 0, %v12235
        %v12237 = vrot.slane %v12232, %v12236
        %v12255 = vunpack.c.l.b16 %v12216
        %v12256 = vunpack.c.l.b16 %v12217
        %v12257 = vunpack.c.l.b16 %v12218
        %v12258 = vunpack.c.l.b16 %v12219
        %v12259 = vunpack.c.l.b16 %v12220
        %v12260 = vunpack.c.l.b16 %v12221
        %v12261 = vunpack.c.l.b16 %v12222
        %v12262 = vunpack.c.l.b16 %v12223
        %v12263 = vunpack.c.l.b16 %v12224
        %v12264 = vunpack.c.l.b16 %v12225
        %v12265 = vunpack.c.l.b16 %v12226
        %v12266 = vunpack.c.l.b16 %v12227
        %v12267 = vunpack.c.l.b16 %v12228
        %v12268 = vunpack.c.l.b16 %v12229
        %v12269 = vunpack.c.l.b16 %v12230
        %v12270 = vunpack.c.l.b16 %v12231
        %v12271 = vpack.c.b16 %v12256, %v12255
        %v12272 = vpack.c.b16 %v12258, %v12257
        %v12273 = vpack.c.b16 %v12260, %v12259
        %v12274 = vpack.c.b16 %v12262, %v12261
        %v12275 = vpack.c.b16 %v12264, %v12263
        %v12276 = vpack.c.b16 %v12266, %v12265
        %v12277 = vpack.c.b16 %v12268, %v12267
        %v12278 = vpack.c.b16 %v12270, %v12269
        %12287 = vmatprep.subr.bf16.mxu0 0
        %12288 = vmatpush1.bf16.msra.mxu0 %v12278
        %12289 = vmatprep.subr.bf16.mxu0 0
        %12290 = vmatpush1.bf16.msra.mxu0 %v12277
        %12291 = vmatprep.subr.bf16.mxu0 0
        %12292 = vmatpush1.bf16.msra.mxu0 %v12276
        %12293 = vmatprep.subr.bf16.mxu0 0
        %12294 = vmatpush1.bf16.msra.mxu0 %v12275
        %12295 = vmatprep.subr.bf16.mxu0 0
        %12296 = vmatpush1.bf16.msra.mxu0 %v12274
        %12297 = vmatprep.subr.bf16.mxu0 0
        %12298 = vmatpush1.bf16.msra.mxu0 %v12273
        %12299 = vmatprep.subr.bf16.mxu0 0
        %12300 = vmatpush1.bf16.msra.mxu0 %v12272
        %12301 = vmatprep.subr.bf16.mxu0 0
        %12302 = vmatpush1.bf16.msra.mxu0 %v12271
        %12303 = vmatprep.subr.bf16.mxu0 0
        %12304 = vmatpush2.bf16.msra.mxu0 0
        %12305 = vmatprep.subr.bf16.mxu0 0
        %12306 = vmatpush2.bf16.msra.mxu0 0
        %12307 = vmatprep.subr.bf16.mxu0 0
        %12308 = vmatpush2.bf16.msra.mxu0 0
        %12309 = vmatprep.subr.bf16.mxu0 0
        %12310 = vmatpush2.bf16.msra.mxu0 0
        %12311 = vmatprep.subr.bf16.mxu0 0
        %12312 = vmatpush2.bf16.msra.mxu0 0
        %12313 = vmatprep.subr.bf16.mxu0 0
        %12314 = vmatpush2.bf16.msra.mxu0 0
        %12315 = vmatprep.subr.bf16.mxu0 0
        %12316 = vmatpush2.bf16.msra.mxu0 0
        %12317 = vmatprep.subr.bf16.mxu0 0
        %12318 = vmatpush2.bf16.msra.mxu0 0
        %12319 = vmatprep.mubr.bf16.mxu0 0
        %12320 = vmatmul.mubr.bf16.gmra.mxu0 %v12200
        %v12321 = vpop.f32.mrf.mxu0
        %v12322 = vadd.f32 %v12237, %v12321
        %v12323 = vpop.f32.mrf.mxu0
        %v12324 = vpop.f32.mrf.mxu0
        %v12325 = vadd.f32 %v12237, %v12324
        %v12326 = vpop.f32.mrf.mxu0
        %12327 = vmatprep.mubr.bf16.mxu0 0
        %12328 = vmatmul.mubr.bf16.gmra.mxu0 %v12201
        %v12329 = vpop.f32.mrf.mxu0
        %v12330 = vadd.f32 %v12237, %v12329
        %v12331 = vpop.f32.mrf.mxu0
        %v12332 = vpop.f32.mrf.mxu0
        %v12333 = vadd.f32 %v12237, %v12332
        %v12334 = vpop.f32.mrf.mxu0
        %12335 = vmatprep.mubr.bf16.mxu0 0
        %12336 = vmatmul.mubr.bf16.gmra.mxu0 %v12202
        %v12337 = vpop.f32.mrf.mxu0
        %v12338 = vadd.f32 %v12237, %v12337
        %v12339 = vpop.f32.mrf.mxu0
        %v12340 = vpop.f32.mrf.mxu0
        %v12341 = vadd.f32 %v12237, %v12340
        %v12342 = vpop.f32.mrf.mxu0
        %12343 = vmatprep.mubr.bf16.mxu0 0
        %12344 = vmatmul.mubr.bf16.gmra.mxu0 %v12203
        %v12345 = vpop.f32.mrf.mxu0
        %v12346 = vadd.f32 %v12237, %v12345
        %v12347 = vpop.f32.mrf.mxu0
        %v12348 = vpop.f32.mrf.mxu0
        %v12349 = vadd.f32 %v12237, %v12348
        %v12350 = vpop.f32.mrf.mxu0
        %12351 = vmatprep.mubr.bf16.mxu0 0
        %12352 = vmatmul.mubr.bf16.gmra.mxu0 %v12204
        %v12353 = vpop.f32.mrf.mxu0
        %v12354 = vadd.f32 %v12237, %v12353
        %v12355 = vpop.f32.mrf.mxu0
        %v12356 = vpop.f32.mrf.mxu0
        %v12357 = vadd.f32 %v12237, %v12356
        %v12358 = vpop.f32.mrf.mxu0
        %12359 = vmatprep.mubr.bf16.mxu0 0
        %12360 = vmatmul.mubr.bf16.gmra.mxu0 %v12205
        %v12361 = vpop.f32.mrf.mxu0
        %v12362 = vadd.f32 %v12237, %v12361
        %v12363 = vpop.f32.mrf.mxu0
        %v12364 = vpop.f32.mrf.mxu0
        %v12365 = vadd.f32 %v12237, %v12364
        %v12366 = vpop.f32.mrf.mxu0
        %12367 = vmatprep.mubr.bf16.mxu0 0
        %12368 = vmatmul.mubr.bf16.gmra.mxu0 %v12206
        %v12369 = vpop.f32.mrf.mxu0
        %v12370 = vadd.f32 %v12237, %v12369
        %v12371 = vpop.f32.mrf.mxu0
        %v12372 = vpop.f32.mrf.mxu0
        %v12373 = vadd.f32 %v12237, %v12372
        %v12374 = vpop.f32.mrf.mxu0
        %12375 = vmatprep.mubr.bf16.mxu0 0
        %12376 = vmatmul.mubr.bf16.gmra.mxu0 %v12207
        %v12377 = vpop.f32.mrf.mxu0
        %v12378 = vadd.f32 %v12237, %v12377
        %v12379 = vpop.f32.mrf.mxu0
        %v12380 = vpop.f32.mrf.mxu0
        %v12381 = vadd.f32 %v12237, %v12380
        %v12382 = vpop.f32.mrf.mxu0
        %12383 = vmatprep.mubr.bf16.mxu0 0
        %12384 = vmatmul.mubr.bf16.gmra.mxu0 %v12208
        %v12385 = vpop.f32.mrf.mxu0
        %v12386 = vadd.f32 %v12237, %v12385
        %v12387 = vpop.f32.mrf.mxu0
        %v12388 = vpop.f32.mrf.mxu0
        %v12389 = vadd.f32 %v12237, %v12388
        %v12390 = vpop.f32.mrf.mxu0
        %12391 = vmatprep.mubr.bf16.mxu0 0
        %12392 = vmatmul.mubr.bf16.gmra.mxu0 %v12209
        %v12393 = vpop.f32.mrf.mxu0
        %v12394 = vadd.f32 %v12237, %v12393
        %v12395 = vpop.f32.mrf.mxu0
        %v12396 = vpop.f32.mrf.mxu0
        %v12397 = vadd.f32 %v12237, %v12396
        %v12398 = vpop.f32.mrf.mxu0
        %12399 = vmatprep.mubr.bf16.mxu0 0
        %12400 = vmatmul.mubr.bf16.gmra.mxu0 %v12210
        %v12401 = vpop.f32.mrf.mxu0
        %v12402 = vadd.f32 %v12237, %v12401
        %v12403 = vpop.f32.mrf.mxu0
        %v12404 = vpop.f32.mrf.mxu0
        %v12405 = vadd.f32 %v12237, %v12404
        %v12406 = vpop.f32.mrf.mxu0
        %12407 = vmatprep.mubr.bf16.mxu0 0
        %12408 = vmatmul.mubr.bf16.gmra.mxu0 %v12211
        %v12409 = vpop.f32.mrf.mxu0
        %v12410 = vadd.f32 %v12237, %v12409
        %v12411 = vpop.f32.mrf.mxu0
        %v12412 = vpop.f32.mrf.mxu0
        %v12413 = vadd.f32 %v12237, %v12412
        %v12414 = vpop.f32.mrf.mxu0
        %12415 = vmatprep.mubr.bf16.mxu0 0
        %12416 = vmatmul.mubr.bf16.gmra.mxu0 %v12212
        %v12417 = vpop.f32.mrf.mxu0
        %v12418 = vadd.f32 %v12237, %v12417
        %v12419 = vpop.f32.mrf.mxu0
        %v12420 = vpop.f32.mrf.mxu0
        %v12421 = vadd.f32 %v12237, %v12420
        %v12422 = vpop.f32.mrf.mxu0
        %12423 = vmatprep.mubr.bf16.mxu0 0
        %12424 = vmatmul.mubr.bf16.gmra.mxu0 %v12213
        %v12425 = vpop.f32.mrf.mxu0
        %v12426 = vadd.f32 %v12237, %v12425
        %v12427 = vpop.f32.mrf.mxu0
        %v12428 = vpop.f32.mrf.mxu0
        %v12429 = vadd.f32 %v12237, %v12428
        %v12430 = vpop.f32.mrf.mxu0
        %12431 = vmatprep.mubr.bf16.mxu0 0
        %12432 = vmatmul.mubr.bf16.gmra.mxu0 %v12214
        %v12433 = vpop.f32.mrf.mxu0
        %v12434 = vadd.f32 %v12237, %v12433
        %v12435 = vpop.f32.mrf.mxu0
        %v12436 = vpop.f32.mrf.mxu0
        %v12437 = vadd.f32 %v12237, %v12436
        %v12438 = vpop.f32.mrf.mxu0
        %12439 = vmatprep.mubr.bf16.mxu0 0
        %12440 = vmatmul.mubr.bf16.gmra.mxu0 %v12215
        %v12441 = vpop.f32.mrf.mxu0
        %v12442 = vadd.f32 %v12237, %v12441
        %v12443 = vpop.f32.mrf.mxu0
        %v12444 = vpop.f32.mrf.mxu0
        %v12445 = vadd.f32 %v12237, %v12444
        %v12446 = vpop.f32.mrf.mxu0
        %12447 = vdwg.mxu0
        %vm12448 = vcmp.gt.f32.partialorder %v12322, 0.0
        %vm12449 = vcmp.gt.f32.partialorder %v12325, 0.0
        %vm12450 = vcmp.gt.f32.partialorder %v12330, 0.0
        %vm12451 = vcmp.gt.f32.partialorder %v12333, 0.0
        %vm12452 = vcmp.gt.f32.partialorder %v12338, 0.0
        %vm12453 = vcmp.gt.f32.partialorder %v12341, 0.0
        %vm12454 = vcmp.gt.f32.partialorder %v12346, 0.0
        %vm12455 = vcmp.gt.f32.partialorder %v12349, 0.0
        %vm12456 = vcmp.gt.f32.partialorder %v12354, 0.0
        %vm12457 = vcmp.gt.f32.partialorder %v12357, 0.0
        %vm12458 = vcmp.gt.f32.partialorder %v12362, 0.0
        %vm12459 = vcmp.gt.f32.partialorder %v12365, 0.0
        %vm12460 = vcmp.gt.f32.partialorder %v12370, 0.0
        %vm12461 = vcmp.gt.f32.partialorder %v12373, 0.0
        %vm12462 = vcmp.gt.f32.partialorder %v12378, 0.0
        %vm12463 = vcmp.gt.f32.partialorder %v12381, 0.0
        %vm12464 = vcmp.gt.f32.partialorder %v12386, 0.0
        %vm12465 = vcmp.gt.f32.partialorder %v12389, 0.0
        %vm12466 = vcmp.gt.f32.partialorder %v12394, 0.0
        %vm12467 = vcmp.gt.f32.partialorder %v12397, 0.0
        %vm12468 = vcmp.gt.f32.partialorder %v12402, 0.0
        %vm12469 = vcmp.gt.f32.partialorder %v12405, 0.0
        %vm12470 = vcmp.gt.f32.partialorder %v12410, 0.0
        %vm12471 = vcmp.gt.f32.partialorder %v12413, 0.0
        %vm12472 = vcmp.gt.f32.partialorder %v12418, 0.0
        %vm12473 = vcmp.gt.f32.partialorder %v12421, 0.0
        %vm12474 = vcmp.gt.f32.partialorder %v12426, 0.0
        %vm12475 = vcmp.gt.f32.partialorder %v12429, 0.0
        %vm12476 = vcmp.gt.f32.partialorder %v12434, 0.0
        %vm12477 = vcmp.gt.f32.partialorder %v12437, 0.0
        %vm12478 = vcmp.gt.f32.partialorder %v12442, 0.0
        %vm12479 = vcmp.gt.f32.partialorder %v12445, 0.0
        %v12480 = vmul.f32 %v12322, 0.1
        %v12481 = vmul.f32 %v12325, 0.1
        %v12482 = vmul.f32 %v12330, 0.1
        %v12483 = vmul.f32 %v12333, 0.1
        %v12484 = vmul.f32 %v12338, 0.1
        %v12485 = vmul.f32 %v12341, 0.1
        %v12486 = vmul.f32 %v12346, 0.1
        %v12487 = vmul.f32 %v12349, 0.1
        %v12488 = vmul.f32 %v12354, 0.1
        %v12489 = vmul.f32 %v12357, 0.1
        %v12490 = vmul.f32 %v12362, 0.1
        %v12491 = vmul.f32 %v12365, 0.1
        %v12492 = vmul.f32 %v12370, 0.1
        %v12493 = vmul.f32 %v12373, 0.1
        %v12494 = vmul.f32 %v12378, 0.1
        %v12495 = vmul.f32 %v12381, 0.1
        %v12496 = vmul.f32 %v12386, 0.1
        %v12497 = vmul.f32 %v12389, 0.1
        %v12498 = vmul.f32 %v12394, 0.1
        %v12499 = vmul.f32 %v12397, 0.1
        %v12500 = vmul.f32 %v12402, 0.1
        %v12501 = vmul.f32 %v12405, 0.1
        %v12502 = vmul.f32 %v12410, 0.1
        %v12503 = vmul.f32 %v12413, 0.1
        %v12504 = vmul.f32 %v12418, 0.1
        %v12505 = vmul.f32 %v12421, 0.1
        %v12506 = vmul.f32 %v12426, 0.1
        %v12507 = vmul.f32 %v12429, 0.1
        %v12508 = vmul.f32 %v12434, 0.1
        %v12509 = vmul.f32 %v12437, 0.1
        %v12510 = vmul.f32 %v12442, 0.1
        %v12511 = vmul.f32 %v12445, 0.1
        %v12512 = vsel %vm12448, %v12322, %v12480
        %v12513 = vsel %vm12449, %v12325, %v12481
        %v12514 = vsel %vm12450, %v12330, %v12482
        %v12515 = vsel %vm12451, %v12333, %v12483
        %v12516 = vsel %vm12452, %v12338, %v12484
        %v12517 = vsel %vm12453, %v12341, %v12485
        %v12518 = vsel %vm12454, %v12346, %v12486
        %v12519 = vsel %vm12455, %v12349, %v12487
        %v12520 = vsel %vm12456, %v12354, %v12488
        %v12521 = vsel %vm12457, %v12357, %v12489
        %v12522 = vsel %vm12458, %v12362, %v12490
        %v12523 = vsel %vm12459, %v12365, %v12491
        %v12524 = vsel %vm12460, %v12370, %v12492
        %v12525 = vsel %vm12461, %v12373, %v12493
        %v12526 = vsel %vm12462, %v12378, %v12494
        %v12527 = vsel %vm12463, %v12381, %v12495
        %v12528 = vsel %vm12464, %v12386, %v12496
        %v12529 = vsel %vm12465, %v12389, %v12497
        %v12530 = vsel %vm12466, %v12394, %v12498
        %v12531 = vsel %vm12467, %v12397, %v12499
        %v12532 = vsel %vm12468, %v12402, %v12500
        %v12533 = vsel %vm12469, %v12405, %v12501
        %v12534 = vsel %vm12470, %v12410, %v12502
        %v12535 = vsel %vm12471, %v12413, %v12503
        %v12536 = vsel %vm12472, %v12418, %v12504
        %v12537 = vsel %vm12473, %v12421, %v12505
        %v12538 = vsel %vm12474, %v12426, %v12506
        %v12539 = vsel %vm12475, %v12429, %v12507
        %v12540 = vsel %vm12476, %v12434, %v12508
        %v12541 = vsel %vm12477, %v12437, %v12509
        %v12542 = vsel %vm12478, %v12442, %v12510
        %v12543 = vsel %vm12479, %v12445, %v12511
        %12544 = vst [vmem:[%s401] sm:$0xff] %v12512
        %12545 = vst [vmem:[%s401 + $0x8] sm:$0xff] %v12513
        %12546 = vst [vmem:[%s401 + $0x10] sm:$0xff] %v12514
        %12547 = vst [vmem:[%s401 + $0x18] sm:$0xff] %v12515
        %12548 = vst [vmem:[%s401 + $0x20] sm:$0xff] %v12516
        %12549 = vst [vmem:[%s401 + $0x28] sm:$0xff] %v12517
        %12550 = vst [vmem:[%s401 + $0x30] sm:$0xff] %v12518
        %12551 = vst [vmem:[%s401 + $0x38] sm:$0xff] %v12519
        %12552 = vst [vmem:[%s401 + $0x40] sm:$0xff] %v12520
        %12553 = vst [vmem:[%s401 + $0x48] sm:$0xff] %v12521
        %12554 = vst [vmem:[%s401 + $0x50] sm:$0xff] %v12522
        %12555 = vst [vmem:[%s401 + $0x58] sm:$0xff] %v12523
        %12556 = vst [vmem:[%s401 + $0x60] sm:$0xff] %v12524
        %12557 = vst [vmem:[%s401 + $0x68] sm:$0xff] %v12525
        %12558 = vst [vmem:[%s401 + $0x70] sm:$0xff] %v12526
        %12559 = vst [vmem:[%s401 + $0x78] sm:$0xff] %v12527
        %12560 = vst [vmem:[%s401 + $0x80] sm:$0xff] %v12528
        %12561 = vst [vmem:[%s401 + $0x88] sm:$0xff] %v12529
        %12562 = vst [vmem:[%s401 + $0x90] sm:$0xff] %v12530
        %12563 = vst [vmem:[%s401 + $0x98] sm:$0xff] %v12531
        %12564 = vst [vmem:[%s401 + $0xa0] sm:$0xff] %v12532
        %12565 = vst [vmem:[%s401 + $0xa8] sm:$0xff] %v12533
        %12566 = vst [vmem:[%s401 + $0xb0] sm:$0xff] %v12534
        %12567 = vst [vmem:[%s401 + $0xb8] sm:$0xff] %v12535
        %12568 = vst [vmem:[%s401 + $0xc0] sm:$0xff] %v12536
        %12569 = vst [vmem:[%s401 + $0xc8] sm:$0xff] %v12537
        %12570 = vst [vmem:[%s401 + $0xd0] sm:$0xff] %v12538
        %12571 = vst [vmem:[%s401 + $0xd8] sm:$0xff] %v12539
        %12572 = vst [vmem:[%s401 + $0xe0] sm:$0xff] %v12540
        %12573 = vst [vmem:[%s401 + $0xe8] sm:$0xff] %v12541
        %12574 = vst [vmem:[%s401 + $0xf0] sm:$0xff] %v12542
        %12575 = vst [vmem:[%s401 + $0xf8] sm:$0xff] %v12543
        %p12576 = scmp.lt.s32.totalorder %s23, 1
        %s12577 = scalar_select %p12576, %s23, 1
        %s12578 = smul.addr %s12577, 32
        %s12579 = smul.addr %s12578, 8
        %s12580 = scalar_lea.vmem %s11, %s12579
        // Predicated region
        $region69: #{convolutional_set_fused.1} parent=63 // pred_check
          %p12581 = pneg %p277
        $region70: #{convolutional_set_fused.1} parent=63 // pred_check_branch
          %12583 = sbr.rel (%p12581) target = $region72
        $region71: #{convolutional_set_fused.1} parent=63 // pred_region
          _
        $region72: #{convolutional_set_fused.1} parent=63 // pred_fallthru
          _
      $region64: #{convolutional_set_fused.1} parent=5 // pred_fallthru
        _
      %p12584 = scmp.le.s32.totalorder 2, %s18
      // Predicated region
      $region73: #{convolutional_set_fused.1} parent=5 // pred_check
        %p12585 = pneg %p12584
      $region74: #{convolutional_set_fused.1} parent=5 // pred_check_branch
        %12587 = sbr.rel (%p12585) target = $region76
      $region75: #{convolutional_set_fused.1} parent=5 // pred_region
        %s12588 = ssub.s32 %s18, 2
        // Predicated region
        $region77: #{convolutional_set_fused.1} parent=75 // pred_check
          %p12589 = pneg %p283
        $region78: #{convolutional_set_fused.1} parent=75 // pred_check_branch
          %12591 = sbr.rel (%p12589) target = $region80
        $region79: #{convolutional_set_fused.1} parent=75 // pred_region
          %p12592 = scmp.lt.s32.totalorder %s24, 1
          %s12593 = scalar_select %p12592, %s24, 1
          %s12594 = smul.addr %s12593, 32
          %s12595 = smul.addr %s12594, 8
          %s12596 = scalar_lea.vmem %s11, %s12595
        $region80: #{convolutional_set_fused.1} parent=75 // pred_fallthru
          _
      $region76: #{convolutional_set_fused.1} parent=5 // pred_fallthru
        _
    $region6: #{convolutional_set_fused.1} parent=1 // loop_footer
      %s22 = sadd.s32 1, %s18
    $region7: #{convolutional_set_fused.1} parent=1 // loop_footer_branch
      %17 = sbr.rel target = $region3
    $region8: #{convolutional_set_fused.1} parent=1 // loop_exit
      _
    %12597 = vsyncpa [#allocation4], 1
    %s12598 = scalar_lea.sflag [#allocation4], 1
    %12599 = vsyncpa %s12598, 1

</llo_original>
